<compile_context>
chip_gen: v7x
topology: tpu7x:2x2x1
jax: 0.10.0
libtpu: 0.0.40
codegen_flags: <defaults>
</compile_context>

<pallas_src>
import jax
import jax.numpy as jnp
from jax import lax
from jax.experimental import pallas as pl
from jax.experimental.pallas import tpu as pltpu

_EPS = 1e-5                 # BatchNorm eps
_CDT = jnp.bfloat16         # MXU compute dtype (activations / banded weights)


# ============================================================================
# Fused "conv stack" Pallas kernel
# ============================================================================
def _make_stack_kernel(plan, out_acts, n_w, has_skip):
    """plan: tuple of (mode, w_idx, relu, res); mode in {"same","down","up"},
    res in {None, ("act", i), ("skip",)}.  Activation index 0 is the kernel
    input, s+1 is the output of stage s.  out_acts lists which activations are
    written to the output refs."""

    def kernel(*refs):
        pos = 0
        x_ref = refs[pos]; pos += 1
        skip_ref = None
        if has_skip:
            skip_ref = refs[pos]; pos += 1
        w_refs = refs[pos:pos + n_w]; pos += n_w
        scale_ref = refs[pos]; pos += 1
        shift_ref = refs[pos]; pos += 1
        out_refs = refs[pos:pos + len(out_acts)]; pos += len(out_acts)
        pad_ref = refs[pos]                     # (h_max + 2, wc_max) f32 VMEM

        acts = [x_ref[0].astype(jnp.float32)]   # VMEM-resident activations
        for s, (mode, w_idx, relu, res) in enumerate(plan):
            a = acts[-1]
            h, wc = a.shape
            wt = w_refs[w_idx][...]             # (3*wc, wc_out) bf16 band

            if mode == "up":
                # ConvTranspose2d(k=3, s=2, p=1, op=1): row-dilate the input
                # in VMEM, then run the transposed banded conv on 2h rows.
                hp = 2 * h
                pad_ref[0:hp + 2, 0:wc] = jnp.zeros((hp + 2, wc), jnp.float32)
                for j in range(h):              # static tiny loop
                    # TODO(synk): single strided store for large H.
                    pad_ref[2 * j + 1:2 * j + 2, 0:wc] = a[j:j + 1]
                ho = hp
                cat = jnp.concatenate(
                    [pad_ref[0:ho, 0:wc], pad_ref[1:ho + 1, 0:wc],
                     pad_ref[2:ho + 2, 0:wc]], axis=1)
            else:
                zrow = jnp.zeros((1, wc), jnp.float32)
                pad_ref[0:1, 0:wc] = zrow                    # top halo
                pad_ref[1:h + 1, 0:wc] = a                   # interior rows
                pad_ref[h + 1:h + 2, 0:wc] = zrow            # bottom halo
                if mode == "same":
                    ho = h
                    cat = jnp.concatenate(
                        [pad_ref[0:h, 0:wc], pad_ref[1:h + 1, 0:wc],
                         pad_ref[2:h + 2, 0:wc]], axis=1)
                else:                       # "down": stride-2 conv; only the
                    ho = h // 2             # surviving output rows are built
                    cat = jnp.concatenate(
                        [pad_ref[pl.ds(0, ho, stride=2), pl.ds(0, wc)],
                         pad_ref[pl.ds(1, ho, stride=2), pl.ds(0, wc)],
                         pad_ref[pl.ds(2, ho, stride=2), pl.ds(0, wc)]],
                        axis=1)

            # single lane-dense bf16 MXU matmul per conv stage (K = 3*wc)
            y = jnp.dot(cat.astype(_CDT), wt,
                        preferred_element_type=jnp.float32)
            # folded bias / BatchNorm, optional residual / skip, ReLU (f32)
            y = y * scale_ref[s:s + 1, :] + shift_ref[s:s + 1, :]
            if res is not None:
                if res[0] == "act":
                    y = y + acts[res[1]]
                else:  # fused skip connection (up path)
                    y = y + skip_ref[0].astype(jnp.float32)
            if relu:
                y = jnp.maximum(y, 0.0)
            acts.append(y)

        for o_ref, a_idx in zip(out_refs, out_acts):
            o_ref[0] = acts[a_idx].astype(o_ref.dtype)

    return kernel


def _conv_stack(x, weights, scales, shifts, plan, out_acts, skip=None):
    """Run a fused stack of conv stages in a single pallas_call."""
    n, h_in, wc_in = x.shape
    wc = scales.shape[1]
    hs = [h_in]
    for (mode, _, _, _) in plan:
        h = hs[-1]
        hs.append(h // 2 if mode == "down" else (2 * h if mode == "up" else h))
    h_max = max(hs)
    wc_max = max(wc, wc_in)
    n_w = len(weights)
    has_skip = skip is not None

    inputs = [x]
    in_specs = [pl.BlockSpec((1, h_in, wc_in), lambda i: (i, 0, 0))]
    if has_skip:
        inputs.append(skip)
        in_specs.append(pl.BlockSpec((1,) + skip.shape[1:],
                                     lambda i: (i, 0, 0)))
    for wt in weights:
        inputs.append(wt)
        in_specs.append(pl.BlockSpec(wt.shape, lambda i: (0, 0)))
    inputs += [scales, shifts]
    in_specs += [pl.BlockSpec(scales.shape, lambda i: (0, 0)),
                 pl.BlockSpec(shifts.shape, lambda i: (0, 0))]

    out_shape = tuple(jax.ShapeDtypeStruct((n, hs[a], wc), _CDT)
                      for a in out_acts)
    out_specs = tuple(pl.BlockSpec((1, hs[a], wc), lambda i: (i, 0, 0))
                      for a in out_acts)

    return pl.pallas_call(
        _make_stack_kernel(plan, tuple(out_acts), n_w, has_skip),
        out_shape=out_shape,
        grid=(n,),
        in_specs=in_specs,
        out_specs=out_specs,
        scratch_shapes=[pltpu.VMEM((h_max + 2, wc_max), jnp.float32)],
        compiler_params=pltpu.CompilerParams(
            dimension_semantics=("parallel",)),
    )(*inputs)


# ============================================================================
# Wrapper-side precomputation (banded weights, BN folding, lane tiling)
# ============================================================================
def _banded_weight(w_hwio, w_in, w_out, stride):
    """B_dy[xi*Cin+ci, xo*Cout+co] = w[dy, xi - stride*xo + 1, ci, co]
    (zero outside the band); dy bands stacked along rows: (3*w_in*Cin, w_out*Cout)."""
    kh, kw, cin, cout = w_hwio.shape
    xi = jnp.arange(w_in)[:, None]
    xo = jnp.arange(w_out)[None, :]
    kx = xi - stride * xo + 1
    valid = ((kx >= 0) & (kx < kw)).astype(w_hwio.dtype)[..., None, None]
    kxc = jnp.clip(kx, 0, kw - 1)
    bands = []
    for dy in range(kh):
        b = w_hwio[dy][kxc] * valid                 # (w_in, w_out, Cin, Cout)
        bands.append(b.transpose(0, 2, 1, 3).reshape(w_in * cin, w_out * cout))
    return jnp.concatenate(bands, axis=0)


def _banded_weight_transposed(w_eff, w_in, w_out):
    """Band for ConvTranspose2d(k=3, s=2, p=1, op=1) applied to a row-dilated
    input.  w_eff[ky, kx, ci, co] == torch weight[ci, co, ky, kx]."""
    kh, kw, cin, cout = w_eff.shape
    xi = jnp.arange(w_in)[:, None]
    xo = jnp.arange(w_out)[None, :]
    kx = xo - 2 * xi + 1
    valid = ((kx >= 0) & (kx < kw)).astype(w_eff.dtype)[..., None, None]
    kxc = jnp.clip(kx, 0, kw - 1)
    bands = []
    for dy in range(kh):
        b = w_eff[kh - 1 - dy][kxc] * valid
        bands.append(b.transpose(0, 2, 1, 3).reshape(w_in * cin, w_out * cout))
    return jnp.concatenate(bands, axis=0)


def _fold_bn(bn, bias):
    s = bn["gamma"] / jnp.sqrt(bn["var"] + _EPS)
    return s, (bias - bn["mean"]) * s + bn["beta"]


def _round_up(x, m):
    return (x + m - 1) // m * m


def prepare_params(params, height, width):
    """Precompute (static_cfg, device_arrays) once, outside the jitted forward."""
    L = len(params["down_blocks"])
    planes = params["inconv"]["w"].shape[-1]
    cin = params["inconv"]["w"].shape[-2]
    cin_pad = _round_up(cin, 8)

    def tile(vec, reps):
        return jnp.tile(vec.astype(jnp.float32), reps)

    down_cfg, down_arr = [], []
    w = width
    for i in range(L):
        bp = params["down_blocks"][i]
        dc = params["down_convs"][i]
        c = bp["w1"].shape[-1]
        weights, plan, srows, trows = [], [], [], []
        if i == 0:   # fuse inconv + in_bn + relu into the first level's kernel
            w_in = jnp.pad(params["inconv"]["w"],
                           ((0, 0), (0, 0), (0, cin_pad - cin), (0, 0)))
            s0, t0 = _fold_bn(params["in_bn"], params["inconv"]["b"])
            weights.append(_banded_weight(w_in, w, w, 1))
            plan.append(("same", 0, True, None))
            srows.append(tile(s0, w)); trows.append(tile(t0, w))
            base = 1
        else:
            base = 0
        k1 = len(weights)
        weights.append(_banded_weight(bp["w1"], w, w, 1))    # conv1, used twice
        s1, t1 = _fold_bn(bp["bn1"], bp["b1"])
        s2, t2 = _fold_bn(bp["bn2"], bp["b1"])
        plan.append(("same", k1, True, None))
        srows.append(tile(s1, w)); trows.append(tile(t1, w))
        plan.append(("same", k1, True, ("act", base)))
        srows.append(tile(s2, w)); trows.append(tile(t2, w))
        kd = len(weights)                                     # fused down-conv
        weights.append(_banded_weight(dc["w"], w, w // 2, 2))
        plan.append(("down", kd, True, None))
        srows.append(tile(jnp.ones((2 * c,), jnp.float32), w // 2))
        trows.append(tile(dc["b"], w // 2))
        blk_out = base + 2
        down_cfg.append({"plan": tuple(plan), "out_acts": (blk_out, blk_out + 1)})
        down_arr.append({"weights": [wt.astype(_CDT) for wt in weights],
                         "scales": jnp.stack(srows),
                         "shifts": jnp.stack(trows)})
        w //= 2

    bp = params["bottom"]
    s1, t1 = _fold_bn(bp["bn1"], bp["b1"])
    s2, t2 = _fold_bn(bp["bn2"], bp["b1"])
    bottom_cfg = {"plan": (("same", 0, True, None),
                           ("same", 0, True, ("act", 0))),
                  "out_acts": (2,)}
    bottom_arr = {"weights": [_banded_weight(bp["w1"], w, w, 1).astype(_CDT)],
                  "scales": jnp.stack([tile(s1, w), tile(s2, w)]),
                  "shifts": jnp.stack([tile(t1, w), tile(t2, w)])}

    up_cfg, up_arr = [], []
    for j in range(L):
        uc = params["up_convs"][j]
        bp = params["up_blocks"][j]
        cout = uc["w"].shape[-1]
        s1, t1 = _fold_bn(bp["bn1"], bp["b1"])
        s2, t2 = _fold_bn(bp["bn2"], bp["b1"])
        up_cfg.append({"plan": (("up", 0, False, ("skip",)),     # +skip fused
                                ("same", 1, True, None),
                                ("same", 1, True, ("act", 1))),
                       "out_acts": (3,)})
        up_arr.append({"weights": [
                           _banded_weight_transposed(uc["w"], w, 2 * w).astype(_CDT),
                           _banded_weight(bp["w1"], 2 * w, 2 * w, 1).astype(_CDT)],
                       "scales": jnp.stack([
                           tile(jnp.ones((cout,), jnp.float32), 2 * w),
                           tile(s1, 2 * w), tile(s2, 2 * w)]),
                       "shifts": jnp.stack([
                           tile(uc["b"], 2 * w),
                           tile(t1, 2 * w), tile(t2, 2 * w)])})
        w *= 2

    cfg = {"layers": L, "planes": planes, "cin": cin, "cin_pad": cin_pad,
           "height": height, "width": width,
           "down": down_cfg, "bottom": bottom_cfg, "up": up_cfg}
    arrs = {"down": down_arr, "bottom": bottom_arr, "up": up_arr}
    return cfg, arrs


def build_forward(cfg):
    L = cfg["layers"]

    def forward(x_nchw, arrs):
        n = x_nchw.shape[0]
        H, W = cfg["height"], cfg["width"]
        cin, cin_pad = cfg["cin"], cfg["cin_pad"]
        x = jnp.transpose(x_nchw, (0, 2, 3, 1)).astype(jnp.float32)   # NHWC
        if cin_pad != cin:
            x = jnp.pad(x, ((0, 0), (0, 0), (0, 0), (0, cin_pad - cin)))
        out = x.reshape(n, H, W * cin_pad).astype(_CDT)

        skips = []
        for i in range(L):
            cg, ar = cfg["down"][i], arrs["down"][i]
            skip_i, out = _conv_stack(out, ar["weights"], ar["scales"],
                                      ar["shifts"], cg["plan"], cg["out_acts"])
            skips.append(skip_i)

        cg, ar = cfg["bottom"], arrs["bottom"]
        (out,) = _conv_stack(out, ar["weights"], ar["scales"], ar["shifts"],
                             cg["plan"], cg["out_acts"])
        packed = [out]

        for j in range(L):
            cg, ar = cfg["up"][j], arrs["up"][j]
            (out,) = _conv_stack(out, ar["weights"], ar["scales"], ar["shifts"],
                                 cg["plan"], cg["out_acts"],
                                 skip=skips[L - 1 - j])
            packed.append(out)

        # TODO(synk): keep lane-packed NHWC outputs if the consumer allows, to
        # avoid this extra relayout pass per output (module spec returns NCHW).
        planes = cfg["planes"]
        outs = []
        for k, p in enumerate(packed):
            lvl = L - k
            cc = planes * 2 ** lvl
            ww = W // 2 ** lvl
            hh = H // 2 ** lvl
            outs.append(p.reshape(n, hh, ww, cc).astype(jnp.float32)
                        .transpose(0, 3, 1, 2))
        return outs

    return jax.jit(forward)


# ============================================================================
# Pure-JAX reference (correctness check only)
# ============================================================================
def _conv_ref(x, w, b, stride=1):
    y = lax.conv_general_dilated(
        x, w, window_strides=(stride, stride), padding=((1, 1), (1, 1)),
        dimension_numbers=("NHWC", "HWIO", "NHWC"))
    return y + b


def _conv_t_ref(x, w_eff, b):
    y = lax.conv_general_dilated(
        x, w_eff[::-1, ::-1], window_strides=(1, 1), padding=((1, 2), (1, 2)),
        lhs_dilation=(2, 2), dimension_numbers=("NHWC", "HWIO", "NHWC"))
    return y + b


def _bn_ref(y, bn):
    return (y - bn["mean"]) / jnp.sqrt(bn["var"] + _EPS) * bn["gamma"] + bn["beta"]


def _basic_block_ref(x, bp):
    if "w0" in bp:
        x = jax.nn.relu(_conv_ref(x, bp["w0"], bp["b0"]))
    h = jax.nn.relu(_bn_ref(_conv_ref(x, bp["w1"], bp["b1"]), bp["bn1"]))
    y = _bn_ref(_conv_ref(h, bp["w1"], bp["b1"]), bp["bn2"])
    return jax.nn.relu(y + x)


def ladder_ref(x_nchw, params):
    x = jnp.transpose(x_nchw, (0, 2, 3, 1)).astype(jnp.float32)
    layers = len(params["down_blocks"])
    out = jax.nn.relu(_bn_ref(
        _conv_ref(x, params["inconv"]["w"], params["inconv"]["b"]),
        params["in_bn"]))
    down = []
    for i in range(layers):
        out = _basic_block_ref(out, params["down_blocks"][i])
        down.append(out)
        dc = params["down_convs"][i]
        out = jax.nn.relu(_conv_ref(out, dc["w"], dc["b"], stride=2))
    out = _basic_block_ref(out, params["bottom"])
    ups = [jnp.transpose(out, (0, 3, 1, 2))]
    for j in range(layers):
        uc = params["up_convs"][j]
        out = _conv_t_ref(out, uc["w"], uc["b"]) + down[layers - j - 1]
        out = _basic_block_ref(out, params["up_blocks"][j])
        ups.append(jnp.transpose(out, (0, 3, 1, 2)))
    return ups


# ============================================================================
# Parameter construction
# ============================================================================
def _conv_init(key, cin, cout):
    kw, kb = jax.random.split(key)
    std = (2.0 / (9.0 * cin)) ** 0.5
    return {"w": std * jax.random.normal(kw, (3, 3, cin, cout), jnp.float32),
            "b": 0.05 * jax.random.normal(kb, (cout,), jnp.float32)}


def _bn_init(c, off):
    i = jnp.arange(c, dtype=jnp.float32)
    return {"gamma": 1.0 + 0.05 * jnp.cos(i + off),
            "beta": 0.02 * jnp.sin(i + off),
            "mean": 0.03 * jnp.sin(0.7 * i + off),
            "var": 1.0 + 0.1 * jnp.cos(0.3 * i + off) ** 2}


def _block_init(key, planes):
    cp = _conv_init(key, planes, planes)
    # TODO(synk): nn.Dropout2d(p=0.25) is identity in eval mode; training-mode
    # channel dropout is not implemented.
    return {"w1": cp["w"], "b1": cp["b"],
            "bn1": _bn_init(planes, 0.1), "bn2": _bn_init(planes, 0.7)}


if __name__ == "__main__":
    key = jax.random.PRNGKey(0)
    keys = jax.random.split(key, 16)

    N, inplanes, planes, layers, H, W = 2, 3, 8, 2, 16, 16
    x = jax.random.normal(keys[0], (N, inplanes, H, W), jnp.float32)  # NCHW

    params = {
        "inconv": _conv_init(keys[1], inplanes, planes),
        "in_bn": _bn_init(planes, 0.3),
        "down_blocks": [_block_init(keys[2 + i], planes * 2 ** i)
                        for i in range(layers)],
        "down_convs": [_conv_init(keys[4 + i], planes * 2 ** i,
                                  planes * 2 ** (i + 1))
                       for i in range(layers)],
        "bottom": _block_init(keys[6], planes * 2 ** layers),
        # up-conv weights stored as w_eff[ky, kx, ci, co]
        # (== torch ConvTranspose2d.weight[ci, co, ky, kx])
        "up_convs": [_conv_init(keys[7 + j], planes * 2 ** (layers - j),
                                planes * 2 ** (layers - j - 1))
                     for j in range(layers)],
        "up_blocks": [_block_init(keys[9 + j], planes * 2 ** (layers - j - 1))
                      for j in range(layers)],
    }

    cfg, arrs = prepare_params(params, H, W)      # precomputed once (hoisted)
    fwd = build_forward(cfg)

    outs = jax.block_until_ready(fwd(x, arrs))
    refs = jax.block_until_ready(ladder_ref(x, params))

    assert len(outs) == layers + 1
    for o, r in zip(outs, refs):
        assert o.shape == r.shape, (o.shape, r.shape)
        err = float(jnp.max(jnp.abs(o - r)))
        # bf16 MXU operands (f32 accumulation/epilogue) -> looser tolerance
        # than the previous all-f32 version.
        assert jnp.allclose(o, r, atol=1e-1, rtol=1e-1), err

    print("KERNEL_OK")
</pallas_src>

<mosaic_0001>
module attributes {stable_mosaic.version = 11 : i64} {
  func.func @kernel(%arg0: i32, %arg1: memref<1x4x128xbf16, #tpu.memory_space<vmem>>, %arg2: memref<1x8x128xbf16, #tpu.memory_space<vmem>>, %arg3: memref<384x128xbf16, #tpu.memory_space<vmem>>, %arg4: memref<384x128xbf16, #tpu.memory_space<vmem>>, %arg5: memref<3x128xf32, #tpu.memory_space<vmem>>, %arg6: memref<3x128xf32, #tpu.memory_space<vmem>>, %arg7: memref<1x8x128xbf16, #tpu.memory_space<vmem>>, %arg8: memref<10x128xf32, #tpu.memory_space<vmem>>) attributes {dimension_semantics = [#tpu.dimension_semantics<parallel>], iteration_bounds = array<i64: 2>, scalar_prefetch = 0 : i64, scratch_operands = 1 : i64, tpu.core_type = #tpu.core_type<tc>, window_params = [{transform_indices = @transform_0, window_bounds = array<i64: 1, 4, 128>}, {transform_indices = @transform_1, window_bounds = array<i64: 1, 8, 128>}, {pipeline_mode = #tpu.pipeline_mode<synchronous>, transform_indices = @transform_2, window_bounds = array<i64: 384, 128>}, {pipeline_mode = #tpu.pipeline_mode<synchronous>, transform_indices = @transform_3, window_bounds = array<i64: 384, 128>}, {pipeline_mode = #tpu.pipeline_mode<synchronous>, transform_indices = @transform_4, window_bounds = array<i64: 3, 128>}, {pipeline_mode = #tpu.pipeline_mode<synchronous>, transform_indices = @transform_5, window_bounds = array<i64: 3, 128>}, {transform_indices = @transform_6, window_bounds = array<i64: 1, 8, 128>}]} {
    %c0 = arith.constant 0 : index
    %c0_0 = arith.constant 0 : index
    %c0_1 = arith.constant 0 : index
    %0 = vector.load %arg1[%c0, %c0_0, %c0_1] : memref<1x4x128xbf16, #tpu.memory_space<vmem>>, vector<1x4x128xbf16>
    %1 = vector.shape_cast %0 : vector<1x4x128xbf16> to vector<4x128xbf16>
    %2 = arith.extf %1 : vector<4x128xbf16> to vector<4x128xf32>
    %c0_2 = arith.constant 0 : index
    %c0_3 = arith.constant 0 : index
    %3 = vector.load %arg3[%c0_2, %c0_3] : memref<384x128xbf16, #tpu.memory_space<vmem>>, vector<384x128xbf16>
    %cst = arith.constant 0.000000e+00 : f32
    %4 = vector.broadcast %cst : f32 to vector<10x128xf32>
    %c0_4 = arith.constant 0 : index
    %c0_5 = arith.constant 0 : index
    %5 = vector.load %arg8[%c0_4, %c0_5] : memref<10x128xf32, #tpu.memory_space<vmem>>, vector<10x128xf32>
    tpu.vector_store %arg8[%c0_4, %c0_5], %4 {strides = array<i32>} : memref<10x128xf32, #tpu.memory_space<vmem>>, vector<10x128xf32>,
    %6 = vector.extract_strided_slice %2 {offsets = [0, 0], sizes = [1, 128], strides = [1, 1]} : vector<4x128xf32> to vector<1x128xf32>
    %c1 = arith.constant 1 : index
    %c0_6 = arith.constant 0 : index
    %7 = vector.load %arg8[%c1, %c0_6] : memref<10x128xf32, #tpu.memory_space<vmem>>, vector<1x128xf32>
    tpu.vector_store %arg8[%c1, %c0_6], %6 {strides = array<i32>} : memref<10x128xf32, #tpu.memory_space<vmem>>, vector<1x128xf32>,
    %8 = vector.extract_strided_slice %2 {offsets = [1, 0], sizes = [1, 128], strides = [1, 1]} : vector<4x128xf32> to vector<1x128xf32>
    %c3 = arith.constant 3 : index
    %c0_7 = arith.constant 0 : index
    %9 = vector.load %arg8[%c3, %c0_7] : memref<10x128xf32, #tpu.memory_space<vmem>>, vector<1x128xf32>
    tpu.vector_store %arg8[%c3, %c0_7], %8 {strides = array<i32>} : memref<10x128xf32, #tpu.memory_space<vmem>>, vector<1x128xf32>,
    %10 = vector.extract_strided_slice %2 {offsets = [2, 0], sizes = [1, 128], strides = [1, 1]} : vector<4x128xf32> to vector<1x128xf32>
    %c5 = arith.constant 5 : index
    %c0_8 = arith.constant 0 : index
    %11 = vector.load %arg8[%c5, %c0_8] : memref<10x128xf32, #tpu.memory_space<vmem>>, vector<1x128xf32>
    tpu.vector_store %arg8[%c5, %c0_8], %10 {strides = array<i32>} : memref<10x128xf32, #tpu.memory_space<vmem>>, vector<1x128xf32>,
    %12 = vector.extract_strided_slice %2 {offsets = [3, 0], sizes = [1, 128], strides = [1, 1]} : vector<4x128xf32> to vector<1x128xf32>
    %c7 = arith.constant 7 : index
    %c0_9 = arith.constant 0 : index
    %13 = vector.load %arg8[%c7, %c0_9] : memref<10x128xf32, #tpu.memory_space<vmem>>, vector<1x128xf32>
    tpu.vector_store %arg8[%c7, %c0_9], %12 {strides = array<i32>} : memref<10x128xf32, #tpu.memory_space<vmem>>, vector<1x128xf32>,
    %c0_10 = arith.constant 0 : index
    %c0_11 = arith.constant 0 : index
    %14 = vector.load %arg8[%c0_10, %c0_11] : memref<10x128xf32, #tpu.memory_space<vmem>>, vector<8x128xf32>
    %c1_12 = arith.constant 1 : index
    %c0_13 = arith.constant 0 : index
    %15 = vector.load %arg8[%c1_12, %c0_13] : memref<10x128xf32, #tpu.memory_space<vmem>>, vector<8x128xf32>
    %c2 = arith.constant 2 : index
    %c0_14 = arith.constant 0 : index
    %16 = vector.load %arg8[%c2, %c0_14] : memref<10x128xf32, #tpu.memory_space<vmem>>, vector<8x128xf32>
    %17 = tpu.concatenate %14, %15, %16 in 1 : vector<8x128xf32>, vector<8x128xf32>, vector<8x128xf32> -> vector<8x384xf32>
    %18 = arith.truncf %17 : vector<8x384xf32> to vector<8x384xbf16>
    %cst_15 = arith.constant dense<0.000000e+00> : vector<8x128xf32>
    %19 = tpu.matmul %18, %3, %cst_15 {dimension_numbers = #tpu.dot_dimension_numbers<[1], [0], [0], [1], [0, 0, 1, 1], [], []>} : vector<8x384xbf16>, vector<384x128xbf16>, vector<8x128xf32> -> vector<8x128xf32>
    %c0_16 = arith.constant 0 : index
    %c0_17 = arith.constant 0 : index
    %20 = vector.load %arg5[%c0_16, %c0_17] : memref<3x128xf32, #tpu.memory_space<vmem>>, vector<1x128xf32>
    %21 = vector.broadcast %20 : vector<1x128xf32> to vector<8x128xf32>
    %22 = arith.mulf %19, %21 : vector<8x128xf32>
    %c0_18 = arith.constant 0 : index
    %c0_19 = arith.constant 0 : index
    %23 = vector.load %arg6[%c0_18, %c0_19] : memref<3x128xf32, #tpu.memory_space<vmem>>, vector<1x128xf32>
    %24 = vector.broadcast %23 : vector<1x128xf32> to vector<8x128xf32>
    %25 = arith.addf %22, %24 : vector<8x128xf32>
    %c0_20 = arith.constant 0 : index
    %c0_21 = arith.constant 0 : index
    %c0_22 = arith.constant 0 : index
    %26 = vector.load %arg2[%c0_20, %c0_21, %c0_22] : memref<1x8x128xbf16, #tpu.memory_space<vmem>>, vector<1x8x128xbf16>
    %27 = vector.shape_cast %26 : vector<1x8x128xbf16> to vector<8x128xbf16>
    %28 = arith.extf %27 : vector<8x128xbf16> to vector<8x128xf32>
    %29 = arith.addf %25, %28 : vector<8x128xf32>
    %c0_23 = arith.constant 0 : index
    %c0_24 = arith.constant 0 : index
    %30 = vector.load %arg4[%c0_23, %c0_24] : memref<384x128xbf16, #tpu.memory_space<vmem>>, vector<384x128xbf16>
    %cst_25 = arith.constant 0.000000e+00 : f32
    %31 = vector.broadcast %cst_25 : f32 to vector<1x128xf32>
    %c0_26 = arith.constant 0 : index
    %c0_27 = arith.constant 0 : index
    %32 = vector.load %arg8[%c0_26, %c0_27] : memref<10x128xf32, #tpu.memory_space<vmem>>, vector<1x128xf32>
    tpu.vector_store %arg8[%c0_26, %c0_27], %31 {strides = array<i32>} : memref<10x128xf32, #tpu.memory_space<vmem>>, vector<1x128xf32>,
    %c1_28 = arith.constant 1 : index
    %c0_29 = arith.constant 0 : index
    %33 = vector.load %arg8[%c1_28, %c0_29] : memref<10x128xf32, #tpu.memory_space<vmem>>, vector<8x128xf32>
    tpu.vector_store %arg8[%c1_28, %c0_29], %29 {strides = array<i32>} : memref<10x128xf32, #tpu.memory_space<vmem>>, vector<8x128xf32>,
    %c9 = arith.constant 9 : index
    %c0_30 = arith.constant 0 : index
    %34 = vector.load %arg8[%c9, %c0_30] : memref<10x128xf32, #tpu.memory_space<vmem>>, vector<1x128xf32>
    tpu.vector_store %arg8[%c9, %c0_30], %31 {strides = array<i32>} : memref<10x128xf32, #tpu.memory_space<vmem>>, vector<1x128xf32>,
    %c0_31 = arith.constant 0 : index
    %c0_32 = arith.constant 0 : index
    %35 = vector.load %arg8[%c0_31, %c0_32] : memref<10x128xf32, #tpu.memory_space<vmem>>, vector<8x128xf32>
    %c1_33 = arith.constant 1 : index
    %c0_34 = arith.constant 0 : index
    %36 = vector.load %arg8[%c1_33, %c0_34] : memref<10x128xf32, #tpu.memory_space<vmem>>, vector<8x128xf32>
    %c2_35 = arith.constant 2 : index
    %c0_36 = arith.constant 0 : index
    %37 = vector.load %arg8[%c2_35, %c0_36] : memref<10x128xf32, #tpu.memory_space<vmem>>, vector<8x128xf32>
    %38 = tpu.concatenate %35, %36, %37 in 1 : vector<8x128xf32>, vector<8x128xf32>, vector<8x128xf32> -> vector<8x384xf32>
    %39 = arith.truncf %38 : vector<8x384xf32> to vector<8x384xbf16>
    %cst_37 = arith.constant dense<0.000000e+00> : vector<8x128xf32>
    %40 = tpu.matmul %39, %30, %cst_37 {dimension_numbers = #tpu.dot_dimension_numbers<[1], [0], [0], [1], [0, 0, 1, 1], [], []>} : vector<8x384xbf16>, vector<384x128xbf16>, vector<8x128xf32> -> vector<8x128xf32>
    %c1_38 = arith.constant 1 : index
    %c0_39 = arith.constant 0 : index
    %41 = vector.load %arg5[%c1_38, %c0_39] : memref<3x128xf32, #tpu.memory_space<vmem>>, vector<1x128xf32>
    %42 = vector.broadcast %41 : vector<1x128xf32> to vector<8x128xf32>
    %43 = arith.mulf %40, %42 : vector<8x128xf32>
    %c1_40 = arith.constant 1 : index
    %c0_41 = arith.constant 0 : index
    %44 = vector.load %arg6[%c1_40, %c0_41] : memref<3x128xf32, #tpu.memory_space<vmem>>, vector<1x128xf32>
    %45 = vector.broadcast %44 : vector<1x128xf32> to vector<8x128xf32>
    %46 = arith.addf %43, %45 : vector<8x128xf32>
    %cst_42 = arith.constant 0.000000e+00 : f32
    %47 = vector.broadcast %cst_42 : f32 to vector<8x128xf32>
    %48 = arith.maximumf %46, %47 : vector<8x128xf32>
    %c0_43 = arith.constant 0 : index
    %c0_44 = arith.constant 0 : index
    %49 = vector.load %arg4[%c0_43, %c0_44] : memref<384x128xbf16, #tpu.memory_space<vmem>>, vector<384x128xbf16>
    %cst_45 = arith.constant 0.000000e+00 : f32
    %50 = vector.broadcast %cst_45 : f32 to vector<1x128xf32>
    %c0_46 = arith.constant 0 : index
    %c0_47 = arith.constant 0 : index
    %51 = vector.load %arg8[%c0_46, %c0_47] : memref<10x128xf32, #tpu.memory_space<vmem>>, vector<1x128xf32>
    tpu.vector_store %arg8[%c0_46, %c0_47], %50 {strides = array<i32>} : memref<10x128xf32, #tpu.memory_space<vmem>>, vector<1x128xf32>,
    %c1_48 = arith.constant 1 : index
    %c0_49 = arith.constant 0 : index
    %52 = vector.load %arg8[%c1_48, %c0_49] : memref<10x128xf32, #tpu.memory_space<vmem>>, vector<8x128xf32>
    tpu.vector_store %arg8[%c1_48, %c0_49], %48 {strides = array<i32>} : memref<10x128xf32, #tpu.memory_space<vmem>>, vector<8x128xf32>,
    %c9_50 = arith.constant 9 : index
    %c0_51 = arith.constant 0 : index
    %53 = vector.load %arg8[%c9_50, %c0_51] : memref<10x128xf32, #tpu.memory_space<vmem>>, vector<1x128xf32>
    tpu.vector_store %arg8[%c9_50, %c0_51], %50 {strides = array<i32>} : memref<10x128xf32, #tpu.memory_space<vmem>>, vector<1x128xf32>,
    %c0_52 = arith.constant 0 : index
    %c0_53 = arith.constant 0 : index
    %54 = vector.load %arg8[%c0_52, %c0_53] : memref<10x128xf32, #tpu.memory_space<vmem>>, vector<8x128xf32>
    %c1_54 = arith.constant 1 : index
    %c0_55 = arith.constant 0 : index
    %55 = vector.load %arg8[%c1_54, %c0_55] : memref<10x128xf32, #tpu.memory_space<vmem>>, vector<8x128xf32>
    %c2_56 = arith.constant 2 : index
    %c0_57 = arith.constant 0 : index
    %56 = vector.load %arg8[%c2_56, %c0_57] : memref<10x128xf32, #tpu.memory_space<vmem>>, vector<8x128xf32>
    %57 = tpu.concatenate %54, %55, %56 in 1 : vector<8x128xf32>, vector<8x128xf32>, vector<8x128xf32> -> vector<8x384xf32>
    %58 = arith.truncf %57 : vector<8x384xf32> to vector<8x384xbf16>
    %cst_58 = arith.constant dense<0.000000e+00> : vector<8x128xf32>
    %59 = tpu.matmul %58, %49, %cst_58 {dimension_numbers = #tpu.dot_dimension_numbers<[1], [0], [0], [1], [0, 0, 1, 1], [], []>} : vector<8x384xbf16>, vector<384x128xbf16>, vector<8x128xf32> -> vector<8x128xf32>
    %c2_59 = arith.constant 2 : index
    %c0_60 = arith.constant 0 : index
    %60 = vector.load %arg5[%c2_59, %c0_60] : memref<3x128xf32, #tpu.memory_space<vmem>>, vector<1x128xf32>
    %61 = vector.broadcast %60 : vector<1x128xf32> to vector<8x128xf32>
    %62 = arith.mulf %59, %61 : vector<8x128xf32>
    %c2_61 = arith.constant 2 : index
    %c0_62 = arith.constant 0 : index
    %63 = vector.load %arg6[%c2_61, %c0_62] : memref<3x128xf32, #tpu.memory_space<vmem>>, vector<1x128xf32>
    %64 = vector.broadcast %63 : vector<1x128xf32> to vector<8x128xf32>
    %65 = arith.addf %62, %64 : vector<8x128xf32>
    %66 = arith.addf %65, %29 : vector<8x128xf32>
    %cst_63 = arith.constant 0.000000e+00 : f32
    %67 = vector.broadcast %cst_63 : f32 to vector<8x128xf32>
    %68 = arith.maximumf %66, %67 : vector<8x128xf32>
    %69 = arith.truncf %68 : vector<8x128xf32> to vector<8x128xbf16>
    %c0_64 = arith.constant 0 : index
    %c0_65 = arith.constant 0 : index
    %c0_66 = arith.constant 0 : index
    %70 = vector.load %arg7[%c0_64, %c0_65, %c0_66] : memref<1x8x128xbf16, #tpu.memory_space<vmem>>, vector<1x8x128xbf16>
    %71 = vector.shape_cast %70 : vector<1x8x128xbf16> to vector<8x128xbf16>
    %72 = vector.shape_cast %69 : vector<8x128xbf16> to vector<1x8x128xbf16>
    tpu.vector_store %arg7[%c0_64, %c0_65, %c0_66], %72 {strides = array<i32>} : memref<1x8x128xbf16, #tpu.memory_space<vmem>>, vector<1x8x128xbf16>,
    return
  }
  func.func @transform_0(%arg0: i32) -> (i32, i32, i32) {
    %c0_i32 = arith.constant 0 : i32
    %c0_i32_0 = arith.constant 0 : i32
    %c0_i32_1 = arith.constant 0 : i32
    return %arg0, %c0_i32, %c0_i32_0 : i32, i32, i32
  }
  func.func @transform_1(%arg0: i32) -> (i32, i32, i32) {
    %c0_i32 = arith.constant 0 : i32
    %c0_i32_0 = arith.constant 0 : i32
    %c0_i32_1 = arith.constant 0 : i32
    return %arg0, %c0_i32, %c0_i32_0 : i32, i32, i32
  }
  func.func @transform_2(%arg0: i32) -> (i32, i32) {
    %c0_i32 = arith.constant 0 : i32
    %c0_i32_0 = arith.constant 0 : i32
    %c0_i32_1 = arith.constant 0 : i32
    return %c0_i32, %c0_i32_0 : i32, i32
  }
  func.func @transform_3(%arg0: i32) -> (i32, i32) {
    %c0_i32 = arith.constant 0 : i32
    %c0_i32_0 = arith.constant 0 : i32
    %c0_i32_1 = arith.constant 0 : i32
    return %c0_i32, %c0_i32_0 : i32, i32
  }
  func.func @transform_4(%arg0: i32) -> (i32, i32) {
    %c0_i32 = arith.constant 0 : i32
    %c0_i32_0 = arith.constant 0 : i32
    %c0_i32_1 = arith.constant 0 : i32
    return %c0_i32, %c0_i32_0 : i32, i32
  }
  func.func @transform_5(%arg0: i32) -> (i32, i32) {
    %c0_i32 = arith.constant 0 : i32
    %c0_i32_0 = arith.constant 0 : i32
    %c0_i32_1 = arith.constant 0 : i32
    return %c0_i32, %c0_i32_0 : i32, i32
  }
  func.func @transform_6(%arg0: i32) -> (i32, i32, i32) {
    %c0_i32 = arith.constant 0 : i32
    %c0_i32_0 = arith.constant 0 : i32
    %c0_i32_1 = arith.constant 0 : i32
    return %arg0, %c0_i32, %c0_i32_0 : i32, i32, i32
  }
}

module attributes {stable_mosaic.version = 11 : i64} {
  func.func @kernel(%arg0: i32, %arg1: memref<1x8x128xbf16, #tpu.memory_space<vmem>>, %arg2: memref<384x128xbf16, #tpu.memory_space<vmem>>, %arg3: memref<384x128xbf16, #tpu.memory_space<vmem>>, %arg4: memref<3x128xf32, #tpu.memory_space<vmem>>, %arg5: memref<3x128xf32, #tpu.memory_space<vmem>>, %arg6: memref<1x8x128xbf16, #tpu.memory_space<vmem>>, %arg7: memref<1x4x128xbf16, #tpu.memory_space<vmem>>, %arg8: memref<10x128xf32, #tpu.memory_space<vmem>>) attributes {dimension_semantics = [#tpu.dimension_semantics<parallel>], iteration_bounds = array<i64: 2>, scalar_prefetch = 0 : i64, scratch_operands = 1 : i64, tpu.core_type = #tpu.core_type<tc>, window_params = [{transform_indices = @transform_0, window_bounds = array<i64: 1, 8, 128>}, {pipeline_mode = #tpu.pipeline_mode<synchronous>, transform_indices = @transform_1, window_bounds = array<i64: 384, 128>}, {pipeline_mode = #tpu.pipeline_mode<synchronous>, transform_indices = @transform_2, window_bounds = array<i64: 384, 128>}, {pipeline_mode = #tpu.pipeline_mode<synchronous>, transform_indices = @transform_3, window_bounds = array<i64: 3, 128>}, {pipeline_mode = #tpu.pipeline_mode<synchronous>, transform_indices = @transform_4, window_bounds = array<i64: 3, 128>}, {transform_indices = @transform_5, window_bounds = array<i64: 1, 8, 128>}, {transform_indices = @transform_6, window_bounds = array<i64: 1, 4, 128>}]} {
    %c0 = arith.constant 0 : index
    %c0_0 = arith.constant 0 : index
    %c0_1 = arith.constant 0 : index
    %0 = vector.load %arg1[%c0, %c0_0, %c0_1] : memref<1x8x128xbf16, #tpu.memory_space<vmem>>, vector<1x8x128xbf16>
    %1 = vector.shape_cast %0 : vector<1x8x128xbf16> to vector<8x128xbf16>
    %2 = arith.extf %1 : vector<8x128xbf16> to vector<8x128xf32>
    %c0_2 = arith.constant 0 : index
    %c0_3 = arith.constant 0 : index
    %3 = vector.load %arg2[%c0_2, %c0_3] : memref<384x128xbf16, #tpu.memory_space<vmem>>, vector<384x128xbf16>
    %cst = arith.constant 0.000000e+00 : f32
    %4 = vector.broadcast %cst : f32 to vector<1x128xf32>
    %c0_4 = arith.constant 0 : index
    %c0_5 = arith.constant 0 : index
    %5 = vector.load %arg8[%c0_4, %c0_5] : memref<10x128xf32, #tpu.memory_space<vmem>>, vector<1x128xf32>
    tpu.vector_store %arg8[%c0_4, %c0_5], %4 {strides = array<i32>} : memref<10x128xf32, #tpu.memory_space<vmem>>, vector<1x128xf32>,
    %c1 = arith.constant 1 : index
    %c0_6 = arith.constant 0 : index
    %6 = vector.load %arg8[%c1, %c0_6] : memref<10x128xf32, #tpu.memory_space<vmem>>, vector<8x128xf32>
    tpu.vector_store %arg8[%c1, %c0_6], %2 {strides = array<i32>} : memref<10x128xf32, #tpu.memory_space<vmem>>, vector<8x128xf32>,
    %c9 = arith.constant 9 : index
    %c0_7 = arith.constant 0 : index
    %7 = vector.load %arg8[%c9, %c0_7] : memref<10x128xf32, #tpu.memory_space<vmem>>, vector<1x128xf32>
    tpu.vector_store %arg8[%c9, %c0_7], %4 {strides = array<i32>} : memref<10x128xf32, #tpu.memory_space<vmem>>, vector<1x128xf32>,
    %c0_8 = arith.constant 0 : index
    %c0_9 = arith.constant 0 : index
    %8 = vector.load %arg8[%c0_8, %c0_9] : memref<10x128xf32, #tpu.memory_space<vmem>>, vector<8x128xf32>
    %c1_10 = arith.constant 1 : index
    %c0_11 = arith.constant 0 : index
    %9 = vector.load %arg8[%c1_10, %c0_11] : memref<10x128xf32, #tpu.memory_space<vmem>>, vector<8x128xf32>
    %c2 = arith.constant 2 : index
    %c0_12 = arith.constant 0 : index
    %10 = vector.load %arg8[%c2, %c0_12] : memref<10x128xf32, #tpu.memory_space<vmem>>, vector<8x128xf32>
    %11 = tpu.concatenate %8, %9, %10 in 1 : vector<8x128xf32>, vector<8x128xf32>, vector<8x128xf32> -> vector<8x384xf32>
    %12 = arith.truncf %11 : vector<8x384xf32> to vector<8x384xbf16>
    %cst_13 = arith.constant dense<0.000000e+00> : vector<8x128xf32>
    %13 = tpu.matmul %12, %3, %cst_13 {dimension_numbers = #tpu.dot_dimension_numbers<[1], [0], [0], [1], [0, 0, 1, 1], [], []>} : vector<8x384xbf16>, vector<384x128xbf16>, vector<8x128xf32> -> vector<8x128xf32>
    %c0_14 = arith.constant 0 : index
    %c0_15 = arith.constant 0 : index
    %14 = vector.load %arg4[%c0_14, %c0_15] : memref<3x128xf32, #tpu.memory_space<vmem>>, vector<1x128xf32>
    %15 = vector.broadcast %14 : vector<1x128xf32> to vector<8x128xf32>
    %16 = arith.mulf %13, %15 : vector<8x128xf32>
    %c0_16 = arith.constant 0 : index
    %c0_17 = arith.constant 0 : index
    %17 = vector.load %arg5[%c0_16, %c0_17] : memref<3x128xf32, #tpu.memory_space<vmem>>, vector<1x128xf32>
    %18 = vector.broadcast %17 : vector<1x128xf32> to vector<8x128xf32>
    %19 = arith.addf %16, %18 : vector<8x128xf32>
    %cst_18 = arith.constant 0.000000e+00 : f32
    %20 = vector.broadcast %cst_18 : f32 to vector<8x128xf32>
    %21 = arith.maximumf %19, %20 : vector<8x128xf32>
    %c0_19 = arith.constant 0 : index
    %c0_20 = arith.constant 0 : index
    %22 = vector.load %arg2[%c0_19, %c0_20] : memref<384x128xbf16, #tpu.memory_space<vmem>>, vector<384x128xbf16>
    %cst_21 = arith.constant 0.000000e+00 : f32
    %23 = vector.broadcast %cst_21 : f32 to vector<1x128xf32>
    %c0_22 = arith.constant 0 : index
    %c0_23 = arith.constant 0 : index
    %24 = vector.load %arg8[%c0_22, %c0_23] : memref<10x128xf32, #tpu.memory_space<vmem>>, vector<1x128xf32>
    tpu.vector_store %arg8[%c0_22, %c0_23], %23 {strides = array<i32>} : memref<10x128xf32, #tpu.memory_space<vmem>>, vector<1x128xf32>,
    %c1_24 = arith.constant 1 : index
    %c0_25 = arith.constant 0 : index
    %25 = vector.load %arg8[%c1_24, %c0_25] : memref<10x128xf32, #tpu.memory_space<vmem>>, vector<8x128xf32>
    tpu.vector_store %arg8[%c1_24, %c0_25], %21 {strides = array<i32>} : memref<10x128xf32, #tpu.memory_space<vmem>>, vector<8x128xf32>,
    %c9_26 = arith.constant 9 : index
    %c0_27 = arith.constant 0 : index
    %26 = vector.load %arg8[%c9_26, %c0_27] : memref<10x128xf32, #tpu.memory_space<vmem>>, vector<1x128xf32>
    tpu.vector_store %arg8[%c9_26, %c0_27], %23 {strides = array<i32>} : memref<10x128xf32, #tpu.memory_space<vmem>>, vector<1x128xf32>,
    %c0_28 = arith.constant 0 : index
    %c0_29 = arith.constant 0 : index
    %27 = vector.load %arg8[%c0_28, %c0_29] : memref<10x128xf32, #tpu.memory_space<vmem>>, vector<8x128xf32>
    %c1_30 = arith.constant 1 : index
    %c0_31 = arith.constant 0 : index
    %28 = vector.load %arg8[%c1_30, %c0_31] : memref<10x128xf32, #tpu.memory_space<vmem>>, vector<8x128xf32>
    %c2_32 = arith.constant 2 : index
    %c0_33 = arith.constant 0 : index
    %29 = vector.load %arg8[%c2_32, %c0_33] : memref<10x128xf32, #tpu.memory_space<vmem>>, vector<8x128xf32>
    %30 = tpu.concatenate %27, %28, %29 in 1 : vector<8x128xf32>, vector<8x128xf32>, vector<8x128xf32> -> vector<8x384xf32>
    %31 = arith.truncf %30 : vector<8x384xf32> to vector<8x384xbf16>
    %cst_34 = arith.constant dense<0.000000e+00> : vector<8x128xf32>
    %32 = tpu.matmul %31, %22, %cst_34 {dimension_numbers = #tpu.dot_dimension_numbers<[1], [0], [0], [1], [0, 0, 1, 1], [], []>} : vector<8x384xbf16>, vector<384x128xbf16>, vector<8x128xf32> -> vector<8x128xf32>
    %c1_35 = arith.constant 1 : index
    %c0_36 = arith.constant 0 : index
    %33 = vector.load %arg4[%c1_35, %c0_36] : memref<3x128xf32, #tpu.memory_space<vmem>>, vector<1x128xf32>
    %34 = vector.broadcast %33 : vector<1x128xf32> to vector<8x128xf32>
    %35 = arith.mulf %32, %34 : vector<8x128xf32>
    %c1_37 = arith.constant 1 : index
    %c0_38 = arith.constant 0 : index
    %36 = vector.load %arg5[%c1_37, %c0_38] : memref<3x128xf32, #tpu.memory_space<vmem>>, vector<1x128xf32>
    %37 = vector.broadcast %36 : vector<1x128xf32> to vector<8x128xf32>
    %38 = arith.addf %35, %37 : vector<8x128xf32>
    %39 = arith.addf %38, %2 : vector<8x128xf32>
    %cst_39 = arith.constant 0.000000e+00 : f32
    %40 = vector.broadcast %cst_39 : f32 to vector<8x128xf32>
    %41 = arith.maximumf %39, %40 : vector<8x128xf32>
    %c0_40 = arith.constant 0 : index
    %c0_41 = arith.constant 0 : index
    %42 = vector.load %arg3[%c0_40, %c0_41] : memref<384x128xbf16, #tpu.memory_space<vmem>>, vector<384x128xbf16>
    %cst_42 = arith.constant 0.000000e+00 : f32
    %43 = vector.broadcast %cst_42 : f32 to vector<1x128xf32>
    %c0_43 = arith.constant 0 : index
    %c0_44 = arith.constant 0 : index
    %44 = vector.load %arg8[%c0_43, %c0_44] : memref<10x128xf32, #tpu.memory_space<vmem>>, vector<1x128xf32>
    tpu.vector_store %arg8[%c0_43, %c0_44], %43 {strides = array<i32>} : memref<10x128xf32, #tpu.memory_space<vmem>>, vector<1x128xf32>,
    %c1_45 = arith.constant 1 : index
    %c0_46 = arith.constant 0 : index
    %45 = vector.load %arg8[%c1_45, %c0_46] : memref<10x128xf32, #tpu.memory_space<vmem>>, vector<8x128xf32>
    tpu.vector_store %arg8[%c1_45, %c0_46], %41 {strides = array<i32>} : memref<10x128xf32, #tpu.memory_space<vmem>>, vector<8x128xf32>,
    %c9_47 = arith.constant 9 : index
    %c0_48 = arith.constant 0 : index
    %46 = vector.load %arg8[%c9_47, %c0_48] : memref<10x128xf32, #tpu.memory_space<vmem>>, vector<1x128xf32>
    tpu.vector_store %arg8[%c9_47, %c0_48], %43 {strides = array<i32>} : memref<10x128xf32, #tpu.memory_space<vmem>>, vector<1x128xf32>,
    %c0_49 = arith.constant 0 : index
    %c0_50 = arith.constant 0 : index
    %47 = tpu.strided_load %arg8[%c0_49, %c0_50] {strides = array<i32: 2, 1>} : memref<10x128xf32, #tpu.memory_space<vmem>>, vector<4x128xf32>
    %c1_51 = arith.constant 1 : index
    %c0_52 = arith.constant 0 : index
    %48 = tpu.strided_load %arg8[%c1_51, %c0_52] {strides = array<i32: 2, 1>} : memref<10x128xf32, #tpu.memory_space<vmem>>, vector<4x128xf32>
    %c2_53 = arith.constant 2 : index
    %c0_54 = arith.constant 0 : index
    %49 = tpu.strided_load %arg8[%c2_53, %c0_54] {strides = array<i32: 2, 1>} : memref<10x128xf32, #tpu.memory_space<vmem>>, vector<4x128xf32>
    %50 = tpu.concatenate %47, %48, %49 in 1 : vector<4x128xf32>, vector<4x128xf32>, vector<4x128xf32> -> vector<4x384xf32>
    %51 = arith.truncf %50 : vector<4x384xf32> to vector<4x384xbf16>
    %cst_55 = arith.constant dense<0.000000e+00> : vector<4x128xf32>
    %52 = tpu.matmul %51, %42, %cst_55 {dimension_numbers = #tpu.dot_dimension_numbers<[1], [0], [0], [1], [0, 0, 1, 1], [], []>} : vector<4x384xbf16>, vector<384x128xbf16>, vector<4x128xf32> -> vector<4x128xf32>
    %c2_56 = arith.constant 2 : index
    %c0_57 = arith.constant 0 : index
    %53 = vector.load %arg4[%c2_56, %c0_57] : memref<3x128xf32, #tpu.memory_space<vmem>>, vector<1x128xf32>
    %54 = vector.broadcast %53 : vector<1x128xf32> to vector<4x128xf32>
    %55 = arith.mulf %52, %54 : vector<4x128xf32>
    %c2_58 = arith.constant 2 : index
    %c0_59 = arith.constant 0 : index
    %56 = vector.load %arg5[%c2_58, %c0_59] : memref<3x128xf32, #tpu.memory_space<vmem>>, vector<1x128xf32>
    %57 = vector.broadcast %56 : vector<1x128xf32> to vector<4x128xf32>
    %58 = arith.addf %55, %57 : vector<4x128xf32>
    %cst_60 = arith.constant 0.000000e+00 : f32
    %59 = vector.broadcast %cst_60 : f32 to vector<4x128xf32>
    %60 = arith.maximumf %58, %59 : vector<4x128xf32>
    %61 = arith.truncf %41 : vector<8x128xf32> to vector<8x128xbf16>
    %c0_61 = arith.constant 0 : index
    %c0_62 = arith.constant 0 : index
    %c0_63 = arith.constant 0 : index
    %62 = vector.load %arg6[%c0_61, %c0_62, %c0_63] : memref<1x8x128xbf16, #tpu.memory_space<vmem>>, vector<1x8x128xbf16>
    %63 = vector.shape_cast %62 : vector<1x8x128xbf16> to vector<8x128xbf16>
    %64 = vector.shape_cast %61 : vector<8x128xbf16> to vector<1x8x128xbf16>
    tpu.vector_store %arg6[%c0_61, %c0_62, %c0_63], %64 {strides = array<i32>} : memref<1x8x128xbf16, #tpu.memory_space<vmem>>, vector<1x8x128xbf16>,
    %65 = arith.truncf %60 : vector<4x128xf32> to vector<4x128xbf16>
    %c0_64 = arith.constant 0 : index
    %c0_65 = arith.constant 0 : index
    %c0_66 = arith.constant 0 : index
    %66 = vector.load %arg7[%c0_64, %c0_65, %c0_66] : memref<1x4x128xbf16, #tpu.memory_space<vmem>>, vector<1x4x128xbf16>
    %67 = vector.shape_cast %66 : vector<1x4x128xbf16> to vector<4x128xbf16>
    %68 = vector.shape_cast %65 : vector<4x128xbf16> to vector<1x4x128xbf16>
    tpu.vector_store %arg7[%c0_64, %c0_65, %c0_66], %68 {strides = array<i32>} : memref<1x4x128xbf16, #tpu.memory_space<vmem>>, vector<1x4x128xbf16>,
    return
  }
  func.func @transform_0(%arg0: i32) -> (i32, i32, i32) {
    %c0_i32 = arith.constant 0 : i32
    %c0_i32_0 = arith.constant 0 : i32
    %c0_i32_1 = arith.constant 0 : i32
    return %arg0, %c0_i32, %c0_i32_0 : i32, i32, i32
  }
  func.func @transform_1(%arg0: i32) -> (i32, i32) {
    %c0_i32 = arith.constant 0 : i32
    %c0_i32_0 = arith.constant 0 : i32
    %c0_i32_1 = arith.constant 0 : i32
    return %c0_i32, %c0_i32_0 : i32, i32
  }
  func.func @transform_2(%arg0: i32) -> (i32, i32) {
    %c0_i32 = arith.constant 0 : i32
    %c0_i32_0 = arith.constant 0 : i32
    %c0_i32_1 = arith.constant 0 : i32
    return %c0_i32, %c0_i32_0 : i32, i32
  }
  func.func @transform_3(%arg0: i32) -> (i32, i32) {
    %c0_i32 = arith.constant 0 : i32
    %c0_i32_0 = arith.constant 0 : i32
    %c0_i32_1 = arith.constant 0 : i32
    return %c0_i32, %c0_i32_0 : i32, i32
  }
  func.func @transform_4(%arg0: i32) -> (i32, i32) {
    %c0_i32 = arith.constant 0 : i32
    %c0_i32_0 = arith.constant 0 : i32
    %c0_i32_1 = arith.constant 0 : i32
    return %c0_i32, %c0_i32_0 : i32, i32
  }
  func.func @transform_5(%arg0: i32) -> (i32, i32, i32) {
    %c0_i32 = arith.constant 0 : i32
    %c0_i32_0 = arith.constant 0 : i32
    %c0_i32_1 = arith.constant 0 : i32
    return %arg0, %c0_i32, %c0_i32_0 : i32, i32, i32
  }
  func.func @transform_6(%arg0: i32) -> (i32, i32, i32) {
    %c0_i32 = arith.constant 0 : i32
    %c0_i32_0 = arith.constant 0 : i32
    %c0_i32_1 = arith.constant 0 : i32
    return %arg0, %c0_i32, %c0_i32_0 : i32, i32, i32
  }
}

module attributes {stable_mosaic.version = 11 : i64} {
  func.func @kernel(%arg0: i32, %arg1: memref<1x16x128xbf16, #tpu.memory_space<vmem>>, %arg2: memref<384x128xbf16, #tpu.memory_space<vmem>>, %arg3: memref<384x128xbf16, #tpu.memory_space<vmem>>, %arg4: memref<384x128xbf16, #tpu.memory_space<vmem>>, %arg5: memref<4x128xf32, #tpu.memory_space<vmem>>, %arg6: memref<4x128xf32, #tpu.memory_space<vmem>>, %arg7: memref<1x16x128xbf16, #tpu.memory_space<vmem>>, %arg8: memref<1x8x128xbf16, #tpu.memory_space<vmem>>, %arg9: memref<18x128xf32, #tpu.memory_space<vmem>>) attributes {dimension_semantics = [#tpu.dimension_semantics<parallel>], iteration_bounds = array<i64: 2>, scalar_prefetch = 0 : i64, scratch_operands = 1 : i64, tpu.core_type = #tpu.core_type<tc>, window_params = [{transform_indices = @transform_0, window_bounds = array<i64: 1, 16, 128>}, {pipeline_mode = #tpu.pipeline_mode<synchronous>, transform_indices = @transform_1, window_bounds = array<i64: 384, 128>}, {pipeline_mode = #tpu.pipeline_mode<synchronous>, transform_indices = @transform_2, window_bounds = array<i64: 384, 128>}, {pipeline_mode = #tpu.pipeline_mode<synchronous>, transform_indices = @transform_3, window_bounds = array<i64: 384, 128>}, {pipeline_mode = #tpu.pipeline_mode<synchronous>, transform_indices = @transform_4, window_bounds = array<i64: 4, 128>}, {pipeline_mode = #tpu.pipeline_mode<synchronous>, transform_indices = @transform_5, window_bounds = array<i64: 4, 128>}, {transform_indices = @transform_6, window_bounds = array<i64: 1, 16, 128>}, {transform_indices = @transform_7, window_bounds = array<i64: 1, 8, 128>}]} {
    %c0 = arith.constant 0 : index
    %c0_0 = arith.constant 0 : index
    %c0_1 = arith.constant 0 : index
    %0 = vector.load %arg1[%c0, %c0_0, %c0_1] : memref<1x16x128xbf16, #tpu.memory_space<vmem>>, vector<1x16x128xbf16>
    %1 = vector.shape_cast %0 : vector<1x16x128xbf16> to vector<16x128xbf16>
    %2 = arith.extf %1 : vector<16x128xbf16> to vector<16x128xf32>
    %c0_2 = arith.constant 0 : index
    %c0_3 = arith.constant 0 : index
    %3 = vector.load %arg2[%c0_2, %c0_3] : memref<384x128xbf16, #tpu.memory_space<vmem>>, vector<384x128xbf16>
    %cst = arith.constant 0.000000e+00 : f32
    %4 = vector.broadcast %cst : f32 to vector<1x128xf32>
    %c0_4 = arith.constant 0 : index
    %c0_5 = arith.constant 0 : index
    %5 = vector.load %arg9[%c0_4, %c0_5] : memref<18x128xf32, #tpu.memory_space<vmem>>, vector<1x128xf32>
    tpu.vector_store %arg9[%c0_4, %c0_5], %4 {strides = array<i32>} : memref<18x128xf32, #tpu.memory_space<vmem>>, vector<1x128xf32>,
    %c1 = arith.constant 1 : index
    %c0_6 = arith.constant 0 : index
    %6 = vector.load %arg9[%c1, %c0_6] : memref<18x128xf32, #tpu.memory_space<vmem>>, vector<16x128xf32>
    tpu.vector_store %arg9[%c1, %c0_6], %2 {strides = array<i32>} : memref<18x128xf32, #tpu.memory_space<vmem>>, vector<16x128xf32>,
    %c17 = arith.constant 17 : index
    %c0_7 = arith.constant 0 : index
    %7 = vector.load %arg9[%c17, %c0_7] : memref<18x128xf32, #tpu.memory_space<vmem>>, vector<1x128xf32>
    tpu.vector_store %arg9[%c17, %c0_7], %4 {strides = array<i32>} : memref<18x128xf32, #tpu.memory_space<vmem>>, vector<1x128xf32>,
    %c0_8 = arith.constant 0 : index
    %c0_9 = arith.constant 0 : index
    %8 = vector.load %arg9[%c0_8, %c0_9] : memref<18x128xf32, #tpu.memory_space<vmem>>, vector<16x128xf32>
    %c1_10 = arith.constant 1 : index
    %c0_11 = arith.constant 0 : index
    %9 = vector.load %arg9[%c1_10, %c0_11] : memref<18x128xf32, #tpu.memory_space<vmem>>, vector<16x128xf32>
    %c2 = arith.constant 2 : index
    %c0_12 = arith.constant 0 : index
    %10 = vector.load %arg9[%c2, %c0_12] : memref<18x128xf32, #tpu.memory_space<vmem>>, vector<16x128xf32>
    %11 = tpu.concatenate %8, %9, %10 in 1 : vector<16x128xf32>, vector<16x128xf32>, vector<16x128xf32> -> vector<16x384xf32>
    %12 = arith.truncf %11 : vector<16x384xf32> to vector<16x384xbf16>
    %cst_13 = arith.constant dense<0.000000e+00> : vector<16x128xf32>
    %13 = tpu.matmul %12, %3, %cst_13 {dimension_numbers = #tpu.dot_dimension_numbers<[1], [0], [0], [1], [0, 0, 1, 1], [], []>} : vector<16x384xbf16>, vector<384x128xbf16>, vector<16x128xf32> -> vector<16x128xf32>
    %c0_14 = arith.constant 0 : index
    %c0_15 = arith.constant 0 : index
    %14 = vector.load %arg5[%c0_14, %c0_15] : memref<4x128xf32, #tpu.memory_space<vmem>>, vector<1x128xf32>
    %15 = vector.broadcast %14 : vector<1x128xf32> to vector<16x128xf32>
    %16 = arith.mulf %13, %15 : vector<16x128xf32>
    %c0_16 = arith.constant 0 : index
    %c0_17 = arith.constant 0 : index
    %17 = vector.load %arg6[%c0_16, %c0_17] : memref<4x128xf32, #tpu.memory_space<vmem>>, vector<1x128xf32>
    %18 = vector.broadcast %17 : vector<1x128xf32> to vector<16x128xf32>
    %19 = arith.addf %16, %18 : vector<16x128xf32>
    %cst_18 = arith.constant 0.000000e+00 : f32
    %20 = vector.broadcast %cst_18 : f32 to vector<16x128xf32>
    %21 = arith.maximumf %19, %20 : vector<16x128xf32>
    %c0_19 = arith.constant 0 : index
    %c0_20 = arith.constant 0 : index
    %22 = vector.load %arg3[%c0_19, %c0_20] : memref<384x128xbf16, #tpu.memory_space<vmem>>, vector<384x128xbf16>
    %cst_21 = arith.constant 0.000000e+00 : f32
    %23 = vector.broadcast %cst_21 : f32 to vector<1x128xf32>
    %c0_22 = arith.constant 0 : index
    %c0_23 = arith.constant 0 : index
    %24 = vector.load %arg9[%c0_22, %c0_23] : memref<18x128xf32, #tpu.memory_space<vmem>>, vector<1x128xf32>
    tpu.vector_store %arg9[%c0_22, %c0_23], %23 {strides = array<i32>} : memref<18x128xf32, #tpu.memory_space<vmem>>, vector<1x128xf32>,
    %c1_24 = arith.constant 1 : index
    %c0_25 = arith.constant 0 : index
    %25 = vector.load %arg9[%c1_24, %c0_25] : memref<18x128xf32, #tpu.memory_space<vmem>>, vector<16x128xf32>
    tpu.vector_store %arg9[%c1_24, %c0_25], %21 {strides = array<i32>} : memref<18x128xf32, #tpu.memory_space<vmem>>, vector<16x128xf32>,
    %c17_26 = arith.constant 17 : index
    %c0_27 = arith.constant 0 : index
    %26 = vector.load %arg9[%c17_26, %c0_27] : memref<18x128xf32, #tpu.memory_space<vmem>>, vector<1x128xf32>
    tpu.vector_store %arg9[%c17_26, %c0_27], %23 {strides = array<i32>} : memref<18x128xf32, #tpu.memory_space<vmem>>, vector<1x128xf32>,
    %c0_28 = arith.constant 0 : index
    %c0_29 = arith.constant 0 : index
    %27 = vector.load %arg9[%c0_28, %c0_29] : memref<18x128xf32, #tpu.memory_space<vmem>>, vector<16x128xf32>
    %c1_30 = arith.constant 1 : index
    %c0_31 = arith.constant 0 : index
    %28 = vector.load %arg9[%c1_30, %c0_31] : memref<18x128xf32, #tpu.memory_space<vmem>>, vector<16x128xf32>
    %c2_32 = arith.constant 2 : index
    %c0_33 = arith.constant 0 : index
    %29 = vector.load %arg9[%c2_32, %c0_33] : memref<18x128xf32, #tpu.memory_space<vmem>>, vector<16x128xf32>
    %30 = tpu.concatenate %27, %28, %29 in 1 : vector<16x128xf32>, vector<16x128xf32>, vector<16x128xf32> -> vector<16x384xf32>
    %31 = arith.truncf %30 : vector<16x384xf32> to vector<16x384xbf16>
    %cst_34 = arith.constant dense<0.000000e+00> : vector<16x128xf32>
    %32 = tpu.matmul %31, %22, %cst_34 {dimension_numbers = #tpu.dot_dimension_numbers<[1], [0], [0], [1], [0, 0, 1, 1], [], []>} : vector<16x384xbf16>, vector<384x128xbf16>, vector<16x128xf32> -> vector<16x128xf32>
    %c1_35 = arith.constant 1 : index
    %c0_36 = arith.constant 0 : index
    %33 = vector.load %arg5[%c1_35, %c0_36] : memref<4x128xf32, #tpu.memory_space<vmem>>, vector<1x128xf32>
    %34 = vector.broadcast %33 : vector<1x128xf32> to vector<16x128xf32>
    %35 = arith.mulf %32, %34 : vector<16x128xf32>
    %c1_37 = arith.constant 1 : index
    %c0_38 = arith.constant 0 : index
    %36 = vector.load %arg6[%c1_37, %c0_38] : memref<4x128xf32, #tpu.memory_space<vmem>>, vector<1x128xf32>
    %37 = vector.broadcast %36 : vector<1x128xf32> to vector<16x128xf32>
    %38 = arith.addf %35, %37 : vector<16x128xf32>
    %cst_39 = arith.constant 0.000000e+00 : f32
    %39 = vector.broadcast %cst_39 : f32 to vector<16x128xf32>
    %40 = arith.maximumf %38, %39 : vector<16x128xf32>
    %c0_40 = arith.constant 0 : index
    %c0_41 = arith.constant 0 : index
    %41 = vector.load %arg3[%c0_40, %c0_41] : memref<384x128xbf16, #tpu.memory_space<vmem>>, vector<384x128xbf16>
    %cst_42 = arith.constant 0.000000e+00 : f32
    %42 = vector.broadcast %cst_42 : f32 to vector<1x128xf32>
    %c0_43 = arith.constant 0 : index
    %c0_44 = arith.constant 0 : index
    %43 = vector.load %arg9[%c0_43, %c0_44] : memref<18x128xf32, #tpu.memory_space<vmem>>, vector<1x128xf32>
    tpu.vector_store %arg9[%c0_43, %c0_44], %42 {strides = array<i32>} : memref<18x128xf32, #tpu.memory_space<vmem>>, vector<1x128xf32>,
    %c1_45 = arith.constant 1 : index
    %c0_46 = arith.constant 0 : index
    %44 = vector.load %arg9[%c1_45, %c0_46] : memref<18x128xf32, #tpu.memory_space<vmem>>, vector<16x128xf32>
    tpu.vector_store %arg9[%c1_45, %c0_46], %40 {strides = array<i32>} : memref<18x128xf32, #tpu.memory_space<vmem>>, vector<16x128xf32>,
    %c17_47 = arith.constant 17 : index
    %c0_48 = arith.constant 0 : index
    %45 = vector.load %arg9[%c17_47, %c0_48] : memref<18x128xf32, #tpu.memory_space<vmem>>, vector<1x128xf32>
    tpu.vector_store %arg9[%c17_47, %c0_48], %42 {strides = array<i32>} : memref<18x128xf32, #tpu.memory_space<vmem>>, vector<1x128xf32>,
    %c0_49 = arith.constant 0 : index
    %c0_50 = arith.constant 0 : index
    %46 = vector.load %arg9[%c0_49, %c0_50] : memref<18x128xf32, #tpu.memory_space<vmem>>, vector<16x128xf32>
    %c1_51 = arith.constant 1 : index
    %c0_52 = arith.constant 0 : index
    %47 = vector.load %arg9[%c1_51, %c0_52] : memref<18x128xf32, #tpu.memory_space<vmem>>, vector<16x128xf32>
    %c2_53 = arith.constant 2 : index
    %c0_54 = arith.constant 0 : index
    %48 = vector.load %arg9[%c2_53, %c0_54] : memref<18x128xf32, #tpu.memory_space<vmem>>, vector<16x128xf32>
    %49 = tpu.concatenate %46, %47, %48 in 1 : vector<16x128xf32>, vector<16x128xf32>, vector<16x128xf32> -> vector<16x384xf32>
    %50 = arith.truncf %49 : vector<16x384xf32> to vector<16x384xbf16>
    %cst_55 = arith.constant dense<0.000000e+00> : vector<16x128xf32>
    %51 = tpu.matmul %50, %41, %cst_55 {dimension_numbers = #tpu.dot_dimension_numbers<[1], [0], [0], [1], [0, 0, 1, 1], [], []>} : vector<16x384xbf16>, vector<384x128xbf16>, vector<16x128xf32> -> vector<16x128xf32>
    %c2_56 = arith.constant 2 : index
    %c0_57 = arith.constant 0 : index
    %52 = vector.load %arg5[%c2_56, %c0_57] : memref<4x128xf32, #tpu.memory_space<vmem>>, vector<1x128xf32>
    %53 = vector.broadcast %52 : vector<1x128xf32> to vector<16x128xf32>
    %54 = arith.mulf %51, %53 : vector<16x128xf32>
    %c2_58 = arith.constant 2 : index
    %c0_59 = arith.constant 0 : index
    %55 = vector.load %arg6[%c2_58, %c0_59] : memref<4x128xf32, #tpu.memory_space<vmem>>, vector<1x128xf32>
    %56 = vector.broadcast %55 : vector<1x128xf32> to vector<16x128xf32>
    %57 = arith.addf %54, %56 : vector<16x128xf32>
    %58 = arith.addf %57, %21 : vector<16x128xf32>
    %cst_60 = arith.constant 0.000000e+00 : f32
    %59 = vector.broadcast %cst_60 : f32 to vector<16x128xf32>
    %60 = arith.maximumf %58, %59 : vector<16x128xf32>
    %c0_61 = arith.constant 0 : index
    %c0_62 = arith.constant 0 : index
    %61 = vector.load %arg4[%c0_61, %c0_62] : memref<384x128xbf16, #tpu.memory_space<vmem>>, vector<384x128xbf16>
    %cst_63 = arith.constant 0.000000e+00 : f32
    %62 = vector.broadcast %cst_63 : f32 to vector<1x128xf32>
    %c0_64 = arith.constant 0 : index
    %c0_65 = arith.constant 0 : index
    %63 = vector.load %arg9[%c0_64, %c0_65] : memref<18x128xf32, #tpu.memory_space<vmem>>, vector<1x128xf32>
    tpu.vector_store %arg9[%c0_64, %c0_65], %62 {strides = array<i32>} : memref<18x128xf32, #tpu.memory_space<vmem>>, vector<1x128xf32>,
    %c1_66 = arith.constant 1 : index
    %c0_67 = arith.constant 0 : index
    %64 = vector.load %arg9[%c1_66, %c0_67] : memref<18x128xf32, #tpu.memory_space<vmem>>, vector<16x128xf32>
    tpu.vector_store %arg9[%c1_66, %c0_67], %60 {strides = array<i32>} : memref<18x128xf32, #tpu.memory_space<vmem>>, vector<16x128xf32>,
    %c17_68 = arith.constant 17 : index
    %c0_69 = arith.constant 0 : index
    %65 = vector.load %arg9[%c17_68, %c0_69] : memref<18x128xf32, #tpu.memory_space<vmem>>, vector<1x128xf32>
    tpu.vector_store %arg9[%c17_68, %c0_69], %62 {strides = array<i32>} : memref<18x128xf32, #tpu.memory_space<vmem>>, vector<1x128xf32>,
    %c0_70 = arith.constant 0 : index
    %c0_71 = arith.constant 0 : index
    %66 = tpu.strided_load %arg9[%c0_70, %c0_71] {strides = array<i32: 2, 1>} : memref<18x128xf32, #tpu.memory_space<vmem>>, vector<8x128xf32>
    %c1_72 = arith.constant 1 : index
    %c0_73 = arith.constant 0 : index
    %67 = tpu.strided_load %arg9[%c1_72, %c0_73] {strides = array<i32: 2, 1>} : memref<18x128xf32, #tpu.memory_space<vmem>>, vector<8x128xf32>
    %c2_74 = arith.constant 2 : index
    %c0_75 = arith.constant 0 : index
    %68 = tpu.strided_load %arg9[%c2_74, %c0_75] {strides = array<i32: 2, 1>} : memref<18x128xf32, #tpu.memory_space<vmem>>, vector<8x128xf32>
    %69 = tpu.concatenate %66, %67, %68 in 1 : vector<8x128xf32>, vector<8x128xf32>, vector<8x128xf32> -> vector<8x384xf32>
    %70 = arith.truncf %69 : vector<8x384xf32> to vector<8x384xbf16>
    %cst_76 = arith.constant dense<0.000000e+00> : vector<8x128xf32>
    %71 = tpu.matmul %70, %61, %cst_76 {dimension_numbers = #tpu.dot_dimension_numbers<[1], [0], [0], [1], [0, 0, 1, 1], [], []>} : vector<8x384xbf16>, vector<384x128xbf16>, vector<8x128xf32> -> vector<8x128xf32>
    %c3 = arith.constant 3 : index
    %c0_77 = arith.constant 0 : index
    %72 = vector.load %arg5[%c3, %c0_77] : memref<4x128xf32, #tpu.memory_space<vmem>>, vector<1x128xf32>
    %73 = vector.broadcast %72 : vector<1x128xf32> to vector<8x128xf32>
    %74 = arith.mulf %71, %73 : vector<8x128xf32>
    %c3_78 = arith.constant 3 : index
    %c0_79 = arith.constant 0 : index
    %75 = vector.load %arg6[%c3_78, %c0_79] : memref<4x128xf32, #tpu.memory_space<vmem>>, vector<1x128xf32>
    %76 = vector.broadcast %75 : vector<1x128xf32> to vector<8x128xf32>
    %77 = arith.addf %74, %76 : vector<8x128xf32>
    %cst_80 = arith.constant 0.000000e+00 : f32
    %78 = vector.broadcast %cst_80 : f32 to vector<8x128xf32>
    %79 = arith.maximumf %77, %78 : vector<8x128xf32>
    %80 = arith.truncf %60 : vector<16x128xf32> to vector<16x128xbf16>
    %c0_81 = arith.constant 0 : index
    %c0_82 = arith.constant 0 : index
    %c0_83 = arith.constant 0 : index
    %81 = vector.load %arg7[%c0_81, %c0_82, %c0_83] : memref<1x16x128xbf16, #tpu.memory_space<vmem>>, vector<1x16x128xbf16>
    %82 = vector.shape_cast %81 : vector<1x16x128xbf16> to vector<16x128xbf16>
    %83 = vector.shape_cast %80 : vector<16x128xbf16> to vector<1x16x128xbf16>
    tpu.vector_store %arg7[%c0_81, %c0_82, %c0_83], %83 {strides = array<i32>} : memref<1x16x128xbf16, #tpu.memory_space<vmem>>, vector<1x16x128xbf16>,
    %84 = arith.truncf %79 : vector<8x128xf32> to vector<8x128xbf16>
    %c0_84 = arith.constant 0 : index
    %c0_85 = arith.constant 0 : index
    %c0_86 = arith.constant 0 : index
    %85 = vector.load %arg8[%c0_84, %c0_85, %c0_86] : memref<1x8x128xbf16, #tpu.memory_space<vmem>>, vector<1x8x128xbf16>
    %86 = vector.shape_cast %85 : vector<1x8x128xbf16> to vector<8x128xbf16>
    %87 = vector.shape_cast %84 : vector<8x128xbf16> to vector<1x8x128xbf16>
    tpu.vector_store %arg8[%c0_84, %c0_85, %c0_86], %87 {strides = array<i32>} : memref<1x8x128xbf16, #tpu.memory_space<vmem>>, vector<1x8x128xbf16>,
    return
  }
  func.func @transform_0(%arg0: i32) -> (i32, i32, i32) {
    %c0_i32 = arith.constant 0 : i32
    %c0_i32_0 = arith.constant 0 : i32
    %c0_i32_1 = arith.constant 0 : i32
    return %arg0, %c0_i32, %c0_i32_0 : i32, i32, i32
  }
  func.func @transform_1(%arg0: i32) -> (i32, i32) {
    %c0_i32 = arith.constant 0 : i32
    %c0_i32_0 = arith.constant 0 : i32
    %c0_i32_1 = arith.constant 0 : i32
    return %c0_i32, %c0_i32_0 : i32, i32
  }
  func.func @transform_2(%arg0: i32) -> (i32, i32) {
    %c0_i32 = arith.constant 0 : i32
    %c0_i32_0 = arith.constant 0 : i32
    %c0_i32_1 = arith.constant 0 : i32
    return %c0_i32, %c0_i32_0 : i32, i32
  }
  func.func @transform_3(%arg0: i32) -> (i32, i32) {
    %c0_i32 = arith.constant 0 : i32
    %c0_i32_0 = arith.constant 0 : i32
    %c0_i32_1 = arith.constant 0 : i32
    return %c0_i32, %c0_i32_0 : i32, i32
  }
  func.func @transform_4(%arg0: i32) -> (i32, i32) {
    %c0_i32 = arith.constant 0 : i32
    %c0_i32_0 = arith.constant 0 : i32
    %c0_i32_1 = arith.constant 0 : i32
    return %c0_i32, %c0_i32_0 : i32, i32
  }
  func.func @transform_5(%arg0: i32) -> (i32, i32) {
    %c0_i32 = arith.constant 0 : i32
    %c0_i32_0 = arith.constant 0 : i32
    %c0_i32_1 = arith.constant 0 : i32
    return %c0_i32, %c0_i32_0 : i32, i32
  }
  func.func @transform_6(%arg0: i32) -> (i32, i32, i32) {
    %c0_i32 = arith.constant 0 : i32
    %c0_i32_0 = arith.constant 0 : i32
    %c0_i32_1 = arith.constant 0 : i32
    return %arg0, %c0_i32, %c0_i32_0 : i32, i32, i32
  }
  func.func @transform_7(%arg0: i32) -> (i32, i32, i32) {
    %c0_i32 = arith.constant 0 : i32
    %c0_i32_0 = arith.constant 0 : i32
    %c0_i32_1 = arith.constant 0 : i32
    return %arg0, %c0_i32, %c0_i32_0 : i32, i32, i32
  }
}

module attributes {stable_mosaic.version = 11 : i64} {
  func.func @kernel(%arg0: i32, %arg1: memref<1x4x128xbf16, #tpu.memory_space<vmem>>, %arg2: memref<384x128xbf16, #tpu.memory_space<vmem>>, %arg3: memref<2x128xf32, #tpu.memory_space<vmem>>, %arg4: memref<2x128xf32, #tpu.memory_space<vmem>>, %arg5: memref<1x4x128xbf16, #tpu.memory_space<vmem>>, %arg6: memref<6x128xf32, #tpu.memory_space<vmem>>) attributes {dimension_semantics = [#tpu.dimension_semantics<parallel>], iteration_bounds = array<i64: 2>, scalar_prefetch = 0 : i64, scratch_operands = 1 : i64, tpu.core_type = #tpu.core_type<tc>, window_params = [{transform_indices = @transform_0, window_bounds = array<i64: 1, 4, 128>}, {pipeline_mode = #tpu.pipeline_mode<synchronous>, transform_indices = @transform_1, window_bounds = array<i64: 384, 128>}, {pipeline_mode = #tpu.pipeline_mode<synchronous>, transform_indices = @transform_2, window_bounds = array<i64: 2, 128>}, {pipeline_mode = #tpu.pipeline_mode<synchronous>, transform_indices = @transform_3, window_bounds = array<i64: 2, 128>}, {transform_indices = @transform_4, window_bounds = array<i64: 1, 4, 128>}]} {
    %c0 = arith.constant 0 : index
    %c0_0 = arith.constant 0 : index
    %c0_1 = arith.constant 0 : index
    %0 = vector.load %arg1[%c0, %c0_0, %c0_1] : memref<1x4x128xbf16, #tpu.memory_space<vmem>>, vector<1x4x128xbf16>
    %1 = vector.shape_cast %0 : vector<1x4x128xbf16> to vector<4x128xbf16>
    %2 = arith.extf %1 : vector<4x128xbf16> to vector<4x128xf32>
    %c0_2 = arith.constant 0 : index
    %c0_3 = arith.constant 0 : index
    %3 = vector.load %arg2[%c0_2, %c0_3] : memref<384x128xbf16, #tpu.memory_space<vmem>>, vector<384x128xbf16>
    %cst = arith.constant 0.000000e+00 : f32
    %4 = vector.broadcast %cst : f32 to vector<1x128xf32>
    %c0_4 = arith.constant 0 : index
    %c0_5 = arith.constant 0 : index
    %5 = vector.load %arg6[%c0_4, %c0_5] : memref<6x128xf32, #tpu.memory_space<vmem>>, vector<1x128xf32>
    tpu.vector_store %arg6[%c0_4, %c0_5], %4 {strides = array<i32>} : memref<6x128xf32, #tpu.memory_space<vmem>>, vector<1x128xf32>,
    %c1 = arith.constant 1 : index
    %c0_6 = arith.constant 0 : index
    %6 = vector.load %arg6[%c1, %c0_6] : memref<6x128xf32, #tpu.memory_space<vmem>>, vector<4x128xf32>
    tpu.vector_store %arg6[%c1, %c0_6], %2 {strides = array<i32>} : memref<6x128xf32, #tpu.memory_space<vmem>>, vector<4x128xf32>,
    %c5 = arith.constant 5 : index
    %c0_7 = arith.constant 0 : index
    %7 = vector.load %arg6[%c5, %c0_7] : memref<6x128xf32, #tpu.memory_space<vmem>>, vector<1x128xf32>
    tpu.vector_store %arg6[%c5, %c0_7], %4 {strides = array<i32>} : memref<6x128xf32, #tpu.memory_space<vmem>>, vector<1x128xf32>,
    %c0_8 = arith.constant 0 : index
    %c0_9 = arith.constant 0 : index
    %8 = vector.load %arg6[%c0_8, %c0_9] : memref<6x128xf32, #tpu.memory_space<vmem>>, vector<4x128xf32>
    %c1_10 = arith.constant 1 : index
    %c0_11 = arith.constant 0 : index
    %9 = vector.load %arg6[%c1_10, %c0_11] : memref<6x128xf32, #tpu.memory_space<vmem>>, vector<4x128xf32>
    %c2 = arith.constant 2 : index
    %c0_12 = arith.constant 0 : index
    %10 = vector.load %arg6[%c2, %c0_12] : memref<6x128xf32, #tpu.memory_space<vmem>>, vector<4x128xf32>
    %11 = tpu.concatenate %8, %9, %10 in 1 : vector<4x128xf32>, vector<4x128xf32>, vector<4x128xf32> -> vector<4x384xf32>
    %12 = arith.truncf %11 : vector<4x384xf32> to vector<4x384xbf16>
    %cst_13 = arith.constant dense<0.000000e+00> : vector<4x128xf32>
    %13 = tpu.matmul %12, %3, %cst_13 {dimension_numbers = #tpu.dot_dimension_numbers<[1], [0], [0], [1], [0, 0, 1, 1], [], []>} : vector<4x384xbf16>, vector<384x128xbf16>, vector<4x128xf32> -> vector<4x128xf32>
    %c0_14 = arith.constant 0 : index
    %c0_15 = arith.constant 0 : index
    %14 = vector.load %arg3[%c0_14, %c0_15] : memref<2x128xf32, #tpu.memory_space<vmem>>, vector<1x128xf32>
    %15 = vector.broadcast %14 : vector<1x128xf32> to vector<4x128xf32>
    %16 = arith.mulf %13, %15 : vector<4x128xf32>
    %c0_16 = arith.constant 0 : index
    %c0_17 = arith.constant 0 : index
    %17 = vector.load %arg4[%c0_16, %c0_17] : memref<2x128xf32, #tpu.memory_space<vmem>>, vector<1x128xf32>
    %18 = vector.broadcast %17 : vector<1x128xf32> to vector<4x128xf32>
    %19 = arith.addf %16, %18 : vector<4x128xf32>
    %cst_18 = arith.constant 0.000000e+00 : f32
    %20 = vector.broadcast %cst_18 : f32 to vector<4x128xf32>
    %21 = arith.maximumf %19, %20 : vector<4x128xf32>
    %c0_19 = arith.constant 0 : index
    %c0_20 = arith.constant 0 : index
    %22 = vector.load %arg2[%c0_19, %c0_20] : memref<384x128xbf16, #tpu.memory_space<vmem>>, vector<384x128xbf16>
    %cst_21 = arith.constant 0.000000e+00 : f32
    %23 = vector.broadcast %cst_21 : f32 to vector<1x128xf32>
    %c0_22 = arith.constant 0 : index
    %c0_23 = arith.constant 0 : index
    %24 = vector.load %arg6[%c0_22, %c0_23] : memref<6x128xf32, #tpu.memory_space<vmem>>, vector<1x128xf32>
    tpu.vector_store %arg6[%c0_22, %c0_23], %23 {strides = array<i32>} : memref<6x128xf32, #tpu.memory_space<vmem>>, vector<1x128xf32>,
    %c1_24 = arith.constant 1 : index
    %c0_25 = arith.constant 0 : index
    %25 = vector.load %arg6[%c1_24, %c0_25] : memref<6x128xf32, #tpu.memory_space<vmem>>, vector<4x128xf32>
    tpu.vector_store %arg6[%c1_24, %c0_25], %21 {strides = array<i32>} : memref<6x128xf32, #tpu.memory_space<vmem>>, vector<4x128xf32>,
    %c5_26 = arith.constant 5 : index
    %c0_27 = arith.constant 0 : index
    %26 = vector.load %arg6[%c5_26, %c0_27] : memref<6x128xf32, #tpu.memory_space<vmem>>, vector<1x128xf32>
    tpu.vector_store %arg6[%c5_26, %c0_27], %23 {strides = array<i32>} : memref<6x128xf32, #tpu.memory_space<vmem>>, vector<1x128xf32>,
    %c0_28 = arith.constant 0 : index
    %c0_29 = arith.constant 0 : index
    %27 = vector.load %arg6[%c0_28, %c0_29] : memref<6x128xf32, #tpu.memory_space<vmem>>, vector<4x128xf32>
    %c1_30 = arith.constant 1 : index
    %c0_31 = arith.constant 0 : index
    %28 = vector.load %arg6[%c1_30, %c0_31] : memref<6x128xf32, #tpu.memory_space<vmem>>, vector<4x128xf32>
    %c2_32 = arith.constant 2 : index
    %c0_33 = arith.constant 0 : index
    %29 = vector.load %arg6[%c2_32, %c0_33] : memref<6x128xf32, #tpu.memory_space<vmem>>, vector<4x128xf32>
    %30 = tpu.concatenate %27, %28, %29 in 1 : vector<4x128xf32>, vector<4x128xf32>, vector<4x128xf32> -> vector<4x384xf32>
    %31 = arith.truncf %30 : vector<4x384xf32> to vector<4x384xbf16>
    %cst_34 = arith.constant dense<0.000000e+00> : vector<4x128xf32>
    %32 = tpu.matmul %31, %22, %cst_34 {dimension_numbers = #tpu.dot_dimension_numbers<[1], [0], [0], [1], [0, 0, 1, 1], [], []>} : vector<4x384xbf16>, vector<384x128xbf16>, vector<4x128xf32> -> vector<4x128xf32>
    %c1_35 = arith.constant 1 : index
    %c0_36 = arith.constant 0 : index
    %33 = vector.load %arg3[%c1_35, %c0_36] : memref<2x128xf32, #tpu.memory_space<vmem>>, vector<1x128xf32>
    %34 = vector.broadcast %33 : vector<1x128xf32> to vector<4x128xf32>
    %35 = arith.mulf %32, %34 : vector<4x128xf32>
    %c1_37 = arith.constant 1 : index
    %c0_38 = arith.constant 0 : index
    %36 = vector.load %arg4[%c1_37, %c0_38] : memref<2x128xf32, #tpu.memory_space<vmem>>, vector<1x128xf32>
    %37 = vector.broadcast %36 : vector<1x128xf32> to vector<4x128xf32>
    %38 = arith.addf %35, %37 : vector<4x128xf32>
    %39 = arith.addf %38, %2 : vector<4x128xf32>
    %cst_39 = arith.constant 0.000000e+00 : f32
    %40 = vector.broadcast %cst_39 : f32 to vector<4x128xf32>
    %41 = arith.maximumf %39, %40 : vector<4x128xf32>
    %42 = arith.truncf %41 : vector<4x128xf32> to vector<4x128xbf16>
    %c0_40 = arith.constant 0 : index
    %c0_41 = arith.constant 0 : index
    %c0_42 = arith.constant 0 : index
    %43 = vector.load %arg5[%c0_40, %c0_41, %c0_42] : memref<1x4x128xbf16, #tpu.memory_space<vmem>>, vector<1x4x128xbf16>
    %44 = vector.shape_cast %43 : vector<1x4x128xbf16> to vector<4x128xbf16>
    %45 = vector.shape_cast %42 : vector<4x128xbf16> to vector<1x4x128xbf16>
    tpu.vector_store %arg5[%c0_40, %c0_41, %c0_42], %45 {strides = array<i32>} : memref<1x4x128xbf16, #tpu.memory_space<vmem>>, vector<1x4x128xbf16>,
    return
  }
  func.func @transform_0(%arg0: i32) -> (i32, i32, i32) {
    %c0_i32 = arith.constant 0 : i32
    %c0_i32_0 = arith.constant 0 : i32
    %c0_i32_1 = arith.constant 0 : i32
    return %arg0, %c0_i32, %c0_i32_0 : i32, i32, i32
  }
  func.func @transform_1(%arg0: i32) -> (i32, i32) {
    %c0_i32 = arith.constant 0 : i32
    %c0_i32_0 = arith.constant 0 : i32
    %c0_i32_1 = arith.constant 0 : i32
    return %c0_i32, %c0_i32_0 : i32, i32
  }
  func.func @transform_2(%arg0: i32) -> (i32, i32) {
    %c0_i32 = arith.constant 0 : i32
    %c0_i32_0 = arith.constant 0 : i32
    %c0_i32_1 = arith.constant 0 : i32
    return %c0_i32, %c0_i32_0 : i32, i32
  }
  func.func @transform_3(%arg0: i32) -> (i32, i32) {
    %c0_i32 = arith.constant 0 : i32
    %c0_i32_0 = arith.constant 0 : i32
    %c0_i32_1 = arith.constant 0 : i32
    return %c0_i32, %c0_i32_0 : i32, i32
  }
  func.func @transform_4(%arg0: i32) -> (i32, i32, i32) {
    %c0_i32 = arith.constant 0 : i32
    %c0_i32_0 = arith.constant 0 : i32
    %c0_i32_1 = arith.constant 0 : i32
    return %arg0, %c0_i32, %c0_i32_0 : i32, i32, i32
  }
}

module attributes {stable_mosaic.version = 11 : i64} {
  func.func @kernel(%arg0: i32, %arg1: memref<1x8x128xbf16, #tpu.memory_space<vmem>>, %arg2: memref<1x16x128xbf16, #tpu.memory_space<vmem>>, %arg3: memref<384x128xbf16, #tpu.memory_space<vmem>>, %arg4: memref<384x128xbf16, #tpu.memory_space<vmem>>, %arg5: memref<3x128xf32, #tpu.memory_space<vmem>>, %arg6: memref<3x128xf32, #tpu.memory_space<vmem>>, %arg7: memref<1x16x128xbf16, #tpu.memory_space<vmem>>, %arg8: memref<18x128xf32, #tpu.memory_space<vmem>>) attributes {dimension_semantics = [#tpu.dimension_semantics<parallel>], iteration_bounds = array<i64: 2>, scalar_prefetch = 0 : i64, scratch_operands = 1 : i64, tpu.core_type = #tpu.core_type<tc>, window_params = [{transform_indices = @transform_0, window_bounds = array<i64: 1, 8, 128>}, {transform_indices = @transform_1, window_bounds = array<i64: 1, 16, 128>}, {pipeline_mode = #tpu.pipeline_mode<synchronous>, transform_indices = @transform_2, window_bounds = array<i64: 384, 128>}, {pipeline_mode = #tpu.pipeline_mode<synchronous>, transform_indices = @transform_3, window_bounds = array<i64: 384, 128>}, {pipeline_mode = #tpu.pipeline_mode<synchronous>, transform_indices = @transform_4, window_bounds = array<i64: 3, 128>}, {pipeline_mode = #tpu.pipeline_mode<synchronous>, transform_indices = @transform_5, window_bounds = array<i64: 3, 128>}, {transform_indices = @transform_6, window_bounds = array<i64: 1, 16, 128>}]} {
    %c0 = arith.constant 0 : index
    %c0_0 = arith.constant 0 : index
    %c0_1 = arith.constant 0 : index
    %0 = vector.load %arg1[%c0, %c0_0, %c0_1] : memref<1x8x128xbf16, #tpu.memory_space<vmem>>, vector<1x8x128xbf16>
    %1 = vector.shape_cast %0 : vector<1x8x128xbf16> to vector<8x128xbf16>
    %2 = arith.extf %1 : vector<8x128xbf16> to vector<8x128xf32>
    %c0_2 = arith.constant 0 : index
    %c0_3 = arith.constant 0 : index
    %3 = vector.load %arg3[%c0_2, %c0_3] : memref<384x128xbf16, #tpu.memory_space<vmem>>, vector<384x128xbf16>
    %cst = arith.constant 0.000000e+00 : f32
    %4 = vector.broadcast %cst : f32 to vector<18x128xf32>
    %c0_4 = arith.constant 0 : index
    %c0_5 = arith.constant 0 : index
    %5 = vector.load %arg8[%c0_4, %c0_5] : memref<18x128xf32, #tpu.memory_space<vmem>>, vector<18x128xf32>
    tpu.vector_store %arg8[%c0_4, %c0_5], %4 {strides = array<i32>} : memref<18x128xf32, #tpu.memory_space<vmem>>, vector<18x128xf32>,
    %6 = vector.extract_strided_slice %2 {offsets = [0, 0], sizes = [1, 128], strides = [1, 1]} : vector<8x128xf32> to vector<1x128xf32>
    %c1 = arith.constant 1 : index
    %c0_6 = arith.constant 0 : index
    %7 = vector.load %arg8[%c1, %c0_6] : memref<18x128xf32, #tpu.memory_space<vmem>>, vector<1x128xf32>
    tpu.vector_store %arg8[%c1, %c0_6], %6 {strides = array<i32>} : memref<18x128xf32, #tpu.memory_space<vmem>>, vector<1x128xf32>,
    %8 = vector.extract_strided_slice %2 {offsets = [1, 0], sizes = [1, 128], strides = [1, 1]} : vector<8x128xf32> to vector<1x128xf32>
    %c3 = arith.constant 3 : index
    %c0_7 = arith.constant 0 : index
    %9 = vector.load %arg8[%c3, %c0_7] : memref<18x128xf32, #tpu.memory_space<vmem>>, vector<1x128xf32>
    tpu.vector_store %arg8[%c3, %c0_7], %8 {strides = array<i32>} : memref<18x128xf32, #tpu.memory_space<vmem>>, vector<1x128xf32>,
    %10 = vector.extract_strided_slice %2 {offsets = [2, 0], sizes = [1, 128], strides = [1, 1]} : vector<8x128xf32> to vector<1x128xf32>
    %c5 = arith.constant 5 : index
    %c0_8 = arith.constant 0 : index
    %11 = vector.load %arg8[%c5, %c0_8] : memref<18x128xf32, #tpu.memory_space<vmem>>, vector<1x128xf32>
    tpu.vector_store %arg8[%c5, %c0_8], %10 {strides = array<i32>} : memref<18x128xf32, #tpu.memory_space<vmem>>, vector<1x128xf32>,
    %12 = vector.extract_strided_slice %2 {offsets = [3, 0], sizes = [1, 128], strides = [1, 1]} : vector<8x128xf32> to vector<1x128xf32>
    %c7 = arith.constant 7 : index
    %c0_9 = arith.constant 0 : index
    %13 = vector.load %arg8[%c7, %c0_9] : memref<18x128xf32, #tpu.memory_space<vmem>>, vector<1x128xf32>
    tpu.vector_store %arg8[%c7, %c0_9], %12 {strides = array<i32>} : memref<18x128xf32, #tpu.memory_space<vmem>>, vector<1x128xf32>,
    %14 = vector.extract_strided_slice %2 {offsets = [4, 0], sizes = [1, 128], strides = [1, 1]} : vector<8x128xf32> to vector<1x128xf32>
    %c9 = arith.constant 9 : index
    %c0_10 = arith.constant 0 : index
    %15 = vector.load %arg8[%c9, %c0_10] : memref<18x128xf32, #tpu.memory_space<vmem>>, vector<1x128xf32>
    tpu.vector_store %arg8[%c9, %c0_10], %14 {strides = array<i32>} : memref<18x128xf32, #tpu.memory_space<vmem>>, vector<1x128xf32>,
    %16 = vector.extract_strided_slice %2 {offsets = [5, 0], sizes = [1, 128], strides = [1, 1]} : vector<8x128xf32> to vector<1x128xf32>
    %c11 = arith.constant 11 : index
    %c0_11 = arith.constant 0 : index
    %17 = vector.load %arg8[%c11, %c0_11] : memref<18x128xf32, #tpu.memory_space<vmem>>, vector<1x128xf32>
    tpu.vector_store %arg8[%c11, %c0_11], %16 {strides = array<i32>} : memref<18x128xf32, #tpu.memory_space<vmem>>, vector<1x128xf32>,
    %18 = vector.extract_strided_slice %2 {offsets = [6, 0], sizes = [1, 128], strides = [1, 1]} : vector<8x128xf32> to vector<1x128xf32>
    %c13 = arith.constant 13 : index
    %c0_12 = arith.constant 0 : index
    %19 = vector.load %arg8[%c13, %c0_12] : memref<18x128xf32, #tpu.memory_space<vmem>>, vector<1x128xf32>
    tpu.vector_store %arg8[%c13, %c0_12], %18 {strides = array<i32>} : memref<18x128xf32, #tpu.memory_space<vmem>>, vector<1x128xf32>,
    %20 = vector.extract_strided_slice %2 {offsets = [7, 0], sizes = [1, 128], strides = [1, 1]} : vector<8x128xf32> to vector<1x128xf32>
    %c15 = arith.constant 15 : index
    %c0_13 = arith.constant 0 : index
    %21 = vector.load %arg8[%c15, %c0_13] : memref<18x128xf32, #tpu.memory_space<vmem>>, vector<1x128xf32>
    tpu.vector_store %arg8[%c15, %c0_13], %20 {strides = array<i32>} : memref<18x128xf32, #tpu.memory_space<vmem>>, vector<1x128xf32>,
    %c0_14 = arith.constant 0 : index
    %c0_15 = arith.constant 0 : index
    %22 = vector.load %arg8[%c0_14, %c0_15] : memref<18x128xf32, #tpu.memory_space<vmem>>, vector<16x128xf32>
    %c1_16 = arith.constant 1 : index
    %c0_17 = arith.constant 0 : index
    %23 = vector.load %arg8[%c1_16, %c0_17] : memref<18x128xf32, #tpu.memory_space<vmem>>, vector<16x128xf32>
    %c2 = arith.constant 2 : index
    %c0_18 = arith.constant 0 : index
    %24 = vector.load %arg8[%c2, %c0_18] : memref<18x128xf32, #tpu.memory_space<vmem>>, vector<16x128xf32>
    %25 = tpu.concatenate %22, %23, %24 in 1 : vector<16x128xf32>, vector<16x128xf32>, vector<16x128xf32> -> vector<16x384xf32>
    %26 = arith.truncf %25 : vector<16x384xf32> to vector<16x384xbf16>
    %cst_19 = arith.constant dense<0.000000e+00> : vector<16x128xf32>
    %27 = tpu.matmul %26, %3, %cst_19 {dimension_numbers = #tpu.dot_dimension_numbers<[1], [0], [0], [1], [0, 0, 1, 1], [], []>} : vector<16x384xbf16>, vector<384x128xbf16>, vector<16x128xf32> -> vector<16x128xf32>
    %c0_20 = arith.constant 0 : index
    %c0_21 = arith.constant 0 : index
    %28 = vector.load %arg5[%c0_20, %c0_21] : memref<3x128xf32, #tpu.memory_space<vmem>>, vector<1x128xf32>
    %29 = vector.broadcast %28 : vector<1x128xf32> to vector<16x128xf32>
    %30 = arith.mulf %27, %29 : vector<16x128xf32>
    %c0_22 = arith.constant 0 : index
    %c0_23 = arith.constant 0 : index
    %31 = vector.load %arg6[%c0_22, %c0_23] : memref<3x128xf32, #tpu.memory_space<vmem>>, vector<1x128xf32>
    %32 = vector.broadcast %31 : vector<1x128xf32> to vector<16x128xf32>
    %33 = arith.addf %30, %32 : vector<16x128xf32>
    %c0_24 = arith.constant 0 : index
    %c0_25 = arith.constant 0 : index
    %c0_26 = arith.constant 0 : index
    %34 = vector.load %arg2[%c0_24, %c0_25, %c0_26] : memref<1x16x128xbf16, #tpu.memory_space<vmem>>, vector<1x16x128xbf16>
    %35 = vector.shape_cast %34 : vector<1x16x128xbf16> to vector<16x128xbf16>
    %36 = arith.extf %35 : vector<16x128xbf16> to vector<16x128xf32>
    %37 = arith.addf %33, %36 : vector<16x128xf32>
    %c0_27 = arith.constant 0 : index
    %c0_28 = arith.constant 0 : index
    %38 = vector.load %arg4[%c0_27, %c0_28] : memref<384x128xbf16, #tpu.memory_space<vmem>>, vector<384x128xbf16>
    %cst_29 = arith.constant 0.000000e+00 : f32
    %39 = vector.broadcast %cst_29 : f32 to vector<1x128xf32>
    %c0_30 = arith.constant 0 : index
    %c0_31 = arith.constant 0 : index
    %40 = vector.load %arg8[%c0_30, %c0_31] : memref<18x128xf32, #tpu.memory_space<vmem>>, vector<1x128xf32>
    tpu.vector_store %arg8[%c0_30, %c0_31], %39 {strides = array<i32>} : memref<18x128xf32, #tpu.memory_space<vmem>>, vector<1x128xf32>,
    %c1_32 = arith.constant 1 : index
    %c0_33 = arith.constant 0 : index
    %41 = vector.load %arg8[%c1_32, %c0_33] : memref<18x128xf32, #tpu.memory_space<vmem>>, vector<16x128xf32>
    tpu.vector_store %arg8[%c1_32, %c0_33], %37 {strides = array<i32>} : memref<18x128xf32, #tpu.memory_space<vmem>>, vector<16x128xf32>,
    %c17 = arith.constant 17 : index
    %c0_34 = arith.constant 0 : index
    %42 = vector.load %arg8[%c17, %c0_34] : memref<18x128xf32, #tpu.memory_space<vmem>>, vector<1x128xf32>
    tpu.vector_store %arg8[%c17, %c0_34], %39 {strides = array<i32>} : memref<18x128xf32, #tpu.memory_space<vmem>>, vector<1x128xf32>,
    %c0_35 = arith.constant 0 : index
    %c0_36 = arith.constant 0 : index
    %43 = vector.load %arg8[%c0_35, %c0_36] : memref<18x128xf32, #tpu.memory_space<vmem>>, vector<16x128xf32>
    %c1_37 = arith.constant 1 : index
    %c0_38 = arith.constant 0 : index
    %44 = vector.load %arg8[%c1_37, %c0_38] : memref<18x128xf32, #tpu.memory_space<vmem>>, vector<16x128xf32>
    %c2_39 = arith.constant 2 : index
    %c0_40 = arith.constant 0 : index
    %45 = vector.load %arg8[%c2_39, %c0_40] : memref<18x128xf32, #tpu.memory_space<vmem>>, vector<16x128xf32>
    %46 = tpu.concatenate %43, %44, %45 in 1 : vector<16x128xf32>, vector<16x128xf32>, vector<16x128xf32> -> vector<16x384xf32>
    %47 = arith.truncf %46 : vector<16x384xf32> to vector<16x384xbf16>
    %cst_41 = arith.constant dense<0.000000e+00> : vector<16x128xf32>
    %48 = tpu.matmul %47, %38, %cst_41 {dimension_numbers = #tpu.dot_dimension_numbers<[1], [0], [0], [1], [0, 0, 1, 1], [], []>} : vector<16x384xbf16>, vector<384x128xbf16>, vector<16x128xf32> -> vector<16x128xf32>
    %c1_42 = arith.constant 1 : index
    %c0_43 = arith.constant 0 : index
    %49 = vector.load %arg5[%c1_42, %c0_43] : memref<3x128xf32, #tpu.memory_space<vmem>>, vector<1x128xf32>
    %50 = vector.broadcast %49 : vector<1x128xf32> to vector<16x128xf32>
    %51 = arith.mulf %48, %50 : vector<16x128xf32>
    %c1_44 = arith.constant 1 : index
    %c0_45 = arith.constant 0 : index
    %52 = vector.load %arg6[%c1_44, %c0_45] : memref<3x128xf32, #tpu.memory_space<vmem>>, vector<1x128xf32>
    %53 = vector.broadcast %52 : vector<1x128xf32> to vector<16x128xf32>
    %54 = arith.addf %51, %53 : vector<16x128xf32>
    %cst_46 = arith.constant 0.000000e+00 : f32
    %55 = vector.broadcast %cst_46 : f32 to vector<16x128xf32>
    %56 = arith.maximumf %54, %55 : vector<16x128xf32>
    %c0_47 = arith.constant 0 : index
    %c0_48 = arith.constant 0 : index
    %57 = vector.load %arg4[%c0_47, %c0_48] : memref<384x128xbf16, #tpu.memory_space<vmem>>, vector<384x128xbf16>
    %cst_49 = arith.constant 0.000000e+00 : f32
    %58 = vector.broadcast %cst_49 : f32 to vector<1x128xf32>
    %c0_50 = arith.constant 0 : index
    %c0_51 = arith.constant 0 : index
    %59 = vector.load %arg8[%c0_50, %c0_51] : memref<18x128xf32, #tpu.memory_space<vmem>>, vector<1x128xf32>
    tpu.vector_store %arg8[%c0_50, %c0_51], %58 {strides = array<i32>} : memref<18x128xf32, #tpu.memory_space<vmem>>, vector<1x128xf32>,
    %c1_52 = arith.constant 1 : index
    %c0_53 = arith.constant 0 : index
    %60 = vector.load %arg8[%c1_52, %c0_53] : memref<18x128xf32, #tpu.memory_space<vmem>>, vector<16x128xf32>
    tpu.vector_store %arg8[%c1_52, %c0_53], %56 {strides = array<i32>} : memref<18x128xf32, #tpu.memory_space<vmem>>, vector<16x128xf32>,
    %c17_54 = arith.constant 17 : index
    %c0_55 = arith.constant 0 : index
    %61 = vector.load %arg8[%c17_54, %c0_55] : memref<18x128xf32, #tpu.memory_space<vmem>>, vector<1x128xf32>
    tpu.vector_store %arg8[%c17_54, %c0_55], %58 {strides = array<i32>} : memref<18x128xf32, #tpu.memory_space<vmem>>, vector<1x128xf32>,
    %c0_56 = arith.constant 0 : index
    %c0_57 = arith.constant 0 : index
    %62 = vector.load %arg8[%c0_56, %c0_57] : memref<18x128xf32, #tpu.memory_space<vmem>>, vector<16x128xf32>
    %c1_58 = arith.constant 1 : index
    %c0_59 = arith.constant 0 : index
    %63 = vector.load %arg8[%c1_58, %c0_59] : memref<18x128xf32, #tpu.memory_space<vmem>>, vector<16x128xf32>
    %c2_60 = arith.constant 2 : index
    %c0_61 = arith.constant 0 : index
    %64 = vector.load %arg8[%c2_60, %c0_61] : memref<18x128xf32, #tpu.memory_space<vmem>>, vector<16x128xf32>
    %65 = tpu.concatenate %62, %63, %64 in 1 : vector<16x128xf32>, vector<16x128xf32>, vector<16x128xf32> -> vector<16x384xf32>
    %66 = arith.truncf %65 : vector<16x384xf32> to vector<16x384xbf16>
    %cst_62 = arith.constant dense<0.000000e+00> : vector<16x128xf32>
    %67 = tpu.matmul %66, %57, %cst_62 {dimension_numbers = #tpu.dot_dimension_numbers<[1], [0], [0], [1], [0, 0, 1, 1], [], []>} : vector<16x384xbf16>, vector<384x128xbf16>, vector<16x128xf32> -> vector<16x128xf32>
    %c2_63 = arith.constant 2 : index
    %c0_64 = arith.constant 0 : index
    %68 = vector.load %arg5[%c2_63, %c0_64] : memref<3x128xf32, #tpu.memory_space<vmem>>, vector<1x128xf32>
    %69 = vector.broadcast %68 : vector<1x128xf32> to vector<16x128xf32>
    %70 = arith.mulf %67, %69 : vector<16x128xf32>
    %c2_65 = arith.constant 2 : index
    %c0_66 = arith.constant 0 : index
    %71 = vector.load %arg6[%c2_65, %c0_66] : memref<3x128xf32, #tpu.memory_space<vmem>>, vector<1x128xf32>
    %72 = vector.broadcast %71 : vector<1x128xf32> to vector<16x128xf32>
    %73 = arith.addf %70, %72 : vector<16x128xf32>
    %74 = arith.addf %73, %37 : vector<16x128xf32>
    %cst_67 = arith.constant 0.000000e+00 : f32
    %75 = vector.broadcast %cst_67 : f32 to vector<16x128xf32>
    %76 = arith.maximumf %74, %75 : vector<16x128xf32>
    %77 = arith.truncf %76 : vector<16x128xf32> to vector<16x128xbf16>
    %c0_68 = arith.constant 0 : index
    %c0_69 = arith.constant 0 : index
    %c0_70 = arith.constant 0 : index
    %78 = vector.load %arg7[%c0_68, %c0_69, %c0_70] : memref<1x16x128xbf16, #tpu.memory_space<vmem>>, vector<1x16x128xbf16>
    %79 = vector.shape_cast %78 : vector<1x16x128xbf16> to vector<16x128xbf16>
    %80 = vector.shape_cast %77 : vector<16x128xbf16> to vector<1x16x128xbf16>
    tpu.vector_store %arg7[%c0_68, %c0_69, %c0_70], %80 {strides = array<i32>} : memref<1x16x128xbf16, #tpu.memory_space<vmem>>, vector<1x16x128xbf16>,
    return
  }
  func.func @transform_0(%arg0: i32) -> (i32, i32, i32) {
    %c0_i32 = arith.constant 0 : i32
    %c0_i32_0 = arith.constant 0 : i32
    %c0_i32_1 = arith.constant 0 : i32
    return %arg0, %c0_i32, %c0_i32_0 : i32, i32, i32
  }
  func.func @transform_1(%arg0: i32) -> (i32, i32, i32) {
    %c0_i32 = arith.constant 0 : i32
    %c0_i32_0 = arith.constant 0 : i32
    %c0_i32_1 = arith.constant 0 : i32
    return %arg0, %c0_i32, %c0_i32_0 : i32, i32, i32
  }
  func.func @transform_2(%arg0: i32) -> (i32, i32) {
    %c0_i32 = arith.constant 0 : i32
    %c0_i32_0 = arith.constant 0 : i32
    %c0_i32_1 = arith.constant 0 : i32
    return %c0_i32, %c0_i32_0 : i32, i32
  }
  func.func @transform_3(%arg0: i32) -> (i32, i32) {
    %c0_i32 = arith.constant 0 : i32
    %c0_i32_0 = arith.constant 0 : i32
    %c0_i32_1 = arith.constant 0 : i32
    return %c0_i32, %c0_i32_0 : i32, i32
  }
  func.func @transform_4(%arg0: i32) -> (i32, i32) {
    %c0_i32 = arith.constant 0 : i32
    %c0_i32_0 = arith.constant 0 : i32
    %c0_i32_1 = arith.constant 0 : i32
    return %c0_i32, %c0_i32_0 : i32, i32
  }
  func.func @transform_5(%arg0: i32) -> (i32, i32) {
    %c0_i32 = arith.constant 0 : i32
    %c0_i32_0 = arith.constant 0 : i32
    %c0_i32_1 = arith.constant 0 : i32
    return %c0_i32, %c0_i32_0 : i32, i32
  }
  func.func @transform_6(%arg0: i32) -> (i32, i32, i32) {
    %c0_i32 = arith.constant 0 : i32
    %c0_i32_0 = arith.constant 0 : i32
    %c0_i32_1 = arith.constant 0 : i32
    return %arg0, %c0_i32, %c0_i32_0 : i32, i32, i32
  }
}

</mosaic_0001>

<llo_original>
// kernel: forward.7
$region0: #{forward.7}
  #allocation0 [shape = 'u32[]', space=smem, size = 0x4, offset = 0x4, fixed_abs, tag = 'smem constant byte address 0x4 - core index']
  #allocation1 [shape = 'u32[144,128]{1,0:T(1,128)}', space=vmem, size = 0x12000, scoped, tag = 'internal scratch']
  #allocation2 [shape = 'f32[6,128]{1,0:T(8,128)}', space=vmem, size = 0x1000, scoped, tag = 'scratch operand']
  %s0 = inlined_call_operand.vmem [shape: bf16[2,4,128], index: 0, kind: input, shape index: {}]
  %s1 = inlined_call_operand.vmem [shape: bf16[384,128], index: 1, kind: input, shape index: {}]
  %s2 = inlined_call_operand.vmem [shape: f32[2,128], index: 2, kind: input, shape index: {}]
  %s3 = inlined_call_operand.vmem [shape: f32[2,128], index: 3, kind: input, shape index: {}]
  %s4 = inlined_call_operand.vmem [shape: bf16[2,4,128], index: 4, kind: output, shape index: {}]
  %s5 = sld [smem:[#allocation0]]
  $region49: #{forward.7} parent=0
    _
  %s7 = ssub.s32 1, %s5
  %s8 = scalar_select 0, %s7, %s5
  loop: start=0, step=1, limit=4
  $region2: #{forward.7} parent=0 // loop_pre_header
    _
  $region3: #{forward.7} parent=0 // loop_header
    %s10 = sphi 0, %s14
    %p11 = scmp.ge.s32.totalorder %s10, 4
    %s20 = sphi 0, %s22
    %s23 = sphi 0, %s20
    %s24 = sphi 0, %s23
    %s40 = sphi 0, %s24
    %s44 = sphi 0, %s44
    %s46 = sphi 0, %s44
    %s47 = sphi 0, %s46
    %s61 = sphi 0, %s47
    %s65 = sphi 0, %s65
    %s67 = sphi 0, %s65
    %s68 = sphi 0, %s67
    %s82 = sphi 0, %s68
    %s86 = sphi 0, %s86
    %s88 = sphi 0, %s86
    %s89 = sphi 0, %s88
    %s103 = sphi 0, %s89
    %s109 = sphi 0, %s111
    %s112 = sphi 0, %s109
    %s113 = sphi 0, %s112
    %s129 = sphi 0, %s113
  $region4: #{forward.7} parent=0 // loop_header_branch
    %13 = sbr.rel (%p11) target = $region8
  $region5: #{forward.7} parent=0 // loop_body
    %s15 = ssub.s32 %s10, 1
    %s16 = ssub.s32 %s10, 2
    %s17 = sadd.s32 %s10, 1
    %s18 = ssub.s32 %s10, %s17
    %p19 = scmp.eq.s32.totalorder %s18, 0
    %s21 = sadd.s32 %s20, 1
    %s22 = scalar_select %p19, %s20, %s21
    %p25 = pneg %p19
    %p26 = scmp.eq.s32.totalorder %s10, 1
    %p27 = por %p25, %p26
    %p28 = scmp.ne.s32.totalorder %s20, %s23
    %p29 = scmp.eq.s32.totalorder %s10, 0
    %p30 = por %p28, %p29
    %p31 = scmp.ne.s32.totalorder %s20, %s23
    %p32 = scmp.eq.s32.totalorder %s15, 1
    %p33 = por %p31, %p32
    %p34 = scmp.ne.s32.totalorder %s23, %s24
    %p35 = scmp.eq.s32.totalorder %s15, 0
    %p36 = por %p34, %p35
    %p37 = scmp.ne.s32.totalorder %s23, %s24
    %p38 = scmp.eq.s32.totalorder %s16, 1
    %p39 = por %p37, %p38
    %p41 = scmp.ne.s32.totalorder %s24, %s40
    %p42 = scmp.eq.s32.totalorder %s16, 0
    %p43 = por %p41, %p42
    %s45 = sadd.s32 %s44, 1
    %p48 = scmp.eq.s32.totalorder %s10, 1
    %p49 = scmp.ne.s32.totalorder %s44, %s46
    %p50 = scmp.eq.s32.totalorder %s10, 0
    %p51 = por %p49, %p50
    %p52 = scmp.ne.s32.totalorder %s44, %s46
    %p53 = scmp.eq.s32.totalorder %s15, 1
    %p54 = por %p52, %p53
    %p55 = scmp.ne.s32.totalorder %s46, %s47
    %p56 = scmp.eq.s32.totalorder %s15, 0
    %p57 = por %p55, %p56
    %p58 = scmp.ne.s32.totalorder %s46, %s47
    %p59 = scmp.eq.s32.totalorder %s16, 1
    %p60 = por %p58, %p59
    %p62 = scmp.ne.s32.totalorder %s47, %s61
    %p63 = scmp.eq.s32.totalorder %s16, 0
    %p64 = por %p62, %p63
    %s66 = sadd.s32 %s65, 1
    %p69 = scmp.eq.s32.totalorder %s10, 1
    %p70 = scmp.ne.s32.totalorder %s65, %s67
    %p71 = scmp.eq.s32.totalorder %s10, 0
    %p72 = por %p70, %p71
    %p73 = scmp.ne.s32.totalorder %s65, %s67
    %p74 = scmp.eq.s32.totalorder %s15, 1
    %p75 = por %p73, %p74
    %p76 = scmp.ne.s32.totalorder %s67, %s68
    %p77 = scmp.eq.s32.totalorder %s15, 0
    %p78 = por %p76, %p77
    %p79 = scmp.ne.s32.totalorder %s67, %s68
    %p80 = scmp.eq.s32.totalorder %s16, 1
    %p81 = por %p79, %p80
    %p83 = scmp.ne.s32.totalorder %s68, %s82
    %p84 = scmp.eq.s32.totalorder %s16, 0
    %p85 = por %p83, %p84
    %s87 = sadd.s32 %s86, 1
    %p90 = scmp.eq.s32.totalorder %s10, 1
    %p91 = scmp.ne.s32.totalorder %s86, %s88
    %p92 = scmp.eq.s32.totalorder %s10, 0
    %p93 = por %p91, %p92
    %p94 = scmp.ne.s32.totalorder %s86, %s88
    %p95 = scmp.eq.s32.totalorder %s15, 1
    %p96 = por %p94, %p95
    %p97 = scmp.ne.s32.totalorder %s88, %s89
    %p98 = scmp.eq.s32.totalorder %s15, 0
    %p99 = por %p97, %p98
    %p100 = scmp.ne.s32.totalorder %s88, %s89
    %p101 = scmp.eq.s32.totalorder %s16, 1
    %p102 = por %p100, %p101
    %p104 = scmp.ne.s32.totalorder %s89, %s103
    %p105 = scmp.eq.s32.totalorder %s16, 0
    %p106 = por %p104, %p105
    %s107 = ssub.s32 %s10, %s17
    %p108 = scmp.eq.s32.totalorder %s107, 0
    %s110 = sadd.s32 %s109, 1
    %s111 = scalar_select %p108, %s109, %s110
    %p114 = pneg %p108
    %p115 = scmp.eq.s32.totalorder %s10, 1
    %p116 = por %p114, %p115
    %p117 = scmp.ne.s32.totalorder %s109, %s112
    %p118 = scmp.eq.s32.totalorder %s10, 0
    %p119 = por %p117, %p118
    %p120 = scmp.ne.s32.totalorder %s109, %s112
    %p121 = scmp.eq.s32.totalorder %s15, 1
    %p122 = por %p120, %p121
    %p123 = scmp.ne.s32.totalorder %s112, %s113
    %p124 = scmp.eq.s32.totalorder %s15, 0
    %p125 = por %p123, %p124
    %p126 = scmp.ne.s32.totalorder %s112, %s113
    %p127 = scmp.eq.s32.totalorder %s16, 1
    %p128 = por %p126, %p127
    %p130 = scmp.ne.s32.totalorder %s113, %s129
    %p131 = scmp.eq.s32.totalorder %s16, 0
    %p132 = por %p130, %p131
    %p133 = scmp.le.s32.totalorder 1, %s10
    %p134 = scmp.lt.s32.totalorder %s10, 3
    %p135 = pnand %p133, %p134
    %p136 = pneg %p135
    // Predicated region
    $region9: #{forward.7} parent=5 // pred_check
      _
    $region10: #{forward.7} parent=5 // pred_check_branch
      %138 = sbr.rel (%p135) target = $region12
    $region11: #{forward.7} parent=5 // pred_region
      %s139 = ssub.s32 %s10, 1
      // Predicated region
      $region13: #{forward.7} parent=11 // pred_check
        %p140 = pneg %p57
      $region14: #{forward.7} parent=11 // pred_check_branch
        %142 = sbr.rel (%p140) target = $region16
      $region15: #{forward.7} parent=11 // pred_region
        _
      $region16: #{forward.7} parent=11 // pred_fallthru
        _
      // Predicated region
      $region17: #{forward.7} parent=11 // pred_check
        %p143 = pneg %p78
      $region18: #{forward.7} parent=11 // pred_check_branch
        %145 = sbr.rel (%p143) target = $region20
      $region19: #{forward.7} parent=11 // pred_region
        _
      $region20: #{forward.7} parent=11 // pred_fallthru
        _
      // Predicated region
      $region21: #{forward.7} parent=11 // pred_check
        %p146 = pneg %p99
      $region22: #{forward.7} parent=11 // pred_check_branch
        %148 = sbr.rel (%p146) target = $region24
      $region23: #{forward.7} parent=11 // pred_region
        _
      $region24: #{forward.7} parent=11 // pred_fallthru
        _
    $region12: #{forward.7} parent=5 // pred_fallthru
      _
    %p149 = scmp.lt.s32.totalorder %s10, 2
    // Predicated region
    $region25: #{forward.7} parent=5 // pred_check
      %p150 = pneg %p149
    $region26: #{forward.7} parent=5 // pred_check_branch
      %152 = sbr.rel (%p150) target = $region28
    $region27: #{forward.7} parent=5 // pred_region
      // Predicated region
      $region29: #{forward.7} parent=27 // pred_check
        %p153 = pneg %p30
      $region30: #{forward.7} parent=27 // pred_check_branch
        %155 = sbr.rel (%p153) target = $region32
      $region31: #{forward.7} parent=27 // pred_region
        %p156 = scmp.lt.s32.totalorder %s10, 1
        %s157 = scalar_select %p156, %s10, 1
        %s158 = smul.addr %s157, 2
        %s159 = scalar_lea.vmem %s0, %s158
      $region32: #{forward.7} parent=27 // pred_fallthru
        _
    $region28: #{forward.7} parent=5 // pred_fallthru
      _
    %p160 = scmp.le.s32.totalorder 1, %s10
    %p161 = scmp.lt.s32.totalorder %s10, 3
    %p162 = pnand %p160, %p161
    %p163 = pneg %p162
    // Predicated region
    $region33: #{forward.7} parent=5 // pred_check
      _
    $region34: #{forward.7} parent=5 // pred_check_branch
      %165 = sbr.rel (%p162) target = $region36
    $region35: #{forward.7} parent=5 // pred_region
      %s166 = ssub.s32 %s10, 1
      %p167 = scmp.lt.s32.totalorder %s15, 1
      %s168 = scalar_select %p167, %s15, 1
      %s169 = smul.addr %s168, 2
      %s170 = scalar_lea.vmem %s0, %s169
      %p171 = pneg %p36
      %p172 = pneg %p33
      %p173 = pneg %p57
      %p174 = pneg %p54
      %p175 = pneg %p78
      %p176 = pneg %p75
      %p177 = pneg %p99
      %p178 = pneg %p96
      %p179 = pneg %p125
      %p180 = pneg %p122
      %p181 = scmp.lt.s32.totalorder %s15, 1
      %s182 = scalar_select %p181, %s15, 1
      %s183 = smul.addr %s182, 2
      %s184 = scalar_lea.vmem %s4, %s183
      %p185 = scmp.lt.s32.totalorder %s15, 1
      %s186 = scalar_select %p185, %s15, 1
      %s187 = smul.addr %s186, 2
      %s188 = scalar_lea.vmem %s0, %s187
      %p189 = scmp.lt.s32.totalorder %s15, 1
      %s190 = scalar_select %p189, %s15, 1
      %s191 = smul.addr %s190, 2
      %s192 = scalar_lea.vmem %s4, %s191
      %v194 = vld [vmem:[%s188] sm:$0x3]
      %v195 = vunpack.c.l.bf16 %v194
      %v196 = vld [vmem:[%s1] sm:$0xf]
      %v197 = vld [vmem:[%s1 + $0x4] sm:$0xf]
      %v198 = vld [vmem:[%s1 + $0x8] sm:$0xf]
      %v199 = vld [vmem:[%s1 + $0xc] sm:$0xf]
      %v200 = vld [vmem:[%s1 + $0x10] sm:$0xf]
      %v201 = vld [vmem:[%s1 + $0x14] sm:$0xf]
      %v202 = vld [vmem:[%s1 + $0x18] sm:$0xf]
      %v203 = vld [vmem:[%s1 + $0x1c] sm:$0xf]
      %v204 = vld [vmem:[%s1 + $0x20] sm:$0xf]
      %v205 = vld [vmem:[%s1 + $0x24] sm:$0xf]
      %v206 = vld [vmem:[%s1 + $0x28] sm:$0xf]
      %v207 = vld [vmem:[%s1 + $0x2c] sm:$0xf]
      %v208 = vld [vmem:[%s1 + $0x30] sm:$0xf]
      %v209 = vld [vmem:[%s1 + $0x34] sm:$0xf]
      %v210 = vld [vmem:[%s1 + $0x38] sm:$0xf]
      %v211 = vld [vmem:[%s1 + $0x3c] sm:$0xf]
      %v212 = vld [vmem:[%s1 + $0x40] sm:$0xf]
      %v213 = vld [vmem:[%s1 + $0x44] sm:$0xf]
      %v214 = vld [vmem:[%s1 + $0x48] sm:$0xf]
      %v215 = vld [vmem:[%s1 + $0x4c] sm:$0xf]
      %v216 = vld [vmem:[%s1 + $0x50] sm:$0xf]
      %v217 = vld [vmem:[%s1 + $0x54] sm:$0xf]
      %v218 = vld [vmem:[%s1 + $0x58] sm:$0xf]
      %v219 = vld [vmem:[%s1 + $0x5c] sm:$0xf]
      %v220 = vld [vmem:[%s1 + $0x60] sm:$0xf]
      %v221 = vld [vmem:[%s1 + $0x64] sm:$0xf]
      %v222 = vld [vmem:[%s1 + $0x68] sm:$0xf]
      %v223 = vld [vmem:[%s1 + $0x6c] sm:$0xf]
      %v224 = vld [vmem:[%s1 + $0x70] sm:$0xf]
      %v225 = vld [vmem:[%s1 + $0x74] sm:$0xf]
      %v226 = vld [vmem:[%s1 + $0x78] sm:$0xf]
      %v227 = vld [vmem:[%s1 + $0x7c] sm:$0xf]
      %v228 = vld [vmem:[%s1 + $0x80] sm:$0xf]
      %v229 = vld [vmem:[%s1 + $0x84] sm:$0xf]
      %v230 = vld [vmem:[%s1 + $0x88] sm:$0xf]
      %v231 = vld [vmem:[%s1 + $0x8c] sm:$0xf]
      %v232 = vld [vmem:[%s1 + $0x90] sm:$0xf]
      %v233 = vld [vmem:[%s1 + $0x94] sm:$0xf]
      %v234 = vld [vmem:[%s1 + $0x98] sm:$0xf]
      %v235 = vld [vmem:[%s1 + $0x9c] sm:$0xf]
      %v236 = vld [vmem:[%s1 + $0xa0] sm:$0xf]
      %v237 = vld [vmem:[%s1 + $0xa4] sm:$0xf]
      %v238 = vld [vmem:[%s1 + $0xa8] sm:$0xf]
      %v239 = vld [vmem:[%s1 + $0xac] sm:$0xf]
      %v240 = vld [vmem:[%s1 + $0xb0] sm:$0xf]
      %v241 = vld [vmem:[%s1 + $0xb4] sm:$0xf]
      %v242 = vld [vmem:[%s1 + $0xb8] sm:$0xf]
      %v243 = vld [vmem:[%s1 + $0xbc] sm:$0xf]
      %244 = vst [vmem:[#allocation2] sm:$0x1] 0.0
      %245 = vst [vmem:[#allocation2 + $0x1] sm:$0xf] %v195
      %246 = vst [vmem:[#allocation2 + $0x5] sm:$0x1] 0.0
      %v247 = vld [vmem:[#allocation2] sm:$0xf]
      %v248 = vld [vmem:[#allocation2 + $0x1] sm:$0xf]
      %v249 = vld [vmem:[#allocation2 + $0x2] sm:$0xf]
      %v250 = vpack.c.bf16 %v247, %v247
      %v251 = vpack.c.bf16 %v248, %v248
      %v252 = vpack.c.bf16 %v249, %v249
      %v301 = vunpack.c.l.b16 %v196
      %v302 = vunpack.c.l.b16 %v197
      %v303 = vunpack.c.l.b16 %v198
      %v304 = vunpack.c.l.b16 %v199
      %v305 = vunpack.c.l.b16 %v200
      %v306 = vunpack.c.l.b16 %v201
      %v307 = vunpack.c.l.b16 %v202
      %v308 = vunpack.c.l.b16 %v203
      %v309 = vunpack.c.l.b16 %v204
      %v310 = vunpack.c.l.b16 %v205
      %v311 = vunpack.c.l.b16 %v206
      %v312 = vunpack.c.l.b16 %v207
      %v313 = vunpack.c.l.b16 %v208
      %v314 = vunpack.c.l.b16 %v209
      %v315 = vunpack.c.l.b16 %v210
      %v316 = vunpack.c.l.b16 %v211
      %v317 = vunpack.c.l.b16 %v212
      %v318 = vunpack.c.l.b16 %v213
      %v319 = vunpack.c.l.b16 %v214
      %v320 = vunpack.c.l.b16 %v215
      %v321 = vunpack.c.l.b16 %v216
      %v322 = vunpack.c.l.b16 %v217
      %v323 = vunpack.c.l.b16 %v218
      %v324 = vunpack.c.l.b16 %v219
      %v325 = vunpack.c.l.b16 %v220
      %v326 = vunpack.c.l.b16 %v221
      %v327 = vunpack.c.l.b16 %v222
      %v328 = vunpack.c.l.b16 %v223
      %v329 = vunpack.c.l.b16 %v224
      %v330 = vunpack.c.l.b16 %v225
      %v331 = vunpack.c.l.b16 %v226
      %v332 = vunpack.c.l.b16 %v227
      %v333 = vunpack.c.l.b16 %v228
      %v334 = vunpack.c.l.b16 %v229
      %v335 = vunpack.c.l.b16 %v230
      %v336 = vunpack.c.l.b16 %v231
      %v337 = vunpack.c.l.b16 %v232
      %v338 = vunpack.c.l.b16 %v233
      %v339 = vunpack.c.l.b16 %v234
      %v340 = vunpack.c.l.b16 %v235
      %v341 = vunpack.c.l.b16 %v236
      %v342 = vunpack.c.l.b16 %v237
      %v343 = vunpack.c.l.b16 %v238
      %v344 = vunpack.c.l.b16 %v239
      %v345 = vunpack.c.l.b16 %v240
      %v346 = vunpack.c.l.b16 %v241
      %v347 = vunpack.c.l.b16 %v242
      %v348 = vunpack.c.l.b16 %v243
      %v349 = vpack.c.b16 %v302, %v301
      %v350 = vpack.c.b16 %v304, %v303
      %v351 = vpack.c.b16 %v306, %v305
      %v352 = vpack.c.b16 %v308, %v307
      %v353 = vpack.c.b16 %v310, %v309
      %v354 = vpack.c.b16 %v312, %v311
      %v355 = vpack.c.b16 %v314, %v313
      %v356 = vpack.c.b16 %v316, %v315
      %v357 = vpack.c.b16 %v318, %v317
      %v358 = vpack.c.b16 %v320, %v319
      %v359 = vpack.c.b16 %v322, %v321
      %v360 = vpack.c.b16 %v324, %v323
      %v361 = vpack.c.b16 %v326, %v325
      %v362 = vpack.c.b16 %v328, %v327
      %v363 = vpack.c.b16 %v330, %v329
      %v364 = vpack.c.b16 %v332, %v331
      %v365 = vpack.c.b16 %v334, %v333
      %v366 = vpack.c.b16 %v336, %v335
      %v367 = vpack.c.b16 %v338, %v337
      %v368 = vpack.c.b16 %v340, %v339
      %v369 = vpack.c.b16 %v342, %v341
      %v370 = vpack.c.b16 %v344, %v343
      %v371 = vpack.c.b16 %v346, %v345
      %v372 = vpack.c.b16 %v348, %v347
      %397 = vmatprep.subr.bf16.mxu0 0
      %398 = vmatpush1.bf16.msra.mxu0 %v349
      %399 = vmatprep.subr.bf16.mxu0 0
      %400 = vmatpush1.bf16.msra.mxu0 %v350
      %401 = vmatprep.subr.bf16.mxu0 0
      %402 = vmatpush1.bf16.msra.mxu0 %v351
      %403 = vmatprep.subr.bf16.mxu0 0
      %404 = vmatpush1.bf16.msra.mxu0 %v352
      %405 = vmatprep.subr.bf16.mxu0 0
      %406 = vmatpush1.bf16.msra.mxu0 %v353
      %407 = vmatprep.subr.bf16.mxu0 0
      %408 = vmatpush1.bf16.msra.mxu0 %v354
      %409 = vmatprep.subr.bf16.mxu0 0
      %410 = vmatpush1.bf16.msra.mxu0 %v355
      %411 = vmatprep.subr.bf16.mxu0 0
      %412 = vmatpush1.bf16.msra.mxu0 %v356
      %413 = vmatprep.subr.bf16.mxu0 0
      %414 = vmatpush1.bf16.msra.mxu0 %v357
      %415 = vmatprep.subr.bf16.mxu0 0
      %416 = vmatpush1.bf16.msra.mxu0 %v358
      %417 = vmatprep.subr.bf16.mxu0 0
      %418 = vmatpush1.bf16.msra.mxu0 %v359
      %419 = vmatprep.subr.bf16.mxu0 0
      %420 = vmatpush1.bf16.msra.mxu0 %v360
      %421 = vmatprep.subr.bf16.mxu0 0
      %422 = vmatpush1.bf16.msra.mxu0 %v361
      %423 = vmatprep.subr.bf16.mxu0 0
      %424 = vmatpush1.bf16.msra.mxu0 %v362
      %425 = vmatprep.subr.bf16.mxu0 0
      %426 = vmatpush1.bf16.msra.mxu0 %v363
      %427 = vmatprep.subr.bf16.mxu0 0
      %428 = vmatpush1.bf16.msra.mxu0 %v364
      %429 = vmatprep.mubr.bf16.mxu0 %v251
      %430 = vmatmul.mubr.bf16.gmra.mrb[0].mxu0 %v250
      %v431 = vpop.f32.mrb[0].mxu0
      %v432 = vadd.f32 0.0, %v431
      %v433 = vpop.f32.mrb[0].mxu0
      %v434 = vpop.f32.mrb[0].mxu0
      %v435 = vpop.f32.mrb[0].mxu0
      %436 = vdwg.mxu0
      %437 = vmatprep.subr.bf16.mxu0 0
      %438 = vmatpush1.bf16.msra.mxu0 %v365
      %439 = vmatprep.subr.bf16.mxu0 0
      %440 = vmatpush1.bf16.msra.mxu0 %v366
      %441 = vmatprep.subr.bf16.mxu0 0
      %442 = vmatpush1.bf16.msra.mxu0 %v367
      %443 = vmatprep.subr.bf16.mxu0 0
      %444 = vmatpush1.bf16.msra.mxu0 %v368
      %445 = vmatprep.subr.bf16.mxu0 0
      %446 = vmatpush1.bf16.msra.mxu0 %v369
      %447 = vmatprep.subr.bf16.mxu0 0
      %448 = vmatpush1.bf16.msra.mxu0 %v370
      %449 = vmatprep.subr.bf16.mxu0 0
      %450 = vmatpush1.bf16.msra.mxu0 %v371
      %451 = vmatprep.subr.bf16.mxu0 0
      %452 = vmatpush1.bf16.msra.mxu0 %v372
      %453 = vmatprep.subr.bf16.mxu0 0
      %454 = vmatpush1.bf16.msra.mxu0 0
      %455 = vmatprep.subr.bf16.mxu0 0
      %456 = vmatpush1.bf16.msra.mxu0 0
      %457 = vmatprep.subr.bf16.mxu0 0
      %458 = vmatpush1.bf16.msra.mxu0 0
      %459 = vmatprep.subr.bf16.mxu0 0
      %460 = vmatpush1.bf16.msra.mxu0 0
      %461 = vmatprep.subr.bf16.mxu0 0
      %462 = vmatpush1.bf16.msra.mxu0 0
      %463 = vmatprep.subr.bf16.mxu0 0
      %464 = vmatpush1.bf16.msra.mxu0 0
      %465 = vmatprep.subr.bf16.mxu0 0
      %466 = vmatpush1.bf16.msra.mxu0 0
      %467 = vmatprep.subr.bf16.mxu0 0
      %468 = vmatpush1.bf16.msra.mxu0 0
      %469 = vmatprep.mubr.bf16.mxu0 0
      %470 = vmatmul.mubr.bf16.gmra.mrb[0].mxu0 %v252
      %v471 = vpop.f32.mrb[0].mxu0
      %v472 = vadd.f32 %v432, %v471
      %v473 = vpop.f32.mrb[0].mxu0
      %v474 = vpop.f32.mrb[0].mxu0
      %v475 = vpop.f32.mrb[0].mxu0
      %476 = vdwg.mxu0
      %v477 = vld [vmem:[%s2] sm:$0x1]
      %v478 = vlaneseq
      %v479 = vshrl.u32 %v478, 7
      %v480 = vsub.s32 0, %v479
      %v481 = vrot.slane %v477, %v480
      %v482 = vmul.f32 %v472, %v481
      %v483 = vld [vmem:[%s3] sm:$0x1]
      %v484 = vlaneseq
      %v485 = vshrl.u32 %v484, 7
      %v486 = vsub.s32 0, %v485
      %v487 = vrot.slane %v483, %v486
      %v488 = vadd.f32 %v482, %v487
      %v489 = vmax.f32 %v488, 0.0
      %v490 = vld [vmem:[%s1] sm:$0xf]
      %v491 = vld [vmem:[%s1 + $0x4] sm:$0xf]
      %v492 = vld [vmem:[%s1 + $0x8] sm:$0xf]
      %v493 = vld [vmem:[%s1 + $0xc] sm:$0xf]
      %v494 = vld [vmem:[%s1 + $0x10] sm:$0xf]
      %v495 = vld [vmem:[%s1 + $0x14] sm:$0xf]
      %v496 = vld [vmem:[%s1 + $0x18] sm:$0xf]
      %v497 = vld [vmem:[%s1 + $0x1c] sm:$0xf]
      %v498 = vld [vmem:[%s1 + $0x20] sm:$0xf]
      %v499 = vld [vmem:[%s1 + $0x24] sm:$0xf]
      %v500 = vld [vmem:[%s1 + $0x28] sm:$0xf]
      %v501 = vld [vmem:[%s1 + $0x2c] sm:$0xf]
      %v502 = vld [vmem:[%s1 + $0x30] sm:$0xf]
      %v503 = vld [vmem:[%s1 + $0x34] sm:$0xf]
      %v504 = vld [vmem:[%s1 + $0x38] sm:$0xf]
      %v505 = vld [vmem:[%s1 + $0x3c] sm:$0xf]
      %v506 = vld [vmem:[%s1 + $0x40] sm:$0xf]
      %v507 = vld [vmem:[%s1 + $0x44] sm:$0xf]
      %v508 = vld [vmem:[%s1 + $0x48] sm:$0xf]
      %v509 = vld [vmem:[%s1 + $0x4c] sm:$0xf]
      %v510 = vld [vmem:[%s1 + $0x50] sm:$0xf]
      %v511 = vld [vmem:[%s1 + $0x54] sm:$0xf]
      %v512 = vld [vmem:[%s1 + $0x58] sm:$0xf]
      %v513 = vld [vmem:[%s1 + $0x5c] sm:$0xf]
      %v514 = vld [vmem:[%s1 + $0x60] sm:$0xf]
      %v515 = vld [vmem:[%s1 + $0x64] sm:$0xf]
      %v516 = vld [vmem:[%s1 + $0x68] sm:$0xf]
      %v517 = vld [vmem:[%s1 + $0x6c] sm:$0xf]
      %v518 = vld [vmem:[%s1 + $0x70] sm:$0xf]
      %v519 = vld [vmem:[%s1 + $0x74] sm:$0xf]
      %v520 = vld [vmem:[%s1 + $0x78] sm:$0xf]
      %v521 = vld [vmem:[%s1 + $0x7c] sm:$0xf]
      %v522 = vld [vmem:[%s1 + $0x80] sm:$0xf]
      %v523 = vld [vmem:[%s1 + $0x84] sm:$0xf]
      %v524 = vld [vmem:[%s1 + $0x88] sm:$0xf]
      %v525 = vld [vmem:[%s1 + $0x8c] sm:$0xf]
      %v526 = vld [vmem:[%s1 + $0x90] sm:$0xf]
      %v527 = vld [vmem:[%s1 + $0x94] sm:$0xf]
      %v528 = vld [vmem:[%s1 + $0x98] sm:$0xf]
      %v529 = vld [vmem:[%s1 + $0x9c] sm:$0xf]
      %v530 = vld [vmem:[%s1 + $0xa0] sm:$0xf]
      %v531 = vld [vmem:[%s1 + $0xa4] sm:$0xf]
      %v532 = vld [vmem:[%s1 + $0xa8] sm:$0xf]
      %v533 = vld [vmem:[%s1 + $0xac] sm:$0xf]
      %v534 = vld [vmem:[%s1 + $0xb0] sm:$0xf]
      %v535 = vld [vmem:[%s1 + $0xb4] sm:$0xf]
      %v536 = vld [vmem:[%s1 + $0xb8] sm:$0xf]
      %v537 = vld [vmem:[%s1 + $0xbc] sm:$0xf]
      %538 = vst [vmem:[#allocation2] sm:$0x1] 0.0
      %539 = vst [vmem:[#allocation2 + $0x1] sm:$0xf] %v489
      %540 = vst [vmem:[#allocation2 + $0x5] sm:$0x1] 0.0
      %v541 = vld [vmem:[#allocation2] sm:$0xf]
      %v542 = vld [vmem:[#allocation2 + $0x1] sm:$0xf]
      %v543 = vld [vmem:[#allocation2 + $0x2] sm:$0xf]
      %v544 = vpack.c.bf16 %v541, %v541
      %v545 = vpack.c.bf16 %v542, %v542
      %v546 = vpack.c.bf16 %v543, %v543
      %v595 = vunpack.c.l.b16 %v490
      %v596 = vunpack.c.l.b16 %v491
      %v597 = vunpack.c.l.b16 %v492
      %v598 = vunpack.c.l.b16 %v493
      %v599 = vunpack.c.l.b16 %v494
      %v600 = vunpack.c.l.b16 %v495
      %v601 = vunpack.c.l.b16 %v496
      %v602 = vunpack.c.l.b16 %v497
      %v603 = vunpack.c.l.b16 %v498
      %v604 = vunpack.c.l.b16 %v499
      %v605 = vunpack.c.l.b16 %v500
      %v606 = vunpack.c.l.b16 %v501
      %v607 = vunpack.c.l.b16 %v502
      %v608 = vunpack.c.l.b16 %v503
      %v609 = vunpack.c.l.b16 %v504
      %v610 = vunpack.c.l.b16 %v505
      %v611 = vunpack.c.l.b16 %v506
      %v612 = vunpack.c.l.b16 %v507
      %v613 = vunpack.c.l.b16 %v508
      %v614 = vunpack.c.l.b16 %v509
      %v615 = vunpack.c.l.b16 %v510
      %v616 = vunpack.c.l.b16 %v511
      %v617 = vunpack.c.l.b16 %v512
      %v618 = vunpack.c.l.b16 %v513
      %v619 = vunpack.c.l.b16 %v514
      %v620 = vunpack.c.l.b16 %v515
      %v621 = vunpack.c.l.b16 %v516
      %v622 = vunpack.c.l.b16 %v517
      %v623 = vunpack.c.l.b16 %v518
      %v624 = vunpack.c.l.b16 %v519
      %v625 = vunpack.c.l.b16 %v520
      %v626 = vunpack.c.l.b16 %v521
      %v627 = vunpack.c.l.b16 %v522
      %v628 = vunpack.c.l.b16 %v523
      %v629 = vunpack.c.l.b16 %v524
      %v630 = vunpack.c.l.b16 %v525
      %v631 = vunpack.c.l.b16 %v526
      %v632 = vunpack.c.l.b16 %v527
      %v633 = vunpack.c.l.b16 %v528
      %v634 = vunpack.c.l.b16 %v529
      %v635 = vunpack.c.l.b16 %v530
      %v636 = vunpack.c.l.b16 %v531
      %v637 = vunpack.c.l.b16 %v532
      %v638 = vunpack.c.l.b16 %v533
      %v639 = vunpack.c.l.b16 %v534
      %v640 = vunpack.c.l.b16 %v535
      %v641 = vunpack.c.l.b16 %v536
      %v642 = vunpack.c.l.b16 %v537
      %v643 = vpack.c.b16 %v596, %v595
      %v644 = vpack.c.b16 %v598, %v597
      %v645 = vpack.c.b16 %v600, %v599
      %v646 = vpack.c.b16 %v602, %v601
      %v647 = vpack.c.b16 %v604, %v603
      %v648 = vpack.c.b16 %v606, %v605
      %v649 = vpack.c.b16 %v608, %v607
      %v650 = vpack.c.b16 %v610, %v609
      %v651 = vpack.c.b16 %v612, %v611
      %v652 = vpack.c.b16 %v614, %v613
      %v653 = vpack.c.b16 %v616, %v615
      %v654 = vpack.c.b16 %v618, %v617
      %v655 = vpack.c.b16 %v620, %v619
      %v656 = vpack.c.b16 %v622, %v621
      %v657 = vpack.c.b16 %v624, %v623
      %v658 = vpack.c.b16 %v626, %v625
      %v659 = vpack.c.b16 %v628, %v627
      %v660 = vpack.c.b16 %v630, %v629
      %v661 = vpack.c.b16 %v632, %v631
      %v662 = vpack.c.b16 %v634, %v633
      %v663 = vpack.c.b16 %v636, %v635
      %v664 = vpack.c.b16 %v638, %v637
      %v665 = vpack.c.b16 %v640, %v639
      %v666 = vpack.c.b16 %v642, %v641
      %691 = vmatprep.subr.bf16.mxu0 0
      %692 = vmatpush1.bf16.msra.mxu0 %v643
      %693 = vmatprep.subr.bf16.mxu0 0
      %694 = vmatpush1.bf16.msra.mxu0 %v644
      %695 = vmatprep.subr.bf16.mxu0 0
      %696 = vmatpush1.bf16.msra.mxu0 %v645
      %697 = vmatprep.subr.bf16.mxu0 0
      %698 = vmatpush1.bf16.msra.mxu0 %v646
      %699 = vmatprep.subr.bf16.mxu0 0
      %700 = vmatpush1.bf16.msra.mxu0 %v647
      %701 = vmatprep.subr.bf16.mxu0 0
      %702 = vmatpush1.bf16.msra.mxu0 %v648
      %703 = vmatprep.subr.bf16.mxu0 0
      %704 = vmatpush1.bf16.msra.mxu0 %v649
      %705 = vmatprep.subr.bf16.mxu0 0
      %706 = vmatpush1.bf16.msra.mxu0 %v650
      %707 = vmatprep.subr.bf16.mxu0 0
      %708 = vmatpush1.bf16.msra.mxu0 %v651
      %709 = vmatprep.subr.bf16.mxu0 0
      %710 = vmatpush1.bf16.msra.mxu0 %v652
      %711 = vmatprep.subr.bf16.mxu0 0
      %712 = vmatpush1.bf16.msra.mxu0 %v653
      %713 = vmatprep.subr.bf16.mxu0 0
      %714 = vmatpush1.bf16.msra.mxu0 %v654
      %715 = vmatprep.subr.bf16.mxu0 0
      %716 = vmatpush1.bf16.msra.mxu0 %v655
      %717 = vmatprep.subr.bf16.mxu0 0
      %718 = vmatpush1.bf16.msra.mxu0 %v656
      %719 = vmatprep.subr.bf16.mxu0 0
      %720 = vmatpush1.bf16.msra.mxu0 %v657
      %721 = vmatprep.subr.bf16.mxu0 0
      %722 = vmatpush1.bf16.msra.mxu0 %v658
      %723 = vmatprep.mubr.bf16.mxu0 %v545
      %724 = vmatmul.mubr.bf16.gmra.mrb[0].mxu0 %v544
      %v725 = vpop.f32.mrb[0].mxu0
      %v726 = vadd.f32 0.0, %v725
      %v727 = vpop.f32.mrb[0].mxu0
      %v728 = vpop.f32.mrb[0].mxu0
      %v729 = vpop.f32.mrb[0].mxu0
      %730 = vdwg.mxu0
      %731 = vmatprep.subr.bf16.mxu0 0
      %732 = vmatpush1.bf16.msra.mxu0 %v659
      %733 = vmatprep.subr.bf16.mxu0 0
      %734 = vmatpush1.bf16.msra.mxu0 %v660
      %735 = vmatprep.subr.bf16.mxu0 0
      %736 = vmatpush1.bf16.msra.mxu0 %v661
      %737 = vmatprep.subr.bf16.mxu0 0
      %738 = vmatpush1.bf16.msra.mxu0 %v662
      %739 = vmatprep.subr.bf16.mxu0 0
      %740 = vmatpush1.bf16.msra.mxu0 %v663
      %741 = vmatprep.subr.bf16.mxu0 0
      %742 = vmatpush1.bf16.msra.mxu0 %v664
      %743 = vmatprep.subr.bf16.mxu0 0
      %744 = vmatpush1.bf16.msra.mxu0 %v665
      %745 = vmatprep.subr.bf16.mxu0 0
      %746 = vmatpush1.bf16.msra.mxu0 %v666
      %747 = vmatprep.subr.bf16.mxu0 0
      %748 = vmatpush1.bf16.msra.mxu0 0
      %749 = vmatprep.subr.bf16.mxu0 0
      %750 = vmatpush1.bf16.msra.mxu0 0
      %751 = vmatprep.subr.bf16.mxu0 0
      %752 = vmatpush1.bf16.msra.mxu0 0
      %753 = vmatprep.subr.bf16.mxu0 0
      %754 = vmatpush1.bf16.msra.mxu0 0
      %755 = vmatprep.subr.bf16.mxu0 0
      %756 = vmatpush1.bf16.msra.mxu0 0
      %757 = vmatprep.subr.bf16.mxu0 0
      %758 = vmatpush1.bf16.msra.mxu0 0
      %759 = vmatprep.subr.bf16.mxu0 0
      %760 = vmatpush1.bf16.msra.mxu0 0
      %761 = vmatprep.subr.bf16.mxu0 0
      %762 = vmatpush1.bf16.msra.mxu0 0
      %763 = vmatprep.mubr.bf16.mxu0 0
      %764 = vmatmul.mubr.bf16.gmra.mrb[0].mxu0 %v546
      %v765 = vpop.f32.mrb[0].mxu0
      %v766 = vadd.f32 %v726, %v765
      %v767 = vpop.f32.mrb[0].mxu0
      %v768 = vpop.f32.mrb[0].mxu0
      %v769 = vpop.f32.mrb[0].mxu0
      %770 = vdwg.mxu0
      %v771 = vld [vmem:[%s2 + $0x1] sm:$0x1]
      %v772 = vlaneseq
      %v773 = vshrl.u32 %v772, 7
      %v774 = vsub.s32 0, %v773
      %v775 = vrot.slane %v771, %v774
      %v776 = vmul.f32 %v766, %v775
      %v777 = vld [vmem:[%s3 + $0x1] sm:$0x1]
      %v778 = vlaneseq
      %v779 = vshrl.u32 %v778, 7
      %v780 = vsub.s32 0, %v779
      %v781 = vrot.slane %v777, %v780
      %v782 = vadd.f32 %v776, %v781
      %v783 = vadd.f32 %v782, %v195
      %v784 = vmax.f32 %v783, 0.0
      %v785 = vpack.c.bf16 %v784, %v784
      %786 = vst [vmem:[%s192] sm:$0x3] %v785
      %p787 = scmp.lt.s32.totalorder %s15, 1
      %s788 = scalar_select %p787, %s15, 1
      %s789 = smul.addr %s788, 2
      %s790 = scalar_lea.vmem %s4, %s789
      // Predicated region
      $region37: #{forward.7} parent=35 // pred_check
        %p791 = pneg %p122
      $region38: #{forward.7} parent=35 // pred_check_branch
        %793 = sbr.rel (%p791) target = $region40
      $region39: #{forward.7} parent=35 // pred_region
        _
      $region40: #{forward.7} parent=35 // pred_fallthru
        _
    $region36: #{forward.7} parent=5 // pred_fallthru
      _
    %p794 = scmp.le.s32.totalorder 2, %s10
    // Predicated region
    $region41: #{forward.7} parent=5 // pred_check
      %p795 = pneg %p794
    $region42: #{forward.7} parent=5 // pred_check_branch
      %797 = sbr.rel (%p795) target = $region44
    $region43: #{forward.7} parent=5 // pred_region
      %s798 = ssub.s32 %s10, 2
      // Predicated region
      $region45: #{forward.7} parent=43 // pred_check
        %p799 = pneg %p128
      $region46: #{forward.7} parent=43 // pred_check_branch
        %801 = sbr.rel (%p799) target = $region48
      $region47: #{forward.7} parent=43 // pred_region
        %p802 = scmp.lt.s32.totalorder %s16, 1
        %s803 = scalar_select %p802, %s16, 1
        %s804 = smul.addr %s803, 2
        %s805 = scalar_lea.vmem %s4, %s804
      $region48: #{forward.7} parent=43 // pred_fallthru
        _
    $region44: #{forward.7} parent=5 // pred_fallthru
      _
  $region6: #{forward.7} parent=0 // loop_footer
    %s14 = sadd.s32 1, %s10
  $region7: #{forward.7} parent=0 // loop_footer_branch
    %9 = sbr.rel target = $region3
  $region8: #{forward.7} parent=0 // loop_exit
    _

// kernel: forward.8
$region0: #{forward.8}
  #allocation0 [shape = 'u32[]', space=smem, size = 0x4, offset = 0x4, fixed_abs, tag = 'smem constant byte address 0x4 - core index']
  #allocation1 [shape = 'u32[144,128]{1,0:T(1,128)}', space=vmem, size = 0x12000, scoped, tag = 'internal scratch']
  #allocation2 [shape = 'f32[10,128]{1,0:T(8,128)}', space=vmem, size = 0x2000, scoped, tag = 'scratch operand']
  %s0 = inlined_call_operand.vmem [shape: bf16[2,4,128], index: 0, kind: input, shape index: {}]
  %s1 = inlined_call_operand.vmem [shape: bf16[2,8,128], index: 1, kind: input, shape index: {}]
  %s2 = inlined_call_operand.vmem [shape: bf16[384,128], index: 2, kind: input, shape index: {}]
  %s3 = inlined_call_operand.vmem [shape: bf16[384,128], index: 3, kind: input, shape index: {}]
  %s4 = inlined_call_operand.vmem [shape: f32[3,128], index: 4, kind: input, shape index: {}]
  %s5 = inlined_call_operand.vmem [shape: f32[3,128], index: 5, kind: input, shape index: {}]
  %s6 = inlined_call_operand.vmem [shape: bf16[2,8,128], index: 6, kind: output, shape index: {}]
  %s7 = sld [smem:[#allocation0]]
  $region57: #{forward.8} parent=0
    _
  %s9 = ssub.s32 1, %s7
  %s10 = scalar_select 0, %s9, %s7
  loop: start=0, step=1, limit=4
  $region2: #{forward.8} parent=0 // loop_pre_header
    _
  $region3: #{forward.8} parent=0 // loop_header
    %s12 = sphi 0, %s16
    %p13 = scmp.ge.s32.totalorder %s12, 4
    %s22 = sphi 0, %s24
    %s25 = sphi 0, %s22
    %s26 = sphi 0, %s25
    %s42 = sphi 0, %s26
    %s48 = sphi 0, %s50
    %s51 = sphi 0, %s48
    %s52 = sphi 0, %s51
    %s68 = sphi 0, %s52
    %s72 = sphi 0, %s72
    %s74 = sphi 0, %s72
    %s75 = sphi 0, %s74
    %s89 = sphi 0, %s75
    %s93 = sphi 0, %s93
    %s95 = sphi 0, %s93
    %s96 = sphi 0, %s95
    %s110 = sphi 0, %s96
    %s114 = sphi 0, %s114
    %s116 = sphi 0, %s114
    %s117 = sphi 0, %s116
    %s131 = sphi 0, %s117
    %s135 = sphi 0, %s135
    %s137 = sphi 0, %s135
    %s138 = sphi 0, %s137
    %s152 = sphi 0, %s138
    %s158 = sphi 0, %s160
    %s161 = sphi 0, %s158
    %s162 = sphi 0, %s161
    %s178 = sphi 0, %s162
  $region4: #{forward.8} parent=0 // loop_header_branch
    %15 = sbr.rel (%p13) target = $region8
  $region5: #{forward.8} parent=0 // loop_body
    %s17 = ssub.s32 %s12, 1
    %s18 = ssub.s32 %s12, 2
    %s19 = sadd.s32 %s12, 1
    %s20 = ssub.s32 %s12, %s19
    %p21 = scmp.eq.s32.totalorder %s20, 0
    %s23 = sadd.s32 %s22, 1
    %s24 = scalar_select %p21, %s22, %s23
    %p27 = pneg %p21
    %p28 = scmp.eq.s32.totalorder %s12, 1
    %p29 = por %p27, %p28
    %p30 = scmp.ne.s32.totalorder %s22, %s25
    %p31 = scmp.eq.s32.totalorder %s12, 0
    %p32 = por %p30, %p31
    %p33 = scmp.ne.s32.totalorder %s22, %s25
    %p34 = scmp.eq.s32.totalorder %s17, 1
    %p35 = por %p33, %p34
    %p36 = scmp.ne.s32.totalorder %s25, %s26
    %p37 = scmp.eq.s32.totalorder %s17, 0
    %p38 = por %p36, %p37
    %p39 = scmp.ne.s32.totalorder %s25, %s26
    %p40 = scmp.eq.s32.totalorder %s18, 1
    %p41 = por %p39, %p40
    %p43 = scmp.ne.s32.totalorder %s26, %s42
    %p44 = scmp.eq.s32.totalorder %s18, 0
    %p45 = por %p43, %p44
    %s46 = ssub.s32 %s12, %s19
    %p47 = scmp.eq.s32.totalorder %s46, 0
    %s49 = sadd.s32 %s48, 1
    %s50 = scalar_select %p47, %s48, %s49
    %p53 = pneg %p47
    %p54 = scmp.eq.s32.totalorder %s12, 1
    %p55 = por %p53, %p54
    %p56 = scmp.ne.s32.totalorder %s48, %s51
    %p57 = scmp.eq.s32.totalorder %s12, 0
    %p58 = por %p56, %p57
    %p59 = scmp.ne.s32.totalorder %s48, %s51
    %p60 = scmp.eq.s32.totalorder %s17, 1
    %p61 = por %p59, %p60
    %p62 = scmp.ne.s32.totalorder %s51, %s52
    %p63 = scmp.eq.s32.totalorder %s17, 0
    %p64 = por %p62, %p63
    %p65 = scmp.ne.s32.totalorder %s51, %s52
    %p66 = scmp.eq.s32.totalorder %s18, 1
    %p67 = por %p65, %p66
    %p69 = scmp.ne.s32.totalorder %s52, %s68
    %p70 = scmp.eq.s32.totalorder %s18, 0
    %p71 = por %p69, %p70
    %s73 = sadd.s32 %s72, 1
    %p76 = scmp.eq.s32.totalorder %s12, 1
    %p77 = scmp.ne.s32.totalorder %s72, %s74
    %p78 = scmp.eq.s32.totalorder %s12, 0
    %p79 = por %p77, %p78
    %p80 = scmp.ne.s32.totalorder %s72, %s74
    %p81 = scmp.eq.s32.totalorder %s17, 1
    %p82 = por %p80, %p81
    %p83 = scmp.ne.s32.totalorder %s74, %s75
    %p84 = scmp.eq.s32.totalorder %s17, 0
    %p85 = por %p83, %p84
    %p86 = scmp.ne.s32.totalorder %s74, %s75
    %p87 = scmp.eq.s32.totalorder %s18, 1
    %p88 = por %p86, %p87
    %p90 = scmp.ne.s32.totalorder %s75, %s89
    %p91 = scmp.eq.s32.totalorder %s18, 0
    %p92 = por %p90, %p91
    %s94 = sadd.s32 %s93, 1
    %p97 = scmp.eq.s32.totalorder %s12, 1
    %p98 = scmp.ne.s32.totalorder %s93, %s95
    %p99 = scmp.eq.s32.totalorder %s12, 0
    %p100 = por %p98, %p99
    %p101 = scmp.ne.s32.totalorder %s93, %s95
    %p102 = scmp.eq.s32.totalorder %s17, 1
    %p103 = por %p101, %p102
    %p104 = scmp.ne.s32.totalorder %s95, %s96
    %p105 = scmp.eq.s32.totalorder %s17, 0
    %p106 = por %p104, %p105
    %p107 = scmp.ne.s32.totalorder %s95, %s96
    %p108 = scmp.eq.s32.totalorder %s18, 1
    %p109 = por %p107, %p108
    %p111 = scmp.ne.s32.totalorder %s96, %s110
    %p112 = scmp.eq.s32.totalorder %s18, 0
    %p113 = por %p111, %p112
    %s115 = sadd.s32 %s114, 1
    %p118 = scmp.eq.s32.totalorder %s12, 1
    %p119 = scmp.ne.s32.totalorder %s114, %s116
    %p120 = scmp.eq.s32.totalorder %s12, 0
    %p121 = por %p119, %p120
    %p122 = scmp.ne.s32.totalorder %s114, %s116
    %p123 = scmp.eq.s32.totalorder %s17, 1
    %p124 = por %p122, %p123
    %p125 = scmp.ne.s32.totalorder %s116, %s117
    %p126 = scmp.eq.s32.totalorder %s17, 0
    %p127 = por %p125, %p126
    %p128 = scmp.ne.s32.totalorder %s116, %s117
    %p129 = scmp.eq.s32.totalorder %s18, 1
    %p130 = por %p128, %p129
    %p132 = scmp.ne.s32.totalorder %s117, %s131
    %p133 = scmp.eq.s32.totalorder %s18, 0
    %p134 = por %p132, %p133
    %s136 = sadd.s32 %s135, 1
    %p139 = scmp.eq.s32.totalorder %s12, 1
    %p140 = scmp.ne.s32.totalorder %s135, %s137
    %p141 = scmp.eq.s32.totalorder %s12, 0
    %p142 = por %p140, %p141
    %p143 = scmp.ne.s32.totalorder %s135, %s137
    %p144 = scmp.eq.s32.totalorder %s17, 1
    %p145 = por %p143, %p144
    %p146 = scmp.ne.s32.totalorder %s137, %s138
    %p147 = scmp.eq.s32.totalorder %s17, 0
    %p148 = por %p146, %p147
    %p149 = scmp.ne.s32.totalorder %s137, %s138
    %p150 = scmp.eq.s32.totalorder %s18, 1
    %p151 = por %p149, %p150
    %p153 = scmp.ne.s32.totalorder %s138, %s152
    %p154 = scmp.eq.s32.totalorder %s18, 0
    %p155 = por %p153, %p154
    %s156 = ssub.s32 %s12, %s19
    %p157 = scmp.eq.s32.totalorder %s156, 0
    %s159 = sadd.s32 %s158, 1
    %s160 = scalar_select %p157, %s158, %s159
    %p163 = pneg %p157
    %p164 = scmp.eq.s32.totalorder %s12, 1
    %p165 = por %p163, %p164
    %p166 = scmp.ne.s32.totalorder %s158, %s161
    %p167 = scmp.eq.s32.totalorder %s12, 0
    %p168 = por %p166, %p167
    %p169 = scmp.ne.s32.totalorder %s158, %s161
    %p170 = scmp.eq.s32.totalorder %s17, 1
    %p171 = por %p169, %p170
    %p172 = scmp.ne.s32.totalorder %s161, %s162
    %p173 = scmp.eq.s32.totalorder %s17, 0
    %p174 = por %p172, %p173
    %p175 = scmp.ne.s32.totalorder %s161, %s162
    %p176 = scmp.eq.s32.totalorder %s18, 1
    %p177 = por %p175, %p176
    %p179 = scmp.ne.s32.totalorder %s162, %s178
    %p180 = scmp.eq.s32.totalorder %s18, 0
    %p181 = por %p179, %p180
    %p182 = scmp.le.s32.totalorder 1, %s12
    %p183 = scmp.lt.s32.totalorder %s12, 3
    %p184 = pnand %p182, %p183
    %p185 = pneg %p184
    // Predicated region
    $region9: #{forward.8} parent=5 // pred_check
      _
    $region10: #{forward.8} parent=5 // pred_check_branch
      %187 = sbr.rel (%p184) target = $region12
    $region11: #{forward.8} parent=5 // pred_region
      %s188 = ssub.s32 %s12, 1
      // Predicated region
      $region13: #{forward.8} parent=11 // pred_check
        %p189 = pneg %p85
      $region14: #{forward.8} parent=11 // pred_check_branch
        %191 = sbr.rel (%p189) target = $region16
      $region15: #{forward.8} parent=11 // pred_region
        _
      $region16: #{forward.8} parent=11 // pred_fallthru
        _
      // Predicated region
      $region17: #{forward.8} parent=11 // pred_check
        %p192 = pneg %p106
      $region18: #{forward.8} parent=11 // pred_check_branch
        %194 = sbr.rel (%p192) target = $region20
      $region19: #{forward.8} parent=11 // pred_region
        _
      $region20: #{forward.8} parent=11 // pred_fallthru
        _
      // Predicated region
      $region21: #{forward.8} parent=11 // pred_check
        %p195 = pneg %p127
      $region22: #{forward.8} parent=11 // pred_check_branch
        %197 = sbr.rel (%p195) target = $region24
      $region23: #{forward.8} parent=11 // pred_region
        _
      $region24: #{forward.8} parent=11 // pred_fallthru
        _
      // Predicated region
      $region25: #{forward.8} parent=11 // pred_check
        %p198 = pneg %p148
      $region26: #{forward.8} parent=11 // pred_check_branch
        %200 = sbr.rel (%p198) target = $region28
      $region27: #{forward.8} parent=11 // pred_region
        _
      $region28: #{forward.8} parent=11 // pred_fallthru
        _
    $region12: #{forward.8} parent=5 // pred_fallthru
      _
    %p201 = scmp.lt.s32.totalorder %s12, 2
    // Predicated region
    $region29: #{forward.8} parent=5 // pred_check
      %p202 = pneg %p201
    $region30: #{forward.8} parent=5 // pred_check_branch
      %204 = sbr.rel (%p202) target = $region32
    $region31: #{forward.8} parent=5 // pred_region
      // Predicated region
      $region33: #{forward.8} parent=31 // pred_check
        %p205 = pneg %p32
      $region34: #{forward.8} parent=31 // pred_check_branch
        %207 = sbr.rel (%p205) target = $region36
      $region35: #{forward.8} parent=31 // pred_region
        %p208 = scmp.lt.s32.totalorder %s12, 1
        %s209 = scalar_select %p208, %s12, 1
        %s210 = smul.addr %s209, 2
        %s211 = scalar_lea.vmem %s0, %s210
      $region36: #{forward.8} parent=31 // pred_fallthru
        _
      // Predicated region
      $region37: #{forward.8} parent=31 // pred_check
        %p212 = pneg %p58
      $region38: #{forward.8} parent=31 // pred_check_branch
        %214 = sbr.rel (%p212) target = $region40
      $region39: #{forward.8} parent=31 // pred_region
        %p215 = scmp.lt.s32.totalorder %s12, 1
        %s216 = scalar_select %p215, %s12, 1
        %s217 = smul.addr %s216, 4
        %s218 = scalar_lea.vmem %s1, %s217
      $region40: #{forward.8} parent=31 // pred_fallthru
        _
    $region32: #{forward.8} parent=5 // pred_fallthru
      _
    %p219 = scmp.le.s32.totalorder 1, %s12
    %p220 = scmp.lt.s32.totalorder %s12, 3
    %p221 = pnand %p219, %p220
    %p222 = pneg %p221
    // Predicated region
    $region41: #{forward.8} parent=5 // pred_check
      _
    $region42: #{forward.8} parent=5 // pred_check_branch
      %224 = sbr.rel (%p221) target = $region44
    $region43: #{forward.8} parent=5 // pred_region
      %s225 = ssub.s32 %s12, 1
      %p226 = scmp.lt.s32.totalorder %s17, 1
      %s227 = scalar_select %p226, %s17, 1
      %s228 = smul.addr %s227, 2
      %s229 = scalar_lea.vmem %s0, %s228
      %p230 = pneg %p38
      %p231 = pneg %p35
      %p232 = scmp.lt.s32.totalorder %s17, 1
      %s233 = scalar_select %p232, %s17, 1
      %s234 = smul.addr %s233, 4
      %s235 = scalar_lea.vmem %s1, %s234
      %p236 = pneg %p64
      %p237 = pneg %p61
      %p238 = pneg %p85
      %p239 = pneg %p82
      %p240 = pneg %p106
      %p241 = pneg %p103
      %p242 = pneg %p127
      %p243 = pneg %p124
      %p244 = pneg %p148
      %p245 = pneg %p145
      %p246 = pneg %p174
      %p247 = pneg %p171
      %p248 = scmp.lt.s32.totalorder %s17, 1
      %s249 = scalar_select %p248, %s17, 1
      %s250 = smul.addr %s249, 4
      %s251 = scalar_lea.vmem %s6, %s250
      %p252 = scmp.lt.s32.totalorder %s17, 1
      %s253 = scalar_select %p252, %s17, 1
      %s254 = smul.addr %s253, 2
      %s255 = scalar_lea.vmem %s0, %s254
      %p256 = scmp.lt.s32.totalorder %s17, 1
      %s257 = scalar_select %p256, %s17, 1
      %s258 = smul.addr %s257, 4
      %s259 = scalar_lea.vmem %s1, %s258
      %p260 = scmp.lt.s32.totalorder %s17, 1
      %s261 = scalar_select %p260, %s17, 1
      %s262 = smul.addr %s261, 4
      %s263 = scalar_lea.vmem %s6, %s262
      %v265 = vld [vmem:[%s255] sm:$0x3]
      %v266 = vunpack.c.l.bf16 %v265
      %v267 = vld [vmem:[%s2] sm:$0xf]
      %v268 = vld [vmem:[%s2 + $0x4] sm:$0xf]
      %v269 = vld [vmem:[%s2 + $0x8] sm:$0xf]
      %v270 = vld [vmem:[%s2 + $0xc] sm:$0xf]
      %v271 = vld [vmem:[%s2 + $0x10] sm:$0xf]
      %v272 = vld [vmem:[%s2 + $0x14] sm:$0xf]
      %v273 = vld [vmem:[%s2 + $0x18] sm:$0xf]
      %v274 = vld [vmem:[%s2 + $0x1c] sm:$0xf]
      %v275 = vld [vmem:[%s2 + $0x20] sm:$0xf]
      %v276 = vld [vmem:[%s2 + $0x24] sm:$0xf]
      %v277 = vld [vmem:[%s2 + $0x28] sm:$0xf]
      %v278 = vld [vmem:[%s2 + $0x2c] sm:$0xf]
      %v279 = vld [vmem:[%s2 + $0x30] sm:$0xf]
      %v280 = vld [vmem:[%s2 + $0x34] sm:$0xf]
      %v281 = vld [vmem:[%s2 + $0x38] sm:$0xf]
      %v282 = vld [vmem:[%s2 + $0x3c] sm:$0xf]
      %v283 = vld [vmem:[%s2 + $0x40] sm:$0xf]
      %v284 = vld [vmem:[%s2 + $0x44] sm:$0xf]
      %v285 = vld [vmem:[%s2 + $0x48] sm:$0xf]
      %v286 = vld [vmem:[%s2 + $0x4c] sm:$0xf]
      %v287 = vld [vmem:[%s2 + $0x50] sm:$0xf]
      %v288 = vld [vmem:[%s2 + $0x54] sm:$0xf]
      %v289 = vld [vmem:[%s2 + $0x58] sm:$0xf]
      %v290 = vld [vmem:[%s2 + $0x5c] sm:$0xf]
      %v291 = vld [vmem:[%s2 + $0x60] sm:$0xf]
      %v292 = vld [vmem:[%s2 + $0x64] sm:$0xf]
      %v293 = vld [vmem:[%s2 + $0x68] sm:$0xf]
      %v294 = vld [vmem:[%s2 + $0x6c] sm:$0xf]
      %v295 = vld [vmem:[%s2 + $0x70] sm:$0xf]
      %v296 = vld [vmem:[%s2 + $0x74] sm:$0xf]
      %v297 = vld [vmem:[%s2 + $0x78] sm:$0xf]
      %v298 = vld [vmem:[%s2 + $0x7c] sm:$0xf]
      %v299 = vld [vmem:[%s2 + $0x80] sm:$0xf]
      %v300 = vld [vmem:[%s2 + $0x84] sm:$0xf]
      %v301 = vld [vmem:[%s2 + $0x88] sm:$0xf]
      %v302 = vld [vmem:[%s2 + $0x8c] sm:$0xf]
      %v303 = vld [vmem:[%s2 + $0x90] sm:$0xf]
      %v304 = vld [vmem:[%s2 + $0x94] sm:$0xf]
      %v305 = vld [vmem:[%s2 + $0x98] sm:$0xf]
      %v306 = vld [vmem:[%s2 + $0x9c] sm:$0xf]
      %v307 = vld [vmem:[%s2 + $0xa0] sm:$0xf]
      %v308 = vld [vmem:[%s2 + $0xa4] sm:$0xf]
      %v309 = vld [vmem:[%s2 + $0xa8] sm:$0xf]
      %v310 = vld [vmem:[%s2 + $0xac] sm:$0xf]
      %v311 = vld [vmem:[%s2 + $0xb0] sm:$0xf]
      %v312 = vld [vmem:[%s2 + $0xb4] sm:$0xf]
      %v313 = vld [vmem:[%s2 + $0xb8] sm:$0xf]
      %v314 = vld [vmem:[%s2 + $0xbc] sm:$0xf]
      %315 = vst [vmem:[#allocation2] sm:$0xff] 0.0
      %316 = vst [vmem:[#allocation2 + $0x8] sm:$0x3] 0.0
      %317 = vst [vmem:[#allocation2 + $0x1] sm:$0x1] %v266
      %318 = vst [vmem:[#allocation2 + $0x2] sm:$0x2] %v266
      %319 = vst [vmem:[#allocation2 + $0x3] sm:$0x4] %v266
      %320 = vst [vmem:[#allocation2 + $0x4] sm:$0x8] %v266
      %v321 = vld [vmem:[#allocation2] sm:$0xff]
      %v322 = vld [vmem:[#allocation2 + $0x1] sm:$0xff]
      %v323 = vld [vmem:[#allocation2 + $0x2] sm:$0xff]
      %v324 = vpack.c.bf16 %v321, %v321
      %v325 = vpack.c.bf16 %v322, %v322
      %v326 = vpack.c.bf16 %v323, %v323
      %v375 = vunpack.c.l.b16 %v267
      %v376 = vunpack.c.l.b16 %v268
      %v377 = vunpack.c.l.b16 %v269
      %v378 = vunpack.c.l.b16 %v270
      %v379 = vunpack.c.l.b16 %v271
      %v380 = vunpack.c.l.b16 %v272
      %v381 = vunpack.c.l.b16 %v273
      %v382 = vunpack.c.l.b16 %v274
      %v383 = vunpack.c.l.b16 %v275
      %v384 = vunpack.c.l.b16 %v276
      %v385 = vunpack.c.l.b16 %v277
      %v386 = vunpack.c.l.b16 %v278
      %v387 = vunpack.c.l.b16 %v279
      %v388 = vunpack.c.l.b16 %v280
      %v389 = vunpack.c.l.b16 %v281
      %v390 = vunpack.c.l.b16 %v282
      %v391 = vunpack.c.l.b16 %v283
      %v392 = vunpack.c.l.b16 %v284
      %v393 = vunpack.c.l.b16 %v285
      %v394 = vunpack.c.l.b16 %v286
      %v395 = vunpack.c.l.b16 %v287
      %v396 = vunpack.c.l.b16 %v288
      %v397 = vunpack.c.l.b16 %v289
      %v398 = vunpack.c.l.b16 %v290
      %v399 = vunpack.c.l.b16 %v291
      %v400 = vunpack.c.l.b16 %v292
      %v401 = vunpack.c.l.b16 %v293
      %v402 = vunpack.c.l.b16 %v294
      %v403 = vunpack.c.l.b16 %v295
      %v404 = vunpack.c.l.b16 %v296
      %v405 = vunpack.c.l.b16 %v297
      %v406 = vunpack.c.l.b16 %v298
      %v407 = vunpack.c.l.b16 %v299
      %v408 = vunpack.c.l.b16 %v300
      %v409 = vunpack.c.l.b16 %v301
      %v410 = vunpack.c.l.b16 %v302
      %v411 = vunpack.c.l.b16 %v303
      %v412 = vunpack.c.l.b16 %v304
      %v413 = vunpack.c.l.b16 %v305
      %v414 = vunpack.c.l.b16 %v306
      %v415 = vunpack.c.l.b16 %v307
      %v416 = vunpack.c.l.b16 %v308
      %v417 = vunpack.c.l.b16 %v309
      %v418 = vunpack.c.l.b16 %v310
      %v419 = vunpack.c.l.b16 %v311
      %v420 = vunpack.c.l.b16 %v312
      %v421 = vunpack.c.l.b16 %v313
      %v422 = vunpack.c.l.b16 %v314
      %v423 = vpack.c.b16 %v376, %v375
      %v424 = vpack.c.b16 %v378, %v377
      %v425 = vpack.c.b16 %v380, %v379
      %v426 = vpack.c.b16 %v382, %v381
      %v427 = vpack.c.b16 %v384, %v383
      %v428 = vpack.c.b16 %v386, %v385
      %v429 = vpack.c.b16 %v388, %v387
      %v430 = vpack.c.b16 %v390, %v389
      %v431 = vpack.c.b16 %v392, %v391
      %v432 = vpack.c.b16 %v394, %v393
      %v433 = vpack.c.b16 %v396, %v395
      %v434 = vpack.c.b16 %v398, %v397
      %v435 = vpack.c.b16 %v400, %v399
      %v436 = vpack.c.b16 %v402, %v401
      %v437 = vpack.c.b16 %v404, %v403
      %v438 = vpack.c.b16 %v406, %v405
      %v439 = vpack.c.b16 %v408, %v407
      %v440 = vpack.c.b16 %v410, %v409
      %v441 = vpack.c.b16 %v412, %v411
      %v442 = vpack.c.b16 %v414, %v413
      %v443 = vpack.c.b16 %v416, %v415
      %v444 = vpack.c.b16 %v418, %v417
      %v445 = vpack.c.b16 %v420, %v419
      %v446 = vpack.c.b16 %v422, %v421
      %471 = vmatprep.subr.bf16.mxu0 0
      %472 = vmatpush1.bf16.msra.mxu0 %v423
      %473 = vmatprep.subr.bf16.mxu0 0
      %474 = vmatpush1.bf16.msra.mxu0 %v424
      %475 = vmatprep.subr.bf16.mxu0 0
      %476 = vmatpush1.bf16.msra.mxu0 %v425
      %477 = vmatprep.subr.bf16.mxu0 0
      %478 = vmatpush1.bf16.msra.mxu0 %v426
      %479 = vmatprep.subr.bf16.mxu0 0
      %480 = vmatpush1.bf16.msra.mxu0 %v427
      %481 = vmatprep.subr.bf16.mxu0 0
      %482 = vmatpush1.bf16.msra.mxu0 %v428
      %483 = vmatprep.subr.bf16.mxu0 0
      %484 = vmatpush1.bf16.msra.mxu0 %v429
      %485 = vmatprep.subr.bf16.mxu0 0
      %486 = vmatpush1.bf16.msra.mxu0 %v430
      %487 = vmatprep.subr.bf16.mxu0 0
      %488 = vmatpush1.bf16.msra.mxu0 %v431
      %489 = vmatprep.subr.bf16.mxu0 0
      %490 = vmatpush1.bf16.msra.mxu0 %v432
      %491 = vmatprep.subr.bf16.mxu0 0
      %492 = vmatpush1.bf16.msra.mxu0 %v433
      %493 = vmatprep.subr.bf16.mxu0 0
      %494 = vmatpush1.bf16.msra.mxu0 %v434
      %495 = vmatprep.subr.bf16.mxu0 0
      %496 = vmatpush1.bf16.msra.mxu0 %v435
      %497 = vmatprep.subr.bf16.mxu0 0
      %498 = vmatpush1.bf16.msra.mxu0 %v436
      %499 = vmatprep.subr.bf16.mxu0 0
      %500 = vmatpush1.bf16.msra.mxu0 %v437
      %501 = vmatprep.subr.bf16.mxu0 0
      %502 = vmatpush1.bf16.msra.mxu0 %v438
      %503 = vmatprep.mubr.bf16.mxu0 %v325
      %504 = vmatmul.mubr.bf16.gmra.mrb[0].mxu0 %v324
      %v505 = vpop.f32.mrb[0].mxu0
      %v506 = vadd.f32 0.0, %v505
      %v507 = vpop.f32.mrb[0].mxu0
      %v508 = vpop.f32.mrb[0].mxu0
      %v509 = vpop.f32.mrb[0].mxu0
      %510 = vdwg.mxu0
      %511 = vmatprep.subr.bf16.mxu0 0
      %512 = vmatpush1.bf16.msra.mxu0 %v439
      %513 = vmatprep.subr.bf16.mxu0 0
      %514 = vmatpush1.bf16.msra.mxu0 %v440
      %515 = vmatprep.subr.bf16.mxu0 0
      %516 = vmatpush1.bf16.msra.mxu0 %v441
      %517 = vmatprep.subr.bf16.mxu0 0
      %518 = vmatpush1.bf16.msra.mxu0 %v442
      %519 = vmatprep.subr.bf16.mxu0 0
      %520 = vmatpush1.bf16.msra.mxu0 %v443
      %521 = vmatprep.subr.bf16.mxu0 0
      %522 = vmatpush1.bf16.msra.mxu0 %v444
      %523 = vmatprep.subr.bf16.mxu0 0
      %524 = vmatpush1.bf16.msra.mxu0 %v445
      %525 = vmatprep.subr.bf16.mxu0 0
      %526 = vmatpush1.bf16.msra.mxu0 %v446
      %527 = vmatprep.subr.bf16.mxu0 0
      %528 = vmatpush1.bf16.msra.mxu0 0
      %529 = vmatprep.subr.bf16.mxu0 0
      %530 = vmatpush1.bf16.msra.mxu0 0
      %531 = vmatprep.subr.bf16.mxu0 0
      %532 = vmatpush1.bf16.msra.mxu0 0
      %533 = vmatprep.subr.bf16.mxu0 0
      %534 = vmatpush1.bf16.msra.mxu0 0
      %535 = vmatprep.subr.bf16.mxu0 0
      %536 = vmatpush1.bf16.msra.mxu0 0
      %537 = vmatprep.subr.bf16.mxu0 0
      %538 = vmatpush1.bf16.msra.mxu0 0
      %539 = vmatprep.subr.bf16.mxu0 0
      %540 = vmatpush1.bf16.msra.mxu0 0
      %541 = vmatprep.subr.bf16.mxu0 0
      %542 = vmatpush1.bf16.msra.mxu0 0
      %543 = vmatprep.mubr.bf16.mxu0 0
      %544 = vmatmul.mubr.bf16.gmra.mrb[0].mxu0 %v326
      %v545 = vpop.f32.mrb[0].mxu0
      %v546 = vadd.f32 %v506, %v545
      %v547 = vpop.f32.mrb[0].mxu0
      %v548 = vpop.f32.mrb[0].mxu0
      %v549 = vpop.f32.mrb[0].mxu0
      %550 = vdwg.mxu0
      %v551 = vld [vmem:[%s4] sm:$0x1]
      %v552 = vlaneseq
      %v553 = vshrl.u32 %v552, 7
      %v554 = vsub.s32 0, %v553
      %v555 = vrot.slane %v551, %v554
      %v556 = vmul.f32 %v546, %v555
      %v557 = vld [vmem:[%s5] sm:$0x1]
      %v558 = vlaneseq
      %v559 = vshrl.u32 %v558, 7
      %v560 = vsub.s32 0, %v559
      %v561 = vrot.slane %v557, %v560
      %v562 = vadd.f32 %v556, %v561
      %v563 = vld [vmem:[%s259] sm:$0xf]
      %v564 = vunpack.c.l.bf16 %v563
      %v565 = vadd.f32 %v562, %v564
      %v566 = vld [vmem:[%s3] sm:$0xf]
      %v567 = vld [vmem:[%s3 + $0x4] sm:$0xf]
      %v568 = vld [vmem:[%s3 + $0x8] sm:$0xf]
      %v569 = vld [vmem:[%s3 + $0xc] sm:$0xf]
      %v570 = vld [vmem:[%s3 + $0x10] sm:$0xf]
      %v571 = vld [vmem:[%s3 + $0x14] sm:$0xf]
      %v572 = vld [vmem:[%s3 + $0x18] sm:$0xf]
      %v573 = vld [vmem:[%s3 + $0x1c] sm:$0xf]
      %v574 = vld [vmem:[%s3 + $0x20] sm:$0xf]
      %v575 = vld [vmem:[%s3 + $0x24] sm:$0xf]
      %v576 = vld [vmem:[%s3 + $0x28] sm:$0xf]
      %v577 = vld [vmem:[%s3 + $0x2c] sm:$0xf]
      %v578 = vld [vmem:[%s3 + $0x30] sm:$0xf]
      %v579 = vld [vmem:[%s3 + $0x34] sm:$0xf]
      %v580 = vld [vmem:[%s3 + $0x38] sm:$0xf]
      %v581 = vld [vmem:[%s3 + $0x3c] sm:$0xf]
      %v582 = vld [vmem:[%s3 + $0x40] sm:$0xf]
      %v583 = vld [vmem:[%s3 + $0x44] sm:$0xf]
      %v584 = vld [vmem:[%s3 + $0x48] sm:$0xf]
      %v585 = vld [vmem:[%s3 + $0x4c] sm:$0xf]
      %v586 = vld [vmem:[%s3 + $0x50] sm:$0xf]
      %v587 = vld [vmem:[%s3 + $0x54] sm:$0xf]
      %v588 = vld [vmem:[%s3 + $0x58] sm:$0xf]
      %v589 = vld [vmem:[%s3 + $0x5c] sm:$0xf]
      %v590 = vld [vmem:[%s3 + $0x60] sm:$0xf]
      %v591 = vld [vmem:[%s3 + $0x64] sm:$0xf]
      %v592 = vld [vmem:[%s3 + $0x68] sm:$0xf]
      %v593 = vld [vmem:[%s3 + $0x6c] sm:$0xf]
      %v594 = vld [vmem:[%s3 + $0x70] sm:$0xf]
      %v595 = vld [vmem:[%s3 + $0x74] sm:$0xf]
      %v596 = vld [vmem:[%s3 + $0x78] sm:$0xf]
      %v597 = vld [vmem:[%s3 + $0x7c] sm:$0xf]
      %v598 = vld [vmem:[%s3 + $0x80] sm:$0xf]
      %v599 = vld [vmem:[%s3 + $0x84] sm:$0xf]
      %v600 = vld [vmem:[%s3 + $0x88] sm:$0xf]
      %v601 = vld [vmem:[%s3 + $0x8c] sm:$0xf]
      %v602 = vld [vmem:[%s3 + $0x90] sm:$0xf]
      %v603 = vld [vmem:[%s3 + $0x94] sm:$0xf]
      %v604 = vld [vmem:[%s3 + $0x98] sm:$0xf]
      %v605 = vld [vmem:[%s3 + $0x9c] sm:$0xf]
      %v606 = vld [vmem:[%s3 + $0xa0] sm:$0xf]
      %v607 = vld [vmem:[%s3 + $0xa4] sm:$0xf]
      %v608 = vld [vmem:[%s3 + $0xa8] sm:$0xf]
      %v609 = vld [vmem:[%s3 + $0xac] sm:$0xf]
      %v610 = vld [vmem:[%s3 + $0xb0] sm:$0xf]
      %v611 = vld [vmem:[%s3 + $0xb4] sm:$0xf]
      %v612 = vld [vmem:[%s3 + $0xb8] sm:$0xf]
      %v613 = vld [vmem:[%s3 + $0xbc] sm:$0xf]
      %614 = vst [vmem:[#allocation2] sm:$0x1] 0.0
      %615 = vst [vmem:[#allocation2 + $0x1] sm:$0xff] %v565
      %616 = vst [vmem:[#allocation2 + $0x9] sm:$0x1] 0.0
      %v617 = vld [vmem:[#allocation2] sm:$0xff]
      %v618 = vld [vmem:[#allocation2 + $0x1] sm:$0xff]
      %v619 = vld [vmem:[#allocation2 + $0x2] sm:$0xff]
      %v620 = vpack.c.bf16 %v617, %v617
      %v621 = vpack.c.bf16 %v618, %v618
      %v622 = vpack.c.bf16 %v619, %v619
      %v671 = vunpack.c.l.b16 %v566
      %v672 = vunpack.c.l.b16 %v567
      %v673 = vunpack.c.l.b16 %v568
      %v674 = vunpack.c.l.b16 %v569
      %v675 = vunpack.c.l.b16 %v570
      %v676 = vunpack.c.l.b16 %v571
      %v677 = vunpack.c.l.b16 %v572
      %v678 = vunpack.c.l.b16 %v573
      %v679 = vunpack.c.l.b16 %v574
      %v680 = vunpack.c.l.b16 %v575
      %v681 = vunpack.c.l.b16 %v576
      %v682 = vunpack.c.l.b16 %v577
      %v683 = vunpack.c.l.b16 %v578
      %v684 = vunpack.c.l.b16 %v579
      %v685 = vunpack.c.l.b16 %v580
      %v686 = vunpack.c.l.b16 %v581
      %v687 = vunpack.c.l.b16 %v582
      %v688 = vunpack.c.l.b16 %v583
      %v689 = vunpack.c.l.b16 %v584
      %v690 = vunpack.c.l.b16 %v585
      %v691 = vunpack.c.l.b16 %v586
      %v692 = vunpack.c.l.b16 %v587
      %v693 = vunpack.c.l.b16 %v588
      %v694 = vunpack.c.l.b16 %v589
      %v695 = vunpack.c.l.b16 %v590
      %v696 = vunpack.c.l.b16 %v591
      %v697 = vunpack.c.l.b16 %v592
      %v698 = vunpack.c.l.b16 %v593
      %v699 = vunpack.c.l.b16 %v594
      %v700 = vunpack.c.l.b16 %v595
      %v701 = vunpack.c.l.b16 %v596
      %v702 = vunpack.c.l.b16 %v597
      %v703 = vunpack.c.l.b16 %v598
      %v704 = vunpack.c.l.b16 %v599
      %v705 = vunpack.c.l.b16 %v600
      %v706 = vunpack.c.l.b16 %v601
      %v707 = vunpack.c.l.b16 %v602
      %v708 = vunpack.c.l.b16 %v603
      %v709 = vunpack.c.l.b16 %v604
      %v710 = vunpack.c.l.b16 %v605
      %v711 = vunpack.c.l.b16 %v606
      %v712 = vunpack.c.l.b16 %v607
      %v713 = vunpack.c.l.b16 %v608
      %v714 = vunpack.c.l.b16 %v609
      %v715 = vunpack.c.l.b16 %v610
      %v716 = vunpack.c.l.b16 %v611
      %v717 = vunpack.c.l.b16 %v612
      %v718 = vunpack.c.l.b16 %v613
      %v719 = vpack.c.b16 %v672, %v671
      %v720 = vpack.c.b16 %v674, %v673
      %v721 = vpack.c.b16 %v676, %v675
      %v722 = vpack.c.b16 %v678, %v677
      %v723 = vpack.c.b16 %v680, %v679
      %v724 = vpack.c.b16 %v682, %v681
      %v725 = vpack.c.b16 %v684, %v683
      %v726 = vpack.c.b16 %v686, %v685
      %v727 = vpack.c.b16 %v688, %v687
      %v728 = vpack.c.b16 %v690, %v689
      %v729 = vpack.c.b16 %v692, %v691
      %v730 = vpack.c.b16 %v694, %v693
      %v731 = vpack.c.b16 %v696, %v695
      %v732 = vpack.c.b16 %v698, %v697
      %v733 = vpack.c.b16 %v700, %v699
      %v734 = vpack.c.b16 %v702, %v701
      %v735 = vpack.c.b16 %v704, %v703
      %v736 = vpack.c.b16 %v706, %v705
      %v737 = vpack.c.b16 %v708, %v707
      %v738 = vpack.c.b16 %v710, %v709
      %v739 = vpack.c.b16 %v712, %v711
      %v740 = vpack.c.b16 %v714, %v713
      %v741 = vpack.c.b16 %v716, %v715
      %v742 = vpack.c.b16 %v718, %v717
      %767 = vmatprep.subr.bf16.mxu0 0
      %768 = vmatpush1.bf16.msra.mxu0 %v719
      %769 = vmatprep.subr.bf16.mxu0 0
      %770 = vmatpush1.bf16.msra.mxu0 %v720
      %771 = vmatprep.subr.bf16.mxu0 0
      %772 = vmatpush1.bf16.msra.mxu0 %v721
      %773 = vmatprep.subr.bf16.mxu0 0
      %774 = vmatpush1.bf16.msra.mxu0 %v722
      %775 = vmatprep.subr.bf16.mxu0 0
      %776 = vmatpush1.bf16.msra.mxu0 %v723
      %777 = vmatprep.subr.bf16.mxu0 0
      %778 = vmatpush1.bf16.msra.mxu0 %v724
      %779 = vmatprep.subr.bf16.mxu0 0
      %780 = vmatpush1.bf16.msra.mxu0 %v725
      %781 = vmatprep.subr.bf16.mxu0 0
      %782 = vmatpush1.bf16.msra.mxu0 %v726
      %783 = vmatprep.subr.bf16.mxu0 0
      %784 = vmatpush1.bf16.msra.mxu0 %v727
      %785 = vmatprep.subr.bf16.mxu0 0
      %786 = vmatpush1.bf16.msra.mxu0 %v728
      %787 = vmatprep.subr.bf16.mxu0 0
      %788 = vmatpush1.bf16.msra.mxu0 %v729
      %789 = vmatprep.subr.bf16.mxu0 0
      %790 = vmatpush1.bf16.msra.mxu0 %v730
      %791 = vmatprep.subr.bf16.mxu0 0
      %792 = vmatpush1.bf16.msra.mxu0 %v731
      %793 = vmatprep.subr.bf16.mxu0 0
      %794 = vmatpush1.bf16.msra.mxu0 %v732
      %795 = vmatprep.subr.bf16.mxu0 0
      %796 = vmatpush1.bf16.msra.mxu0 %v733
      %797 = vmatprep.subr.bf16.mxu0 0
      %798 = vmatpush1.bf16.msra.mxu0 %v734
      %799 = vmatprep.mubr.bf16.mxu0 %v621
      %800 = vmatmul.mubr.bf16.gmra.mrb[0].mxu0 %v620
      %v801 = vpop.f32.mrb[0].mxu0
      %v802 = vadd.f32 0.0, %v801
      %v803 = vpop.f32.mrb[0].mxu0
      %v804 = vpop.f32.mrb[0].mxu0
      %v805 = vpop.f32.mrb[0].mxu0
      %806 = vdwg.mxu0
      %807 = vmatprep.subr.bf16.mxu0 0
      %808 = vmatpush1.bf16.msra.mxu0 %v735
      %809 = vmatprep.subr.bf16.mxu0 0
      %810 = vmatpush1.bf16.msra.mxu0 %v736
      %811 = vmatprep.subr.bf16.mxu0 0
      %812 = vmatpush1.bf16.msra.mxu0 %v737
      %813 = vmatprep.subr.bf16.mxu0 0
      %814 = vmatpush1.bf16.msra.mxu0 %v738
      %815 = vmatprep.subr.bf16.mxu0 0
      %816 = vmatpush1.bf16.msra.mxu0 %v739
      %817 = vmatprep.subr.bf16.mxu0 0
      %818 = vmatpush1.bf16.msra.mxu0 %v740
      %819 = vmatprep.subr.bf16.mxu0 0
      %820 = vmatpush1.bf16.msra.mxu0 %v741
      %821 = vmatprep.subr.bf16.mxu0 0
      %822 = vmatpush1.bf16.msra.mxu0 %v742
      %823 = vmatprep.subr.bf16.mxu0 0
      %824 = vmatpush1.bf16.msra.mxu0 0
      %825 = vmatprep.subr.bf16.mxu0 0
      %826 = vmatpush1.bf16.msra.mxu0 0
      %827 = vmatprep.subr.bf16.mxu0 0
      %828 = vmatpush1.bf16.msra.mxu0 0
      %829 = vmatprep.subr.bf16.mxu0 0
      %830 = vmatpush1.bf16.msra.mxu0 0
      %831 = vmatprep.subr.bf16.mxu0 0
      %832 = vmatpush1.bf16.msra.mxu0 0
      %833 = vmatprep.subr.bf16.mxu0 0
      %834 = vmatpush1.bf16.msra.mxu0 0
      %835 = vmatprep.subr.bf16.mxu0 0
      %836 = vmatpush1.bf16.msra.mxu0 0
      %837 = vmatprep.subr.bf16.mxu0 0
      %838 = vmatpush1.bf16.msra.mxu0 0
      %839 = vmatprep.mubr.bf16.mxu0 0
      %840 = vmatmul.mubr.bf16.gmra.mrb[0].mxu0 %v622
      %v841 = vpop.f32.mrb[0].mxu0
      %v842 = vadd.f32 %v802, %v841
      %v843 = vpop.f32.mrb[0].mxu0
      %v844 = vpop.f32.mrb[0].mxu0
      %v845 = vpop.f32.mrb[0].mxu0
      %846 = vdwg.mxu0
      %v847 = vld [vmem:[%s4 + $0x1] sm:$0x1]
      %v848 = vlaneseq
      %v849 = vshrl.u32 %v848, 7
      %v850 = vsub.s32 0, %v849
      %v851 = vrot.slane %v847, %v850
      %v852 = vmul.f32 %v842, %v851
      %v853 = vld [vmem:[%s5 + $0x1] sm:$0x1]
      %v854 = vlaneseq
      %v855 = vshrl.u32 %v854, 7
      %v856 = vsub.s32 0, %v855
      %v857 = vrot.slane %v853, %v856
      %v858 = vadd.f32 %v852, %v857
      %v859 = vmax.f32 %v858, 0.0
      %v860 = vld [vmem:[%s3] sm:$0xf]
      %v861 = vld [vmem:[%s3 + $0x4] sm:$0xf]
      %v862 = vld [vmem:[%s3 + $0x8] sm:$0xf]
      %v863 = vld [vmem:[%s3 + $0xc] sm:$0xf]
      %v864 = vld [vmem:[%s3 + $0x10] sm:$0xf]
      %v865 = vld [vmem:[%s3 + $0x14] sm:$0xf]
      %v866 = vld [vmem:[%s3 + $0x18] sm:$0xf]
      %v867 = vld [vmem:[%s3 + $0x1c] sm:$0xf]
      %v868 = vld [vmem:[%s3 + $0x20] sm:$0xf]
      %v869 = vld [vmem:[%s3 + $0x24] sm:$0xf]
      %v870 = vld [vmem:[%s3 + $0x28] sm:$0xf]
      %v871 = vld [vmem:[%s3 + $0x2c] sm:$0xf]
      %v872 = vld [vmem:[%s3 + $0x30] sm:$0xf]
      %v873 = vld [vmem:[%s3 + $0x34] sm:$0xf]
      %v874 = vld [vmem:[%s3 + $0x38] sm:$0xf]
      %v875 = vld [vmem:[%s3 + $0x3c] sm:$0xf]
      %v876 = vld [vmem:[%s3 + $0x40] sm:$0xf]
      %v877 = vld [vmem:[%s3 + $0x44] sm:$0xf]
      %v878 = vld [vmem:[%s3 + $0x48] sm:$0xf]
      %v879 = vld [vmem:[%s3 + $0x4c] sm:$0xf]
      %v880 = vld [vmem:[%s3 + $0x50] sm:$0xf]
      %v881 = vld [vmem:[%s3 + $0x54] sm:$0xf]
      %v882 = vld [vmem:[%s3 + $0x58] sm:$0xf]
      %v883 = vld [vmem:[%s3 + $0x5c] sm:$0xf]
      %v884 = vld [vmem:[%s3 + $0x60] sm:$0xf]
      %v885 = vld [vmem:[%s3 + $0x64] sm:$0xf]
      %v886 = vld [vmem:[%s3 + $0x68] sm:$0xf]
      %v887 = vld [vmem:[%s3 + $0x6c] sm:$0xf]
      %v888 = vld [vmem:[%s3 + $0x70] sm:$0xf]
      %v889 = vld [vmem:[%s3 + $0x74] sm:$0xf]
      %v890 = vld [vmem:[%s3 + $0x78] sm:$0xf]
      %v891 = vld [vmem:[%s3 + $0x7c] sm:$0xf]
      %v892 = vld [vmem:[%s3 + $0x80] sm:$0xf]
      %v893 = vld [vmem:[%s3 + $0x84] sm:$0xf]
      %v894 = vld [vmem:[%s3 + $0x88] sm:$0xf]
      %v895 = vld [vmem:[%s3 + $0x8c] sm:$0xf]
      %v896 = vld [vmem:[%s3 + $0x90] sm:$0xf]
      %v897 = vld [vmem:[%s3 + $0x94] sm:$0xf]
      %v898 = vld [vmem:[%s3 + $0x98] sm:$0xf]
      %v899 = vld [vmem:[%s3 + $0x9c] sm:$0xf]
      %v900 = vld [vmem:[%s3 + $0xa0] sm:$0xf]
      %v901 = vld [vmem:[%s3 + $0xa4] sm:$0xf]
      %v902 = vld [vmem:[%s3 + $0xa8] sm:$0xf]
      %v903 = vld [vmem:[%s3 + $0xac] sm:$0xf]
      %v904 = vld [vmem:[%s3 + $0xb0] sm:$0xf]
      %v905 = vld [vmem:[%s3 + $0xb4] sm:$0xf]
      %v906 = vld [vmem:[%s3 + $0xb8] sm:$0xf]
      %v907 = vld [vmem:[%s3 + $0xbc] sm:$0xf]
      %908 = vst [vmem:[#allocation2] sm:$0x1] 0.0
      %909 = vst [vmem:[#allocation2 + $0x1] sm:$0xff] %v859
      %910 = vst [vmem:[#allocation2 + $0x9] sm:$0x1] 0.0
      %v911 = vld [vmem:[#allocation2] sm:$0xff]
      %v912 = vld [vmem:[#allocation2 + $0x1] sm:$0xff]
      %v913 = vld [vmem:[#allocation2 + $0x2] sm:$0xff]
      %v914 = vpack.c.bf16 %v911, %v911
      %v915 = vpack.c.bf16 %v912, %v912
      %v916 = vpack.c.bf16 %v913, %v913
      %v965 = vunpack.c.l.b16 %v860
      %v966 = vunpack.c.l.b16 %v861
      %v967 = vunpack.c.l.b16 %v862
      %v968 = vunpack.c.l.b16 %v863
      %v969 = vunpack.c.l.b16 %v864
      %v970 = vunpack.c.l.b16 %v865
      %v971 = vunpack.c.l.b16 %v866
      %v972 = vunpack.c.l.b16 %v867
      %v973 = vunpack.c.l.b16 %v868
      %v974 = vunpack.c.l.b16 %v869
      %v975 = vunpack.c.l.b16 %v870
      %v976 = vunpack.c.l.b16 %v871
      %v977 = vunpack.c.l.b16 %v872
      %v978 = vunpack.c.l.b16 %v873
      %v979 = vunpack.c.l.b16 %v874
      %v980 = vunpack.c.l.b16 %v875
      %v981 = vunpack.c.l.b16 %v876
      %v982 = vunpack.c.l.b16 %v877
      %v983 = vunpack.c.l.b16 %v878
      %v984 = vunpack.c.l.b16 %v879
      %v985 = vunpack.c.l.b16 %v880
      %v986 = vunpack.c.l.b16 %v881
      %v987 = vunpack.c.l.b16 %v882
      %v988 = vunpack.c.l.b16 %v883
      %v989 = vunpack.c.l.b16 %v884
      %v990 = vunpack.c.l.b16 %v885
      %v991 = vunpack.c.l.b16 %v886
      %v992 = vunpack.c.l.b16 %v887
      %v993 = vunpack.c.l.b16 %v888
      %v994 = vunpack.c.l.b16 %v889
      %v995 = vunpack.c.l.b16 %v890
      %v996 = vunpack.c.l.b16 %v891
      %v997 = vunpack.c.l.b16 %v892
      %v998 = vunpack.c.l.b16 %v893
      %v999 = vunpack.c.l.b16 %v894
      %v1000 = vunpack.c.l.b16 %v895
      %v1001 = vunpack.c.l.b16 %v896
      %v1002 = vunpack.c.l.b16 %v897
      %v1003 = vunpack.c.l.b16 %v898
      %v1004 = vunpack.c.l.b16 %v899
      %v1005 = vunpack.c.l.b16 %v900
      %v1006 = vunpack.c.l.b16 %v901
      %v1007 = vunpack.c.l.b16 %v902
      %v1008 = vunpack.c.l.b16 %v903
      %v1009 = vunpack.c.l.b16 %v904
      %v1010 = vunpack.c.l.b16 %v905
      %v1011 = vunpack.c.l.b16 %v906
      %v1012 = vunpack.c.l.b16 %v907
      %v1013 = vpack.c.b16 %v966, %v965
      %v1014 = vpack.c.b16 %v968, %v967
      %v1015 = vpack.c.b16 %v970, %v969
      %v1016 = vpack.c.b16 %v972, %v971
      %v1017 = vpack.c.b16 %v974, %v973
      %v1018 = vpack.c.b16 %v976, %v975
      %v1019 = vpack.c.b16 %v978, %v977
      %v1020 = vpack.c.b16 %v980, %v979
      %v1021 = vpack.c.b16 %v982, %v981
      %v1022 = vpack.c.b16 %v984, %v983
      %v1023 = vpack.c.b16 %v986, %v985
      %v1024 = vpack.c.b16 %v988, %v987
      %v1025 = vpack.c.b16 %v990, %v989
      %v1026 = vpack.c.b16 %v992, %v991
      %v1027 = vpack.c.b16 %v994, %v993
      %v1028 = vpack.c.b16 %v996, %v995
      %v1029 = vpack.c.b16 %v998, %v997
      %v1030 = vpack.c.b16 %v1000, %v999
      %v1031 = vpack.c.b16 %v1002, %v1001
      %v1032 = vpack.c.b16 %v1004, %v1003
      %v1033 = vpack.c.b16 %v1006, %v1005
      %v1034 = vpack.c.b16 %v1008, %v1007
      %v1035 = vpack.c.b16 %v1010, %v1009
      %v1036 = vpack.c.b16 %v1012, %v1011
      %1061 = vmatprep.subr.bf16.mxu0 0
      %1062 = vmatpush1.bf16.msra.mxu0 %v1013
      %1063 = vmatprep.subr.bf16.mxu0 0
      %1064 = vmatpush1.bf16.msra.mxu0 %v1014
      %1065 = vmatprep.subr.bf16.mxu0 0
      %1066 = vmatpush1.bf16.msra.mxu0 %v1015
      %1067 = vmatprep.subr.bf16.mxu0 0
      %1068 = vmatpush1.bf16.msra.mxu0 %v1016
      %1069 = vmatprep.subr.bf16.mxu0 0
      %1070 = vmatpush1.bf16.msra.mxu0 %v1017
      %1071 = vmatprep.subr.bf16.mxu0 0
      %1072 = vmatpush1.bf16.msra.mxu0 %v1018
      %1073 = vmatprep.subr.bf16.mxu0 0
      %1074 = vmatpush1.bf16.msra.mxu0 %v1019
      %1075 = vmatprep.subr.bf16.mxu0 0
      %1076 = vmatpush1.bf16.msra.mxu0 %v1020
      %1077 = vmatprep.subr.bf16.mxu0 0
      %1078 = vmatpush1.bf16.msra.mxu0 %v1021
      %1079 = vmatprep.subr.bf16.mxu0 0
      %1080 = vmatpush1.bf16.msra.mxu0 %v1022
      %1081 = vmatprep.subr.bf16.mxu0 0
      %1082 = vmatpush1.bf16.msra.mxu0 %v1023
      %1083 = vmatprep.subr.bf16.mxu0 0
      %1084 = vmatpush1.bf16.msra.mxu0 %v1024
      %1085 = vmatprep.subr.bf16.mxu0 0
      %1086 = vmatpush1.bf16.msra.mxu0 %v1025
      %1087 = vmatprep.subr.bf16.mxu0 0
      %1088 = vmatpush1.bf16.msra.mxu0 %v1026
      %1089 = vmatprep.subr.bf16.mxu0 0
      %1090 = vmatpush1.bf16.msra.mxu0 %v1027
      %1091 = vmatprep.subr.bf16.mxu0 0
      %1092 = vmatpush1.bf16.msra.mxu0 %v1028
      %1093 = vmatprep.mubr.bf16.mxu0 %v915
      %1094 = vmatmul.mubr.bf16.gmra.mrb[0].mxu0 %v914
      %v1095 = vpop.f32.mrb[0].mxu0
      %v1096 = vadd.f32 0.0, %v1095
      %v1097 = vpop.f32.mrb[0].mxu0
      %v1098 = vpop.f32.mrb[0].mxu0
      %v1099 = vpop.f32.mrb[0].mxu0
      %1100 = vdwg.mxu0
      %1101 = vmatprep.subr.bf16.mxu0 0
      %1102 = vmatpush1.bf16.msra.mxu0 %v1029
      %1103 = vmatprep.subr.bf16.mxu0 0
      %1104 = vmatpush1.bf16.msra.mxu0 %v1030
      %1105 = vmatprep.subr.bf16.mxu0 0
      %1106 = vmatpush1.bf16.msra.mxu0 %v1031
      %1107 = vmatprep.subr.bf16.mxu0 0
      %1108 = vmatpush1.bf16.msra.mxu0 %v1032
      %1109 = vmatprep.subr.bf16.mxu0 0
      %1110 = vmatpush1.bf16.msra.mxu0 %v1033
      %1111 = vmatprep.subr.bf16.mxu0 0
      %1112 = vmatpush1.bf16.msra.mxu0 %v1034
      %1113 = vmatprep.subr.bf16.mxu0 0
      %1114 = vmatpush1.bf16.msra.mxu0 %v1035
      %1115 = vmatprep.subr.bf16.mxu0 0
      %1116 = vmatpush1.bf16.msra.mxu0 %v1036
      %1117 = vmatprep.subr.bf16.mxu0 0
      %1118 = vmatpush1.bf16.msra.mxu0 0
      %1119 = vmatprep.subr.bf16.mxu0 0
      %1120 = vmatpush1.bf16.msra.mxu0 0
      %1121 = vmatprep.subr.bf16.mxu0 0
      %1122 = vmatpush1.bf16.msra.mxu0 0
      %1123 = vmatprep.subr.bf16.mxu0 0
      %1124 = vmatpush1.bf16.msra.mxu0 0
      %1125 = vmatprep.subr.bf16.mxu0 0
      %1126 = vmatpush1.bf16.msra.mxu0 0
      %1127 = vmatprep.subr.bf16.mxu0 0
      %1128 = vmatpush1.bf16.msra.mxu0 0
      %1129 = vmatprep.subr.bf16.mxu0 0
      %1130 = vmatpush1.bf16.msra.mxu0 0
      %1131 = vmatprep.subr.bf16.mxu0 0
      %1132 = vmatpush1.bf16.msra.mxu0 0
      %1133 = vmatprep.mubr.bf16.mxu0 0
      %1134 = vmatmul.mubr.bf16.gmra.mrb[0].mxu0 %v916
      %v1135 = vpop.f32.mrb[0].mxu0
      %v1136 = vadd.f32 %v1096, %v1135
      %v1137 = vpop.f32.mrb[0].mxu0
      %v1138 = vpop.f32.mrb[0].mxu0
      %v1139 = vpop.f32.mrb[0].mxu0
      %1140 = vdwg.mxu0
      %v1141 = vld [vmem:[%s4 + $0x2] sm:$0x1]
      %v1142 = vlaneseq
      %v1143 = vshrl.u32 %v1142, 7
      %v1144 = vsub.s32 0, %v1143
      %v1145 = vrot.slane %v1141, %v1144
      %v1146 = vmul.f32 %v1136, %v1145
      %v1147 = vld [vmem:[%s5 + $0x2] sm:$0x1]
      %v1148 = vlaneseq
      %v1149 = vshrl.u32 %v1148, 7
      %v1150 = vsub.s32 0, %v1149
      %v1151 = vrot.slane %v1147, %v1150
      %v1152 = vadd.f32 %v1146, %v1151
      %v1153 = vadd.f32 %v1152, %v565
      %v1154 = vmax.f32 %v1153, 0.0
      %v1155 = vpack.c.bf16 %v1154, %v1154
      %1156 = vst [vmem:[%s263] sm:$0xf] %v1155
      %p1157 = scmp.lt.s32.totalorder %s17, 1
      %s1158 = scalar_select %p1157, %s17, 1
      %s1159 = smul.addr %s1158, 4
      %s1160 = scalar_lea.vmem %s6, %s1159
      // Predicated region
      $region45: #{forward.8} parent=43 // pred_check
        %p1161 = pneg %p171
      $region46: #{forward.8} parent=43 // pred_check_branch
        %1163 = sbr.rel (%p1161) target = $region48
      $region47: #{forward.8} parent=43 // pred_region
        _
      $region48: #{forward.8} parent=43 // pred_fallthru
        _
    $region44: #{forward.8} parent=5 // pred_fallthru
      _
    %p1164 = scmp.le.s32.totalorder 2, %s12
    // Predicated region
    $region49: #{forward.8} parent=5 // pred_check
      %p1165 = pneg %p1164
    $region50: #{forward.8} parent=5 // pred_check_branch
      %1167 = sbr.rel (%p1165) target = $region52
    $region51: #{forward.8} parent=5 // pred_region
      %s1168 = ssub.s32 %s12, 2
      // Predicated region
      $region53: #{forward.8} parent=51 // pred_check
        %p1169 = pneg %p177
      $region54: #{forward.8} parent=51 // pred_check_branch
        %1171 = sbr.rel (%p1169) target = $region56
      $region55: #{forward.8} parent=51 // pred_region
        %p1172 = scmp.lt.s32.totalorder %s18, 1
        %s1173 = scalar_select %p1172, %s18, 1
        %s1174 = smul.addr %s1173, 4
        %s1175 = scalar_lea.vmem %s6, %s1174
      $region56: #{forward.8} parent=51 // pred_fallthru
        _
    $region52: #{forward.8} parent=5 // pred_fallthru
      _
  $region6: #{forward.8} parent=0 // loop_footer
    %s16 = sadd.s32 1, %s12
  $region7: #{forward.8} parent=0 // loop_footer_branch
    %11 = sbr.rel target = $region3
  $region8: #{forward.8} parent=0 // loop_exit
    _

// kernel: forward.6
$region0: #{forward.6}
  #allocation0 [shape = 'u32[]', space=smem, size = 0x4, offset = 0x4, fixed_abs, tag = 'smem constant byte address 0x4 - core index']
  #allocation1 [shape = 'u32[144,128]{1,0:T(1,128)}', space=vmem, size = 0x12000, scoped, tag = 'internal scratch']
  #allocation2 [shape = 'f32[10,128]{1,0:T(8,128)}', space=vmem, size = 0x2000, scoped, tag = 'scratch operand']
  %s0 = inlined_call_operand.vmem [shape: bf16[2,8,128], index: 0, kind: input, shape index: {}]
  %s1 = inlined_call_operand.vmem [shape: bf16[384,128], index: 1, kind: input, shape index: {}]
  %s2 = inlined_call_operand.vmem [shape: bf16[384,128], index: 2, kind: input, shape index: {}]
  %s3 = inlined_call_operand.vmem [shape: f32[3,128], index: 3, kind: input, shape index: {}]
  %s4 = inlined_call_operand.vmem [shape: f32[3,128], index: 4, kind: input, shape index: {}]
  %s5 = inlined_call_operand.vmem [shape: bf16[2,8,128], index: 5, kind: output, shape index: {0}]
  %s6 = inlined_call_operand.vmem [shape: bf16[2,4,128], index: 6, kind: output, shape index: {1}]
  %7 = xla_tuple %s5, %s6
  %s8 = sld [smem:[#allocation0]]
  $region61: #{forward.6} parent=0
    _
  %s10 = ssub.s32 1, %s8
  %s11 = scalar_select 0, %s10, %s8
  loop: start=0, step=1, limit=4
  $region2: #{forward.6} parent=0 // loop_pre_header
    _
  $region3: #{forward.6} parent=0 // loop_header
    %s13 = sphi 0, %s17
    %p14 = scmp.ge.s32.totalorder %s13, 4
    %s23 = sphi 0, %s25
    %s26 = sphi 0, %s23
    %s27 = sphi 0, %s26
    %s43 = sphi 0, %s27
    %s47 = sphi 0, %s47
    %s49 = sphi 0, %s47
    %s50 = sphi 0, %s49
    %s64 = sphi 0, %s50
    %s68 = sphi 0, %s68
    %s70 = sphi 0, %s68
    %s71 = sphi 0, %s70
    %s85 = sphi 0, %s71
    %s89 = sphi 0, %s89
    %s91 = sphi 0, %s89
    %s92 = sphi 0, %s91
    %s106 = sphi 0, %s92
    %s110 = sphi 0, %s110
    %s112 = sphi 0, %s110
    %s113 = sphi 0, %s112
    %s127 = sphi 0, %s113
    %s133 = sphi 0, %s135
    %s136 = sphi 0, %s133
    %s137 = sphi 0, %s136
    %s153 = sphi 0, %s137
    %s159 = sphi 0, %s161
    %s162 = sphi 0, %s159
    %s163 = sphi 0, %s162
    %s179 = sphi 0, %s163
  $region4: #{forward.6} parent=0 // loop_header_branch
    %16 = sbr.rel (%p14) target = $region8
  $region5: #{forward.6} parent=0 // loop_body
    %s18 = ssub.s32 %s13, 1
    %s19 = ssub.s32 %s13, 2
    %s20 = sadd.s32 %s13, 1
    %s21 = ssub.s32 %s13, %s20
    %p22 = scmp.eq.s32.totalorder %s21, 0
    %s24 = sadd.s32 %s23, 1
    %s25 = scalar_select %p22, %s23, %s24
    %p28 = pneg %p22
    %p29 = scmp.eq.s32.totalorder %s13, 1
    %p30 = por %p28, %p29
    %p31 = scmp.ne.s32.totalorder %s23, %s26
    %p32 = scmp.eq.s32.totalorder %s13, 0
    %p33 = por %p31, %p32
    %p34 = scmp.ne.s32.totalorder %s23, %s26
    %p35 = scmp.eq.s32.totalorder %s18, 1
    %p36 = por %p34, %p35
    %p37 = scmp.ne.s32.totalorder %s26, %s27
    %p38 = scmp.eq.s32.totalorder %s18, 0
    %p39 = por %p37, %p38
    %p40 = scmp.ne.s32.totalorder %s26, %s27
    %p41 = scmp.eq.s32.totalorder %s19, 1
    %p42 = por %p40, %p41
    %p44 = scmp.ne.s32.totalorder %s27, %s43
    %p45 = scmp.eq.s32.totalorder %s19, 0
    %p46 = por %p44, %p45
    %s48 = sadd.s32 %s47, 1
    %p51 = scmp.eq.s32.totalorder %s13, 1
    %p52 = scmp.ne.s32.totalorder %s47, %s49
    %p53 = scmp.eq.s32.totalorder %s13, 0
    %p54 = por %p52, %p53
    %p55 = scmp.ne.s32.totalorder %s47, %s49
    %p56 = scmp.eq.s32.totalorder %s18, 1
    %p57 = por %p55, %p56
    %p58 = scmp.ne.s32.totalorder %s49, %s50
    %p59 = scmp.eq.s32.totalorder %s18, 0
    %p60 = por %p58, %p59
    %p61 = scmp.ne.s32.totalorder %s49, %s50
    %p62 = scmp.eq.s32.totalorder %s19, 1
    %p63 = por %p61, %p62
    %p65 = scmp.ne.s32.totalorder %s50, %s64
    %p66 = scmp.eq.s32.totalorder %s19, 0
    %p67 = por %p65, %p66
    %s69 = sadd.s32 %s68, 1
    %p72 = scmp.eq.s32.totalorder %s13, 1
    %p73 = scmp.ne.s32.totalorder %s68, %s70
    %p74 = scmp.eq.s32.totalorder %s13, 0
    %p75 = por %p73, %p74
    %p76 = scmp.ne.s32.totalorder %s68, %s70
    %p77 = scmp.eq.s32.totalorder %s18, 1
    %p78 = por %p76, %p77
    %p79 = scmp.ne.s32.totalorder %s70, %s71
    %p80 = scmp.eq.s32.totalorder %s18, 0
    %p81 = por %p79, %p80
    %p82 = scmp.ne.s32.totalorder %s70, %s71
    %p83 = scmp.eq.s32.totalorder %s19, 1
    %p84 = por %p82, %p83
    %p86 = scmp.ne.s32.totalorder %s71, %s85
    %p87 = scmp.eq.s32.totalorder %s19, 0
    %p88 = por %p86, %p87
    %s90 = sadd.s32 %s89, 1
    %p93 = scmp.eq.s32.totalorder %s13, 1
    %p94 = scmp.ne.s32.totalorder %s89, %s91
    %p95 = scmp.eq.s32.totalorder %s13, 0
    %p96 = por %p94, %p95
    %p97 = scmp.ne.s32.totalorder %s89, %s91
    %p98 = scmp.eq.s32.totalorder %s18, 1
    %p99 = por %p97, %p98
    %p100 = scmp.ne.s32.totalorder %s91, %s92
    %p101 = scmp.eq.s32.totalorder %s18, 0
    %p102 = por %p100, %p101
    %p103 = scmp.ne.s32.totalorder %s91, %s92
    %p104 = scmp.eq.s32.totalorder %s19, 1
    %p105 = por %p103, %p104
    %p107 = scmp.ne.s32.totalorder %s92, %s106
    %p108 = scmp.eq.s32.totalorder %s19, 0
    %p109 = por %p107, %p108
    %s111 = sadd.s32 %s110, 1
    %p114 = scmp.eq.s32.totalorder %s13, 1
    %p115 = scmp.ne.s32.totalorder %s110, %s112
    %p116 = scmp.eq.s32.totalorder %s13, 0
    %p117 = por %p115, %p116
    %p118 = scmp.ne.s32.totalorder %s110, %s112
    %p119 = scmp.eq.s32.totalorder %s18, 1
    %p120 = por %p118, %p119
    %p121 = scmp.ne.s32.totalorder %s112, %s113
    %p122 = scmp.eq.s32.totalorder %s18, 0
    %p123 = por %p121, %p122
    %p124 = scmp.ne.s32.totalorder %s112, %s113
    %p125 = scmp.eq.s32.totalorder %s19, 1
    %p126 = por %p124, %p125
    %p128 = scmp.ne.s32.totalorder %s113, %s127
    %p129 = scmp.eq.s32.totalorder %s19, 0
    %p130 = por %p128, %p129
    %s131 = ssub.s32 %s13, %s20
    %p132 = scmp.eq.s32.totalorder %s131, 0
    %s134 = sadd.s32 %s133, 1
    %s135 = scalar_select %p132, %s133, %s134
    %p138 = pneg %p132
    %p139 = scmp.eq.s32.totalorder %s13, 1
    %p140 = por %p138, %p139
    %p141 = scmp.ne.s32.totalorder %s133, %s136
    %p142 = scmp.eq.s32.totalorder %s13, 0
    %p143 = por %p141, %p142
    %p144 = scmp.ne.s32.totalorder %s133, %s136
    %p145 = scmp.eq.s32.totalorder %s18, 1
    %p146 = por %p144, %p145
    %p147 = scmp.ne.s32.totalorder %s136, %s137
    %p148 = scmp.eq.s32.totalorder %s18, 0
    %p149 = por %p147, %p148
    %p150 = scmp.ne.s32.totalorder %s136, %s137
    %p151 = scmp.eq.s32.totalorder %s19, 1
    %p152 = por %p150, %p151
    %p154 = scmp.ne.s32.totalorder %s137, %s153
    %p155 = scmp.eq.s32.totalorder %s19, 0
    %p156 = por %p154, %p155
    %s157 = ssub.s32 %s13, %s20
    %p158 = scmp.eq.s32.totalorder %s157, 0
    %s160 = sadd.s32 %s159, 1
    %s161 = scalar_select %p158, %s159, %s160
    %p164 = pneg %p158
    %p165 = scmp.eq.s32.totalorder %s13, 1
    %p166 = por %p164, %p165
    %p167 = scmp.ne.s32.totalorder %s159, %s162
    %p168 = scmp.eq.s32.totalorder %s13, 0
    %p169 = por %p167, %p168
    %p170 = scmp.ne.s32.totalorder %s159, %s162
    %p171 = scmp.eq.s32.totalorder %s18, 1
    %p172 = por %p170, %p171
    %p173 = scmp.ne.s32.totalorder %s162, %s163
    %p174 = scmp.eq.s32.totalorder %s18, 0
    %p175 = por %p173, %p174
    %p176 = scmp.ne.s32.totalorder %s162, %s163
    %p177 = scmp.eq.s32.totalorder %s19, 1
    %p178 = por %p176, %p177
    %p180 = scmp.ne.s32.totalorder %s163, %s179
    %p181 = scmp.eq.s32.totalorder %s19, 0
    %p182 = por %p180, %p181
    %p183 = scmp.le.s32.totalorder 1, %s13
    %p184 = scmp.lt.s32.totalorder %s13, 3
    %p185 = pnand %p183, %p184
    %p186 = pneg %p185
    // Predicated region
    $region9: #{forward.6} parent=5 // pred_check
      _
    $region10: #{forward.6} parent=5 // pred_check_branch
      %188 = sbr.rel (%p185) target = $region12
    $region11: #{forward.6} parent=5 // pred_region
      %s189 = ssub.s32 %s13, 1
      // Predicated region
      $region13: #{forward.6} parent=11 // pred_check
        %p190 = pneg %p60
      $region14: #{forward.6} parent=11 // pred_check_branch
        %192 = sbr.rel (%p190) target = $region16
      $region15: #{forward.6} parent=11 // pred_region
        _
      $region16: #{forward.6} parent=11 // pred_fallthru
        _
      // Predicated region
      $region17: #{forward.6} parent=11 // pred_check
        %p193 = pneg %p81
      $region18: #{forward.6} parent=11 // pred_check_branch
        %195 = sbr.rel (%p193) target = $region20
      $region19: #{forward.6} parent=11 // pred_region
        _
      $region20: #{forward.6} parent=11 // pred_fallthru
        _
      // Predicated region
      $region21: #{forward.6} parent=11 // pred_check
        %p196 = pneg %p102
      $region22: #{forward.6} parent=11 // pred_check_branch
        %198 = sbr.rel (%p196) target = $region24
      $region23: #{forward.6} parent=11 // pred_region
        _
      $region24: #{forward.6} parent=11 // pred_fallthru
        _
      // Predicated region
      $region25: #{forward.6} parent=11 // pred_check
        %p199 = pneg %p123
      $region26: #{forward.6} parent=11 // pred_check_branch
        %201 = sbr.rel (%p199) target = $region28
      $region27: #{forward.6} parent=11 // pred_region
        _
      $region28: #{forward.6} parent=11 // pred_fallthru
        _
    $region12: #{forward.6} parent=5 // pred_fallthru
      _
    %p202 = scmp.lt.s32.totalorder %s13, 2
    // Predicated region
    $region29: #{forward.6} parent=5 // pred_check
      %p203 = pneg %p202
    $region30: #{forward.6} parent=5 // pred_check_branch
      %205 = sbr.rel (%p203) target = $region32
    $region31: #{forward.6} parent=5 // pred_region
      // Predicated region
      $region33: #{forward.6} parent=31 // pred_check
        %p206 = pneg %p33
      $region34: #{forward.6} parent=31 // pred_check_branch
        %208 = sbr.rel (%p206) target = $region36
      $region35: #{forward.6} parent=31 // pred_region
        %p209 = scmp.lt.s32.totalorder %s13, 1
        %s210 = scalar_select %p209, %s13, 1
        %s211 = smul.addr %s210, 4
        %s212 = scalar_lea.vmem %s0, %s211
      $region36: #{forward.6} parent=31 // pred_fallthru
        _
    $region32: #{forward.6} parent=5 // pred_fallthru
      _
    %p213 = scmp.le.s32.totalorder 1, %s13
    %p214 = scmp.lt.s32.totalorder %s13, 3
    %p215 = pnand %p213, %p214
    %p216 = pneg %p215
    // Predicated region
    $region37: #{forward.6} parent=5 // pred_check
      _
    $region38: #{forward.6} parent=5 // pred_check_branch
      %218 = sbr.rel (%p215) target = $region40
    $region39: #{forward.6} parent=5 // pred_region
      %s219 = ssub.s32 %s13, 1
      %p220 = scmp.lt.s32.totalorder %s18, 1
      %s221 = scalar_select %p220, %s18, 1
      %s222 = smul.addr %s221, 4
      %s223 = scalar_lea.vmem %s0, %s222
      %p224 = pneg %p39
      %p225 = pneg %p36
      %p226 = pneg %p60
      %p227 = pneg %p57
      %p228 = pneg %p81
      %p229 = pneg %p78
      %p230 = pneg %p102
      %p231 = pneg %p99
      %p232 = pneg %p123
      %p233 = pneg %p120
      %p234 = pneg %p149
      %p235 = pneg %p146
      %p236 = scmp.lt.s32.totalorder %s18, 1
      %s237 = scalar_select %p236, %s18, 1
      %s238 = smul.addr %s237, 4
      %s239 = scalar_lea.vmem %s5, %s238
      %p240 = pneg %p175
      %p241 = pneg %p172
      %p242 = scmp.lt.s32.totalorder %s18, 1
      %s243 = scalar_select %p242, %s18, 1
      %s244 = smul.addr %s243, 2
      %s245 = scalar_lea.vmem %s6, %s244
      %p246 = scmp.lt.s32.totalorder %s18, 1
      %s247 = scalar_select %p246, %s18, 1
      %s248 = smul.addr %s247, 4
      %s249 = scalar_lea.vmem %s0, %s248
      %p250 = scmp.lt.s32.totalorder %s18, 1
      %s251 = scalar_select %p250, %s18, 1
      %s252 = smul.addr %s251, 4
      %s253 = scalar_lea.vmem %s5, %s252
      %p254 = scmp.lt.s32.totalorder %s18, 1
      %s255 = scalar_select %p254, %s18, 1
      %s256 = smul.addr %s255, 2
      %s257 = scalar_lea.vmem %s6, %s256
      %v259 = vld [vmem:[%s249] sm:$0xf]
      %v260 = vunpack.c.l.bf16 %v259
      %v261 = vld [vmem:[%s1] sm:$0xf]
      %v262 = vld [vmem:[%s1 + $0x4] sm:$0xf]
      %v263 = vld [vmem:[%s1 + $0x8] sm:$0xf]
      %v264 = vld [vmem:[%s1 + $0xc] sm:$0xf]
      %v265 = vld [vmem:[%s1 + $0x10] sm:$0xf]
      %v266 = vld [vmem:[%s1 + $0x14] sm:$0xf]
      %v267 = vld [vmem:[%s1 + $0x18] sm:$0xf]
      %v268 = vld [vmem:[%s1 + $0x1c] sm:$0xf]
      %v269 = vld [vmem:[%s1 + $0x20] sm:$0xf]
      %v270 = vld [vmem:[%s1 + $0x24] sm:$0xf]
      %v271 = vld [vmem:[%s1 + $0x28] sm:$0xf]
      %v272 = vld [vmem:[%s1 + $0x2c] sm:$0xf]
      %v273 = vld [vmem:[%s1 + $0x30] sm:$0xf]
      %v274 = vld [vmem:[%s1 + $0x34] sm:$0xf]
      %v275 = vld [vmem:[%s1 + $0x38] sm:$0xf]
      %v276 = vld [vmem:[%s1 + $0x3c] sm:$0xf]
      %v277 = vld [vmem:[%s1 + $0x40] sm:$0xf]
      %v278 = vld [vmem:[%s1 + $0x44] sm:$0xf]
      %v279 = vld [vmem:[%s1 + $0x48] sm:$0xf]
      %v280 = vld [vmem:[%s1 + $0x4c] sm:$0xf]
      %v281 = vld [vmem:[%s1 + $0x50] sm:$0xf]
      %v282 = vld [vmem:[%s1 + $0x54] sm:$0xf]
      %v283 = vld [vmem:[%s1 + $0x58] sm:$0xf]
      %v284 = vld [vmem:[%s1 + $0x5c] sm:$0xf]
      %v285 = vld [vmem:[%s1 + $0x60] sm:$0xf]
      %v286 = vld [vmem:[%s1 + $0x64] sm:$0xf]
      %v287 = vld [vmem:[%s1 + $0x68] sm:$0xf]
      %v288 = vld [vmem:[%s1 + $0x6c] sm:$0xf]
      %v289 = vld [vmem:[%s1 + $0x70] sm:$0xf]
      %v290 = vld [vmem:[%s1 + $0x74] sm:$0xf]
      %v291 = vld [vmem:[%s1 + $0x78] sm:$0xf]
      %v292 = vld [vmem:[%s1 + $0x7c] sm:$0xf]
      %v293 = vld [vmem:[%s1 + $0x80] sm:$0xf]
      %v294 = vld [vmem:[%s1 + $0x84] sm:$0xf]
      %v295 = vld [vmem:[%s1 + $0x88] sm:$0xf]
      %v296 = vld [vmem:[%s1 + $0x8c] sm:$0xf]
      %v297 = vld [vmem:[%s1 + $0x90] sm:$0xf]
      %v298 = vld [vmem:[%s1 + $0x94] sm:$0xf]
      %v299 = vld [vmem:[%s1 + $0x98] sm:$0xf]
      %v300 = vld [vmem:[%s1 + $0x9c] sm:$0xf]
      %v301 = vld [vmem:[%s1 + $0xa0] sm:$0xf]
      %v302 = vld [vmem:[%s1 + $0xa4] sm:$0xf]
      %v303 = vld [vmem:[%s1 + $0xa8] sm:$0xf]
      %v304 = vld [vmem:[%s1 + $0xac] sm:$0xf]
      %v305 = vld [vmem:[%s1 + $0xb0] sm:$0xf]
      %v306 = vld [vmem:[%s1 + $0xb4] sm:$0xf]
      %v307 = vld [vmem:[%s1 + $0xb8] sm:$0xf]
      %v308 = vld [vmem:[%s1 + $0xbc] sm:$0xf]
      %309 = vst [vmem:[#allocation2] sm:$0x1] 0.0
      %310 = vst [vmem:[#allocation2 + $0x1] sm:$0xff] %v260
      %311 = vst [vmem:[#allocation2 + $0x9] sm:$0x1] 0.0
      %v312 = vld [vmem:[#allocation2] sm:$0xff]
      %v313 = vld [vmem:[#allocation2 + $0x1] sm:$0xff]
      %v314 = vld [vmem:[#allocation2 + $0x2] sm:$0xff]
      %v315 = vpack.c.bf16 %v312, %v312
      %v316 = vpack.c.bf16 %v313, %v313
      %v317 = vpack.c.bf16 %v314, %v314
      %v366 = vunpack.c.l.b16 %v261
      %v367 = vunpack.c.l.b16 %v262
      %v368 = vunpack.c.l.b16 %v263
      %v369 = vunpack.c.l.b16 %v264
      %v370 = vunpack.c.l.b16 %v265
      %v371 = vunpack.c.l.b16 %v266
      %v372 = vunpack.c.l.b16 %v267
      %v373 = vunpack.c.l.b16 %v268
      %v374 = vunpack.c.l.b16 %v269
      %v375 = vunpack.c.l.b16 %v270
      %v376 = vunpack.c.l.b16 %v271
      %v377 = vunpack.c.l.b16 %v272
      %v378 = vunpack.c.l.b16 %v273
      %v379 = vunpack.c.l.b16 %v274
      %v380 = vunpack.c.l.b16 %v275
      %v381 = vunpack.c.l.b16 %v276
      %v382 = vunpack.c.l.b16 %v277
      %v383 = vunpack.c.l.b16 %v278
      %v384 = vunpack.c.l.b16 %v279
      %v385 = vunpack.c.l.b16 %v280
      %v386 = vunpack.c.l.b16 %v281
      %v387 = vunpack.c.l.b16 %v282
      %v388 = vunpack.c.l.b16 %v283
      %v389 = vunpack.c.l.b16 %v284
      %v390 = vunpack.c.l.b16 %v285
      %v391 = vunpack.c.l.b16 %v286
      %v392 = vunpack.c.l.b16 %v287
      %v393 = vunpack.c.l.b16 %v288
      %v394 = vunpack.c.l.b16 %v289
      %v395 = vunpack.c.l.b16 %v290
      %v396 = vunpack.c.l.b16 %v291
      %v397 = vunpack.c.l.b16 %v292
      %v398 = vunpack.c.l.b16 %v293
      %v399 = vunpack.c.l.b16 %v294
      %v400 = vunpack.c.l.b16 %v295
      %v401 = vunpack.c.l.b16 %v296
      %v402 = vunpack.c.l.b16 %v297
      %v403 = vunpack.c.l.b16 %v298
      %v404 = vunpack.c.l.b16 %v299
      %v405 = vunpack.c.l.b16 %v300
      %v406 = vunpack.c.l.b16 %v301
      %v407 = vunpack.c.l.b16 %v302
      %v408 = vunpack.c.l.b16 %v303
      %v409 = vunpack.c.l.b16 %v304
      %v410 = vunpack.c.l.b16 %v305
      %v411 = vunpack.c.l.b16 %v306
      %v412 = vunpack.c.l.b16 %v307
      %v413 = vunpack.c.l.b16 %v308
      %v414 = vpack.c.b16 %v367, %v366
      %v415 = vpack.c.b16 %v369, %v368
      %v416 = vpack.c.b16 %v371, %v370
      %v417 = vpack.c.b16 %v373, %v372
      %v418 = vpack.c.b16 %v375, %v374
      %v419 = vpack.c.b16 %v377, %v376
      %v420 = vpack.c.b16 %v379, %v378
      %v421 = vpack.c.b16 %v381, %v380
      %v422 = vpack.c.b16 %v383, %v382
      %v423 = vpack.c.b16 %v385, %v384
      %v424 = vpack.c.b16 %v387, %v386
      %v425 = vpack.c.b16 %v389, %v388
      %v426 = vpack.c.b16 %v391, %v390
      %v427 = vpack.c.b16 %v393, %v392
      %v428 = vpack.c.b16 %v395, %v394
      %v429 = vpack.c.b16 %v397, %v396
      %v430 = vpack.c.b16 %v399, %v398
      %v431 = vpack.c.b16 %v401, %v400
      %v432 = vpack.c.b16 %v403, %v402
      %v433 = vpack.c.b16 %v405, %v404
      %v434 = vpack.c.b16 %v407, %v406
      %v435 = vpack.c.b16 %v409, %v408
      %v436 = vpack.c.b16 %v411, %v410
      %v437 = vpack.c.b16 %v413, %v412
      %462 = vmatprep.subr.bf16.mxu0 0
      %463 = vmatpush1.bf16.msra.mxu0 %v414
      %464 = vmatprep.subr.bf16.mxu0 0
      %465 = vmatpush1.bf16.msra.mxu0 %v415
      %466 = vmatprep.subr.bf16.mxu0 0
      %467 = vmatpush1.bf16.msra.mxu0 %v416
      %468 = vmatprep.subr.bf16.mxu0 0
      %469 = vmatpush1.bf16.msra.mxu0 %v417
      %470 = vmatprep.subr.bf16.mxu0 0
      %471 = vmatpush1.bf16.msra.mxu0 %v418
      %472 = vmatprep.subr.bf16.mxu0 0
      %473 = vmatpush1.bf16.msra.mxu0 %v419
      %474 = vmatprep.subr.bf16.mxu0 0
      %475 = vmatpush1.bf16.msra.mxu0 %v420
      %476 = vmatprep.subr.bf16.mxu0 0
      %477 = vmatpush1.bf16.msra.mxu0 %v421
      %478 = vmatprep.subr.bf16.mxu0 0
      %479 = vmatpush1.bf16.msra.mxu0 %v422
      %480 = vmatprep.subr.bf16.mxu0 0
      %481 = vmatpush1.bf16.msra.mxu0 %v423
      %482 = vmatprep.subr.bf16.mxu0 0
      %483 = vmatpush1.bf16.msra.mxu0 %v424
      %484 = vmatprep.subr.bf16.mxu0 0
      %485 = vmatpush1.bf16.msra.mxu0 %v425
      %486 = vmatprep.subr.bf16.mxu0 0
      %487 = vmatpush1.bf16.msra.mxu0 %v426
      %488 = vmatprep.subr.bf16.mxu0 0
      %489 = vmatpush1.bf16.msra.mxu0 %v427
      %490 = vmatprep.subr.bf16.mxu0 0
      %491 = vmatpush1.bf16.msra.mxu0 %v428
      %492 = vmatprep.subr.bf16.mxu0 0
      %493 = vmatpush1.bf16.msra.mxu0 %v429
      %494 = vmatprep.mubr.bf16.mxu0 %v316
      %495 = vmatmul.mubr.bf16.gmra.mrb[0].mxu0 %v315
      %v496 = vpop.f32.mrb[0].mxu0
      %v497 = vadd.f32 0.0, %v496
      %v498 = vpop.f32.mrb[0].mxu0
      %v499 = vpop.f32.mrb[0].mxu0
      %v500 = vpop.f32.mrb[0].mxu0
      %501 = vdwg.mxu0
      %502 = vmatprep.subr.bf16.mxu0 0
      %503 = vmatpush1.bf16.msra.mxu0 %v430
      %504 = vmatprep.subr.bf16.mxu0 0
      %505 = vmatpush1.bf16.msra.mxu0 %v431
      %506 = vmatprep.subr.bf16.mxu0 0
      %507 = vmatpush1.bf16.msra.mxu0 %v432
      %508 = vmatprep.subr.bf16.mxu0 0
      %509 = vmatpush1.bf16.msra.mxu0 %v433
      %510 = vmatprep.subr.bf16.mxu0 0
      %511 = vmatpush1.bf16.msra.mxu0 %v434
      %512 = vmatprep.subr.bf16.mxu0 0
      %513 = vmatpush1.bf16.msra.mxu0 %v435
      %514 = vmatprep.subr.bf16.mxu0 0
      %515 = vmatpush1.bf16.msra.mxu0 %v436
      %516 = vmatprep.subr.bf16.mxu0 0
      %517 = vmatpush1.bf16.msra.mxu0 %v437
      %518 = vmatprep.subr.bf16.mxu0 0
      %519 = vmatpush1.bf16.msra.mxu0 0
      %520 = vmatprep.subr.bf16.mxu0 0
      %521 = vmatpush1.bf16.msra.mxu0 0
      %522 = vmatprep.subr.bf16.mxu0 0
      %523 = vmatpush1.bf16.msra.mxu0 0
      %524 = vmatprep.subr.bf16.mxu0 0
      %525 = vmatpush1.bf16.msra.mxu0 0
      %526 = vmatprep.subr.bf16.mxu0 0
      %527 = vmatpush1.bf16.msra.mxu0 0
      %528 = vmatprep.subr.bf16.mxu0 0
      %529 = vmatpush1.bf16.msra.mxu0 0
      %530 = vmatprep.subr.bf16.mxu0 0
      %531 = vmatpush1.bf16.msra.mxu0 0
      %532 = vmatprep.subr.bf16.mxu0 0
      %533 = vmatpush1.bf16.msra.mxu0 0
      %534 = vmatprep.mubr.bf16.mxu0 0
      %535 = vmatmul.mubr.bf16.gmra.mrb[0].mxu0 %v317
      %v536 = vpop.f32.mrb[0].mxu0
      %v537 = vadd.f32 %v497, %v536
      %v538 = vpop.f32.mrb[0].mxu0
      %v539 = vpop.f32.mrb[0].mxu0
      %v540 = vpop.f32.mrb[0].mxu0
      %541 = vdwg.mxu0
      %v542 = vld [vmem:[%s3] sm:$0x1]
      %v543 = vlaneseq
      %v544 = vshrl.u32 %v543, 7
      %v545 = vsub.s32 0, %v544
      %v546 = vrot.slane %v542, %v545
      %v547 = vmul.f32 %v537, %v546
      %v548 = vld [vmem:[%s4] sm:$0x1]
      %v549 = vlaneseq
      %v550 = vshrl.u32 %v549, 7
      %v551 = vsub.s32 0, %v550
      %v552 = vrot.slane %v548, %v551
      %v553 = vadd.f32 %v547, %v552
      %v554 = vmax.f32 %v553, 0.0
      %v555 = vld [vmem:[%s1] sm:$0xf]
      %v556 = vld [vmem:[%s1 + $0x4] sm:$0xf]
      %v557 = vld [vmem:[%s1 + $0x8] sm:$0xf]
      %v558 = vld [vmem:[%s1 + $0xc] sm:$0xf]
      %v559 = vld [vmem:[%s1 + $0x10] sm:$0xf]
      %v560 = vld [vmem:[%s1 + $0x14] sm:$0xf]
      %v561 = vld [vmem:[%s1 + $0x18] sm:$0xf]
      %v562 = vld [vmem:[%s1 + $0x1c] sm:$0xf]
      %v563 = vld [vmem:[%s1 + $0x20] sm:$0xf]
      %v564 = vld [vmem:[%s1 + $0x24] sm:$0xf]
      %v565 = vld [vmem:[%s1 + $0x28] sm:$0xf]
      %v566 = vld [vmem:[%s1 + $0x2c] sm:$0xf]
      %v567 = vld [vmem:[%s1 + $0x30] sm:$0xf]
      %v568 = vld [vmem:[%s1 + $0x34] sm:$0xf]
      %v569 = vld [vmem:[%s1 + $0x38] sm:$0xf]
      %v570 = vld [vmem:[%s1 + $0x3c] sm:$0xf]
      %v571 = vld [vmem:[%s1 + $0x40] sm:$0xf]
      %v572 = vld [vmem:[%s1 + $0x44] sm:$0xf]
      %v573 = vld [vmem:[%s1 + $0x48] sm:$0xf]
      %v574 = vld [vmem:[%s1 + $0x4c] sm:$0xf]
      %v575 = vld [vmem:[%s1 + $0x50] sm:$0xf]
      %v576 = vld [vmem:[%s1 + $0x54] sm:$0xf]
      %v577 = vld [vmem:[%s1 + $0x58] sm:$0xf]
      %v578 = vld [vmem:[%s1 + $0x5c] sm:$0xf]
      %v579 = vld [vmem:[%s1 + $0x60] sm:$0xf]
      %v580 = vld [vmem:[%s1 + $0x64] sm:$0xf]
      %v581 = vld [vmem:[%s1 + $0x68] sm:$0xf]
      %v582 = vld [vmem:[%s1 + $0x6c] sm:$0xf]
      %v583 = vld [vmem:[%s1 + $0x70] sm:$0xf]
      %v584 = vld [vmem:[%s1 + $0x74] sm:$0xf]
      %v585 = vld [vmem:[%s1 + $0x78] sm:$0xf]
      %v586 = vld [vmem:[%s1 + $0x7c] sm:$0xf]
      %v587 = vld [vmem:[%s1 + $0x80] sm:$0xf]
      %v588 = vld [vmem:[%s1 + $0x84] sm:$0xf]
      %v589 = vld [vmem:[%s1 + $0x88] sm:$0xf]
      %v590 = vld [vmem:[%s1 + $0x8c] sm:$0xf]
      %v591 = vld [vmem:[%s1 + $0x90] sm:$0xf]
      %v592 = vld [vmem:[%s1 + $0x94] sm:$0xf]
      %v593 = vld [vmem:[%s1 + $0x98] sm:$0xf]
      %v594 = vld [vmem:[%s1 + $0x9c] sm:$0xf]
      %v595 = vld [vmem:[%s1 + $0xa0] sm:$0xf]
      %v596 = vld [vmem:[%s1 + $0xa4] sm:$0xf]
      %v597 = vld [vmem:[%s1 + $0xa8] sm:$0xf]
      %v598 = vld [vmem:[%s1 + $0xac] sm:$0xf]
      %v599 = vld [vmem:[%s1 + $0xb0] sm:$0xf]
      %v600 = vld [vmem:[%s1 + $0xb4] sm:$0xf]
      %v601 = vld [vmem:[%s1 + $0xb8] sm:$0xf]
      %v602 = vld [vmem:[%s1 + $0xbc] sm:$0xf]
      %603 = vst [vmem:[#allocation2] sm:$0x1] 0.0
      %604 = vst [vmem:[#allocation2 + $0x1] sm:$0xff] %v554
      %605 = vst [vmem:[#allocation2 + $0x9] sm:$0x1] 0.0
      %v606 = vld [vmem:[#allocation2] sm:$0xff]
      %v607 = vld [vmem:[#allocation2 + $0x1] sm:$0xff]
      %v608 = vld [vmem:[#allocation2 + $0x2] sm:$0xff]
      %v609 = vpack.c.bf16 %v606, %v606
      %v610 = vpack.c.bf16 %v607, %v607
      %v611 = vpack.c.bf16 %v608, %v608
      %v660 = vunpack.c.l.b16 %v555
      %v661 = vunpack.c.l.b16 %v556
      %v662 = vunpack.c.l.b16 %v557
      %v663 = vunpack.c.l.b16 %v558
      %v664 = vunpack.c.l.b16 %v559
      %v665 = vunpack.c.l.b16 %v560
      %v666 = vunpack.c.l.b16 %v561
      %v667 = vunpack.c.l.b16 %v562
      %v668 = vunpack.c.l.b16 %v563
      %v669 = vunpack.c.l.b16 %v564
      %v670 = vunpack.c.l.b16 %v565
      %v671 = vunpack.c.l.b16 %v566
      %v672 = vunpack.c.l.b16 %v567
      %v673 = vunpack.c.l.b16 %v568
      %v674 = vunpack.c.l.b16 %v569
      %v675 = vunpack.c.l.b16 %v570
      %v676 = vunpack.c.l.b16 %v571
      %v677 = vunpack.c.l.b16 %v572
      %v678 = vunpack.c.l.b16 %v573
      %v679 = vunpack.c.l.b16 %v574
      %v680 = vunpack.c.l.b16 %v575
      %v681 = vunpack.c.l.b16 %v576
      %v682 = vunpack.c.l.b16 %v577
      %v683 = vunpack.c.l.b16 %v578
      %v684 = vunpack.c.l.b16 %v579
      %v685 = vunpack.c.l.b16 %v580
      %v686 = vunpack.c.l.b16 %v581
      %v687 = vunpack.c.l.b16 %v582
      %v688 = vunpack.c.l.b16 %v583
      %v689 = vunpack.c.l.b16 %v584
      %v690 = vunpack.c.l.b16 %v585
      %v691 = vunpack.c.l.b16 %v586
      %v692 = vunpack.c.l.b16 %v587
      %v693 = vunpack.c.l.b16 %v588
      %v694 = vunpack.c.l.b16 %v589
      %v695 = vunpack.c.l.b16 %v590
      %v696 = vunpack.c.l.b16 %v591
      %v697 = vunpack.c.l.b16 %v592
      %v698 = vunpack.c.l.b16 %v593
      %v699 = vunpack.c.l.b16 %v594
      %v700 = vunpack.c.l.b16 %v595
      %v701 = vunpack.c.l.b16 %v596
      %v702 = vunpack.c.l.b16 %v597
      %v703 = vunpack.c.l.b16 %v598
      %v704 = vunpack.c.l.b16 %v599
      %v705 = vunpack.c.l.b16 %v600
      %v706 = vunpack.c.l.b16 %v601
      %v707 = vunpack.c.l.b16 %v602
      %v708 = vpack.c.b16 %v661, %v660
      %v709 = vpack.c.b16 %v663, %v662
      %v710 = vpack.c.b16 %v665, %v664
      %v711 = vpack.c.b16 %v667, %v666
      %v712 = vpack.c.b16 %v669, %v668
      %v713 = vpack.c.b16 %v671, %v670
      %v714 = vpack.c.b16 %v673, %v672
      %v715 = vpack.c.b16 %v675, %v674
      %v716 = vpack.c.b16 %v677, %v676
      %v717 = vpack.c.b16 %v679, %v678
      %v718 = vpack.c.b16 %v681, %v680
      %v719 = vpack.c.b16 %v683, %v682
      %v720 = vpack.c.b16 %v685, %v684
      %v721 = vpack.c.b16 %v687, %v686
      %v722 = vpack.c.b16 %v689, %v688
      %v723 = vpack.c.b16 %v691, %v690
      %v724 = vpack.c.b16 %v693, %v692
      %v725 = vpack.c.b16 %v695, %v694
      %v726 = vpack.c.b16 %v697, %v696
      %v727 = vpack.c.b16 %v699, %v698
      %v728 = vpack.c.b16 %v701, %v700
      %v729 = vpack.c.b16 %v703, %v702
      %v730 = vpack.c.b16 %v705, %v704
      %v731 = vpack.c.b16 %v707, %v706
      %756 = vmatprep.subr.bf16.mxu0 0
      %757 = vmatpush1.bf16.msra.mxu0 %v708
      %758 = vmatprep.subr.bf16.mxu0 0
      %759 = vmatpush1.bf16.msra.mxu0 %v709
      %760 = vmatprep.subr.bf16.mxu0 0
      %761 = vmatpush1.bf16.msra.mxu0 %v710
      %762 = vmatprep.subr.bf16.mxu0 0
      %763 = vmatpush1.bf16.msra.mxu0 %v711
      %764 = vmatprep.subr.bf16.mxu0 0
      %765 = vmatpush1.bf16.msra.mxu0 %v712
      %766 = vmatprep.subr.bf16.mxu0 0
      %767 = vmatpush1.bf16.msra.mxu0 %v713
      %768 = vmatprep.subr.bf16.mxu0 0
      %769 = vmatpush1.bf16.msra.mxu0 %v714
      %770 = vmatprep.subr.bf16.mxu0 0
      %771 = vmatpush1.bf16.msra.mxu0 %v715
      %772 = vmatprep.subr.bf16.mxu0 0
      %773 = vmatpush1.bf16.msra.mxu0 %v716
      %774 = vmatprep.subr.bf16.mxu0 0
      %775 = vmatpush1.bf16.msra.mxu0 %v717
      %776 = vmatprep.subr.bf16.mxu0 0
      %777 = vmatpush1.bf16.msra.mxu0 %v718
      %778 = vmatprep.subr.bf16.mxu0 0
      %779 = vmatpush1.bf16.msra.mxu0 %v719
      %780 = vmatprep.subr.bf16.mxu0 0
      %781 = vmatpush1.bf16.msra.mxu0 %v720
      %782 = vmatprep.subr.bf16.mxu0 0
      %783 = vmatpush1.bf16.msra.mxu0 %v721
      %784 = vmatprep.subr.bf16.mxu0 0
      %785 = vmatpush1.bf16.msra.mxu0 %v722
      %786 = vmatprep.subr.bf16.mxu0 0
      %787 = vmatpush1.bf16.msra.mxu0 %v723
      %788 = vmatprep.mubr.bf16.mxu0 %v610
      %789 = vmatmul.mubr.bf16.gmra.mrb[0].mxu0 %v609
      %v790 = vpop.f32.mrb[0].mxu0
      %v791 = vadd.f32 0.0, %v790
      %v792 = vpop.f32.mrb[0].mxu0
      %v793 = vpop.f32.mrb[0].mxu0
      %v794 = vpop.f32.mrb[0].mxu0
      %795 = vdwg.mxu0
      %796 = vmatprep.subr.bf16.mxu0 0
      %797 = vmatpush1.bf16.msra.mxu0 %v724
      %798 = vmatprep.subr.bf16.mxu0 0
      %799 = vmatpush1.bf16.msra.mxu0 %v725
      %800 = vmatprep.subr.bf16.mxu0 0
      %801 = vmatpush1.bf16.msra.mxu0 %v726
      %802 = vmatprep.subr.bf16.mxu0 0
      %803 = vmatpush1.bf16.msra.mxu0 %v727
      %804 = vmatprep.subr.bf16.mxu0 0
      %805 = vmatpush1.bf16.msra.mxu0 %v728
      %806 = vmatprep.subr.bf16.mxu0 0
      %807 = vmatpush1.bf16.msra.mxu0 %v729
      %808 = vmatprep.subr.bf16.mxu0 0
      %809 = vmatpush1.bf16.msra.mxu0 %v730
      %810 = vmatprep.subr.bf16.mxu0 0
      %811 = vmatpush1.bf16.msra.mxu0 %v731
      %812 = vmatprep.subr.bf16.mxu0 0
      %813 = vmatpush1.bf16.msra.mxu0 0
      %814 = vmatprep.subr.bf16.mxu0 0
      %815 = vmatpush1.bf16.msra.mxu0 0
      %816 = vmatprep.subr.bf16.mxu0 0
      %817 = vmatpush1.bf16.msra.mxu0 0
      %818 = vmatprep.subr.bf16.mxu0 0
      %819 = vmatpush1.bf16.msra.mxu0 0
      %820 = vmatprep.subr.bf16.mxu0 0
      %821 = vmatpush1.bf16.msra.mxu0 0
      %822 = vmatprep.subr.bf16.mxu0 0
      %823 = vmatpush1.bf16.msra.mxu0 0
      %824 = vmatprep.subr.bf16.mxu0 0
      %825 = vmatpush1.bf16.msra.mxu0 0
      %826 = vmatprep.subr.bf16.mxu0 0
      %827 = vmatpush1.bf16.msra.mxu0 0
      %828 = vmatprep.mubr.bf16.mxu0 0
      %829 = vmatmul.mubr.bf16.gmra.mrb[0].mxu0 %v611
      %v830 = vpop.f32.mrb[0].mxu0
      %v831 = vadd.f32 %v791, %v830
      %v832 = vpop.f32.mrb[0].mxu0
      %v833 = vpop.f32.mrb[0].mxu0
      %v834 = vpop.f32.mrb[0].mxu0
      %835 = vdwg.mxu0
      %v836 = vld [vmem:[%s3 + $0x1] sm:$0x1]
      %v837 = vlaneseq
      %v838 = vshrl.u32 %v837, 7
      %v839 = vsub.s32 0, %v838
      %v840 = vrot.slane %v836, %v839
      %v841 = vmul.f32 %v831, %v840
      %v842 = vld [vmem:[%s4 + $0x1] sm:$0x1]
      %v843 = vlaneseq
      %v844 = vshrl.u32 %v843, 7
      %v845 = vsub.s32 0, %v844
      %v846 = vrot.slane %v842, %v845
      %v847 = vadd.f32 %v841, %v846
      %v848 = vadd.f32 %v847, %v260
      %v849 = vmax.f32 %v848, 0.0
      %v850 = vld [vmem:[%s2] sm:$0xf]
      %v851 = vld [vmem:[%s2 + $0x4] sm:$0xf]
      %v852 = vld [vmem:[%s2 + $0x8] sm:$0xf]
      %v853 = vld [vmem:[%s2 + $0xc] sm:$0xf]
      %v854 = vld [vmem:[%s2 + $0x10] sm:$0xf]
      %v855 = vld [vmem:[%s2 + $0x14] sm:$0xf]
      %v856 = vld [vmem:[%s2 + $0x18] sm:$0xf]
      %v857 = vld [vmem:[%s2 + $0x1c] sm:$0xf]
      %v858 = vld [vmem:[%s2 + $0x20] sm:$0xf]
      %v859 = vld [vmem:[%s2 + $0x24] sm:$0xf]
      %v860 = vld [vmem:[%s2 + $0x28] sm:$0xf]
      %v861 = vld [vmem:[%s2 + $0x2c] sm:$0xf]
      %v862 = vld [vmem:[%s2 + $0x30] sm:$0xf]
      %v863 = vld [vmem:[%s2 + $0x34] sm:$0xf]
      %v864 = vld [vmem:[%s2 + $0x38] sm:$0xf]
      %v865 = vld [vmem:[%s2 + $0x3c] sm:$0xf]
      %v866 = vld [vmem:[%s2 + $0x40] sm:$0xf]
      %v867 = vld [vmem:[%s2 + $0x44] sm:$0xf]
      %v868 = vld [vmem:[%s2 + $0x48] sm:$0xf]
      %v869 = vld [vmem:[%s2 + $0x4c] sm:$0xf]
      %v870 = vld [vmem:[%s2 + $0x50] sm:$0xf]
      %v871 = vld [vmem:[%s2 + $0x54] sm:$0xf]
      %v872 = vld [vmem:[%s2 + $0x58] sm:$0xf]
      %v873 = vld [vmem:[%s2 + $0x5c] sm:$0xf]
      %v874 = vld [vmem:[%s2 + $0x60] sm:$0xf]
      %v875 = vld [vmem:[%s2 + $0x64] sm:$0xf]
      %v876 = vld [vmem:[%s2 + $0x68] sm:$0xf]
      %v877 = vld [vmem:[%s2 + $0x6c] sm:$0xf]
      %v878 = vld [vmem:[%s2 + $0x70] sm:$0xf]
      %v879 = vld [vmem:[%s2 + $0x74] sm:$0xf]
      %v880 = vld [vmem:[%s2 + $0x78] sm:$0xf]
      %v881 = vld [vmem:[%s2 + $0x7c] sm:$0xf]
      %v882 = vld [vmem:[%s2 + $0x80] sm:$0xf]
      %v883 = vld [vmem:[%s2 + $0x84] sm:$0xf]
      %v884 = vld [vmem:[%s2 + $0x88] sm:$0xf]
      %v885 = vld [vmem:[%s2 + $0x8c] sm:$0xf]
      %v886 = vld [vmem:[%s2 + $0x90] sm:$0xf]
      %v887 = vld [vmem:[%s2 + $0x94] sm:$0xf]
      %v888 = vld [vmem:[%s2 + $0x98] sm:$0xf]
      %v889 = vld [vmem:[%s2 + $0x9c] sm:$0xf]
      %v890 = vld [vmem:[%s2 + $0xa0] sm:$0xf]
      %v891 = vld [vmem:[%s2 + $0xa4] sm:$0xf]
      %v892 = vld [vmem:[%s2 + $0xa8] sm:$0xf]
      %v893 = vld [vmem:[%s2 + $0xac] sm:$0xf]
      %v894 = vld [vmem:[%s2 + $0xb0] sm:$0xf]
      %v895 = vld [vmem:[%s2 + $0xb4] sm:$0xf]
      %v896 = vld [vmem:[%s2 + $0xb8] sm:$0xf]
      %v897 = vld [vmem:[%s2 + $0xbc] sm:$0xf]
      %898 = vst [vmem:[#allocation2] sm:$0x1] 0.0
      %899 = vst [vmem:[#allocation2 + $0x1] sm:$0xff] %v849
      %900 = vst [vmem:[#allocation2 + $0x9] sm:$0x1] 0.0
      %v901 = vld [vmem:[#allocation2] ss:$2 sm:$0xf]
      %s902 = scalar_lea.vmem [#allocation2], 1
      %v903 = vld [vmem:[%s902] ss:$2 sm:$0xf]
      %s904 = scalar_lea.vmem [#allocation2], 2
      %v905 = vld [vmem:[%s904] ss:$2 sm:$0xf]
      %v906 = vpack.c.bf16 %v901, %v901
      %v907 = vpack.c.bf16 %v903, %v903
      %v908 = vpack.c.bf16 %v905, %v905
      %v957 = vunpack.c.l.b16 %v850
      %v958 = vunpack.c.l.b16 %v851
      %v959 = vunpack.c.l.b16 %v852
      %v960 = vunpack.c.l.b16 %v853
      %v961 = vunpack.c.l.b16 %v854
      %v962 = vunpack.c.l.b16 %v855
      %v963 = vunpack.c.l.b16 %v856
      %v964 = vunpack.c.l.b16 %v857
      %v965 = vunpack.c.l.b16 %v858
      %v966 = vunpack.c.l.b16 %v859
      %v967 = vunpack.c.l.b16 %v860
      %v968 = vunpack.c.l.b16 %v861
      %v969 = vunpack.c.l.b16 %v862
      %v970 = vunpack.c.l.b16 %v863
      %v971 = vunpack.c.l.b16 %v864
      %v972 = vunpack.c.l.b16 %v865
      %v973 = vunpack.c.l.b16 %v866
      %v974 = vunpack.c.l.b16 %v867
      %v975 = vunpack.c.l.b16 %v868
      %v976 = vunpack.c.l.b16 %v869
      %v977 = vunpack.c.l.b16 %v870
      %v978 = vunpack.c.l.b16 %v871
      %v979 = vunpack.c.l.b16 %v872
      %v980 = vunpack.c.l.b16 %v873
      %v981 = vunpack.c.l.b16 %v874
      %v982 = vunpack.c.l.b16 %v875
      %v983 = vunpack.c.l.b16 %v876
      %v984 = vunpack.c.l.b16 %v877
      %v985 = vunpack.c.l.b16 %v878
      %v986 = vunpack.c.l.b16 %v879
      %v987 = vunpack.c.l.b16 %v880
      %v988 = vunpack.c.l.b16 %v881
      %v989 = vunpack.c.l.b16 %v882
      %v990 = vunpack.c.l.b16 %v883
      %v991 = vunpack.c.l.b16 %v884
      %v992 = vunpack.c.l.b16 %v885
      %v993 = vunpack.c.l.b16 %v886
      %v994 = vunpack.c.l.b16 %v887
      %v995 = vunpack.c.l.b16 %v888
      %v996 = vunpack.c.l.b16 %v889
      %v997 = vunpack.c.l.b16 %v890
      %v998 = vunpack.c.l.b16 %v891
      %v999 = vunpack.c.l.b16 %v892
      %v1000 = vunpack.c.l.b16 %v893
      %v1001 = vunpack.c.l.b16 %v894
      %v1002 = vunpack.c.l.b16 %v895
      %v1003 = vunpack.c.l.b16 %v896
      %v1004 = vunpack.c.l.b16 %v897
      %v1005 = vpack.c.b16 %v958, %v957
      %v1006 = vpack.c.b16 %v960, %v959
      %v1007 = vpack.c.b16 %v962, %v961
      %v1008 = vpack.c.b16 %v964, %v963
      %v1009 = vpack.c.b16 %v966, %v965
      %v1010 = vpack.c.b16 %v968, %v967
      %v1011 = vpack.c.b16 %v970, %v969
      %v1012 = vpack.c.b16 %v972, %v971
      %v1013 = vpack.c.b16 %v974, %v973
      %v1014 = vpack.c.b16 %v976, %v975
      %v1015 = vpack.c.b16 %v978, %v977
      %v1016 = vpack.c.b16 %v980, %v979
      %v1017 = vpack.c.b16 %v982, %v981
      %v1018 = vpack.c.b16 %v984, %v983
      %v1019 = vpack.c.b16 %v986, %v985
      %v1020 = vpack.c.b16 %v988, %v987
      %v1021 = vpack.c.b16 %v990, %v989
      %v1022 = vpack.c.b16 %v992, %v991
      %v1023 = vpack.c.b16 %v994, %v993
      %v1024 = vpack.c.b16 %v996, %v995
      %v1025 = vpack.c.b16 %v998, %v997
      %v1026 = vpack.c.b16 %v1000, %v999
      %v1027 = vpack.c.b16 %v1002, %v1001
      %v1028 = vpack.c.b16 %v1004, %v1003
      %1053 = vmatprep.subr.bf16.mxu0 0
      %1054 = vmatpush1.bf16.msra.mxu0 %v1005
      %1055 = vmatprep.subr.bf16.mxu0 0
      %1056 = vmatpush1.bf16.msra.mxu0 %v1006
      %1057 = vmatprep.subr.bf16.mxu0 0
      %1058 = vmatpush1.bf16.msra.mxu0 %v1007
      %1059 = vmatprep.subr.bf16.mxu0 0
      %1060 = vmatpush1.bf16.msra.mxu0 %v1008
      %1061 = vmatprep.subr.bf16.mxu0 0
      %1062 = vmatpush1.bf16.msra.mxu0 %v1009
      %1063 = vmatprep.subr.bf16.mxu0 0
      %1064 = vmatpush1.bf16.msra.mxu0 %v1010
      %1065 = vmatprep.subr.bf16.mxu0 0
      %1066 = vmatpush1.bf16.msra.mxu0 %v1011
      %1067 = vmatprep.subr.bf16.mxu0 0
      %1068 = vmatpush1.bf16.msra.mxu0 %v1012
      %1069 = vmatprep.subr.bf16.mxu0 0
      %1070 = vmatpush1.bf16.msra.mxu0 %v1013
      %1071 = vmatprep.subr.bf16.mxu0 0
      %1072 = vmatpush1.bf16.msra.mxu0 %v1014
      %1073 = vmatprep.subr.bf16.mxu0 0
      %1074 = vmatpush1.bf16.msra.mxu0 %v1015
      %1075 = vmatprep.subr.bf16.mxu0 0
      %1076 = vmatpush1.bf16.msra.mxu0 %v1016
      %1077 = vmatprep.subr.bf16.mxu0 0
      %1078 = vmatpush1.bf16.msra.mxu0 %v1017
      %1079 = vmatprep.subr.bf16.mxu0 0
      %1080 = vmatpush1.bf16.msra.mxu0 %v1018
      %1081 = vmatprep.subr.bf16.mxu0 0
      %1082 = vmatpush1.bf16.msra.mxu0 %v1019
      %1083 = vmatprep.subr.bf16.mxu0 0
      %1084 = vmatpush1.bf16.msra.mxu0 %v1020
      %1085 = vmatprep.mubr.bf16.mxu0 %v907
      %1086 = vmatmul.mubr.bf16.gmra.mrb[0].mxu0 %v906
      %v1087 = vpop.f32.mrb[0].mxu0
      %v1088 = vadd.f32 0.0, %v1087
      %v1089 = vpop.f32.mrb[0].mxu0
      %v1090 = vpop.f32.mrb[0].mxu0
      %v1091 = vpop.f32.mrb[0].mxu0
      %1092 = vdwg.mxu0
      %1093 = vmatprep.subr.bf16.mxu0 0
      %1094 = vmatpush1.bf16.msra.mxu0 %v1021
      %1095 = vmatprep.subr.bf16.mxu0 0
      %1096 = vmatpush1.bf16.msra.mxu0 %v1022
      %1097 = vmatprep.subr.bf16.mxu0 0
      %1098 = vmatpush1.bf16.msra.mxu0 %v1023
      %1099 = vmatprep.subr.bf16.mxu0 0
      %1100 = vmatpush1.bf16.msra.mxu0 %v1024
      %1101 = vmatprep.subr.bf16.mxu0 0
      %1102 = vmatpush1.bf16.msra.mxu0 %v1025
      %1103 = vmatprep.subr.bf16.mxu0 0
      %1104 = vmatpush1.bf16.msra.mxu0 %v1026
      %1105 = vmatprep.subr.bf16.mxu0 0
      %1106 = vmatpush1.bf16.msra.mxu0 %v1027
      %1107 = vmatprep.subr.bf16.mxu0 0
      %1108 = vmatpush1.bf16.msra.mxu0 %v1028
      %1109 = vmatprep.subr.bf16.mxu0 0
      %1110 = vmatpush1.bf16.msra.mxu0 0
      %1111 = vmatprep.subr.bf16.mxu0 0
      %1112 = vmatpush1.bf16.msra.mxu0 0
      %1113 = vmatprep.subr.bf16.mxu0 0
      %1114 = vmatpush1.bf16.msra.mxu0 0
      %1115 = vmatprep.subr.bf16.mxu0 0
      %1116 = vmatpush1.bf16.msra.mxu0 0
      %1117 = vmatprep.subr.bf16.mxu0 0
      %1118 = vmatpush1.bf16.msra.mxu0 0
      %1119 = vmatprep.subr.bf16.mxu0 0
      %1120 = vmatpush1.bf16.msra.mxu0 0
      %1121 = vmatprep.subr.bf16.mxu0 0
      %1122 = vmatpush1.bf16.msra.mxu0 0
      %1123 = vmatprep.subr.bf16.mxu0 0
      %1124 = vmatpush1.bf16.msra.mxu0 0
      %1125 = vmatprep.mubr.bf16.mxu0 0
      %1126 = vmatmul.mubr.bf16.gmra.mrb[0].mxu0 %v908
      %v1127 = vpop.f32.mrb[0].mxu0
      %v1128 = vadd.f32 %v1088, %v1127
      %v1129 = vpop.f32.mrb[0].mxu0
      %v1130 = vpop.f32.mrb[0].mxu0
      %v1131 = vpop.f32.mrb[0].mxu0
      %1132 = vdwg.mxu0
      %v1133 = vld [vmem:[%s3 + $0x2] sm:$0x1]
      %v1134 = vlaneseq
      %v1135 = vshrl.u32 %v1134, 7
      %v1136 = vsub.s32 0, %v1135
      %v1137 = vrot.slane %v1133, %v1136
      %v1138 = vmul.f32 %v1128, %v1137
      %v1139 = vld [vmem:[%s4 + $0x2] sm:$0x1]
      %v1140 = vlaneseq
      %v1141 = vshrl.u32 %v1140, 7
      %v1142 = vsub.s32 0, %v1141
      %v1143 = vrot.slane %v1139, %v1142
      %v1144 = vadd.f32 %v1138, %v1143
      %v1145 = vmax.f32 %v1144, 0.0
      %v1146 = vpack.c.bf16 %v849, %v849
      %1147 = vst [vmem:[%s253] sm:$0xf] %v1146
      %v1148 = vpack.c.bf16 %v1145, %v1145
      %1149 = vst [vmem:[%s257] sm:$0x3] %v1148
      %p1150 = scmp.lt.s32.totalorder %s18, 1
      %s1151 = scalar_select %p1150, %s18, 1
      %s1152 = smul.addr %s1151, 4
      %s1153 = scalar_lea.vmem %s5, %s1152
      %p1154 = scmp.lt.s32.totalorder %s18, 1
      %s1155 = scalar_select %p1154, %s18, 1
      %s1156 = smul.addr %s1155, 2
      %s1157 = scalar_lea.vmem %s6, %s1156
      // Predicated region
      $region41: #{forward.6} parent=39 // pred_check
        %p1158 = pneg %p146
      $region42: #{forward.6} parent=39 // pred_check_branch
        %1160 = sbr.rel (%p1158) target = $region44
      $region43: #{forward.6} parent=39 // pred_region
        _
      $region44: #{forward.6} parent=39 // pred_fallthru
        _
      // Predicated region
      $region45: #{forward.6} parent=39 // pred_check
        %p1161 = pneg %p172
      $region46: #{forward.6} parent=39 // pred_check_branch
        %1163 = sbr.rel (%p1161) target = $region48
      $region47: #{forward.6} parent=39 // pred_region
        _
      $region48: #{forward.6} parent=39 // pred_fallthru
        _
    $region40: #{forward.6} parent=5 // pred_fallthru
      _
    %p1164 = scmp.le.s32.totalorder 2, %s13
    // Predicated region
    $region49: #{forward.6} parent=5 // pred_check
      %p1165 = pneg %p1164
    $region50: #{forward.6} parent=5 // pred_check_branch
      %1167 = sbr.rel (%p1165) target = $region52
    $region51: #{forward.6} parent=5 // pred_region
      %s1168 = ssub.s32 %s13, 2
      // Predicated region
      $region53: #{forward.6} parent=51 // pred_check
        %p1169 = pneg %p152
      $region54: #{forward.6} parent=51 // pred_check_branch
        %1171 = sbr.rel (%p1169) target = $region56
      $region55: #{forward.6} parent=51 // pred_region
        %p1172 = scmp.lt.s32.totalorder %s19, 1
        %s1173 = scalar_select %p1172, %s19, 1
        %s1174 = smul.addr %s1173, 4
        %s1175 = scalar_lea.vmem %s5, %s1174
      $region56: #{forward.6} parent=51 // pred_fallthru
        _
      // Predicated region
      $region57: #{forward.6} parent=51 // pred_check
        %p1176 = pneg %p178
      $region58: #{forward.6} parent=51 // pred_check_branch
        %1178 = sbr.rel (%p1176) target = $region60
      $region59: #{forward.6} parent=51 // pred_region
        %p1179 = scmp.lt.s32.totalorder %s19, 1
        %s1180 = scalar_select %p1179, %s19, 1
        %s1181 = smul.addr %s1180, 2
        %s1182 = scalar_lea.vmem %s6, %s1181
      $region60: #{forward.6} parent=51 // pred_fallthru
        _
    $region52: #{forward.6} parent=5 // pred_fallthru
      _
  $region6: #{forward.6} parent=0 // loop_footer
    %s17 = sadd.s32 1, %s13
  $region7: #{forward.6} parent=0 // loop_footer_branch
    %12 = sbr.rel target = $region3
  $region8: #{forward.6} parent=0 // loop_exit
    _

// kernel: forward.5
$region0: #{forward.5}
  #allocation0 [shape = 'u32[]', space=smem, size = 0x4, offset = 0x4, fixed_abs, tag = 'smem constant byte address 0x4 - core index']
  #allocation1 [shape = 'u32[144,128]{1,0:T(1,128)}', space=vmem, size = 0x12000, scoped, tag = 'internal scratch']
  #allocation2 [shape = 'f32[18,128]{1,0:T(8,128)}', space=vmem, size = 0x3000, scoped, tag = 'scratch operand']
  %s0 = inlined_call_operand.vmem [shape: bf16[2,16,128], index: 0, kind: input, shape index: {}]
  %s1 = inlined_call_operand.vmem [shape: bf16[384,128], index: 1, kind: input, shape index: {}]
  %s2 = inlined_call_operand.vmem [shape: bf16[384,128], index: 2, kind: input, shape index: {}]
  %s3 = inlined_call_operand.vmem [shape: bf16[384,128], index: 3, kind: input, shape index: {}]
  %s4 = inlined_call_operand.vmem [shape: f32[4,128], index: 4, kind: input, shape index: {}]
  %s5 = inlined_call_operand.vmem [shape: f32[4,128], index: 5, kind: input, shape index: {}]
  %s6 = inlined_call_operand.vmem [shape: bf16[2,16,128], index: 6, kind: output, shape index: {0}]
  %s7 = inlined_call_operand.vmem [shape: bf16[2,8,128], index: 7, kind: output, shape index: {1}]
  %8 = xla_tuple %s6, %s7
  %s9 = sld [smem:[#allocation0]]
  $region65: #{forward.5} parent=0
    _
  %s11 = ssub.s32 1, %s9
  %s12 = scalar_select 0, %s11, %s9
  loop: start=0, step=1, limit=4
  $region2: #{forward.5} parent=0 // loop_pre_header
    _
  $region3: #{forward.5} parent=0 // loop_header
    %s14 = sphi 0, %s18
    %p15 = scmp.ge.s32.totalorder %s14, 4
    %s24 = sphi 0, %s26
    %s27 = sphi 0, %s24
    %s28 = sphi 0, %s27
    %s44 = sphi 0, %s28
    %s48 = sphi 0, %s48
    %s50 = sphi 0, %s48
    %s51 = sphi 0, %s50
    %s65 = sphi 0, %s51
    %s69 = sphi 0, %s69
    %s71 = sphi 0, %s69
    %s72 = sphi 0, %s71
    %s86 = sphi 0, %s72
    %s90 = sphi 0, %s90
    %s92 = sphi 0, %s90
    %s93 = sphi 0, %s92
    %s107 = sphi 0, %s93
    %s111 = sphi 0, %s111
    %s113 = sphi 0, %s111
    %s114 = sphi 0, %s113
    %s128 = sphi 0, %s114
    %s132 = sphi 0, %s132
    %s134 = sphi 0, %s132
    %s135 = sphi 0, %s134
    %s149 = sphi 0, %s135
    %s155 = sphi 0, %s157
    %s158 = sphi 0, %s155
    %s159 = sphi 0, %s158
    %s175 = sphi 0, %s159
    %s181 = sphi 0, %s183
    %s184 = sphi 0, %s181
    %s185 = sphi 0, %s184
    %s201 = sphi 0, %s185
  $region4: #{forward.5} parent=0 // loop_header_branch
    %17 = sbr.rel (%p15) target = $region8
  $region5: #{forward.5} parent=0 // loop_body
    %s19 = ssub.s32 %s14, 1
    %s20 = ssub.s32 %s14, 2
    %s21 = sadd.s32 %s14, 1
    %s22 = ssub.s32 %s14, %s21
    %p23 = scmp.eq.s32.totalorder %s22, 0
    %s25 = sadd.s32 %s24, 1
    %s26 = scalar_select %p23, %s24, %s25
    %p29 = pneg %p23
    %p30 = scmp.eq.s32.totalorder %s14, 1
    %p31 = por %p29, %p30
    %p32 = scmp.ne.s32.totalorder %s24, %s27
    %p33 = scmp.eq.s32.totalorder %s14, 0
    %p34 = por %p32, %p33
    %p35 = scmp.ne.s32.totalorder %s24, %s27
    %p36 = scmp.eq.s32.totalorder %s19, 1
    %p37 = por %p35, %p36
    %p38 = scmp.ne.s32.totalorder %s27, %s28
    %p39 = scmp.eq.s32.totalorder %s19, 0
    %p40 = por %p38, %p39
    %p41 = scmp.ne.s32.totalorder %s27, %s28
    %p42 = scmp.eq.s32.totalorder %s20, 1
    %p43 = por %p41, %p42
    %p45 = scmp.ne.s32.totalorder %s28, %s44
    %p46 = scmp.eq.s32.totalorder %s20, 0
    %p47 = por %p45, %p46
    %s49 = sadd.s32 %s48, 1
    %p52 = scmp.eq.s32.totalorder %s14, 1
    %p53 = scmp.ne.s32.totalorder %s48, %s50
    %p54 = scmp.eq.s32.totalorder %s14, 0
    %p55 = por %p53, %p54
    %p56 = scmp.ne.s32.totalorder %s48, %s50
    %p57 = scmp.eq.s32.totalorder %s19, 1
    %p58 = por %p56, %p57
    %p59 = scmp.ne.s32.totalorder %s50, %s51
    %p60 = scmp.eq.s32.totalorder %s19, 0
    %p61 = por %p59, %p60
    %p62 = scmp.ne.s32.totalorder %s50, %s51
    %p63 = scmp.eq.s32.totalorder %s20, 1
    %p64 = por %p62, %p63
    %p66 = scmp.ne.s32.totalorder %s51, %s65
    %p67 = scmp.eq.s32.totalorder %s20, 0
    %p68 = por %p66, %p67
    %s70 = sadd.s32 %s69, 1
    %p73 = scmp.eq.s32.totalorder %s14, 1
    %p74 = scmp.ne.s32.totalorder %s69, %s71
    %p75 = scmp.eq.s32.totalorder %s14, 0
    %p76 = por %p74, %p75
    %p77 = scmp.ne.s32.totalorder %s69, %s71
    %p78 = scmp.eq.s32.totalorder %s19, 1
    %p79 = por %p77, %p78
    %p80 = scmp.ne.s32.totalorder %s71, %s72
    %p81 = scmp.eq.s32.totalorder %s19, 0
    %p82 = por %p80, %p81
    %p83 = scmp.ne.s32.totalorder %s71, %s72
    %p84 = scmp.eq.s32.totalorder %s20, 1
    %p85 = por %p83, %p84
    %p87 = scmp.ne.s32.totalorder %s72, %s86
    %p88 = scmp.eq.s32.totalorder %s20, 0
    %p89 = por %p87, %p88
    %s91 = sadd.s32 %s90, 1
    %p94 = scmp.eq.s32.totalorder %s14, 1
    %p95 = scmp.ne.s32.totalorder %s90, %s92
    %p96 = scmp.eq.s32.totalorder %s14, 0
    %p97 = por %p95, %p96
    %p98 = scmp.ne.s32.totalorder %s90, %s92
    %p99 = scmp.eq.s32.totalorder %s19, 1
    %p100 = por %p98, %p99
    %p101 = scmp.ne.s32.totalorder %s92, %s93
    %p102 = scmp.eq.s32.totalorder %s19, 0
    %p103 = por %p101, %p102
    %p104 = scmp.ne.s32.totalorder %s92, %s93
    %p105 = scmp.eq.s32.totalorder %s20, 1
    %p106 = por %p104, %p105
    %p108 = scmp.ne.s32.totalorder %s93, %s107
    %p109 = scmp.eq.s32.totalorder %s20, 0
    %p110 = por %p108, %p109
    %s112 = sadd.s32 %s111, 1
    %p115 = scmp.eq.s32.totalorder %s14, 1
    %p116 = scmp.ne.s32.totalorder %s111, %s113
    %p117 = scmp.eq.s32.totalorder %s14, 0
    %p118 = por %p116, %p117
    %p119 = scmp.ne.s32.totalorder %s111, %s113
    %p120 = scmp.eq.s32.totalorder %s19, 1
    %p121 = por %p119, %p120
    %p122 = scmp.ne.s32.totalorder %s113, %s114
    %p123 = scmp.eq.s32.totalorder %s19, 0
    %p124 = por %p122, %p123
    %p125 = scmp.ne.s32.totalorder %s113, %s114
    %p126 = scmp.eq.s32.totalorder %s20, 1
    %p127 = por %p125, %p126
    %p129 = scmp.ne.s32.totalorder %s114, %s128
    %p130 = scmp.eq.s32.totalorder %s20, 0
    %p131 = por %p129, %p130
    %s133 = sadd.s32 %s132, 1
    %p136 = scmp.eq.s32.totalorder %s14, 1
    %p137 = scmp.ne.s32.totalorder %s132, %s134
    %p138 = scmp.eq.s32.totalorder %s14, 0
    %p139 = por %p137, %p138
    %p140 = scmp.ne.s32.totalorder %s132, %s134
    %p141 = scmp.eq.s32.totalorder %s19, 1
    %p142 = por %p140, %p141
    %p143 = scmp.ne.s32.totalorder %s134, %s135
    %p144 = scmp.eq.s32.totalorder %s19, 0
    %p145 = por %p143, %p144
    %p146 = scmp.ne.s32.totalorder %s134, %s135
    %p147 = scmp.eq.s32.totalorder %s20, 1
    %p148 = por %p146, %p147
    %p150 = scmp.ne.s32.totalorder %s135, %s149
    %p151 = scmp.eq.s32.totalorder %s20, 0
    %p152 = por %p150, %p151
    %s153 = ssub.s32 %s14, %s21
    %p154 = scmp.eq.s32.totalorder %s153, 0
    %s156 = sadd.s32 %s155, 1
    %s157 = scalar_select %p154, %s155, %s156
    %p160 = pneg %p154
    %p161 = scmp.eq.s32.totalorder %s14, 1
    %p162 = por %p160, %p161
    %p163 = scmp.ne.s32.totalorder %s155, %s158
    %p164 = scmp.eq.s32.totalorder %s14, 0
    %p165 = por %p163, %p164
    %p166 = scmp.ne.s32.totalorder %s155, %s158
    %p167 = scmp.eq.s32.totalorder %s19, 1
    %p168 = por %p166, %p167
    %p169 = scmp.ne.s32.totalorder %s158, %s159
    %p170 = scmp.eq.s32.totalorder %s19, 0
    %p171 = por %p169, %p170
    %p172 = scmp.ne.s32.totalorder %s158, %s159
    %p173 = scmp.eq.s32.totalorder %s20, 1
    %p174 = por %p172, %p173
    %p176 = scmp.ne.s32.totalorder %s159, %s175
    %p177 = scmp.eq.s32.totalorder %s20, 0
    %p178 = por %p176, %p177
    %s179 = ssub.s32 %s14, %s21
    %p180 = scmp.eq.s32.totalorder %s179, 0
    %s182 = sadd.s32 %s181, 1
    %s183 = scalar_select %p180, %s181, %s182
    %p186 = pneg %p180
    %p187 = scmp.eq.s32.totalorder %s14, 1
    %p188 = por %p186, %p187
    %p189 = scmp.ne.s32.totalorder %s181, %s184
    %p190 = scmp.eq.s32.totalorder %s14, 0
    %p191 = por %p189, %p190
    %p192 = scmp.ne.s32.totalorder %s181, %s184
    %p193 = scmp.eq.s32.totalorder %s19, 1
    %p194 = por %p192, %p193
    %p195 = scmp.ne.s32.totalorder %s184, %s185
    %p196 = scmp.eq.s32.totalorder %s19, 0
    %p197 = por %p195, %p196
    %p198 = scmp.ne.s32.totalorder %s184, %s185
    %p199 = scmp.eq.s32.totalorder %s20, 1
    %p200 = por %p198, %p199
    %p202 = scmp.ne.s32.totalorder %s185, %s201
    %p203 = scmp.eq.s32.totalorder %s20, 0
    %p204 = por %p202, %p203
    %p205 = scmp.le.s32.totalorder 1, %s14
    %p206 = scmp.lt.s32.totalorder %s14, 3
    %p207 = pnand %p205, %p206
    %p208 = pneg %p207
    // Predicated region
    $region9: #{forward.5} parent=5 // pred_check
      _
    $region10: #{forward.5} parent=5 // pred_check_branch
      %210 = sbr.rel (%p207) target = $region12
    $region11: #{forward.5} parent=5 // pred_region
      %s211 = ssub.s32 %s14, 1
      // Predicated region
      $region13: #{forward.5} parent=11 // pred_check
        %p212 = pneg %p61
      $region14: #{forward.5} parent=11 // pred_check_branch
        %214 = sbr.rel (%p212) target = $region16
      $region15: #{forward.5} parent=11 // pred_region
        _
      $region16: #{forward.5} parent=11 // pred_fallthru
        _
      // Predicated region
      $region17: #{forward.5} parent=11 // pred_check
        %p215 = pneg %p82
      $region18: #{forward.5} parent=11 // pred_check_branch
        %217 = sbr.rel (%p215) target = $region20
      $region19: #{forward.5} parent=11 // pred_region
        _
      $region20: #{forward.5} parent=11 // pred_fallthru
        _
      // Predicated region
      $region21: #{forward.5} parent=11 // pred_check
        %p218 = pneg %p103
      $region22: #{forward.5} parent=11 // pred_check_branch
        %220 = sbr.rel (%p218) target = $region24
      $region23: #{forward.5} parent=11 // pred_region
        _
      $region24: #{forward.5} parent=11 // pred_fallthru
        _
      // Predicated region
      $region25: #{forward.5} parent=11 // pred_check
        %p221 = pneg %p124
      $region26: #{forward.5} parent=11 // pred_check_branch
        %223 = sbr.rel (%p221) target = $region28
      $region27: #{forward.5} parent=11 // pred_region
        _
      $region28: #{forward.5} parent=11 // pred_fallthru
        _
      // Predicated region
      $region29: #{forward.5} parent=11 // pred_check
        %p224 = pneg %p145
      $region30: #{forward.5} parent=11 // pred_check_branch
        %226 = sbr.rel (%p224) target = $region32
      $region31: #{forward.5} parent=11 // pred_region
        _
      $region32: #{forward.5} parent=11 // pred_fallthru
        _
    $region12: #{forward.5} parent=5 // pred_fallthru
      _
    %p227 = scmp.lt.s32.totalorder %s14, 2
    // Predicated region
    $region33: #{forward.5} parent=5 // pred_check
      %p228 = pneg %p227
    $region34: #{forward.5} parent=5 // pred_check_branch
      %230 = sbr.rel (%p228) target = $region36
    $region35: #{forward.5} parent=5 // pred_region
      // Predicated region
      $region37: #{forward.5} parent=35 // pred_check
        %p231 = pneg %p34
      $region38: #{forward.5} parent=35 // pred_check_branch
        %233 = sbr.rel (%p231) target = $region40
      $region39: #{forward.5} parent=35 // pred_region
        %p234 = scmp.lt.s32.totalorder %s14, 1
        %s235 = scalar_select %p234, %s14, 1
        %s236 = smul.addr %s235, 2
        %s237 = smul.addr %s236, 4
        %s238 = scalar_lea.vmem %s0, %s237
      $region40: #{forward.5} parent=35 // pred_fallthru
        _
    $region36: #{forward.5} parent=5 // pred_fallthru
      _
    %p239 = scmp.le.s32.totalorder 1, %s14
    %p240 = scmp.lt.s32.totalorder %s14, 3
    %p241 = pnand %p239, %p240
    %p242 = pneg %p241
    // Predicated region
    $region41: #{forward.5} parent=5 // pred_check
      _
    $region42: #{forward.5} parent=5 // pred_check_branch
      %244 = sbr.rel (%p241) target = $region44
    $region43: #{forward.5} parent=5 // pred_region
      %s245 = ssub.s32 %s14, 1
      %p246 = scmp.lt.s32.totalorder %s19, 1
      %s247 = scalar_select %p246, %s19, 1
      %s248 = smul.addr %s247, 2
      %s249 = smul.addr %s248, 4
      %s250 = scalar_lea.vmem %s0, %s249
      %p251 = pneg %p40
      %p252 = pneg %p37
      %p253 = pneg %p61
      %p254 = pneg %p58
      %p255 = pneg %p82
      %p256 = pneg %p79
      %p257 = pneg %p103
      %p258 = pneg %p100
      %p259 = pneg %p124
      %p260 = pneg %p121
      %p261 = pneg %p145
      %p262 = pneg %p142
      %p263 = pneg %p171
      %p264 = pneg %p168
      %p265 = scmp.lt.s32.totalorder %s19, 1
      %s266 = scalar_select %p265, %s19, 1
      %s267 = smul.addr %s266, 2
      %s268 = smul.addr %s267, 4
      %s269 = scalar_lea.vmem %s6, %s268
      %p270 = pneg %p197
      %p271 = pneg %p194
      %p272 = scmp.lt.s32.totalorder %s19, 1
      %s273 = scalar_select %p272, %s19, 1
      %s274 = smul.addr %s273, 4
      %s275 = scalar_lea.vmem %s7, %s274
      %p276 = scmp.lt.s32.totalorder %s19, 1
      %s277 = scalar_select %p276, %s19, 1
      %s278 = smul.addr %s277, 2
      %s279 = smul.addr %s278, 4
      %s280 = scalar_lea.vmem %s0, %s279
      %p281 = scmp.lt.s32.totalorder %s19, 1
      %s282 = scalar_select %p281, %s19, 1
      %s283 = smul.addr %s282, 2
      %s284 = smul.addr %s283, 4
      %s285 = scalar_lea.vmem %s6, %s284
      %p286 = scmp.lt.s32.totalorder %s19, 1
      %s287 = scalar_select %p286, %s19, 1
      %s288 = smul.addr %s287, 4
      %s289 = scalar_lea.vmem %s7, %s288
      %v291 = vld [vmem:[%s280] sm:$0xf]
      %v292 = vld [vmem:[%s280 + $0x4] sm:$0xf]
      %v293 = vunpack.c.l.bf16 %v291
      %v294 = vunpack.c.l.bf16 %v292
      %v295 = vld [vmem:[%s1] sm:$0xf]
      %v296 = vld [vmem:[%s1 + $0x4] sm:$0xf]
      %v297 = vld [vmem:[%s1 + $0x8] sm:$0xf]
      %v298 = vld [vmem:[%s1 + $0xc] sm:$0xf]
      %v299 = vld [vmem:[%s1 + $0x10] sm:$0xf]
      %v300 = vld [vmem:[%s1 + $0x14] sm:$0xf]
      %v301 = vld [vmem:[%s1 + $0x18] sm:$0xf]
      %v302 = vld [vmem:[%s1 + $0x1c] sm:$0xf]
      %v303 = vld [vmem:[%s1 + $0x20] sm:$0xf]
      %v304 = vld [vmem:[%s1 + $0x24] sm:$0xf]
      %v305 = vld [vmem:[%s1 + $0x28] sm:$0xf]
      %v306 = vld [vmem:[%s1 + $0x2c] sm:$0xf]
      %v307 = vld [vmem:[%s1 + $0x30] sm:$0xf]
      %v308 = vld [vmem:[%s1 + $0x34] sm:$0xf]
      %v309 = vld [vmem:[%s1 + $0x38] sm:$0xf]
      %v310 = vld [vmem:[%s1 + $0x3c] sm:$0xf]
      %v311 = vld [vmem:[%s1 + $0x40] sm:$0xf]
      %v312 = vld [vmem:[%s1 + $0x44] sm:$0xf]
      %v313 = vld [vmem:[%s1 + $0x48] sm:$0xf]
      %v314 = vld [vmem:[%s1 + $0x4c] sm:$0xf]
      %v315 = vld [vmem:[%s1 + $0x50] sm:$0xf]
      %v316 = vld [vmem:[%s1 + $0x54] sm:$0xf]
      %v317 = vld [vmem:[%s1 + $0x58] sm:$0xf]
      %v318 = vld [vmem:[%s1 + $0x5c] sm:$0xf]
      %v319 = vld [vmem:[%s1 + $0x60] sm:$0xf]
      %v320 = vld [vmem:[%s1 + $0x64] sm:$0xf]
      %v321 = vld [vmem:[%s1 + $0x68] sm:$0xf]
      %v322 = vld [vmem:[%s1 + $0x6c] sm:$0xf]
      %v323 = vld [vmem:[%s1 + $0x70] sm:$0xf]
      %v324 = vld [vmem:[%s1 + $0x74] sm:$0xf]
      %v325 = vld [vmem:[%s1 + $0x78] sm:$0xf]
      %v326 = vld [vmem:[%s1 + $0x7c] sm:$0xf]
      %v327 = vld [vmem:[%s1 + $0x80] sm:$0xf]
      %v328 = vld [vmem:[%s1 + $0x84] sm:$0xf]
      %v329 = vld [vmem:[%s1 + $0x88] sm:$0xf]
      %v330 = vld [vmem:[%s1 + $0x8c] sm:$0xf]
      %v331 = vld [vmem:[%s1 + $0x90] sm:$0xf]
      %v332 = vld [vmem:[%s1 + $0x94] sm:$0xf]
      %v333 = vld [vmem:[%s1 + $0x98] sm:$0xf]
      %v334 = vld [vmem:[%s1 + $0x9c] sm:$0xf]
      %v335 = vld [vmem:[%s1 + $0xa0] sm:$0xf]
      %v336 = vld [vmem:[%s1 + $0xa4] sm:$0xf]
      %v337 = vld [vmem:[%s1 + $0xa8] sm:$0xf]
      %v338 = vld [vmem:[%s1 + $0xac] sm:$0xf]
      %v339 = vld [vmem:[%s1 + $0xb0] sm:$0xf]
      %v340 = vld [vmem:[%s1 + $0xb4] sm:$0xf]
      %v341 = vld [vmem:[%s1 + $0xb8] sm:$0xf]
      %v342 = vld [vmem:[%s1 + $0xbc] sm:$0xf]
      %343 = vst [vmem:[#allocation2] sm:$0x1] 0.0
      %344 = vst [vmem:[#allocation2 + $0x1] sm:$0xff] %v293
      %345 = vst [vmem:[#allocation2 + $0x9] sm:$0xff] %v294
      %346 = vst [vmem:[#allocation2 + $0x11] sm:$0x1] 0.0
      %v347 = vld [vmem:[#allocation2] sm:$0xff]
      %v348 = vld [vmem:[#allocation2 + $0x8] sm:$0xff]
      %v349 = vld [vmem:[#allocation2 + $0x1] sm:$0xff]
      %v350 = vld [vmem:[#allocation2 + $0x9] sm:$0xff]
      %v351 = vld [vmem:[#allocation2 + $0x2] sm:$0xff]
      %v352 = vld [vmem:[#allocation2 + $0xa] sm:$0xff]
      %v353 = vpack.c.bf16 %v348, %v347
      %v354 = vpack.c.bf16 %v350, %v349
      %v355 = vpack.c.bf16 %v352, %v351
      %v404 = vunpack.c.l.b16 %v295
      %v405 = vunpack.c.l.b16 %v296
      %v406 = vunpack.c.l.b16 %v297
      %v407 = vunpack.c.l.b16 %v298
      %v408 = vunpack.c.l.b16 %v299
      %v409 = vunpack.c.l.b16 %v300
      %v410 = vunpack.c.l.b16 %v301
      %v411 = vunpack.c.l.b16 %v302
      %v412 = vunpack.c.l.b16 %v303
      %v413 = vunpack.c.l.b16 %v304
      %v414 = vunpack.c.l.b16 %v305
      %v415 = vunpack.c.l.b16 %v306
      %v416 = vunpack.c.l.b16 %v307
      %v417 = vunpack.c.l.b16 %v308
      %v418 = vunpack.c.l.b16 %v309
      %v419 = vunpack.c.l.b16 %v310
      %v420 = vunpack.c.l.b16 %v311
      %v421 = vunpack.c.l.b16 %v312
      %v422 = vunpack.c.l.b16 %v313
      %v423 = vunpack.c.l.b16 %v314
      %v424 = vunpack.c.l.b16 %v315
      %v425 = vunpack.c.l.b16 %v316
      %v426 = vunpack.c.l.b16 %v317
      %v427 = vunpack.c.l.b16 %v318
      %v428 = vunpack.c.l.b16 %v319
      %v429 = vunpack.c.l.b16 %v320
      %v430 = vunpack.c.l.b16 %v321
      %v431 = vunpack.c.l.b16 %v322
      %v432 = vunpack.c.l.b16 %v323
      %v433 = vunpack.c.l.b16 %v324
      %v434 = vunpack.c.l.b16 %v325
      %v435 = vunpack.c.l.b16 %v326
      %v436 = vunpack.c.l.b16 %v327
      %v437 = vunpack.c.l.b16 %v328
      %v438 = vunpack.c.l.b16 %v329
      %v439 = vunpack.c.l.b16 %v330
      %v440 = vunpack.c.l.b16 %v331
      %v441 = vunpack.c.l.b16 %v332
      %v442 = vunpack.c.l.b16 %v333
      %v443 = vunpack.c.l.b16 %v334
      %v444 = vunpack.c.l.b16 %v335
      %v445 = vunpack.c.l.b16 %v336
      %v446 = vunpack.c.l.b16 %v337
      %v447 = vunpack.c.l.b16 %v338
      %v448 = vunpack.c.l.b16 %v339
      %v449 = vunpack.c.l.b16 %v340
      %v450 = vunpack.c.l.b16 %v341
      %v451 = vunpack.c.l.b16 %v342
      %v452 = vpack.c.b16 %v405, %v404
      %v453 = vpack.c.b16 %v407, %v406
      %v454 = vpack.c.b16 %v409, %v408
      %v455 = vpack.c.b16 %v411, %v410
      %v456 = vpack.c.b16 %v413, %v412
      %v457 = vpack.c.b16 %v415, %v414
      %v458 = vpack.c.b16 %v417, %v416
      %v459 = vpack.c.b16 %v419, %v418
      %v460 = vpack.c.b16 %v421, %v420
      %v461 = vpack.c.b16 %v423, %v422
      %v462 = vpack.c.b16 %v425, %v424
      %v463 = vpack.c.b16 %v427, %v426
      %v464 = vpack.c.b16 %v429, %v428
      %v465 = vpack.c.b16 %v431, %v430
      %v466 = vpack.c.b16 %v433, %v432
      %v467 = vpack.c.b16 %v435, %v434
      %v468 = vpack.c.b16 %v437, %v436
      %v469 = vpack.c.b16 %v439, %v438
      %v470 = vpack.c.b16 %v441, %v440
      %v471 = vpack.c.b16 %v443, %v442
      %v472 = vpack.c.b16 %v445, %v444
      %v473 = vpack.c.b16 %v447, %v446
      %v474 = vpack.c.b16 %v449, %v448
      %v475 = vpack.c.b16 %v451, %v450
      %500 = vmatprep.subr.bf16.mxu0 0
      %501 = vmatpush1.bf16.msra.mxu0 %v452
      %502 = vmatprep.subr.bf16.mxu0 0
      %503 = vmatpush1.bf16.msra.mxu0 %v453
      %504 = vmatprep.subr.bf16.mxu0 0
      %505 = vmatpush1.bf16.msra.mxu0 %v454
      %506 = vmatprep.subr.bf16.mxu0 0
      %507 = vmatpush1.bf16.msra.mxu0 %v455
      %508 = vmatprep.subr.bf16.mxu0 0
      %509 = vmatpush1.bf16.msra.mxu0 %v456
      %510 = vmatprep.subr.bf16.mxu0 0
      %511 = vmatpush1.bf16.msra.mxu0 %v457
      %512 = vmatprep.subr.bf16.mxu0 0
      %513 = vmatpush1.bf16.msra.mxu0 %v458
      %514 = vmatprep.subr.bf16.mxu0 0
      %515 = vmatpush1.bf16.msra.mxu0 %v459
      %516 = vmatprep.subr.bf16.mxu0 0
      %517 = vmatpush1.bf16.msra.mxu0 %v460
      %518 = vmatprep.subr.bf16.mxu0 0
      %519 = vmatpush1.bf16.msra.mxu0 %v461
      %520 = vmatprep.subr.bf16.mxu0 0
      %521 = vmatpush1.bf16.msra.mxu0 %v462
      %522 = vmatprep.subr.bf16.mxu0 0
      %523 = vmatpush1.bf16.msra.mxu0 %v463
      %524 = vmatprep.subr.bf16.mxu0 0
      %525 = vmatpush1.bf16.msra.mxu0 %v464
      %526 = vmatprep.subr.bf16.mxu0 0
      %527 = vmatpush1.bf16.msra.mxu0 %v465
      %528 = vmatprep.subr.bf16.mxu0 0
      %529 = vmatpush1.bf16.msra.mxu0 %v466
      %530 = vmatprep.subr.bf16.mxu0 0
      %531 = vmatpush1.bf16.msra.mxu0 %v467
      %532 = vmatprep.mubr.bf16.mxu0 %v354
      %533 = vmatmul.mubr.bf16.gmra.mrb[0].mxu0 %v353
      %v534 = vpop.f32.mrb[0].mxu0
      %v535 = vadd.f32 0.0, %v534
      %v536 = vpop.f32.mrb[0].mxu0
      %v537 = vpop.f32.mrb[0].mxu0
      %v538 = vadd.f32 0.0, %v537
      %v539 = vpop.f32.mrb[0].mxu0
      %540 = vdwg.mxu0
      %541 = vmatprep.subr.bf16.mxu0 0
      %542 = vmatpush1.bf16.msra.mxu0 %v468
      %543 = vmatprep.subr.bf16.mxu0 0
      %544 = vmatpush1.bf16.msra.mxu0 %v469
      %545 = vmatprep.subr.bf16.mxu0 0
      %546 = vmatpush1.bf16.msra.mxu0 %v470
      %547 = vmatprep.subr.bf16.mxu0 0
      %548 = vmatpush1.bf16.msra.mxu0 %v471
      %549 = vmatprep.subr.bf16.mxu0 0
      %550 = vmatpush1.bf16.msra.mxu0 %v472
      %551 = vmatprep.subr.bf16.mxu0 0
      %552 = vmatpush1.bf16.msra.mxu0 %v473
      %553 = vmatprep.subr.bf16.mxu0 0
      %554 = vmatpush1.bf16.msra.mxu0 %v474
      %555 = vmatprep.subr.bf16.mxu0 0
      %556 = vmatpush1.bf16.msra.mxu0 %v475
      %557 = vmatprep.subr.bf16.mxu0 0
      %558 = vmatpush1.bf16.msra.mxu0 0
      %559 = vmatprep.subr.bf16.mxu0 0
      %560 = vmatpush1.bf16.msra.mxu0 0
      %561 = vmatprep.subr.bf16.mxu0 0
      %562 = vmatpush1.bf16.msra.mxu0 0
      %563 = vmatprep.subr.bf16.mxu0 0
      %564 = vmatpush1.bf16.msra.mxu0 0
      %565 = vmatprep.subr.bf16.mxu0 0
      %566 = vmatpush1.bf16.msra.mxu0 0
      %567 = vmatprep.subr.bf16.mxu0 0
      %568 = vmatpush1.bf16.msra.mxu0 0
      %569 = vmatprep.subr.bf16.mxu0 0
      %570 = vmatpush1.bf16.msra.mxu0 0
      %571 = vmatprep.subr.bf16.mxu0 0
      %572 = vmatpush1.bf16.msra.mxu0 0
      %573 = vmatprep.mubr.bf16.mxu0 0
      %574 = vmatmul.mubr.bf16.gmra.mrb[0].mxu0 %v355
      %v575 = vpop.f32.mrb[0].mxu0
      %v576 = vadd.f32 %v535, %v575
      %v577 = vpop.f32.mrb[0].mxu0
      %v578 = vpop.f32.mrb[0].mxu0
      %v579 = vadd.f32 %v538, %v578
      %v580 = vpop.f32.mrb[0].mxu0
      %581 = vdwg.mxu0
      %v582 = vld [vmem:[%s4] sm:$0x1]
      %v583 = vlaneseq
      %v584 = vshrl.u32 %v583, 7
      %v585 = vsub.s32 0, %v584
      %v586 = vrot.slane %v582, %v585
      %v587 = vmul.f32 %v576, %v586
      %v588 = vmul.f32 %v579, %v586
      %v589 = vld [vmem:[%s5] sm:$0x1]
      %v590 = vlaneseq
      %v591 = vshrl.u32 %v590, 7
      %v592 = vsub.s32 0, %v591
      %v593 = vrot.slane %v589, %v592
      %v594 = vadd.f32 %v587, %v593
      %v595 = vadd.f32 %v588, %v593
      %v596 = vmax.f32 %v594, 0.0
      %v597 = vmax.f32 %v595, 0.0
      %v598 = vld [vmem:[%s2] sm:$0xf]
      %v599 = vld [vmem:[%s2 + $0x4] sm:$0xf]
      %v600 = vld [vmem:[%s2 + $0x8] sm:$0xf]
      %v601 = vld [vmem:[%s2 + $0xc] sm:$0xf]
      %v602 = vld [vmem:[%s2 + $0x10] sm:$0xf]
      %v603 = vld [vmem:[%s2 + $0x14] sm:$0xf]
      %v604 = vld [vmem:[%s2 + $0x18] sm:$0xf]
      %v605 = vld [vmem:[%s2 + $0x1c] sm:$0xf]
      %v606 = vld [vmem:[%s2 + $0x20] sm:$0xf]
      %v607 = vld [vmem:[%s2 + $0x24] sm:$0xf]
      %v608 = vld [vmem:[%s2 + $0x28] sm:$0xf]
      %v609 = vld [vmem:[%s2 + $0x2c] sm:$0xf]
      %v610 = vld [vmem:[%s2 + $0x30] sm:$0xf]
      %v611 = vld [vmem:[%s2 + $0x34] sm:$0xf]
      %v612 = vld [vmem:[%s2 + $0x38] sm:$0xf]
      %v613 = vld [vmem:[%s2 + $0x3c] sm:$0xf]
      %v614 = vld [vmem:[%s2 + $0x40] sm:$0xf]
      %v615 = vld [vmem:[%s2 + $0x44] sm:$0xf]
      %v616 = vld [vmem:[%s2 + $0x48] sm:$0xf]
      %v617 = vld [vmem:[%s2 + $0x4c] sm:$0xf]
      %v618 = vld [vmem:[%s2 + $0x50] sm:$0xf]
      %v619 = vld [vmem:[%s2 + $0x54] sm:$0xf]
      %v620 = vld [vmem:[%s2 + $0x58] sm:$0xf]
      %v621 = vld [vmem:[%s2 + $0x5c] sm:$0xf]
      %v622 = vld [vmem:[%s2 + $0x60] sm:$0xf]
      %v623 = vld [vmem:[%s2 + $0x64] sm:$0xf]
      %v624 = vld [vmem:[%s2 + $0x68] sm:$0xf]
      %v625 = vld [vmem:[%s2 + $0x6c] sm:$0xf]
      %v626 = vld [vmem:[%s2 + $0x70] sm:$0xf]
      %v627 = vld [vmem:[%s2 + $0x74] sm:$0xf]
      %v628 = vld [vmem:[%s2 + $0x78] sm:$0xf]
      %v629 = vld [vmem:[%s2 + $0x7c] sm:$0xf]
      %v630 = vld [vmem:[%s2 + $0x80] sm:$0xf]
      %v631 = vld [vmem:[%s2 + $0x84] sm:$0xf]
      %v632 = vld [vmem:[%s2 + $0x88] sm:$0xf]
      %v633 = vld [vmem:[%s2 + $0x8c] sm:$0xf]
      %v634 = vld [vmem:[%s2 + $0x90] sm:$0xf]
      %v635 = vld [vmem:[%s2 + $0x94] sm:$0xf]
      %v636 = vld [vmem:[%s2 + $0x98] sm:$0xf]
      %v637 = vld [vmem:[%s2 + $0x9c] sm:$0xf]
      %v638 = vld [vmem:[%s2 + $0xa0] sm:$0xf]
      %v639 = vld [vmem:[%s2 + $0xa4] sm:$0xf]
      %v640 = vld [vmem:[%s2 + $0xa8] sm:$0xf]
      %v641 = vld [vmem:[%s2 + $0xac] sm:$0xf]
      %v642 = vld [vmem:[%s2 + $0xb0] sm:$0xf]
      %v643 = vld [vmem:[%s2 + $0xb4] sm:$0xf]
      %v644 = vld [vmem:[%s2 + $0xb8] sm:$0xf]
      %v645 = vld [vmem:[%s2 + $0xbc] sm:$0xf]
      %646 = vst [vmem:[#allocation2] sm:$0x1] 0.0
      %647 = vst [vmem:[#allocation2 + $0x1] sm:$0xff] %v596
      %648 = vst [vmem:[#allocation2 + $0x9] sm:$0xff] %v597
      %649 = vst [vmem:[#allocation2 + $0x11] sm:$0x1] 0.0
      %v650 = vld [vmem:[#allocation2] sm:$0xff]
      %v651 = vld [vmem:[#allocation2 + $0x8] sm:$0xff]
      %v652 = vld [vmem:[#allocation2 + $0x1] sm:$0xff]
      %v653 = vld [vmem:[#allocation2 + $0x9] sm:$0xff]
      %v654 = vld [vmem:[#allocation2 + $0x2] sm:$0xff]
      %v655 = vld [vmem:[#allocation2 + $0xa] sm:$0xff]
      %v656 = vpack.c.bf16 %v651, %v650
      %v657 = vpack.c.bf16 %v653, %v652
      %v658 = vpack.c.bf16 %v655, %v654
      %v707 = vunpack.c.l.b16 %v598
      %v708 = vunpack.c.l.b16 %v599
      %v709 = vunpack.c.l.b16 %v600
      %v710 = vunpack.c.l.b16 %v601
      %v711 = vunpack.c.l.b16 %v602
      %v712 = vunpack.c.l.b16 %v603
      %v713 = vunpack.c.l.b16 %v604
      %v714 = vunpack.c.l.b16 %v605
      %v715 = vunpack.c.l.b16 %v606
      %v716 = vunpack.c.l.b16 %v607
      %v717 = vunpack.c.l.b16 %v608
      %v718 = vunpack.c.l.b16 %v609
      %v719 = vunpack.c.l.b16 %v610
      %v720 = vunpack.c.l.b16 %v611
      %v721 = vunpack.c.l.b16 %v612
      %v722 = vunpack.c.l.b16 %v613
      %v723 = vunpack.c.l.b16 %v614
      %v724 = vunpack.c.l.b16 %v615
      %v725 = vunpack.c.l.b16 %v616
      %v726 = vunpack.c.l.b16 %v617
      %v727 = vunpack.c.l.b16 %v618
      %v728 = vunpack.c.l.b16 %v619
      %v729 = vunpack.c.l.b16 %v620
      %v730 = vunpack.c.l.b16 %v621
      %v731 = vunpack.c.l.b16 %v622
      %v732 = vunpack.c.l.b16 %v623
      %v733 = vunpack.c.l.b16 %v624
      %v734 = vunpack.c.l.b16 %v625
      %v735 = vunpack.c.l.b16 %v626
      %v736 = vunpack.c.l.b16 %v627
      %v737 = vunpack.c.l.b16 %v628
      %v738 = vunpack.c.l.b16 %v629
      %v739 = vunpack.c.l.b16 %v630
      %v740 = vunpack.c.l.b16 %v631
      %v741 = vunpack.c.l.b16 %v632
      %v742 = vunpack.c.l.b16 %v633
      %v743 = vunpack.c.l.b16 %v634
      %v744 = vunpack.c.l.b16 %v635
      %v745 = vunpack.c.l.b16 %v636
      %v746 = vunpack.c.l.b16 %v637
      %v747 = vunpack.c.l.b16 %v638
      %v748 = vunpack.c.l.b16 %v639
      %v749 = vunpack.c.l.b16 %v640
      %v750 = vunpack.c.l.b16 %v641
      %v751 = vunpack.c.l.b16 %v642
      %v752 = vunpack.c.l.b16 %v643
      %v753 = vunpack.c.l.b16 %v644
      %v754 = vunpack.c.l.b16 %v645
      %v755 = vpack.c.b16 %v708, %v707
      %v756 = vpack.c.b16 %v710, %v709
      %v757 = vpack.c.b16 %v712, %v711
      %v758 = vpack.c.b16 %v714, %v713
      %v759 = vpack.c.b16 %v716, %v715
      %v760 = vpack.c.b16 %v718, %v717
      %v761 = vpack.c.b16 %v720, %v719
      %v762 = vpack.c.b16 %v722, %v721
      %v763 = vpack.c.b16 %v724, %v723
      %v764 = vpack.c.b16 %v726, %v725
      %v765 = vpack.c.b16 %v728, %v727
      %v766 = vpack.c.b16 %v730, %v729
      %v767 = vpack.c.b16 %v732, %v731
      %v768 = vpack.c.b16 %v734, %v733
      %v769 = vpack.c.b16 %v736, %v735
      %v770 = vpack.c.b16 %v738, %v737
      %v771 = vpack.c.b16 %v740, %v739
      %v772 = vpack.c.b16 %v742, %v741
      %v773 = vpack.c.b16 %v744, %v743
      %v774 = vpack.c.b16 %v746, %v745
      %v775 = vpack.c.b16 %v748, %v747
      %v776 = vpack.c.b16 %v750, %v749
      %v777 = vpack.c.b16 %v752, %v751
      %v778 = vpack.c.b16 %v754, %v753
      %803 = vmatprep.subr.bf16.mxu0 0
      %804 = vmatpush1.bf16.msra.mxu0 %v755
      %805 = vmatprep.subr.bf16.mxu0 0
      %806 = vmatpush1.bf16.msra.mxu0 %v756
      %807 = vmatprep.subr.bf16.mxu0 0
      %808 = vmatpush1.bf16.msra.mxu0 %v757
      %809 = vmatprep.subr.bf16.mxu0 0
      %810 = vmatpush1.bf16.msra.mxu0 %v758
      %811 = vmatprep.subr.bf16.mxu0 0
      %812 = vmatpush1.bf16.msra.mxu0 %v759
      %813 = vmatprep.subr.bf16.mxu0 0
      %814 = vmatpush1.bf16.msra.mxu0 %v760
      %815 = vmatprep.subr.bf16.mxu0 0
      %816 = vmatpush1.bf16.msra.mxu0 %v761
      %817 = vmatprep.subr.bf16.mxu0 0
      %818 = vmatpush1.bf16.msra.mxu0 %v762
      %819 = vmatprep.subr.bf16.mxu0 0
      %820 = vmatpush1.bf16.msra.mxu0 %v763
      %821 = vmatprep.subr.bf16.mxu0 0
      %822 = vmatpush1.bf16.msra.mxu0 %v764
      %823 = vmatprep.subr.bf16.mxu0 0
      %824 = vmatpush1.bf16.msra.mxu0 %v765
      %825 = vmatprep.subr.bf16.mxu0 0
      %826 = vmatpush1.bf16.msra.mxu0 %v766
      %827 = vmatprep.subr.bf16.mxu0 0
      %828 = vmatpush1.bf16.msra.mxu0 %v767
      %829 = vmatprep.subr.bf16.mxu0 0
      %830 = vmatpush1.bf16.msra.mxu0 %v768
      %831 = vmatprep.subr.bf16.mxu0 0
      %832 = vmatpush1.bf16.msra.mxu0 %v769
      %833 = vmatprep.subr.bf16.mxu0 0
      %834 = vmatpush1.bf16.msra.mxu0 %v770
      %835 = vmatprep.mubr.bf16.mxu0 %v657
      %836 = vmatmul.mubr.bf16.gmra.mrb[0].mxu0 %v656
      %v837 = vpop.f32.mrb[0].mxu0
      %v838 = vadd.f32 0.0, %v837
      %v839 = vpop.f32.mrb[0].mxu0
      %v840 = vpop.f32.mrb[0].mxu0
      %v841 = vadd.f32 0.0, %v840
      %v842 = vpop.f32.mrb[0].mxu0
      %843 = vdwg.mxu0
      %844 = vmatprep.subr.bf16.mxu0 0
      %845 = vmatpush1.bf16.msra.mxu0 %v771
      %846 = vmatprep.subr.bf16.mxu0 0
      %847 = vmatpush1.bf16.msra.mxu0 %v772
      %848 = vmatprep.subr.bf16.mxu0 0
      %849 = vmatpush1.bf16.msra.mxu0 %v773
      %850 = vmatprep.subr.bf16.mxu0 0
      %851 = vmatpush1.bf16.msra.mxu0 %v774
      %852 = vmatprep.subr.bf16.mxu0 0
      %853 = vmatpush1.bf16.msra.mxu0 %v775
      %854 = vmatprep.subr.bf16.mxu0 0
      %855 = vmatpush1.bf16.msra.mxu0 %v776
      %856 = vmatprep.subr.bf16.mxu0 0
      %857 = vmatpush1.bf16.msra.mxu0 %v777
      %858 = vmatprep.subr.bf16.mxu0 0
      %859 = vmatpush1.bf16.msra.mxu0 %v778
      %860 = vmatprep.subr.bf16.mxu0 0
      %861 = vmatpush1.bf16.msra.mxu0 0
      %862 = vmatprep.subr.bf16.mxu0 0
      %863 = vmatpush1.bf16.msra.mxu0 0
      %864 = vmatprep.subr.bf16.mxu0 0
      %865 = vmatpush1.bf16.msra.mxu0 0
      %866 = vmatprep.subr.bf16.mxu0 0
      %867 = vmatpush1.bf16.msra.mxu0 0
      %868 = vmatprep.subr.bf16.mxu0 0
      %869 = vmatpush1.bf16.msra.mxu0 0
      %870 = vmatprep.subr.bf16.mxu0 0
      %871 = vmatpush1.bf16.msra.mxu0 0
      %872 = vmatprep.subr.bf16.mxu0 0
      %873 = vmatpush1.bf16.msra.mxu0 0
      %874 = vmatprep.subr.bf16.mxu0 0
      %875 = vmatpush1.bf16.msra.mxu0 0
      %876 = vmatprep.mubr.bf16.mxu0 0
      %877 = vmatmul.mubr.bf16.gmra.mrb[0].mxu0 %v658
      %v878 = vpop.f32.mrb[0].mxu0
      %v879 = vadd.f32 %v838, %v878
      %v880 = vpop.f32.mrb[0].mxu0
      %v881 = vpop.f32.mrb[0].mxu0
      %v882 = vadd.f32 %v841, %v881
      %v883 = vpop.f32.mrb[0].mxu0
      %884 = vdwg.mxu0
      %v885 = vld [vmem:[%s4 + $0x1] sm:$0x1]
      %v886 = vlaneseq
      %v887 = vshrl.u32 %v886, 7
      %v888 = vsub.s32 0, %v887
      %v889 = vrot.slane %v885, %v888
      %v890 = vmul.f32 %v879, %v889
      %v891 = vmul.f32 %v882, %v889
      %v892 = vld [vmem:[%s5 + $0x1] sm:$0x1]
      %v893 = vlaneseq
      %v894 = vshrl.u32 %v893, 7
      %v895 = vsub.s32 0, %v894
      %v896 = vrot.slane %v892, %v895
      %v897 = vadd.f32 %v890, %v896
      %v898 = vadd.f32 %v891, %v896
      %v899 = vmax.f32 %v897, 0.0
      %v900 = vmax.f32 %v898, 0.0
      %v901 = vld [vmem:[%s2] sm:$0xf]
      %v902 = vld [vmem:[%s2 + $0x4] sm:$0xf]
      %v903 = vld [vmem:[%s2 + $0x8] sm:$0xf]
      %v904 = vld [vmem:[%s2 + $0xc] sm:$0xf]
      %v905 = vld [vmem:[%s2 + $0x10] sm:$0xf]
      %v906 = vld [vmem:[%s2 + $0x14] sm:$0xf]
      %v907 = vld [vmem:[%s2 + $0x18] sm:$0xf]
      %v908 = vld [vmem:[%s2 + $0x1c] sm:$0xf]
      %v909 = vld [vmem:[%s2 + $0x20] sm:$0xf]
      %v910 = vld [vmem:[%s2 + $0x24] sm:$0xf]
      %v911 = vld [vmem:[%s2 + $0x28] sm:$0xf]
      %v912 = vld [vmem:[%s2 + $0x2c] sm:$0xf]
      %v913 = vld [vmem:[%s2 + $0x30] sm:$0xf]
      %v914 = vld [vmem:[%s2 + $0x34] sm:$0xf]
      %v915 = vld [vmem:[%s2 + $0x38] sm:$0xf]
      %v916 = vld [vmem:[%s2 + $0x3c] sm:$0xf]
      %v917 = vld [vmem:[%s2 + $0x40] sm:$0xf]
      %v918 = vld [vmem:[%s2 + $0x44] sm:$0xf]
      %v919 = vld [vmem:[%s2 + $0x48] sm:$0xf]
      %v920 = vld [vmem:[%s2 + $0x4c] sm:$0xf]
      %v921 = vld [vmem:[%s2 + $0x50] sm:$0xf]
      %v922 = vld [vmem:[%s2 + $0x54] sm:$0xf]
      %v923 = vld [vmem:[%s2 + $0x58] sm:$0xf]
      %v924 = vld [vmem:[%s2 + $0x5c] sm:$0xf]
      %v925 = vld [vmem:[%s2 + $0x60] sm:$0xf]
      %v926 = vld [vmem:[%s2 + $0x64] sm:$0xf]
      %v927 = vld [vmem:[%s2 + $0x68] sm:$0xf]
      %v928 = vld [vmem:[%s2 + $0x6c] sm:$0xf]
      %v929 = vld [vmem:[%s2 + $0x70] sm:$0xf]
      %v930 = vld [vmem:[%s2 + $0x74] sm:$0xf]
      %v931 = vld [vmem:[%s2 + $0x78] sm:$0xf]
      %v932 = vld [vmem:[%s2 + $0x7c] sm:$0xf]
      %v933 = vld [vmem:[%s2 + $0x80] sm:$0xf]
      %v934 = vld [vmem:[%s2 + $0x84] sm:$0xf]
      %v935 = vld [vmem:[%s2 + $0x88] sm:$0xf]
      %v936 = vld [vmem:[%s2 + $0x8c] sm:$0xf]
      %v937 = vld [vmem:[%s2 + $0x90] sm:$0xf]
      %v938 = vld [vmem:[%s2 + $0x94] sm:$0xf]
      %v939 = vld [vmem:[%s2 + $0x98] sm:$0xf]
      %v940 = vld [vmem:[%s2 + $0x9c] sm:$0xf]
      %v941 = vld [vmem:[%s2 + $0xa0] sm:$0xf]
      %v942 = vld [vmem:[%s2 + $0xa4] sm:$0xf]
      %v943 = vld [vmem:[%s2 + $0xa8] sm:$0xf]
      %v944 = vld [vmem:[%s2 + $0xac] sm:$0xf]
      %v945 = vld [vmem:[%s2 + $0xb0] sm:$0xf]
      %v946 = vld [vmem:[%s2 + $0xb4] sm:$0xf]
      %v947 = vld [vmem:[%s2 + $0xb8] sm:$0xf]
      %v948 = vld [vmem:[%s2 + $0xbc] sm:$0xf]
      %949 = vst [vmem:[#allocation2] sm:$0x1] 0.0
      %950 = vst [vmem:[#allocation2 + $0x1] sm:$0xff] %v899
      %951 = vst [vmem:[#allocation2 + $0x9] sm:$0xff] %v900
      %952 = vst [vmem:[#allocation2 + $0x11] sm:$0x1] 0.0
      %v953 = vld [vmem:[#allocation2] sm:$0xff]
      %v954 = vld [vmem:[#allocation2 + $0x8] sm:$0xff]
      %v955 = vld [vmem:[#allocation2 + $0x1] sm:$0xff]
      %v956 = vld [vmem:[#allocation2 + $0x9] sm:$0xff]
      %v957 = vld [vmem:[#allocation2 + $0x2] sm:$0xff]
      %v958 = vld [vmem:[#allocation2 + $0xa] sm:$0xff]
      %v959 = vpack.c.bf16 %v954, %v953
      %v960 = vpack.c.bf16 %v956, %v955
      %v961 = vpack.c.bf16 %v958, %v957
      %v1010 = vunpack.c.l.b16 %v901
      %v1011 = vunpack.c.l.b16 %v902
      %v1012 = vunpack.c.l.b16 %v903
      %v1013 = vunpack.c.l.b16 %v904
      %v1014 = vunpack.c.l.b16 %v905
      %v1015 = vunpack.c.l.b16 %v906
      %v1016 = vunpack.c.l.b16 %v907
      %v1017 = vunpack.c.l.b16 %v908
      %v1018 = vunpack.c.l.b16 %v909
      %v1019 = vunpack.c.l.b16 %v910
      %v1020 = vunpack.c.l.b16 %v911
      %v1021 = vunpack.c.l.b16 %v912
      %v1022 = vunpack.c.l.b16 %v913
      %v1023 = vunpack.c.l.b16 %v914
      %v1024 = vunpack.c.l.b16 %v915
      %v1025 = vunpack.c.l.b16 %v916
      %v1026 = vunpack.c.l.b16 %v917
      %v1027 = vunpack.c.l.b16 %v918
      %v1028 = vunpack.c.l.b16 %v919
      %v1029 = vunpack.c.l.b16 %v920
      %v1030 = vunpack.c.l.b16 %v921
      %v1031 = vunpack.c.l.b16 %v922
      %v1032 = vunpack.c.l.b16 %v923
      %v1033 = vunpack.c.l.b16 %v924
      %v1034 = vunpack.c.l.b16 %v925
      %v1035 = vunpack.c.l.b16 %v926
      %v1036 = vunpack.c.l.b16 %v927
      %v1037 = vunpack.c.l.b16 %v928
      %v1038 = vunpack.c.l.b16 %v929
      %v1039 = vunpack.c.l.b16 %v930
      %v1040 = vunpack.c.l.b16 %v931
      %v1041 = vunpack.c.l.b16 %v932
      %v1042 = vunpack.c.l.b16 %v933
      %v1043 = vunpack.c.l.b16 %v934
      %v1044 = vunpack.c.l.b16 %v935
      %v1045 = vunpack.c.l.b16 %v936
      %v1046 = vunpack.c.l.b16 %v937
      %v1047 = vunpack.c.l.b16 %v938
      %v1048 = vunpack.c.l.b16 %v939
      %v1049 = vunpack.c.l.b16 %v940
      %v1050 = vunpack.c.l.b16 %v941
      %v1051 = vunpack.c.l.b16 %v942
      %v1052 = vunpack.c.l.b16 %v943
      %v1053 = vunpack.c.l.b16 %v944
      %v1054 = vunpack.c.l.b16 %v945
      %v1055 = vunpack.c.l.b16 %v946
      %v1056 = vunpack.c.l.b16 %v947
      %v1057 = vunpack.c.l.b16 %v948
      %v1058 = vpack.c.b16 %v1011, %v1010
      %v1059 = vpack.c.b16 %v1013, %v1012
      %v1060 = vpack.c.b16 %v1015, %v1014
      %v1061 = vpack.c.b16 %v1017, %v1016
      %v1062 = vpack.c.b16 %v1019, %v1018
      %v1063 = vpack.c.b16 %v1021, %v1020
      %v1064 = vpack.c.b16 %v1023, %v1022
      %v1065 = vpack.c.b16 %v1025, %v1024
      %v1066 = vpack.c.b16 %v1027, %v1026
      %v1067 = vpack.c.b16 %v1029, %v1028
      %v1068 = vpack.c.b16 %v1031, %v1030
      %v1069 = vpack.c.b16 %v1033, %v1032
      %v1070 = vpack.c.b16 %v1035, %v1034
      %v1071 = vpack.c.b16 %v1037, %v1036
      %v1072 = vpack.c.b16 %v1039, %v1038
      %v1073 = vpack.c.b16 %v1041, %v1040
      %v1074 = vpack.c.b16 %v1043, %v1042
      %v1075 = vpack.c.b16 %v1045, %v1044
      %v1076 = vpack.c.b16 %v1047, %v1046
      %v1077 = vpack.c.b16 %v1049, %v1048
      %v1078 = vpack.c.b16 %v1051, %v1050
      %v1079 = vpack.c.b16 %v1053, %v1052
      %v1080 = vpack.c.b16 %v1055, %v1054
      %v1081 = vpack.c.b16 %v1057, %v1056
      %1106 = vmatprep.subr.bf16.mxu0 0
      %1107 = vmatpush1.bf16.msra.mxu0 %v1058
      %1108 = vmatprep.subr.bf16.mxu0 0
      %1109 = vmatpush1.bf16.msra.mxu0 %v1059
      %1110 = vmatprep.subr.bf16.mxu0 0
      %1111 = vmatpush1.bf16.msra.mxu0 %v1060
      %1112 = vmatprep.subr.bf16.mxu0 0
      %1113 = vmatpush1.bf16.msra.mxu0 %v1061
      %1114 = vmatprep.subr.bf16.mxu0 0
      %1115 = vmatpush1.bf16.msra.mxu0 %v1062
      %1116 = vmatprep.subr.bf16.mxu0 0
      %1117 = vmatpush1.bf16.msra.mxu0 %v1063
      %1118 = vmatprep.subr.bf16.mxu0 0
      %1119 = vmatpush1.bf16.msra.mxu0 %v1064
      %1120 = vmatprep.subr.bf16.mxu0 0
      %1121 = vmatpush1.bf16.msra.mxu0 %v1065
      %1122 = vmatprep.subr.bf16.mxu0 0
      %1123 = vmatpush1.bf16.msra.mxu0 %v1066
      %1124 = vmatprep.subr.bf16.mxu0 0
      %1125 = vmatpush1.bf16.msra.mxu0 %v1067
      %1126 = vmatprep.subr.bf16.mxu0 0
      %1127 = vmatpush1.bf16.msra.mxu0 %v1068
      %1128 = vmatprep.subr.bf16.mxu0 0
      %1129 = vmatpush1.bf16.msra.mxu0 %v1069
      %1130 = vmatprep.subr.bf16.mxu0 0
      %1131 = vmatpush1.bf16.msra.mxu0 %v1070
      %1132 = vmatprep.subr.bf16.mxu0 0
      %1133 = vmatpush1.bf16.msra.mxu0 %v1071
      %1134 = vmatprep.subr.bf16.mxu0 0
      %1135 = vmatpush1.bf16.msra.mxu0 %v1072
      %1136 = vmatprep.subr.bf16.mxu0 0
      %1137 = vmatpush1.bf16.msra.mxu0 %v1073
      %1138 = vmatprep.mubr.bf16.mxu0 %v960
      %1139 = vmatmul.mubr.bf16.gmra.mrb[0].mxu0 %v959
      %v1140 = vpop.f32.mrb[0].mxu0
      %v1141 = vadd.f32 0.0, %v1140
      %v1142 = vpop.f32.mrb[0].mxu0
      %v1143 = vpop.f32.mrb[0].mxu0
      %v1144 = vadd.f32 0.0, %v1143
      %v1145 = vpop.f32.mrb[0].mxu0
      %1146 = vdwg.mxu0
      %1147 = vmatprep.subr.bf16.mxu0 0
      %1148 = vmatpush1.bf16.msra.mxu0 %v1074
      %1149 = vmatprep.subr.bf16.mxu0 0
      %1150 = vmatpush1.bf16.msra.mxu0 %v1075
      %1151 = vmatprep.subr.bf16.mxu0 0
      %1152 = vmatpush1.bf16.msra.mxu0 %v1076
      %1153 = vmatprep.subr.bf16.mxu0 0
      %1154 = vmatpush1.bf16.msra.mxu0 %v1077
      %1155 = vmatprep.subr.bf16.mxu0 0
      %1156 = vmatpush1.bf16.msra.mxu0 %v1078
      %1157 = vmatprep.subr.bf16.mxu0 0
      %1158 = vmatpush1.bf16.msra.mxu0 %v1079
      %1159 = vmatprep.subr.bf16.mxu0 0
      %1160 = vmatpush1.bf16.msra.mxu0 %v1080
      %1161 = vmatprep.subr.bf16.mxu0 0
      %1162 = vmatpush1.bf16.msra.mxu0 %v1081
      %1163 = vmatprep.subr.bf16.mxu0 0
      %1164 = vmatpush1.bf16.msra.mxu0 0
      %1165 = vmatprep.subr.bf16.mxu0 0
      %1166 = vmatpush1.bf16.msra.mxu0 0
      %1167 = vmatprep.subr.bf16.mxu0 0
      %1168 = vmatpush1.bf16.msra.mxu0 0
      %1169 = vmatprep.subr.bf16.mxu0 0
      %1170 = vmatpush1.bf16.msra.mxu0 0
      %1171 = vmatprep.subr.bf16.mxu0 0
      %1172 = vmatpush1.bf16.msra.mxu0 0
      %1173 = vmatprep.subr.bf16.mxu0 0
      %1174 = vmatpush1.bf16.msra.mxu0 0
      %1175 = vmatprep.subr.bf16.mxu0 0
      %1176 = vmatpush1.bf16.msra.mxu0 0
      %1177 = vmatprep.subr.bf16.mxu0 0
      %1178 = vmatpush1.bf16.msra.mxu0 0
      %1179 = vmatprep.mubr.bf16.mxu0 0
      %1180 = vmatmul.mubr.bf16.gmra.mrb[0].mxu0 %v961
      %v1181 = vpop.f32.mrb[0].mxu0
      %v1182 = vadd.f32 %v1141, %v1181
      %v1183 = vpop.f32.mrb[0].mxu0
      %v1184 = vpop.f32.mrb[0].mxu0
      %v1185 = vadd.f32 %v1144, %v1184
      %v1186 = vpop.f32.mrb[0].mxu0
      %1187 = vdwg.mxu0
      %v1188 = vld [vmem:[%s4 + $0x2] sm:$0x1]
      %v1189 = vlaneseq
      %v1190 = vshrl.u32 %v1189, 7
      %v1191 = vsub.s32 0, %v1190
      %v1192 = vrot.slane %v1188, %v1191
      %v1193 = vmul.f32 %v1182, %v1192
      %v1194 = vmul.f32 %v1185, %v1192
      %v1195 = vld [vmem:[%s5 + $0x2] sm:$0x1]
      %v1196 = vlaneseq
      %v1197 = vshrl.u32 %v1196, 7
      %v1198 = vsub.s32 0, %v1197
      %v1199 = vrot.slane %v1195, %v1198
      %v1200 = vadd.f32 %v1193, %v1199
      %v1201 = vadd.f32 %v1194, %v1199
      %v1202 = vadd.f32 %v1200, %v596
      %v1203 = vadd.f32 %v1201, %v597
      %v1204 = vmax.f32 %v1202, 0.0
      %v1205 = vmax.f32 %v1203, 0.0
      %v1206 = vld [vmem:[%s3] sm:$0xf]
      %v1207 = vld [vmem:[%s3 + $0x4] sm:$0xf]
      %v1208 = vld [vmem:[%s3 + $0x8] sm:$0xf]
      %v1209 = vld [vmem:[%s3 + $0xc] sm:$0xf]
      %v1210 = vld [vmem:[%s3 + $0x10] sm:$0xf]
      %v1211 = vld [vmem:[%s3 + $0x14] sm:$0xf]
      %v1212 = vld [vmem:[%s3 + $0x18] sm:$0xf]
      %v1213 = vld [vmem:[%s3 + $0x1c] sm:$0xf]
      %v1214 = vld [vmem:[%s3 + $0x20] sm:$0xf]
      %v1215 = vld [vmem:[%s3 + $0x24] sm:$0xf]
      %v1216 = vld [vmem:[%s3 + $0x28] sm:$0xf]
      %v1217 = vld [vmem:[%s3 + $0x2c] sm:$0xf]
      %v1218 = vld [vmem:[%s3 + $0x30] sm:$0xf]
      %v1219 = vld [vmem:[%s3 + $0x34] sm:$0xf]
      %v1220 = vld [vmem:[%s3 + $0x38] sm:$0xf]
      %v1221 = vld [vmem:[%s3 + $0x3c] sm:$0xf]
      %v1222 = vld [vmem:[%s3 + $0x40] sm:$0xf]
      %v1223 = vld [vmem:[%s3 + $0x44] sm:$0xf]
      %v1224 = vld [vmem:[%s3 + $0x48] sm:$0xf]
      %v1225 = vld [vmem:[%s3 + $0x4c] sm:$0xf]
      %v1226 = vld [vmem:[%s3 + $0x50] sm:$0xf]
      %v1227 = vld [vmem:[%s3 + $0x54] sm:$0xf]
      %v1228 = vld [vmem:[%s3 + $0x58] sm:$0xf]
      %v1229 = vld [vmem:[%s3 + $0x5c] sm:$0xf]
      %v1230 = vld [vmem:[%s3 + $0x60] sm:$0xf]
      %v1231 = vld [vmem:[%s3 + $0x64] sm:$0xf]
      %v1232 = vld [vmem:[%s3 + $0x68] sm:$0xf]
      %v1233 = vld [vmem:[%s3 + $0x6c] sm:$0xf]
      %v1234 = vld [vmem:[%s3 + $0x70] sm:$0xf]
      %v1235 = vld [vmem:[%s3 + $0x74] sm:$0xf]
      %v1236 = vld [vmem:[%s3 + $0x78] sm:$0xf]
      %v1237 = vld [vmem:[%s3 + $0x7c] sm:$0xf]
      %v1238 = vld [vmem:[%s3 + $0x80] sm:$0xf]
      %v1239 = vld [vmem:[%s3 + $0x84] sm:$0xf]
      %v1240 = vld [vmem:[%s3 + $0x88] sm:$0xf]
      %v1241 = vld [vmem:[%s3 + $0x8c] sm:$0xf]
      %v1242 = vld [vmem:[%s3 + $0x90] sm:$0xf]
      %v1243 = vld [vmem:[%s3 + $0x94] sm:$0xf]
      %v1244 = vld [vmem:[%s3 + $0x98] sm:$0xf]
      %v1245 = vld [vmem:[%s3 + $0x9c] sm:$0xf]
      %v1246 = vld [vmem:[%s3 + $0xa0] sm:$0xf]
      %v1247 = vld [vmem:[%s3 + $0xa4] sm:$0xf]
      %v1248 = vld [vmem:[%s3 + $0xa8] sm:$0xf]
      %v1249 = vld [vmem:[%s3 + $0xac] sm:$0xf]
      %v1250 = vld [vmem:[%s3 + $0xb0] sm:$0xf]
      %v1251 = vld [vmem:[%s3 + $0xb4] sm:$0xf]
      %v1252 = vld [vmem:[%s3 + $0xb8] sm:$0xf]
      %v1253 = vld [vmem:[%s3 + $0xbc] sm:$0xf]
      %1254 = vst [vmem:[#allocation2] sm:$0x1] 0.0
      %1255 = vst [vmem:[#allocation2 + $0x1] sm:$0xff] %v1204
      %1256 = vst [vmem:[#allocation2 + $0x9] sm:$0xff] %v1205
      %1257 = vst [vmem:[#allocation2 + $0x11] sm:$0x1] 0.0
      %v1258 = vld [vmem:[#allocation2] ss:$2 sm:$0xff]
      %s1259 = scalar_lea.vmem [#allocation2], 1
      %v1260 = vld [vmem:[%s1259] ss:$2 sm:$0xff]
      %s1261 = scalar_lea.vmem [#allocation2], 2
      %v1262 = vld [vmem:[%s1261] ss:$2 sm:$0xff]
      %v1263 = vpack.c.bf16 %v1258, %v1258
      %v1264 = vpack.c.bf16 %v1260, %v1260
      %v1265 = vpack.c.bf16 %v1262, %v1262
      %v1314 = vunpack.c.l.b16 %v1206
      %v1315 = vunpack.c.l.b16 %v1207
      %v1316 = vunpack.c.l.b16 %v1208
      %v1317 = vunpack.c.l.b16 %v1209
      %v1318 = vunpack.c.l.b16 %v1210
      %v1319 = vunpack.c.l.b16 %v1211
      %v1320 = vunpack.c.l.b16 %v1212
      %v1321 = vunpack.c.l.b16 %v1213
      %v1322 = vunpack.c.l.b16 %v1214
      %v1323 = vunpack.c.l.b16 %v1215
      %v1324 = vunpack.c.l.b16 %v1216
      %v1325 = vunpack.c.l.b16 %v1217
      %v1326 = vunpack.c.l.b16 %v1218
      %v1327 = vunpack.c.l.b16 %v1219
      %v1328 = vunpack.c.l.b16 %v1220
      %v1329 = vunpack.c.l.b16 %v1221
      %v1330 = vunpack.c.l.b16 %v1222
      %v1331 = vunpack.c.l.b16 %v1223
      %v1332 = vunpack.c.l.b16 %v1224
      %v1333 = vunpack.c.l.b16 %v1225
      %v1334 = vunpack.c.l.b16 %v1226
      %v1335 = vunpack.c.l.b16 %v1227
      %v1336 = vunpack.c.l.b16 %v1228
      %v1337 = vunpack.c.l.b16 %v1229
      %v1338 = vunpack.c.l.b16 %v1230
      %v1339 = vunpack.c.l.b16 %v1231
      %v1340 = vunpack.c.l.b16 %v1232
      %v1341 = vunpack.c.l.b16 %v1233
      %v1342 = vunpack.c.l.b16 %v1234
      %v1343 = vunpack.c.l.b16 %v1235
      %v1344 = vunpack.c.l.b16 %v1236
      %v1345 = vunpack.c.l.b16 %v1237
      %v1346 = vunpack.c.l.b16 %v1238
      %v1347 = vunpack.c.l.b16 %v1239
      %v1348 = vunpack.c.l.b16 %v1240
      %v1349 = vunpack.c.l.b16 %v1241
      %v1350 = vunpack.c.l.b16 %v1242
      %v1351 = vunpack.c.l.b16 %v1243
      %v1352 = vunpack.c.l.b16 %v1244
      %v1353 = vunpack.c.l.b16 %v1245
      %v1354 = vunpack.c.l.b16 %v1246
      %v1355 = vunpack.c.l.b16 %v1247
      %v1356 = vunpack.c.l.b16 %v1248
      %v1357 = vunpack.c.l.b16 %v1249
      %v1358 = vunpack.c.l.b16 %v1250
      %v1359 = vunpack.c.l.b16 %v1251
      %v1360 = vunpack.c.l.b16 %v1252
      %v1361 = vunpack.c.l.b16 %v1253
      %v1362 = vpack.c.b16 %v1315, %v1314
      %v1363 = vpack.c.b16 %v1317, %v1316
      %v1364 = vpack.c.b16 %v1319, %v1318
      %v1365 = vpack.c.b16 %v1321, %v1320
      %v1366 = vpack.c.b16 %v1323, %v1322
      %v1367 = vpack.c.b16 %v1325, %v1324
      %v1368 = vpack.c.b16 %v1327, %v1326
      %v1369 = vpack.c.b16 %v1329, %v1328
      %v1370 = vpack.c.b16 %v1331, %v1330
      %v1371 = vpack.c.b16 %v1333, %v1332
      %v1372 = vpack.c.b16 %v1335, %v1334
      %v1373 = vpack.c.b16 %v1337, %v1336
      %v1374 = vpack.c.b16 %v1339, %v1338
      %v1375 = vpack.c.b16 %v1341, %v1340
      %v1376 = vpack.c.b16 %v1343, %v1342
      %v1377 = vpack.c.b16 %v1345, %v1344
      %v1378 = vpack.c.b16 %v1347, %v1346
      %v1379 = vpack.c.b16 %v1349, %v1348
      %v1380 = vpack.c.b16 %v1351, %v1350
      %v1381 = vpack.c.b16 %v1353, %v1352
      %v1382 = vpack.c.b16 %v1355, %v1354
      %v1383 = vpack.c.b16 %v1357, %v1356
      %v1384 = vpack.c.b16 %v1359, %v1358
      %v1385 = vpack.c.b16 %v1361, %v1360
      %1410 = vmatprep.subr.bf16.mxu0 0
      %1411 = vmatpush1.bf16.msra.mxu0 %v1362
      %1412 = vmatprep.subr.bf16.mxu0 0
      %1413 = vmatpush1.bf16.msra.mxu0 %v1363
      %1414 = vmatprep.subr.bf16.mxu0 0
      %1415 = vmatpush1.bf16.msra.mxu0 %v1364
      %1416 = vmatprep.subr.bf16.mxu0 0
      %1417 = vmatpush1.bf16.msra.mxu0 %v1365
      %1418 = vmatprep.subr.bf16.mxu0 0
      %1419 = vmatpush1.bf16.msra.mxu0 %v1366
      %1420 = vmatprep.subr.bf16.mxu0 0
      %1421 = vmatpush1.bf16.msra.mxu0 %v1367
      %1422 = vmatprep.subr.bf16.mxu0 0
      %1423 = vmatpush1.bf16.msra.mxu0 %v1368
      %1424 = vmatprep.subr.bf16.mxu0 0
      %1425 = vmatpush1.bf16.msra.mxu0 %v1369
      %1426 = vmatprep.subr.bf16.mxu0 0
      %1427 = vmatpush1.bf16.msra.mxu0 %v1370
      %1428 = vmatprep.subr.bf16.mxu0 0
      %1429 = vmatpush1.bf16.msra.mxu0 %v1371
      %1430 = vmatprep.subr.bf16.mxu0 0
      %1431 = vmatpush1.bf16.msra.mxu0 %v1372
      %1432 = vmatprep.subr.bf16.mxu0 0
      %1433 = vmatpush1.bf16.msra.mxu0 %v1373
      %1434 = vmatprep.subr.bf16.mxu0 0
      %1435 = vmatpush1.bf16.msra.mxu0 %v1374
      %1436 = vmatprep.subr.bf16.mxu0 0
      %1437 = vmatpush1.bf16.msra.mxu0 %v1375
      %1438 = vmatprep.subr.bf16.mxu0 0
      %1439 = vmatpush1.bf16.msra.mxu0 %v1376
      %1440 = vmatprep.subr.bf16.mxu0 0
      %1441 = vmatpush1.bf16.msra.mxu0 %v1377
      %1442 = vmatprep.mubr.bf16.mxu0 %v1264
      %1443 = vmatmul.mubr.bf16.gmra.mrb[0].mxu0 %v1263
      %v1444 = vpop.f32.mrb[0].mxu0
      %v1445 = vadd.f32 0.0, %v1444
      %v1446 = vpop.f32.mrb[0].mxu0
      %v1447 = vpop.f32.mrb[0].mxu0
      %v1448 = vpop.f32.mrb[0].mxu0
      %1449 = vdwg.mxu0
      %1450 = vmatprep.subr.bf16.mxu0 0
      %1451 = vmatpush1.bf16.msra.mxu0 %v1378
      %1452 = vmatprep.subr.bf16.mxu0 0
      %1453 = vmatpush1.bf16.msra.mxu0 %v1379
      %1454 = vmatprep.subr.bf16.mxu0 0
      %1455 = vmatpush1.bf16.msra.mxu0 %v1380
      %1456 = vmatprep.subr.bf16.mxu0 0
      %1457 = vmatpush1.bf16.msra.mxu0 %v1381
      %1458 = vmatprep.subr.bf16.mxu0 0
      %1459 = vmatpush1.bf16.msra.mxu0 %v1382
      %1460 = vmatprep.subr.bf16.mxu0 0
      %1461 = vmatpush1.bf16.msra.mxu0 %v1383
      %1462 = vmatprep.subr.bf16.mxu0 0
      %1463 = vmatpush1.bf16.msra.mxu0 %v1384
      %1464 = vmatprep.subr.bf16.mxu0 0
      %1465 = vmatpush1.bf16.msra.mxu0 %v1385
      %1466 = vmatprep.subr.bf16.mxu0 0
      %1467 = vmatpush1.bf16.msra.mxu0 0
      %1468 = vmatprep.subr.bf16.mxu0 0
      %1469 = vmatpush1.bf16.msra.mxu0 0
      %1470 = vmatprep.subr.bf16.mxu0 0
      %1471 = vmatpush1.bf16.msra.mxu0 0
      %1472 = vmatprep.subr.bf16.mxu0 0
      %1473 = vmatpush1.bf16.msra.mxu0 0
      %1474 = vmatprep.subr.bf16.mxu0 0
      %1475 = vmatpush1.bf16.msra.mxu0 0
      %1476 = vmatprep.subr.bf16.mxu0 0
      %1477 = vmatpush1.bf16.msra.mxu0 0
      %1478 = vmatprep.subr.bf16.mxu0 0
      %1479 = vmatpush1.bf16.msra.mxu0 0
      %1480 = vmatprep.subr.bf16.mxu0 0
      %1481 = vmatpush1.bf16.msra.mxu0 0
      %1482 = vmatprep.mubr.bf16.mxu0 0
      %1483 = vmatmul.mubr.bf16.gmra.mrb[0].mxu0 %v1265
      %v1484 = vpop.f32.mrb[0].mxu0
      %v1485 = vadd.f32 %v1445, %v1484
      %v1486 = vpop.f32.mrb[0].mxu0
      %v1487 = vpop.f32.mrb[0].mxu0
      %v1488 = vpop.f32.mrb[0].mxu0
      %1489 = vdwg.mxu0
      %v1490 = vld [vmem:[%s4 + $0x3] sm:$0x1]
      %v1491 = vlaneseq
      %v1492 = vshrl.u32 %v1491, 7
      %v1493 = vsub.s32 0, %v1492
      %v1494 = vrot.slane %v1490, %v1493
      %v1495 = vmul.f32 %v1485, %v1494
      %v1496 = vld [vmem:[%s5 + $0x3] sm:$0x1]
      %v1497 = vlaneseq
      %v1498 = vshrl.u32 %v1497, 7
      %v1499 = vsub.s32 0, %v1498
      %v1500 = vrot.slane %v1496, %v1499
      %v1501 = vadd.f32 %v1495, %v1500
      %v1502 = vmax.f32 %v1501, 0.0
      %v1503 = vpack.c.bf16 %v1205, %v1204
      %v1505 = vunpack.c.l.b16 %v1503
      %v1506 = vunpack.c.h.b16 %v1503
      %v1507 = vpack.c.b16 %v1505, %v1505
      %v1508 = vpack.c.b16 %v1506, %v1506
      %1511 = vst [vmem:[%s285] sm:$0xf] %v1507
      %1512 = vst [vmem:[%s285 + $0x4] sm:$0xf] %v1508
      %v1513 = vpack.c.bf16 %v1502, %v1502
      %1514 = vst [vmem:[%s289] sm:$0xf] %v1513
      %p1515 = scmp.lt.s32.totalorder %s19, 1
      %s1516 = scalar_select %p1515, %s19, 1
      %s1517 = smul.addr %s1516, 2
      %s1518 = smul.addr %s1517, 4
      %s1519 = scalar_lea.vmem %s6, %s1518
      %p1520 = scmp.lt.s32.totalorder %s19, 1
      %s1521 = scalar_select %p1520, %s19, 1
      %s1522 = smul.addr %s1521, 4
      %s1523 = scalar_lea.vmem %s7, %s1522
      // Predicated region
      $region45: #{forward.5} parent=43 // pred_check
        %p1524 = pneg %p168
      $region46: #{forward.5} parent=43 // pred_check_branch
        %1526 = sbr.rel (%p1524) target = $region48
      $region47: #{forward.5} parent=43 // pred_region
        _
      $region48: #{forward.5} parent=43 // pred_fallthru
        _
      // Predicated region
      $region49: #{forward.5} parent=43 // pred_check
        %p1527 = pneg %p194
      $region50: #{forward.5} parent=43 // pred_check_branch
        %1529 = sbr.rel (%p1527) target = $region52
      $region51: #{forward.5} parent=43 // pred_region
        _
      $region52: #{forward.5} parent=43 // pred_fallthru
        _
    $region44: #{forward.5} parent=5 // pred_fallthru
      _
    %p1530 = scmp.le.s32.totalorder 2, %s14
    // Predicated region
    $region53: #{forward.5} parent=5 // pred_check
      %p1531 = pneg %p1530
    $region54: #{forward.5} parent=5 // pred_check_branch
      %1533 = sbr.rel (%p1531) target = $region56
    $region55: #{forward.5} parent=5 // pred_region
      %s1534 = ssub.s32 %s14, 2
      // Predicated region
      $region57: #{forward.5} parent=55 // pred_check
        %p1535 = pneg %p174
      $region58: #{forward.5} parent=55 // pred_check_branch
        %1537 = sbr.rel (%p1535) target = $region60
      $region59: #{forward.5} parent=55 // pred_region
        %p1538 = scmp.lt.s32.totalorder %s20, 1
        %s1539 = scalar_select %p1538, %s20, 1
        %s1540 = smul.addr %s1539, 2
        %s1541 = smul.addr %s1540, 4
        %s1542 = scalar_lea.vmem %s6, %s1541
      $region60: #{forward.5} parent=55 // pred_fallthru
        _
      // Predicated region
      $region61: #{forward.5} parent=55 // pred_check
        %p1543 = pneg %p200
      $region62: #{forward.5} parent=55 // pred_check_branch
        %1545 = sbr.rel (%p1543) target = $region64
      $region63: #{forward.5} parent=55 // pred_region
        %p1546 = scmp.lt.s32.totalorder %s20, 1
        %s1547 = scalar_select %p1546, %s20, 1
        %s1548 = smul.addr %s1547, 4
        %s1549 = scalar_lea.vmem %s7, %s1548
      $region64: #{forward.5} parent=55 // pred_fallthru
        _
    $region56: #{forward.5} parent=5 // pred_fallthru
      _
  $region6: #{forward.5} parent=0 // loop_footer
    %s18 = sadd.s32 1, %s14
  $region7: #{forward.5} parent=0 // loop_footer_branch
    %13 = sbr.rel target = $region3
  $region8: #{forward.5} parent=0 // loop_exit
    _

// kernel: forward.9
$region0: #{forward.9}
  #allocation0 [shape = 'u32[]', space=smem, size = 0x4, offset = 0x4, fixed_abs, tag = 'smem constant byte address 0x4 - core index']
  #allocation1 [shape = 'u32[144,128]{1,0:T(1,128)}', space=vmem, size = 0x12000, scoped, tag = 'internal scratch']
  #allocation2 [shape = 'f32[18,128]{1,0:T(8,128)}', space=vmem, size = 0x3000, scoped, tag = 'scratch operand']
  %s0 = inlined_call_operand.vmem [shape: bf16[2,8,128], index: 0, kind: input, shape index: {}]
  %s1 = inlined_call_operand.vmem [shape: bf16[2,16,128], index: 1, kind: input, shape index: {}]
  %s2 = inlined_call_operand.vmem [shape: bf16[384,128], index: 2, kind: input, shape index: {}]
  %s3 = inlined_call_operand.vmem [shape: bf16[384,128], index: 3, kind: input, shape index: {}]
  %s4 = inlined_call_operand.vmem [shape: f32[3,128], index: 4, kind: input, shape index: {}]
  %s5 = inlined_call_operand.vmem [shape: f32[3,128], index: 5, kind: input, shape index: {}]
  %s6 = inlined_call_operand.vmem [shape: bf16[2,16,128], index: 6, kind: output, shape index: {}]
  %s7 = sld [smem:[#allocation0]]
  $region57: #{forward.9} parent=0
    _
  %s9 = ssub.s32 1, %s7
  %s10 = scalar_select 0, %s9, %s7
  loop: start=0, step=1, limit=4
  $region2: #{forward.9} parent=0 // loop_pre_header
    _
  $region3: #{forward.9} parent=0 // loop_header
    %s12 = sphi 0, %s16
    %p13 = scmp.ge.s32.totalorder %s12, 4
    %s22 = sphi 0, %s24
    %s25 = sphi 0, %s22
    %s26 = sphi 0, %s25
    %s42 = sphi 0, %s26
    %s48 = sphi 0, %s50
    %s51 = sphi 0, %s48
    %s52 = sphi 0, %s51
    %s68 = sphi 0, %s52
    %s72 = sphi 0, %s72
    %s74 = sphi 0, %s72
    %s75 = sphi 0, %s74
    %s89 = sphi 0, %s75
    %s93 = sphi 0, %s93
    %s95 = sphi 0, %s93
    %s96 = sphi 0, %s95
    %s110 = sphi 0, %s96
    %s114 = sphi 0, %s114
    %s116 = sphi 0, %s114
    %s117 = sphi 0, %s116
    %s131 = sphi 0, %s117
    %s135 = sphi 0, %s135
    %s137 = sphi 0, %s135
    %s138 = sphi 0, %s137
    %s152 = sphi 0, %s138
    %s158 = sphi 0, %s160
    %s161 = sphi 0, %s158
    %s162 = sphi 0, %s161
    %s178 = sphi 0, %s162
  $region4: #{forward.9} parent=0 // loop_header_branch
    %15 = sbr.rel (%p13) target = $region8
  $region5: #{forward.9} parent=0 // loop_body
    %s17 = ssub.s32 %s12, 1
    %s18 = ssub.s32 %s12, 2
    %s19 = sadd.s32 %s12, 1
    %s20 = ssub.s32 %s12, %s19
    %p21 = scmp.eq.s32.totalorder %s20, 0
    %s23 = sadd.s32 %s22, 1
    %s24 = scalar_select %p21, %s22, %s23
    %p27 = pneg %p21
    %p28 = scmp.eq.s32.totalorder %s12, 1
    %p29 = por %p27, %p28
    %p30 = scmp.ne.s32.totalorder %s22, %s25
    %p31 = scmp.eq.s32.totalorder %s12, 0
    %p32 = por %p30, %p31
    %p33 = scmp.ne.s32.totalorder %s22, %s25
    %p34 = scmp.eq.s32.totalorder %s17, 1
    %p35 = por %p33, %p34
    %p36 = scmp.ne.s32.totalorder %s25, %s26
    %p37 = scmp.eq.s32.totalorder %s17, 0
    %p38 = por %p36, %p37
    %p39 = scmp.ne.s32.totalorder %s25, %s26
    %p40 = scmp.eq.s32.totalorder %s18, 1
    %p41 = por %p39, %p40
    %p43 = scmp.ne.s32.totalorder %s26, %s42
    %p44 = scmp.eq.s32.totalorder %s18, 0
    %p45 = por %p43, %p44
    %s46 = ssub.s32 %s12, %s19
    %p47 = scmp.eq.s32.totalorder %s46, 0
    %s49 = sadd.s32 %s48, 1
    %s50 = scalar_select %p47, %s48, %s49
    %p53 = pneg %p47
    %p54 = scmp.eq.s32.totalorder %s12, 1
    %p55 = por %p53, %p54
    %p56 = scmp.ne.s32.totalorder %s48, %s51
    %p57 = scmp.eq.s32.totalorder %s12, 0
    %p58 = por %p56, %p57
    %p59 = scmp.ne.s32.totalorder %s48, %s51
    %p60 = scmp.eq.s32.totalorder %s17, 1
    %p61 = por %p59, %p60
    %p62 = scmp.ne.s32.totalorder %s51, %s52
    %p63 = scmp.eq.s32.totalorder %s17, 0
    %p64 = por %p62, %p63
    %p65 = scmp.ne.s32.totalorder %s51, %s52
    %p66 = scmp.eq.s32.totalorder %s18, 1
    %p67 = por %p65, %p66
    %p69 = scmp.ne.s32.totalorder %s52, %s68
    %p70 = scmp.eq.s32.totalorder %s18, 0
    %p71 = por %p69, %p70
    %s73 = sadd.s32 %s72, 1
    %p76 = scmp.eq.s32.totalorder %s12, 1
    %p77 = scmp.ne.s32.totalorder %s72, %s74
    %p78 = scmp.eq.s32.totalorder %s12, 0
    %p79 = por %p77, %p78
    %p80 = scmp.ne.s32.totalorder %s72, %s74
    %p81 = scmp.eq.s32.totalorder %s17, 1
    %p82 = por %p80, %p81
    %p83 = scmp.ne.s32.totalorder %s74, %s75
    %p84 = scmp.eq.s32.totalorder %s17, 0
    %p85 = por %p83, %p84
    %p86 = scmp.ne.s32.totalorder %s74, %s75
    %p87 = scmp.eq.s32.totalorder %s18, 1
    %p88 = por %p86, %p87
    %p90 = scmp.ne.s32.totalorder %s75, %s89
    %p91 = scmp.eq.s32.totalorder %s18, 0
    %p92 = por %p90, %p91
    %s94 = sadd.s32 %s93, 1
    %p97 = scmp.eq.s32.totalorder %s12, 1
    %p98 = scmp.ne.s32.totalorder %s93, %s95
    %p99 = scmp.eq.s32.totalorder %s12, 0
    %p100 = por %p98, %p99
    %p101 = scmp.ne.s32.totalorder %s93, %s95
    %p102 = scmp.eq.s32.totalorder %s17, 1
    %p103 = por %p101, %p102
    %p104 = scmp.ne.s32.totalorder %s95, %s96
    %p105 = scmp.eq.s32.totalorder %s17, 0
    %p106 = por %p104, %p105
    %p107 = scmp.ne.s32.totalorder %s95, %s96
    %p108 = scmp.eq.s32.totalorder %s18, 1
    %p109 = por %p107, %p108
    %p111 = scmp.ne.s32.totalorder %s96, %s110
    %p112 = scmp.eq.s32.totalorder %s18, 0
    %p113 = por %p111, %p112
    %s115 = sadd.s32 %s114, 1
    %p118 = scmp.eq.s32.totalorder %s12, 1
    %p119 = scmp.ne.s32.totalorder %s114, %s116
    %p120 = scmp.eq.s32.totalorder %s12, 0
    %p121 = por %p119, %p120
    %p122 = scmp.ne.s32.totalorder %s114, %s116
    %p123 = scmp.eq.s32.totalorder %s17, 1
    %p124 = por %p122, %p123
    %p125 = scmp.ne.s32.totalorder %s116, %s117
    %p126 = scmp.eq.s32.totalorder %s17, 0
    %p127 = por %p125, %p126
    %p128 = scmp.ne.s32.totalorder %s116, %s117
    %p129 = scmp.eq.s32.totalorder %s18, 1
    %p130 = por %p128, %p129
    %p132 = scmp.ne.s32.totalorder %s117, %s131
    %p133 = scmp.eq.s32.totalorder %s18, 0
    %p134 = por %p132, %p133
    %s136 = sadd.s32 %s135, 1
    %p139 = scmp.eq.s32.totalorder %s12, 1
    %p140 = scmp.ne.s32.totalorder %s135, %s137
    %p141 = scmp.eq.s32.totalorder %s12, 0
    %p142 = por %p140, %p141
    %p143 = scmp.ne.s32.totalorder %s135, %s137
    %p144 = scmp.eq.s32.totalorder %s17, 1
    %p145 = por %p143, %p144
    %p146 = scmp.ne.s32.totalorder %s137, %s138
    %p147 = scmp.eq.s32.totalorder %s17, 0
    %p148 = por %p146, %p147
    %p149 = scmp.ne.s32.totalorder %s137, %s138
    %p150 = scmp.eq.s32.totalorder %s18, 1
    %p151 = por %p149, %p150
    %p153 = scmp.ne.s32.totalorder %s138, %s152
    %p154 = scmp.eq.s32.totalorder %s18, 0
    %p155 = por %p153, %p154
    %s156 = ssub.s32 %s12, %s19
    %p157 = scmp.eq.s32.totalorder %s156, 0
    %s159 = sadd.s32 %s158, 1
    %s160 = scalar_select %p157, %s158, %s159
    %p163 = pneg %p157
    %p164 = scmp.eq.s32.totalorder %s12, 1
    %p165 = por %p163, %p164
    %p166 = scmp.ne.s32.totalorder %s158, %s161
    %p167 = scmp.eq.s32.totalorder %s12, 0
    %p168 = por %p166, %p167
    %p169 = scmp.ne.s32.totalorder %s158, %s161
    %p170 = scmp.eq.s32.totalorder %s17, 1
    %p171 = por %p169, %p170
    %p172 = scmp.ne.s32.totalorder %s161, %s162
    %p173 = scmp.eq.s32.totalorder %s17, 0
    %p174 = por %p172, %p173
    %p175 = scmp.ne.s32.totalorder %s161, %s162
    %p176 = scmp.eq.s32.totalorder %s18, 1
    %p177 = por %p175, %p176
    %p179 = scmp.ne.s32.totalorder %s162, %s178
    %p180 = scmp.eq.s32.totalorder %s18, 0
    %p181 = por %p179, %p180
    %p182 = scmp.le.s32.totalorder 1, %s12
    %p183 = scmp.lt.s32.totalorder %s12, 3
    %p184 = pnand %p182, %p183
    %p185 = pneg %p184
    // Predicated region
    $region9: #{forward.9} parent=5 // pred_check
      _
    $region10: #{forward.9} parent=5 // pred_check_branch
      %187 = sbr.rel (%p184) target = $region12
    $region11: #{forward.9} parent=5 // pred_region
      %s188 = ssub.s32 %s12, 1
      // Predicated region
      $region13: #{forward.9} parent=11 // pred_check
        %p189 = pneg %p85
      $region14: #{forward.9} parent=11 // pred_check_branch
        %191 = sbr.rel (%p189) target = $region16
      $region15: #{forward.9} parent=11 // pred_region
        _
      $region16: #{forward.9} parent=11 // pred_fallthru
        _
      // Predicated region
      $region17: #{forward.9} parent=11 // pred_check
        %p192 = pneg %p106
      $region18: #{forward.9} parent=11 // pred_check_branch
        %194 = sbr.rel (%p192) target = $region20
      $region19: #{forward.9} parent=11 // pred_region
        _
      $region20: #{forward.9} parent=11 // pred_fallthru
        _
      // Predicated region
      $region21: #{forward.9} parent=11 // pred_check
        %p195 = pneg %p127
      $region22: #{forward.9} parent=11 // pred_check_branch
        %197 = sbr.rel (%p195) target = $region24
      $region23: #{forward.9} parent=11 // pred_region
        _
      $region24: #{forward.9} parent=11 // pred_fallthru
        _
      // Predicated region
      $region25: #{forward.9} parent=11 // pred_check
        %p198 = pneg %p148
      $region26: #{forward.9} parent=11 // pred_check_branch
        %200 = sbr.rel (%p198) target = $region28
      $region27: #{forward.9} parent=11 // pred_region
        _
      $region28: #{forward.9} parent=11 // pred_fallthru
        _
    $region12: #{forward.9} parent=5 // pred_fallthru
      _
    %p201 = scmp.lt.s32.totalorder %s12, 2
    // Predicated region
    $region29: #{forward.9} parent=5 // pred_check
      %p202 = pneg %p201
    $region30: #{forward.9} parent=5 // pred_check_branch
      %204 = sbr.rel (%p202) target = $region32
    $region31: #{forward.9} parent=5 // pred_region
      // Predicated region
      $region33: #{forward.9} parent=31 // pred_check
        %p205 = pneg %p32
      $region34: #{forward.9} parent=31 // pred_check_branch
        %207 = sbr.rel (%p205) target = $region36
      $region35: #{forward.9} parent=31 // pred_region
        %p208 = scmp.lt.s32.totalorder %s12, 1
        %s209 = scalar_select %p208, %s12, 1
        %s210 = smul.addr %s209, 4
        %s211 = scalar_lea.vmem %s0, %s210
      $region36: #{forward.9} parent=31 // pred_fallthru
        _
      // Predicated region
      $region37: #{forward.9} parent=31 // pred_check
        %p212 = pneg %p58
      $region38: #{forward.9} parent=31 // pred_check_branch
        %214 = sbr.rel (%p212) target = $region40
      $region39: #{forward.9} parent=31 // pred_region
        %p215 = scmp.lt.s32.totalorder %s12, 1
        %s216 = scalar_select %p215, %s12, 1
        %s217 = smul.addr %s216, 2
        %s218 = smul.addr %s217, 4
        %s219 = scalar_lea.vmem %s1, %s218
      $region40: #{forward.9} parent=31 // pred_fallthru
        _
    $region32: #{forward.9} parent=5 // pred_fallthru
      _
    %p220 = scmp.le.s32.totalorder 1, %s12
    %p221 = scmp.lt.s32.totalorder %s12, 3
    %p222 = pnand %p220, %p221
    %p223 = pneg %p222
    // Predicated region
    $region41: #{forward.9} parent=5 // pred_check
      _
    $region42: #{forward.9} parent=5 // pred_check_branch
      %225 = sbr.rel (%p222) target = $region44
    $region43: #{forward.9} parent=5 // pred_region
      %s226 = ssub.s32 %s12, 1
      %p227 = scmp.lt.s32.totalorder %s17, 1
      %s228 = scalar_select %p227, %s17, 1
      %s229 = smul.addr %s228, 4
      %s230 = scalar_lea.vmem %s0, %s229
      %p231 = pneg %p38
      %p232 = pneg %p35
      %p233 = scmp.lt.s32.totalorder %s17, 1
      %s234 = scalar_select %p233, %s17, 1
      %s235 = smul.addr %s234, 2
      %s236 = smul.addr %s235, 4
      %s237 = scalar_lea.vmem %s1, %s236
      %p238 = pneg %p64
      %p239 = pneg %p61
      %p240 = pneg %p85
      %p241 = pneg %p82
      %p242 = pneg %p106
      %p243 = pneg %p103
      %p244 = pneg %p127
      %p245 = pneg %p124
      %p246 = pneg %p148
      %p247 = pneg %p145
      %p248 = pneg %p174
      %p249 = pneg %p171
      %p250 = scmp.lt.s32.totalorder %s17, 1
      %s251 = scalar_select %p250, %s17, 1
      %s252 = smul.addr %s251, 2
      %s253 = smul.addr %s252, 4
      %s254 = scalar_lea.vmem %s6, %s253
      %p255 = scmp.lt.s32.totalorder %s17, 1
      %s256 = scalar_select %p255, %s17, 1
      %s257 = smul.addr %s256, 4
      %s258 = scalar_lea.vmem %s0, %s257
      %p259 = scmp.lt.s32.totalorder %s17, 1
      %s260 = scalar_select %p259, %s17, 1
      %s261 = smul.addr %s260, 2
      %s262 = smul.addr %s261, 4
      %s263 = scalar_lea.vmem %s1, %s262
      %p264 = scmp.lt.s32.totalorder %s17, 1
      %s265 = scalar_select %p264, %s17, 1
      %s266 = smul.addr %s265, 2
      %s267 = smul.addr %s266, 4
      %s268 = scalar_lea.vmem %s6, %s267
      %v270 = vld [vmem:[%s258] sm:$0xf]
      %v271 = vunpack.c.l.bf16 %v270
      %v272 = vld [vmem:[%s2] sm:$0xf]
      %v273 = vld [vmem:[%s2 + $0x4] sm:$0xf]
      %v274 = vld [vmem:[%s2 + $0x8] sm:$0xf]
      %v275 = vld [vmem:[%s2 + $0xc] sm:$0xf]
      %v276 = vld [vmem:[%s2 + $0x10] sm:$0xf]
      %v277 = vld [vmem:[%s2 + $0x14] sm:$0xf]
      %v278 = vld [vmem:[%s2 + $0x18] sm:$0xf]
      %v279 = vld [vmem:[%s2 + $0x1c] sm:$0xf]
      %v280 = vld [vmem:[%s2 + $0x20] sm:$0xf]
      %v281 = vld [vmem:[%s2 + $0x24] sm:$0xf]
      %v282 = vld [vmem:[%s2 + $0x28] sm:$0xf]
      %v283 = vld [vmem:[%s2 + $0x2c] sm:$0xf]
      %v284 = vld [vmem:[%s2 + $0x30] sm:$0xf]
      %v285 = vld [vmem:[%s2 + $0x34] sm:$0xf]
      %v286 = vld [vmem:[%s2 + $0x38] sm:$0xf]
      %v287 = vld [vmem:[%s2 + $0x3c] sm:$0xf]
      %v288 = vld [vmem:[%s2 + $0x40] sm:$0xf]
      %v289 = vld [vmem:[%s2 + $0x44] sm:$0xf]
      %v290 = vld [vmem:[%s2 + $0x48] sm:$0xf]
      %v291 = vld [vmem:[%s2 + $0x4c] sm:$0xf]
      %v292 = vld [vmem:[%s2 + $0x50] sm:$0xf]
      %v293 = vld [vmem:[%s2 + $0x54] sm:$0xf]
      %v294 = vld [vmem:[%s2 + $0x58] sm:$0xf]
      %v295 = vld [vmem:[%s2 + $0x5c] sm:$0xf]
      %v296 = vld [vmem:[%s2 + $0x60] sm:$0xf]
      %v297 = vld [vmem:[%s2 + $0x64] sm:$0xf]
      %v298 = vld [vmem:[%s2 + $0x68] sm:$0xf]
      %v299 = vld [vmem:[%s2 + $0x6c] sm:$0xf]
      %v300 = vld [vmem:[%s2 + $0x70] sm:$0xf]
      %v301 = vld [vmem:[%s2 + $0x74] sm:$0xf]
      %v302 = vld [vmem:[%s2 + $0x78] sm:$0xf]
      %v303 = vld [vmem:[%s2 + $0x7c] sm:$0xf]
      %v304 = vld [vmem:[%s2 + $0x80] sm:$0xf]
      %v305 = vld [vmem:[%s2 + $0x84] sm:$0xf]
      %v306 = vld [vmem:[%s2 + $0x88] sm:$0xf]
      %v307 = vld [vmem:[%s2 + $0x8c] sm:$0xf]
      %v308 = vld [vmem:[%s2 + $0x90] sm:$0xf]
      %v309 = vld [vmem:[%s2 + $0x94] sm:$0xf]
      %v310 = vld [vmem:[%s2 + $0x98] sm:$0xf]
      %v311 = vld [vmem:[%s2 + $0x9c] sm:$0xf]
      %v312 = vld [vmem:[%s2 + $0xa0] sm:$0xf]
      %v313 = vld [vmem:[%s2 + $0xa4] sm:$0xf]
      %v314 = vld [vmem:[%s2 + $0xa8] sm:$0xf]
      %v315 = vld [vmem:[%s2 + $0xac] sm:$0xf]
      %v316 = vld [vmem:[%s2 + $0xb0] sm:$0xf]
      %v317 = vld [vmem:[%s2 + $0xb4] sm:$0xf]
      %v318 = vld [vmem:[%s2 + $0xb8] sm:$0xf]
      %v319 = vld [vmem:[%s2 + $0xbc] sm:$0xf]
      %320 = vst [vmem:[#allocation2] sm:$0xff] 0.0
      %321 = vst [vmem:[#allocation2 + $0x8] sm:$0xff] 0.0
      %322 = vst [vmem:[#allocation2 + $0x10] sm:$0x3] 0.0
      %323 = vst [vmem:[#allocation2 + $0x1] sm:$0x1] %v271
      %324 = vst [vmem:[#allocation2 + $0x2] sm:$0x2] %v271
      %325 = vst [vmem:[#allocation2 + $0x3] sm:$0x4] %v271
      %326 = vst [vmem:[#allocation2 + $0x4] sm:$0x8] %v271
      %327 = vst [vmem:[#allocation2 + $0x5] sm:$0x10] %v271
      %328 = vst [vmem:[#allocation2 + $0x6] sm:$0x20] %v271
      %329 = vst [vmem:[#allocation2 + $0x7] sm:$0x40] %v271
      %330 = vst [vmem:[#allocation2 + $0x8] sm:$0x80] %v271
      %v331 = vld [vmem:[#allocation2] sm:$0xff]
      %v332 = vld [vmem:[#allocation2 + $0x8] sm:$0xff]
      %v333 = vld [vmem:[#allocation2 + $0x1] sm:$0xff]
      %v334 = vld [vmem:[#allocation2 + $0x9] sm:$0xff]
      %v335 = vld [vmem:[#allocation2 + $0x2] sm:$0xff]
      %v336 = vld [vmem:[#allocation2 + $0xa] sm:$0xff]
      %v337 = vpack.c.bf16 %v332, %v331
      %v338 = vpack.c.bf16 %v334, %v333
      %v339 = vpack.c.bf16 %v336, %v335
      %v388 = vunpack.c.l.b16 %v272
      %v389 = vunpack.c.l.b16 %v273
      %v390 = vunpack.c.l.b16 %v274
      %v391 = vunpack.c.l.b16 %v275
      %v392 = vunpack.c.l.b16 %v276
      %v393 = vunpack.c.l.b16 %v277
      %v394 = vunpack.c.l.b16 %v278
      %v395 = vunpack.c.l.b16 %v279
      %v396 = vunpack.c.l.b16 %v280
      %v397 = vunpack.c.l.b16 %v281
      %v398 = vunpack.c.l.b16 %v282
      %v399 = vunpack.c.l.b16 %v283
      %v400 = vunpack.c.l.b16 %v284
      %v401 = vunpack.c.l.b16 %v285
      %v402 = vunpack.c.l.b16 %v286
      %v403 = vunpack.c.l.b16 %v287
      %v404 = vunpack.c.l.b16 %v288
      %v405 = vunpack.c.l.b16 %v289
      %v406 = vunpack.c.l.b16 %v290
      %v407 = vunpack.c.l.b16 %v291
      %v408 = vunpack.c.l.b16 %v292
      %v409 = vunpack.c.l.b16 %v293
      %v410 = vunpack.c.l.b16 %v294
      %v411 = vunpack.c.l.b16 %v295
      %v412 = vunpack.c.l.b16 %v296
      %v413 = vunpack.c.l.b16 %v297
      %v414 = vunpack.c.l.b16 %v298
      %v415 = vunpack.c.l.b16 %v299
      %v416 = vunpack.c.l.b16 %v300
      %v417 = vunpack.c.l.b16 %v301
      %v418 = vunpack.c.l.b16 %v302
      %v419 = vunpack.c.l.b16 %v303
      %v420 = vunpack.c.l.b16 %v304
      %v421 = vunpack.c.l.b16 %v305
      %v422 = vunpack.c.l.b16 %v306
      %v423 = vunpack.c.l.b16 %v307
      %v424 = vunpack.c.l.b16 %v308
      %v425 = vunpack.c.l.b16 %v309
      %v426 = vunpack.c.l.b16 %v310
      %v427 = vunpack.c.l.b16 %v311
      %v428 = vunpack.c.l.b16 %v312
      %v429 = vunpack.c.l.b16 %v313
      %v430 = vunpack.c.l.b16 %v314
      %v431 = vunpack.c.l.b16 %v315
      %v432 = vunpack.c.l.b16 %v316
      %v433 = vunpack.c.l.b16 %v317
      %v434 = vunpack.c.l.b16 %v318
      %v435 = vunpack.c.l.b16 %v319
      %v436 = vpack.c.b16 %v389, %v388
      %v437 = vpack.c.b16 %v391, %v390
      %v438 = vpack.c.b16 %v393, %v392
      %v439 = vpack.c.b16 %v395, %v394
      %v440 = vpack.c.b16 %v397, %v396
      %v441 = vpack.c.b16 %v399, %v398
      %v442 = vpack.c.b16 %v401, %v400
      %v443 = vpack.c.b16 %v403, %v402
      %v444 = vpack.c.b16 %v405, %v404
      %v445 = vpack.c.b16 %v407, %v406
      %v446 = vpack.c.b16 %v409, %v408
      %v447 = vpack.c.b16 %v411, %v410
      %v448 = vpack.c.b16 %v413, %v412
      %v449 = vpack.c.b16 %v415, %v414
      %v450 = vpack.c.b16 %v417, %v416
      %v451 = vpack.c.b16 %v419, %v418
      %v452 = vpack.c.b16 %v421, %v420
      %v453 = vpack.c.b16 %v423, %v422
      %v454 = vpack.c.b16 %v425, %v424
      %v455 = vpack.c.b16 %v427, %v426
      %v456 = vpack.c.b16 %v429, %v428
      %v457 = vpack.c.b16 %v431, %v430
      %v458 = vpack.c.b16 %v433, %v432
      %v459 = vpack.c.b16 %v435, %v434
      %484 = vmatprep.subr.bf16.mxu0 0
      %485 = vmatpush1.bf16.msra.mxu0 %v436
      %486 = vmatprep.subr.bf16.mxu0 0
      %487 = vmatpush1.bf16.msra.mxu0 %v437
      %488 = vmatprep.subr.bf16.mxu0 0
      %489 = vmatpush1.bf16.msra.mxu0 %v438
      %490 = vmatprep.subr.bf16.mxu0 0
      %491 = vmatpush1.bf16.msra.mxu0 %v439
      %492 = vmatprep.subr.bf16.mxu0 0
      %493 = vmatpush1.bf16.msra.mxu0 %v440
      %494 = vmatprep.subr.bf16.mxu0 0
      %495 = vmatpush1.bf16.msra.mxu0 %v441
      %496 = vmatprep.subr.bf16.mxu0 0
      %497 = vmatpush1.bf16.msra.mxu0 %v442
      %498 = vmatprep.subr.bf16.mxu0 0
      %499 = vmatpush1.bf16.msra.mxu0 %v443
      %500 = vmatprep.subr.bf16.mxu0 0
      %501 = vmatpush1.bf16.msra.mxu0 %v444
      %502 = vmatprep.subr.bf16.mxu0 0
      %503 = vmatpush1.bf16.msra.mxu0 %v445
      %504 = vmatprep.subr.bf16.mxu0 0
      %505 = vmatpush1.bf16.msra.mxu0 %v446
      %506 = vmatprep.subr.bf16.mxu0 0
      %507 = vmatpush1.bf16.msra.mxu0 %v447
      %508 = vmatprep.subr.bf16.mxu0 0
      %509 = vmatpush1.bf16.msra.mxu0 %v448
      %510 = vmatprep.subr.bf16.mxu0 0
      %511 = vmatpush1.bf16.msra.mxu0 %v449
      %512 = vmatprep.subr.bf16.mxu0 0
      %513 = vmatpush1.bf16.msra.mxu0 %v450
      %514 = vmatprep.subr.bf16.mxu0 0
      %515 = vmatpush1.bf16.msra.mxu0 %v451
      %516 = vmatprep.mubr.bf16.mxu0 %v338
      %517 = vmatmul.mubr.bf16.gmra.mrb[0].mxu0 %v337
      %v518 = vpop.f32.mrb[0].mxu0
      %v519 = vadd.f32 0.0, %v518
      %v520 = vpop.f32.mrb[0].mxu0
      %v521 = vpop.f32.mrb[0].mxu0
      %v522 = vadd.f32 0.0, %v521
      %v523 = vpop.f32.mrb[0].mxu0
      %524 = vdwg.mxu0
      %525 = vmatprep.subr.bf16.mxu0 0
      %526 = vmatpush1.bf16.msra.mxu0 %v452
      %527 = vmatprep.subr.bf16.mxu0 0
      %528 = vmatpush1.bf16.msra.mxu0 %v453
      %529 = vmatprep.subr.bf16.mxu0 0
      %530 = vmatpush1.bf16.msra.mxu0 %v454
      %531 = vmatprep.subr.bf16.mxu0 0
      %532 = vmatpush1.bf16.msra.mxu0 %v455
      %533 = vmatprep.subr.bf16.mxu0 0
      %534 = vmatpush1.bf16.msra.mxu0 %v456
      %535 = vmatprep.subr.bf16.mxu0 0
      %536 = vmatpush1.bf16.msra.mxu0 %v457
      %537 = vmatprep.subr.bf16.mxu0 0
      %538 = vmatpush1.bf16.msra.mxu0 %v458
      %539 = vmatprep.subr.bf16.mxu0 0
      %540 = vmatpush1.bf16.msra.mxu0 %v459
      %541 = vmatprep.subr.bf16.mxu0 0
      %542 = vmatpush1.bf16.msra.mxu0 0
      %543 = vmatprep.subr.bf16.mxu0 0
      %544 = vmatpush1.bf16.msra.mxu0 0
      %545 = vmatprep.subr.bf16.mxu0 0
      %546 = vmatpush1.bf16.msra.mxu0 0
      %547 = vmatprep.subr.bf16.mxu0 0
      %548 = vmatpush1.bf16.msra.mxu0 0
      %549 = vmatprep.subr.bf16.mxu0 0
      %550 = vmatpush1.bf16.msra.mxu0 0
      %551 = vmatprep.subr.bf16.mxu0 0
      %552 = vmatpush1.bf16.msra.mxu0 0
      %553 = vmatprep.subr.bf16.mxu0 0
      %554 = vmatpush1.bf16.msra.mxu0 0
      %555 = vmatprep.subr.bf16.mxu0 0
      %556 = vmatpush1.bf16.msra.mxu0 0
      %557 = vmatprep.mubr.bf16.mxu0 0
      %558 = vmatmul.mubr.bf16.gmra.mrb[0].mxu0 %v339
      %v559 = vpop.f32.mrb[0].mxu0
      %v560 = vadd.f32 %v519, %v559
      %v561 = vpop.f32.mrb[0].mxu0
      %v562 = vpop.f32.mrb[0].mxu0
      %v563 = vadd.f32 %v522, %v562
      %v564 = vpop.f32.mrb[0].mxu0
      %565 = vdwg.mxu0
      %v566 = vld [vmem:[%s4] sm:$0x1]
      %v567 = vlaneseq
      %v568 = vshrl.u32 %v567, 7
      %v569 = vsub.s32 0, %v568
      %v570 = vrot.slane %v566, %v569
      %v571 = vmul.f32 %v560, %v570
      %v572 = vmul.f32 %v563, %v570
      %v573 = vld [vmem:[%s5] sm:$0x1]
      %v574 = vlaneseq
      %v575 = vshrl.u32 %v574, 7
      %v576 = vsub.s32 0, %v575
      %v577 = vrot.slane %v573, %v576
      %v578 = vadd.f32 %v571, %v577
      %v579 = vadd.f32 %v572, %v577
      %v580 = vld [vmem:[%s263] sm:$0xf]
      %v581 = vld [vmem:[%s263 + $0x4] sm:$0xf]
      %v582 = vunpack.c.l.bf16 %v580
      %v583 = vunpack.c.l.bf16 %v581
      %v584 = vadd.f32 %v578, %v582
      %v585 = vadd.f32 %v579, %v583
      %v586 = vld [vmem:[%s3] sm:$0xf]
      %v587 = vld [vmem:[%s3 + $0x4] sm:$0xf]
      %v588 = vld [vmem:[%s3 + $0x8] sm:$0xf]
      %v589 = vld [vmem:[%s3 + $0xc] sm:$0xf]
      %v590 = vld [vmem:[%s3 + $0x10] sm:$0xf]
      %v591 = vld [vmem:[%s3 + $0x14] sm:$0xf]
      %v592 = vld [vmem:[%s3 + $0x18] sm:$0xf]
      %v593 = vld [vmem:[%s3 + $0x1c] sm:$0xf]
      %v594 = vld [vmem:[%s3 + $0x20] sm:$0xf]
      %v595 = vld [vmem:[%s3 + $0x24] sm:$0xf]
      %v596 = vld [vmem:[%s3 + $0x28] sm:$0xf]
      %v597 = vld [vmem:[%s3 + $0x2c] sm:$0xf]
      %v598 = vld [vmem:[%s3 + $0x30] sm:$0xf]
      %v599 = vld [vmem:[%s3 + $0x34] sm:$0xf]
      %v600 = vld [vmem:[%s3 + $0x38] sm:$0xf]
      %v601 = vld [vmem:[%s3 + $0x3c] sm:$0xf]
      %v602 = vld [vmem:[%s3 + $0x40] sm:$0xf]
      %v603 = vld [vmem:[%s3 + $0x44] sm:$0xf]
      %v604 = vld [vmem:[%s3 + $0x48] sm:$0xf]
      %v605 = vld [vmem:[%s3 + $0x4c] sm:$0xf]
      %v606 = vld [vmem:[%s3 + $0x50] sm:$0xf]
      %v607 = vld [vmem:[%s3 + $0x54] sm:$0xf]
      %v608 = vld [vmem:[%s3 + $0x58] sm:$0xf]
      %v609 = vld [vmem:[%s3 + $0x5c] sm:$0xf]
      %v610 = vld [vmem:[%s3 + $0x60] sm:$0xf]
      %v611 = vld [vmem:[%s3 + $0x64] sm:$0xf]
      %v612 = vld [vmem:[%s3 + $0x68] sm:$0xf]
      %v613 = vld [vmem:[%s3 + $0x6c] sm:$0xf]
      %v614 = vld [vmem:[%s3 + $0x70] sm:$0xf]
      %v615 = vld [vmem:[%s3 + $0x74] sm:$0xf]
      %v616 = vld [vmem:[%s3 + $0x78] sm:$0xf]
      %v617 = vld [vmem:[%s3 + $0x7c] sm:$0xf]
      %v618 = vld [vmem:[%s3 + $0x80] sm:$0xf]
      %v619 = vld [vmem:[%s3 + $0x84] sm:$0xf]
      %v620 = vld [vmem:[%s3 + $0x88] sm:$0xf]
      %v621 = vld [vmem:[%s3 + $0x8c] sm:$0xf]
      %v622 = vld [vmem:[%s3 + $0x90] sm:$0xf]
      %v623 = vld [vmem:[%s3 + $0x94] sm:$0xf]
      %v624 = vld [vmem:[%s3 + $0x98] sm:$0xf]
      %v625 = vld [vmem:[%s3 + $0x9c] sm:$0xf]
      %v626 = vld [vmem:[%s3 + $0xa0] sm:$0xf]
      %v627 = vld [vmem:[%s3 + $0xa4] sm:$0xf]
      %v628 = vld [vmem:[%s3 + $0xa8] sm:$0xf]
      %v629 = vld [vmem:[%s3 + $0xac] sm:$0xf]
      %v630 = vld [vmem:[%s3 + $0xb0] sm:$0xf]
      %v631 = vld [vmem:[%s3 + $0xb4] sm:$0xf]
      %v632 = vld [vmem:[%s3 + $0xb8] sm:$0xf]
      %v633 = vld [vmem:[%s3 + $0xbc] sm:$0xf]
      %634 = vst [vmem:[#allocation2] sm:$0x1] 0.0
      %635 = vst [vmem:[#allocation2 + $0x1] sm:$0xff] %v584
      %636 = vst [vmem:[#allocation2 + $0x9] sm:$0xff] %v585
      %637 = vst [vmem:[#allocation2 + $0x11] sm:$0x1] 0.0
      %v638 = vld [vmem:[#allocation2] sm:$0xff]
      %v639 = vld [vmem:[#allocation2 + $0x8] sm:$0xff]
      %v640 = vld [vmem:[#allocation2 + $0x1] sm:$0xff]
      %v641 = vld [vmem:[#allocation2 + $0x9] sm:$0xff]
      %v642 = vld [vmem:[#allocation2 + $0x2] sm:$0xff]
      %v643 = vld [vmem:[#allocation2 + $0xa] sm:$0xff]
      %v644 = vpack.c.bf16 %v639, %v638
      %v645 = vpack.c.bf16 %v641, %v640
      %v646 = vpack.c.bf16 %v643, %v642
      %v695 = vunpack.c.l.b16 %v586
      %v696 = vunpack.c.l.b16 %v587
      %v697 = vunpack.c.l.b16 %v588
      %v698 = vunpack.c.l.b16 %v589
      %v699 = vunpack.c.l.b16 %v590
      %v700 = vunpack.c.l.b16 %v591
      %v701 = vunpack.c.l.b16 %v592
      %v702 = vunpack.c.l.b16 %v593
      %v703 = vunpack.c.l.b16 %v594
      %v704 = vunpack.c.l.b16 %v595
      %v705 = vunpack.c.l.b16 %v596
      %v706 = vunpack.c.l.b16 %v597
      %v707 = vunpack.c.l.b16 %v598
      %v708 = vunpack.c.l.b16 %v599
      %v709 = vunpack.c.l.b16 %v600
      %v710 = vunpack.c.l.b16 %v601
      %v711 = vunpack.c.l.b16 %v602
      %v712 = vunpack.c.l.b16 %v603
      %v713 = vunpack.c.l.b16 %v604
      %v714 = vunpack.c.l.b16 %v605
      %v715 = vunpack.c.l.b16 %v606
      %v716 = vunpack.c.l.b16 %v607
      %v717 = vunpack.c.l.b16 %v608
      %v718 = vunpack.c.l.b16 %v609
      %v719 = vunpack.c.l.b16 %v610
      %v720 = vunpack.c.l.b16 %v611
      %v721 = vunpack.c.l.b16 %v612
      %v722 = vunpack.c.l.b16 %v613
      %v723 = vunpack.c.l.b16 %v614
      %v724 = vunpack.c.l.b16 %v615
      %v725 = vunpack.c.l.b16 %v616
      %v726 = vunpack.c.l.b16 %v617
      %v727 = vunpack.c.l.b16 %v618
      %v728 = vunpack.c.l.b16 %v619
      %v729 = vunpack.c.l.b16 %v620
      %v730 = vunpack.c.l.b16 %v621
      %v731 = vunpack.c.l.b16 %v622
      %v732 = vunpack.c.l.b16 %v623
      %v733 = vunpack.c.l.b16 %v624
      %v734 = vunpack.c.l.b16 %v625
      %v735 = vunpack.c.l.b16 %v626
      %v736 = vunpack.c.l.b16 %v627
      %v737 = vunpack.c.l.b16 %v628
      %v738 = vunpack.c.l.b16 %v629
      %v739 = vunpack.c.l.b16 %v630
      %v740 = vunpack.c.l.b16 %v631
      %v741 = vunpack.c.l.b16 %v632
      %v742 = vunpack.c.l.b16 %v633
      %v743 = vpack.c.b16 %v696, %v695
      %v744 = vpack.c.b16 %v698, %v697
      %v745 = vpack.c.b16 %v700, %v699
      %v746 = vpack.c.b16 %v702, %v701
      %v747 = vpack.c.b16 %v704, %v703
      %v748 = vpack.c.b16 %v706, %v705
      %v749 = vpack.c.b16 %v708, %v707
      %v750 = vpack.c.b16 %v710, %v709
      %v751 = vpack.c.b16 %v712, %v711
      %v752 = vpack.c.b16 %v714, %v713
      %v753 = vpack.c.b16 %v716, %v715
      %v754 = vpack.c.b16 %v718, %v717
      %v755 = vpack.c.b16 %v720, %v719
      %v756 = vpack.c.b16 %v722, %v721
      %v757 = vpack.c.b16 %v724, %v723
      %v758 = vpack.c.b16 %v726, %v725
      %v759 = vpack.c.b16 %v728, %v727
      %v760 = vpack.c.b16 %v730, %v729
      %v761 = vpack.c.b16 %v732, %v731
      %v762 = vpack.c.b16 %v734, %v733
      %v763 = vpack.c.b16 %v736, %v735
      %v764 = vpack.c.b16 %v738, %v737
      %v765 = vpack.c.b16 %v740, %v739
      %v766 = vpack.c.b16 %v742, %v741
      %791 = vmatprep.subr.bf16.mxu0 0
      %792 = vmatpush1.bf16.msra.mxu0 %v743
      %793 = vmatprep.subr.bf16.mxu0 0
      %794 = vmatpush1.bf16.msra.mxu0 %v744
      %795 = vmatprep.subr.bf16.mxu0 0
      %796 = vmatpush1.bf16.msra.mxu0 %v745
      %797 = vmatprep.subr.bf16.mxu0 0
      %798 = vmatpush1.bf16.msra.mxu0 %v746
      %799 = vmatprep.subr.bf16.mxu0 0
      %800 = vmatpush1.bf16.msra.mxu0 %v747
      %801 = vmatprep.subr.bf16.mxu0 0
      %802 = vmatpush1.bf16.msra.mxu0 %v748
      %803 = vmatprep.subr.bf16.mxu0 0
      %804 = vmatpush1.bf16.msra.mxu0 %v749
      %805 = vmatprep.subr.bf16.mxu0 0
      %806 = vmatpush1.bf16.msra.mxu0 %v750
      %807 = vmatprep.subr.bf16.mxu0 0
      %808 = vmatpush1.bf16.msra.mxu0 %v751
      %809 = vmatprep.subr.bf16.mxu0 0
      %810 = vmatpush1.bf16.msra.mxu0 %v752
      %811 = vmatprep.subr.bf16.mxu0 0
      %812 = vmatpush1.bf16.msra.mxu0 %v753
      %813 = vmatprep.subr.bf16.mxu0 0
      %814 = vmatpush1.bf16.msra.mxu0 %v754
      %815 = vmatprep.subr.bf16.mxu0 0
      %816 = vmatpush1.bf16.msra.mxu0 %v755
      %817 = vmatprep.subr.bf16.mxu0 0
      %818 = vmatpush1.bf16.msra.mxu0 %v756
      %819 = vmatprep.subr.bf16.mxu0 0
      %820 = vmatpush1.bf16.msra.mxu0 %v757
      %821 = vmatprep.subr.bf16.mxu0 0
      %822 = vmatpush1.bf16.msra.mxu0 %v758
      %823 = vmatprep.mubr.bf16.mxu0 %v645
      %824 = vmatmul.mubr.bf16.gmra.mrb[0].mxu0 %v644
      %v825 = vpop.f32.mrb[0].mxu0
      %v826 = vadd.f32 0.0, %v825
      %v827 = vpop.f32.mrb[0].mxu0
      %v828 = vpop.f32.mrb[0].mxu0
      %v829 = vadd.f32 0.0, %v828
      %v830 = vpop.f32.mrb[0].mxu0
      %831 = vdwg.mxu0
      %832 = vmatprep.subr.bf16.mxu0 0
      %833 = vmatpush1.bf16.msra.mxu0 %v759
      %834 = vmatprep.subr.bf16.mxu0 0
      %835 = vmatpush1.bf16.msra.mxu0 %v760
      %836 = vmatprep.subr.bf16.mxu0 0
      %837 = vmatpush1.bf16.msra.mxu0 %v761
      %838 = vmatprep.subr.bf16.mxu0 0
      %839 = vmatpush1.bf16.msra.mxu0 %v762
      %840 = vmatprep.subr.bf16.mxu0 0
      %841 = vmatpush1.bf16.msra.mxu0 %v763
      %842 = vmatprep.subr.bf16.mxu0 0
      %843 = vmatpush1.bf16.msra.mxu0 %v764
      %844 = vmatprep.subr.bf16.mxu0 0
      %845 = vmatpush1.bf16.msra.mxu0 %v765
      %846 = vmatprep.subr.bf16.mxu0 0
      %847 = vmatpush1.bf16.msra.mxu0 %v766
      %848 = vmatprep.subr.bf16.mxu0 0
      %849 = vmatpush1.bf16.msra.mxu0 0
      %850 = vmatprep.subr.bf16.mxu0 0
      %851 = vmatpush1.bf16.msra.mxu0 0
      %852 = vmatprep.subr.bf16.mxu0 0
      %853 = vmatpush1.bf16.msra.mxu0 0
      %854 = vmatprep.subr.bf16.mxu0 0
      %855 = vmatpush1.bf16.msra.mxu0 0
      %856 = vmatprep.subr.bf16.mxu0 0
      %857 = vmatpush1.bf16.msra.mxu0 0
      %858 = vmatprep.subr.bf16.mxu0 0
      %859 = vmatpush1.bf16.msra.mxu0 0
      %860 = vmatprep.subr.bf16.mxu0 0
      %861 = vmatpush1.bf16.msra.mxu0 0
      %862 = vmatprep.subr.bf16.mxu0 0
      %863 = vmatpush1.bf16.msra.mxu0 0
      %864 = vmatprep.mubr.bf16.mxu0 0
      %865 = vmatmul.mubr.bf16.gmra.mrb[0].mxu0 %v646
      %v866 = vpop.f32.mrb[0].mxu0
      %v867 = vadd.f32 %v826, %v866
      %v868 = vpop.f32.mrb[0].mxu0
      %v869 = vpop.f32.mrb[0].mxu0
      %v870 = vadd.f32 %v829, %v869
      %v871 = vpop.f32.mrb[0].mxu0
      %872 = vdwg.mxu0
      %v873 = vld [vmem:[%s4 + $0x1] sm:$0x1]
      %v874 = vlaneseq
      %v875 = vshrl.u32 %v874, 7
      %v876 = vsub.s32 0, %v875
      %v877 = vrot.slane %v873, %v876
      %v878 = vmul.f32 %v867, %v877
      %v879 = vmul.f32 %v870, %v877
      %v880 = vld [vmem:[%s5 + $0x1] sm:$0x1]
      %v881 = vlaneseq
      %v882 = vshrl.u32 %v881, 7
      %v883 = vsub.s32 0, %v882
      %v884 = vrot.slane %v880, %v883
      %v885 = vadd.f32 %v878, %v884
      %v886 = vadd.f32 %v879, %v884
      %v887 = vmax.f32 %v885, 0.0
      %v888 = vmax.f32 %v886, 0.0
      %v889 = vld [vmem:[%s3] sm:$0xf]
      %v890 = vld [vmem:[%s3 + $0x4] sm:$0xf]
      %v891 = vld [vmem:[%s3 + $0x8] sm:$0xf]
      %v892 = vld [vmem:[%s3 + $0xc] sm:$0xf]
      %v893 = vld [vmem:[%s3 + $0x10] sm:$0xf]
      %v894 = vld [vmem:[%s3 + $0x14] sm:$0xf]
      %v895 = vld [vmem:[%s3 + $0x18] sm:$0xf]
      %v896 = vld [vmem:[%s3 + $0x1c] sm:$0xf]
      %v897 = vld [vmem:[%s3 + $0x20] sm:$0xf]
      %v898 = vld [vmem:[%s3 + $0x24] sm:$0xf]
      %v899 = vld [vmem:[%s3 + $0x28] sm:$0xf]
      %v900 = vld [vmem:[%s3 + $0x2c] sm:$0xf]
      %v901 = vld [vmem:[%s3 + $0x30] sm:$0xf]
      %v902 = vld [vmem:[%s3 + $0x34] sm:$0xf]
      %v903 = vld [vmem:[%s3 + $0x38] sm:$0xf]
      %v904 = vld [vmem:[%s3 + $0x3c] sm:$0xf]
      %v905 = vld [vmem:[%s3 + $0x40] sm:$0xf]
      %v906 = vld [vmem:[%s3 + $0x44] sm:$0xf]
      %v907 = vld [vmem:[%s3 + $0x48] sm:$0xf]
      %v908 = vld [vmem:[%s3 + $0x4c] sm:$0xf]
      %v909 = vld [vmem:[%s3 + $0x50] sm:$0xf]
      %v910 = vld [vmem:[%s3 + $0x54] sm:$0xf]
      %v911 = vld [vmem:[%s3 + $0x58] sm:$0xf]
      %v912 = vld [vmem:[%s3 + $0x5c] sm:$0xf]
      %v913 = vld [vmem:[%s3 + $0x60] sm:$0xf]
      %v914 = vld [vmem:[%s3 + $0x64] sm:$0xf]
      %v915 = vld [vmem:[%s3 + $0x68] sm:$0xf]
      %v916 = vld [vmem:[%s3 + $0x6c] sm:$0xf]
      %v917 = vld [vmem:[%s3 + $0x70] sm:$0xf]
      %v918 = vld [vmem:[%s3 + $0x74] sm:$0xf]
      %v919 = vld [vmem:[%s3 + $0x78] sm:$0xf]
      %v920 = vld [vmem:[%s3 + $0x7c] sm:$0xf]
      %v921 = vld [vmem:[%s3 + $0x80] sm:$0xf]
      %v922 = vld [vmem:[%s3 + $0x84] sm:$0xf]
      %v923 = vld [vmem:[%s3 + $0x88] sm:$0xf]
      %v924 = vld [vmem:[%s3 + $0x8c] sm:$0xf]
      %v925 = vld [vmem:[%s3 + $0x90] sm:$0xf]
      %v926 = vld [vmem:[%s3 + $0x94] sm:$0xf]
      %v927 = vld [vmem:[%s3 + $0x98] sm:$0xf]
      %v928 = vld [vmem:[%s3 + $0x9c] sm:$0xf]
      %v929 = vld [vmem:[%s3 + $0xa0] sm:$0xf]
      %v930 = vld [vmem:[%s3 + $0xa4] sm:$0xf]
      %v931 = vld [vmem:[%s3 + $0xa8] sm:$0xf]
      %v932 = vld [vmem:[%s3 + $0xac] sm:$0xf]
      %v933 = vld [vmem:[%s3 + $0xb0] sm:$0xf]
      %v934 = vld [vmem:[%s3 + $0xb4] sm:$0xf]
      %v935 = vld [vmem:[%s3 + $0xb8] sm:$0xf]
      %v936 = vld [vmem:[%s3 + $0xbc] sm:$0xf]
      %937 = vst [vmem:[#allocation2] sm:$0x1] 0.0
      %938 = vst [vmem:[#allocation2 + $0x1] sm:$0xff] %v887
      %939 = vst [vmem:[#allocation2 + $0x9] sm:$0xff] %v888
      %940 = vst [vmem:[#allocation2 + $0x11] sm:$0x1] 0.0
      %v941 = vld [vmem:[#allocation2] sm:$0xff]
      %v942 = vld [vmem:[#allocation2 + $0x8] sm:$0xff]
      %v943 = vld [vmem:[#allocation2 + $0x1] sm:$0xff]
      %v944 = vld [vmem:[#allocation2 + $0x9] sm:$0xff]
      %v945 = vld [vmem:[#allocation2 + $0x2] sm:$0xff]
      %v946 = vld [vmem:[#allocation2 + $0xa] sm:$0xff]
      %v947 = vpack.c.bf16 %v942, %v941
      %v948 = vpack.c.bf16 %v944, %v943
      %v949 = vpack.c.bf16 %v946, %v945
      %v998 = vunpack.c.l.b16 %v889
      %v999 = vunpack.c.l.b16 %v890
      %v1000 = vunpack.c.l.b16 %v891
      %v1001 = vunpack.c.l.b16 %v892
      %v1002 = vunpack.c.l.b16 %v893
      %v1003 = vunpack.c.l.b16 %v894
      %v1004 = vunpack.c.l.b16 %v895
      %v1005 = vunpack.c.l.b16 %v896
      %v1006 = vunpack.c.l.b16 %v897
      %v1007 = vunpack.c.l.b16 %v898
      %v1008 = vunpack.c.l.b16 %v899
      %v1009 = vunpack.c.l.b16 %v900
      %v1010 = vunpack.c.l.b16 %v901
      %v1011 = vunpack.c.l.b16 %v902
      %v1012 = vunpack.c.l.b16 %v903
      %v1013 = vunpack.c.l.b16 %v904
      %v1014 = vunpack.c.l.b16 %v905
      %v1015 = vunpack.c.l.b16 %v906
      %v1016 = vunpack.c.l.b16 %v907
      %v1017 = vunpack.c.l.b16 %v908
      %v1018 = vunpack.c.l.b16 %v909
      %v1019 = vunpack.c.l.b16 %v910
      %v1020 = vunpack.c.l.b16 %v911
      %v1021 = vunpack.c.l.b16 %v912
      %v1022 = vunpack.c.l.b16 %v913
      %v1023 = vunpack.c.l.b16 %v914
      %v1024 = vunpack.c.l.b16 %v915
      %v1025 = vunpack.c.l.b16 %v916
      %v1026 = vunpack.c.l.b16 %v917
      %v1027 = vunpack.c.l.b16 %v918
      %v1028 = vunpack.c.l.b16 %v919
      %v1029 = vunpack.c.l.b16 %v920
      %v1030 = vunpack.c.l.b16 %v921
      %v1031 = vunpack.c.l.b16 %v922
      %v1032 = vunpack.c.l.b16 %v923
      %v1033 = vunpack.c.l.b16 %v924
      %v1034 = vunpack.c.l.b16 %v925
      %v1035 = vunpack.c.l.b16 %v926
      %v1036 = vunpack.c.l.b16 %v927
      %v1037 = vunpack.c.l.b16 %v928
      %v1038 = vunpack.c.l.b16 %v929
      %v1039 = vunpack.c.l.b16 %v930
      %v1040 = vunpack.c.l.b16 %v931
      %v1041 = vunpack.c.l.b16 %v932
      %v1042 = vunpack.c.l.b16 %v933
      %v1043 = vunpack.c.l.b16 %v934
      %v1044 = vunpack.c.l.b16 %v935
      %v1045 = vunpack.c.l.b16 %v936
      %v1046 = vpack.c.b16 %v999, %v998
      %v1047 = vpack.c.b16 %v1001, %v1000
      %v1048 = vpack.c.b16 %v1003, %v1002
      %v1049 = vpack.c.b16 %v1005, %v1004
      %v1050 = vpack.c.b16 %v1007, %v1006
      %v1051 = vpack.c.b16 %v1009, %v1008
      %v1052 = vpack.c.b16 %v1011, %v1010
      %v1053 = vpack.c.b16 %v1013, %v1012
      %v1054 = vpack.c.b16 %v1015, %v1014
      %v1055 = vpack.c.b16 %v1017, %v1016
      %v1056 = vpack.c.b16 %v1019, %v1018
      %v1057 = vpack.c.b16 %v1021, %v1020
      %v1058 = vpack.c.b16 %v1023, %v1022
      %v1059 = vpack.c.b16 %v1025, %v1024
      %v1060 = vpack.c.b16 %v1027, %v1026
      %v1061 = vpack.c.b16 %v1029, %v1028
      %v1062 = vpack.c.b16 %v1031, %v1030
      %v1063 = vpack.c.b16 %v1033, %v1032
      %v1064 = vpack.c.b16 %v1035, %v1034
      %v1065 = vpack.c.b16 %v1037, %v1036
      %v1066 = vpack.c.b16 %v1039, %v1038
      %v1067 = vpack.c.b16 %v1041, %v1040
      %v1068 = vpack.c.b16 %v1043, %v1042
      %v1069 = vpack.c.b16 %v1045, %v1044
      %1094 = vmatprep.subr.bf16.mxu0 0
      %1095 = vmatpush1.bf16.msra.mxu0 %v1046
      %1096 = vmatprep.subr.bf16.mxu0 0
      %1097 = vmatpush1.bf16.msra.mxu0 %v1047
      %1098 = vmatprep.subr.bf16.mxu0 0
      %1099 = vmatpush1.bf16.msra.mxu0 %v1048
      %1100 = vmatprep.subr.bf16.mxu0 0
      %1101 = vmatpush1.bf16.msra.mxu0 %v1049
      %1102 = vmatprep.subr.bf16.mxu0 0
      %1103 = vmatpush1.bf16.msra.mxu0 %v1050
      %1104 = vmatprep.subr.bf16.mxu0 0
      %1105 = vmatpush1.bf16.msra.mxu0 %v1051
      %1106 = vmatprep.subr.bf16.mxu0 0
      %1107 = vmatpush1.bf16.msra.mxu0 %v1052
      %1108 = vmatprep.subr.bf16.mxu0 0
      %1109 = vmatpush1.bf16.msra.mxu0 %v1053
      %1110 = vmatprep.subr.bf16.mxu0 0
      %1111 = vmatpush1.bf16.msra.mxu0 %v1054
      %1112 = vmatprep.subr.bf16.mxu0 0
      %1113 = vmatpush1.bf16.msra.mxu0 %v1055
      %1114 = vmatprep.subr.bf16.mxu0 0
      %1115 = vmatpush1.bf16.msra.mxu0 %v1056
      %1116 = vmatprep.subr.bf16.mxu0 0
      %1117 = vmatpush1.bf16.msra.mxu0 %v1057
      %1118 = vmatprep.subr.bf16.mxu0 0
      %1119 = vmatpush1.bf16.msra.mxu0 %v1058
      %1120 = vmatprep.subr.bf16.mxu0 0
      %1121 = vmatpush1.bf16.msra.mxu0 %v1059
      %1122 = vmatprep.subr.bf16.mxu0 0
      %1123 = vmatpush1.bf16.msra.mxu0 %v1060
      %1124 = vmatprep.subr.bf16.mxu0 0
      %1125 = vmatpush1.bf16.msra.mxu0 %v1061
      %1126 = vmatprep.mubr.bf16.mxu0 %v948
      %1127 = vmatmul.mubr.bf16.gmra.mrb[0].mxu0 %v947
      %v1128 = vpop.f32.mrb[0].mxu0
      %v1129 = vadd.f32 0.0, %v1128
      %v1130 = vpop.f32.mrb[0].mxu0
      %v1131 = vpop.f32.mrb[0].mxu0
      %v1132 = vadd.f32 0.0, %v1131
      %v1133 = vpop.f32.mrb[0].mxu0
      %1134 = vdwg.mxu0
      %1135 = vmatprep.subr.bf16.mxu0 0
      %1136 = vmatpush1.bf16.msra.mxu0 %v1062
      %1137 = vmatprep.subr.bf16.mxu0 0
      %1138 = vmatpush1.bf16.msra.mxu0 %v1063
      %1139 = vmatprep.subr.bf16.mxu0 0
      %1140 = vmatpush1.bf16.msra.mxu0 %v1064
      %1141 = vmatprep.subr.bf16.mxu0 0
      %1142 = vmatpush1.bf16.msra.mxu0 %v1065
      %1143 = vmatprep.subr.bf16.mxu0 0
      %1144 = vmatpush1.bf16.msra.mxu0 %v1066
      %1145 = vmatprep.subr.bf16.mxu0 0
      %1146 = vmatpush1.bf16.msra.mxu0 %v1067
      %1147 = vmatprep.subr.bf16.mxu0 0
      %1148 = vmatpush1.bf16.msra.mxu0 %v1068
      %1149 = vmatprep.subr.bf16.mxu0 0
      %1150 = vmatpush1.bf16.msra.mxu0 %v1069
      %1151 = vmatprep.subr.bf16.mxu0 0
      %1152 = vmatpush1.bf16.msra.mxu0 0
      %1153 = vmatprep.subr.bf16.mxu0 0
      %1154 = vmatpush1.bf16.msra.mxu0 0
      %1155 = vmatprep.subr.bf16.mxu0 0
      %1156 = vmatpush1.bf16.msra.mxu0 0
      %1157 = vmatprep.subr.bf16.mxu0 0
      %1158 = vmatpush1.bf16.msra.mxu0 0
      %1159 = vmatprep.subr.bf16.mxu0 0
      %1160 = vmatpush1.bf16.msra.mxu0 0
      %1161 = vmatprep.subr.bf16.mxu0 0
      %1162 = vmatpush1.bf16.msra.mxu0 0
      %1163 = vmatprep.subr.bf16.mxu0 0
      %1164 = vmatpush1.bf16.msra.mxu0 0
      %1165 = vmatprep.subr.bf16.mxu0 0
      %1166 = vmatpush1.bf16.msra.mxu0 0
      %1167 = vmatprep.mubr.bf16.mxu0 0
      %1168 = vmatmul.mubr.bf16.gmra.mrb[0].mxu0 %v949
      %v1169 = vpop.f32.mrb[0].mxu0
      %v1170 = vadd.f32 %v1129, %v1169
      %v1171 = vpop.f32.mrb[0].mxu0
      %v1172 = vpop.f32.mrb[0].mxu0
      %v1173 = vadd.f32 %v1132, %v1172
      %v1174 = vpop.f32.mrb[0].mxu0
      %1175 = vdwg.mxu0
      %v1176 = vld [vmem:[%s4 + $0x2] sm:$0x1]
      %v1177 = vlaneseq
      %v1178 = vshrl.u32 %v1177, 7
      %v1179 = vsub.s32 0, %v1178
      %v1180 = vrot.slane %v1176, %v1179
      %v1181 = vmul.f32 %v1170, %v1180
      %v1182 = vmul.f32 %v1173, %v1180
      %v1183 = vld [vmem:[%s5 + $0x2] sm:$0x1]
      %v1184 = vlaneseq
      %v1185 = vshrl.u32 %v1184, 7
      %v1186 = vsub.s32 0, %v1185
      %v1187 = vrot.slane %v1183, %v1186
      %v1188 = vadd.f32 %v1181, %v1187
      %v1189 = vadd.f32 %v1182, %v1187
      %v1190 = vadd.f32 %v1188, %v584
      %v1191 = vadd.f32 %v1189, %v585
      %v1192 = vmax.f32 %v1190, 0.0
      %v1193 = vmax.f32 %v1191, 0.0
      %v1194 = vpack.c.bf16 %v1193, %v1192
      %v1196 = vunpack.c.l.b16 %v1194
      %v1197 = vunpack.c.h.b16 %v1194
      %v1198 = vpack.c.b16 %v1196, %v1196
      %v1199 = vpack.c.b16 %v1197, %v1197
      %1202 = vst [vmem:[%s268] sm:$0xf] %v1198
      %1203 = vst [vmem:[%s268 + $0x4] sm:$0xf] %v1199
      %p1204 = scmp.lt.s32.totalorder %s17, 1
      %s1205 = scalar_select %p1204, %s17, 1
      %s1206 = smul.addr %s1205, 2
      %s1207 = smul.addr %s1206, 4
      %s1208 = scalar_lea.vmem %s6, %s1207
      // Predicated region
      $region45: #{forward.9} parent=43 // pred_check
        %p1209 = pneg %p171
      $region46: #{forward.9} parent=43 // pred_check_branch
        %1211 = sbr.rel (%p1209) target = $region48
      $region47: #{forward.9} parent=43 // pred_region
        _
      $region48: #{forward.9} parent=43 // pred_fallthru
        _
    $region44: #{forward.9} parent=5 // pred_fallthru
      _
    %p1212 = scmp.le.s32.totalorder 2, %s12
    // Predicated region
    $region49: #{forward.9} parent=5 // pred_check
      %p1213 = pneg %p1212
    $region50: #{forward.9} parent=5 // pred_check_branch
      %1215 = sbr.rel (%p1213) target = $region52
    $region51: #{forward.9} parent=5 // pred_region
      %s1216 = ssub.s32 %s12, 2
      // Predicated region
      $region53: #{forward.9} parent=51 // pred_check
        %p1217 = pneg %p177
      $region54: #{forward.9} parent=51 // pred_check_branch
        %1219 = sbr.rel (%p1217) target = $region56
      $region55: #{forward.9} parent=51 // pred_region
        %p1220 = scmp.lt.s32.totalorder %s18, 1
        %s1221 = scalar_select %p1220, %s18, 1
        %s1222 = smul.addr %s1221, 2
        %s1223 = smul.addr %s1222, 4
        %s1224 = scalar_lea.vmem %s6, %s1223
      $region56: #{forward.9} parent=51 // pred_fallthru
        _
    $region52: #{forward.9} parent=5 // pred_fallthru
      _
  $region6: #{forward.9} parent=0 // loop_footer
    %s16 = sadd.s32 1, %s12
  $region7: #{forward.9} parent=0 // loop_footer_branch
    %11 = sbr.rel target = $region3
  $region8: #{forward.9} parent=0 // loop_exit
    _

</llo_original>
